<compile_context>
chip_gen: v6e
topology: v6e:2x2x1
jax: 0.10.0
libtpu: 0.0.40
codegen_flags: <defaults>
</compile_context>

<pallas_src>
import functools

import numpy as np

import jax
import jax.numpy as jnp
from jax import lax
from jax.experimental import pallas as pl
from jax.experimental.pallas import tpu as pltpu

# ---- model hyper-parameters implied by CustomNetwork.__init__ ----
VOCAB      = 14                     # nn.Embedding(14, 16, padding_idx=0)
EMB_DIM    = 16
SEQ_LEN    = 10
NUM_REL    = 8
NUM_HEADS  = 32
HEAD_DIM   = 4                      # num_heads * head_dim = 128 (lane friendly)
NUM_LAYERS = 3
FEAT_DIM   = SEQ_LEN * EMB_DIM      # 160
PI_DIM     = 64
VF_DIM     = 64
OUT_DIM    = PI_DIM + VF_DIM        # 128  (fused policy|value head, lane dense)
QKV_DIM    = NUM_HEADS * HEAD_DIM   # 128
LN_EPS     = 1e-5

# lane permutation applied to the qkv/wo weights in the wrapper:
#   new lane j = d*32 + h   holds old column h*4 + d    (d = head_dim index, h = head index)
_PERM = np.array([h * HEAD_DIM + d for d in range(HEAD_DIM) for h in range(NUM_HEADS)],
                 dtype=np.int32)


# ----------------------------------------------------------------------------------------
# kernel
# ----------------------------------------------------------------------------------------
def _ga_policy_value_kernel(
    formula_ref,   # (1, tb*10, 1)    int32 token ids, rows (l, b)-major
    rels_ref,      # (1, tb*100, 1)   int32 relation ids, rows (l, m, b)-major
    emb_ref,       # (14, 16)         embedding table (row 0 = padding, zeros)
    relemb_ref,    # (8, 128)         relation bias table, replicated over 4 lane groups
    wqkv_ref,      # (NL, 16, 384)    fused q|k|v weights (permuted lanes, q pre-scaled)
    bqkv_ref,      # (NL, 1, 384)
    wo_ref,        # (NL, 128, 16)    output projection (rows permuted to d-major order)
    bo_ref,        # (NL, 1, 16)
    lng_ref,       # (NL, 1, 16)      LayerNorm gamma
    lnb_ref,       # (NL, 1, 16)      LayerNorm beta
    whead_ref,     # (10, 16, 128)    fused policy|value head weight, per sequence position
    bhead_ref,     # (1, 128)
    out_ref,       # (tb, 128)        [:, :64] = latent_pi, [:, 64:] = latent_vf
    *, compute_dtype,
):
    tb = out_ref.shape[0]
    L = SEQ_LEN
    n_tok = tb * L
    n_pair = tb * L * L
    cdt = compute_dtype

    # ---- embedding lookup as one_hot @ table (MXU); padding / OOB ids -> zeros -------------
    # rows are (l, b)-major -> the (n_tok,16) <-> (L,tb,16) reshapes below are layout-free.
    tok = formula_ref[...].reshape(n_tok, 1)
    tok_iota = lax.broadcasted_iota(jnp.int32, (n_tok, VOCAB), 1)
    tok_oh = (tok == tok_iota).astype(jnp.float32)
    x = jnp.dot(tok_oh, emb_ref[...], preferred_element_type=jnp.float32)    # (n_tok, 16)

    # ---- relation bias (layer independent, computed once per tile) -------------------------
    #   relb[l, m, b, d*32+h] = rel_emb[rels[b,l,m], h]   (replicated over d)
    rel = rels_ref[...].reshape(n_pair, 1)
    rel_iota = lax.broadcasted_iota(jnp.int32, (n_pair, NUM_REL), 1)
    rel_oh = (rel == rel_iota).astype(jnp.float32)
    relb = jnp.dot(rel_oh, relemb_ref[...], preferred_element_type=jnp.float32)
    relb = relb.astype(cdt).reshape(L, L, tb, QKV_DIM)                       # (L, L, tb, 128)

    for layer in range(NUM_LAYERS):
        # --- fused q|k|v projection: one (n_tok,16) x (16,384) matmul, f32 accumulation ---
        qkv = jnp.dot(x, wqkv_ref[layer],
                      preferred_element_type=jnp.float32) + bqkv_ref[layer]  # (n_tok, 384)
        qkv = qkv.reshape(L, tb, 3 * QKV_DIM)                                # free reshape
        q4 = qkv[:, :, 0:QKV_DIM].astype(cdt)                                # (L, tb, 128)
        k4 = qkv[:, :, QKV_DIM:2 * QKV_DIM].astype(cdt)
        v4 = qkv[:, :, 2 * QKV_DIM:3 * QKV_DIM].astype(cdt)

        # --- relation-biased scores, replicated over the 4 head-dim lane groups:
        #   sc[l,m,b,d*32+h] = sum_d' q[l,b,d'*32+h]*k[m,b,d'*32+h] + rel_emb[rels[b,l,m], h]
        # head-dim contraction = 3 static 32-lane rolls + VPU FMAs (no tiny matmuls); the
        # minor dims (tb,128) are fully dense (no sublane padding).
        sc = relb
        for t in range(HEAD_DIM):
            shift = t * NUM_HEADS
            qr = pltpu.roll(q4, shift, 2) if shift else q4
            kr = pltpu.roll(k4, shift, 2) if shift else k4
            sc = sc + qr[:, None, :, :] * kr[None, :, :, :]                  # (L, L, tb, 128)

        # --- softmax over keys (axis=1 = outer axis -> cheap slab accumulations) with the
        #     probability tensor fused away: accumulate exp*v and exp in the same pass. ---
        mx = jnp.max(sc, axis=1, keepdims=True)                              # (L, 1, tb, 128)
        ex = jnp.exp(sc - mx)                                                # (L, L, tb, 128)
        denom = jnp.sum(ex, axis=1)                                          # (L, tb, 128)
        ctx_un = jnp.sum(ex * v4[None, :, :, :], axis=1)                     # (L, tb, 128)
        ctx = ctx_un.astype(jnp.float32) * pl.reciprocal(
            denom.astype(jnp.float32), approx=True)                          # (L, tb, 128) f32

        out = jnp.dot(ctx.reshape(n_tok, QKV_DIM), wo_ref[layer],
                      preferred_element_type=jnp.float32) + bo_ref[layer]    # (n_tok, 16)

        # --- residual + LayerNorm (f32) ---
        y = x + out
        mu = jnp.mean(y, axis=-1, keepdims=True)
        var = jnp.mean(jnp.square(y - mu), axis=-1, keepdims=True)
        x = (y - mu) * lax.rsqrt(var + LN_EPS) * lng_ref[layer] + lnb_ref[layer]

    # ---- policy|value head: 10 accumulated (tb,16)x(16,128) matmuls (no 160-lane flatten
    #      relayout); output is a single lane-dense (tb, 128) block. ----
    x3 = x.reshape(L, tb, EMB_DIM)                                           # free reshape
    head = jnp.zeros((tb, OUT_DIM), jnp.float32)
    for l in range(SEQ_LEN):
        head = head + jnp.dot(x3[l], whead_ref[l], preferred_element_type=jnp.float32)
    out_ref[...] = head + bhead_ref[...]


# ----------------------------------------------------------------------------------------
# wrapper
# ----------------------------------------------------------------------------------------
def _round_up(x, m):
    return ((x + m - 1) // m) * m


def _full_spec(arr):
    nd = arr.ndim
    return pl.BlockSpec(arr.shape, lambda b, _nd=nd: (0,) * _nd)


def _tpu_config():
    """Generation-aware defaults: batch tile, scoped-VMEM limit, softmax compute dtype."""
    kind = ""
    try:
        kind = jax.devices()[0].device_kind.lower()
    except Exception:
        pass
    if "v7" in kind:
        # 64 MiB VMEM per TensorCore, 2 TCs -> modest scoped VMEM; bf16 VPU/EUP available.
        return dict(tile=64, vmem_limit=40 * 1024 * 1024, compute_dtype=jnp.bfloat16)
    if "v6" in kind:
        return dict(tile=64, vmem_limit=64 * 1024 * 1024, compute_dtype=jnp.bfloat16)
    # v5e and older / unknown: no bf16 VPU/EUP -> keep f32; 128 MiB VMEM so raise the limit.
    return dict(tile=64, vmem_limit=64 * 1024 * 1024, compute_dtype=jnp.float32)


def pack_params(p):
    """One-time repack of reference-layout params into kernel-friendly tensors.

    Call this ONCE at init (outside the per-step path) and pass the packed dict to
    custom_network_forward; it is NOT re-run per call.
    """
    scale = 1.0 / np.sqrt(HEAD_DIM)          # attention scale folded into q weights/bias
    perm = _PERM
    wq = p['wq'][:, :, perm] * scale
    bq = p['bq'][:, perm] * scale
    wk = p['wk'][:, :, perm]
    bk = p['bk'][:, perm]
    wv = p['wv'][:, :, perm]
    bv = p['bv'][:, perm]
    whead = jnp.concatenate([p['wpi'], p['wvf']], axis=1)          # (160, 128)
    return dict(
        emb=p['emb_table'],                                        # (14, 16)
        relemb=jnp.tile(p['rel_emb'], (1, HEAD_DIM)),              # (8, 128) head-replicated
        wqkv=jnp.concatenate([wq, wk, wv], axis=2),                # (NL, 16, 384)
        bqkv=jnp.concatenate([bq, bk, bv], axis=1)[:, None, :],    # (NL, 1, 384)
        wo=p['wo'][:, perm, :],                                    # (NL, 128, 16)
        bo=p['bo'][:, None, :],                                    # (NL, 1, 16)
        ln_g=p['ln_g'][:, None, :],                                # (NL, 1, 16)
        ln_b=p['ln_b'][:, None, :],                                # (NL, 1, 16)
        whead=whead.reshape(SEQ_LEN, EMB_DIM, OUT_DIM),            # (10, 16, 128)
        bhead=jnp.concatenate([p['bpi'], p['bvf']], axis=1),       # (1, 128)
    )


def custom_network_forward(features, packed, *, tile=64,
                           vmem_limit=64 * 1024 * 1024, compute_dtype=jnp.float32):
    """features: (B, 110) float32 -> (latent_pi (B, 64), latent_vf (B, 64))."""
    B = features.shape[0]
    formula = features[:, :SEQ_LEN].astype(jnp.int32)                               # (B, 10)
    rels = features[:, SEQ_LEN:SEQ_LEN + SEQ_LEN * SEQ_LEN].astype(jnp.int32)       # (B, 100)

    tb = min(tile, _round_up(B, 8))
    b_pad = _round_up(B, tb)
    n_tiles = b_pad // tb
    if b_pad != B:                            # pad batch; padded rows use token id 0 (zero emb)
        formula = jnp.pad(formula, ((0, b_pad - B), (0, 0)))
        rels = jnp.pad(rels, ((0, b_pad - B), (0, 0)))

    # id columns in (l,b)- / (l,m,b)-major row order per batch tile: the kernel's one-hot
    # builds and all activation reshapes are then layout-free (batch sits on sublanes).
    formula_col = (formula.reshape(n_tiles, tb, SEQ_LEN)
                   .transpose(0, 2, 1).reshape(n_tiles, SEQ_LEN * tb, 1))
    rels_col = (rels.reshape(n_tiles, tb, SEQ_LEN * SEQ_LEN)
                .transpose(0, 2, 1).reshape(n_tiles, SEQ_LEN * SEQ_LEN * tb, 1))

    weights = (packed['emb'], packed['relemb'], packed['wqkv'], packed['bqkv'],
               packed['wo'], packed['bo'], packed['ln_g'], packed['ln_b'],
               packed['whead'], packed['bhead'])

    kernel = functools.partial(_ga_policy_value_kernel, compute_dtype=compute_dtype)
    out = pl.pallas_call(
        kernel,
        out_shape=jax.ShapeDtypeStruct((b_pad, OUT_DIM), jnp.float32),
        grid=(n_tiles,),
        in_specs=[
            pl.BlockSpec((1, SEQ_LEN * tb, 1), lambda b: (b, 0, 0)),
            pl.BlockSpec((1, SEQ_LEN * SEQ_LEN * tb, 1), lambda b: (b, 0, 0)),
        ] + [_full_spec(w) for w in weights],
        out_specs=pl.BlockSpec((tb, OUT_DIM), lambda b: (b, 0)),
        compiler_params=pltpu.CompilerParams(
            dimension_semantics=("parallel",),
            vmem_limit_bytes=vmem_limit),
    )(formula_col, rels_col, *weights)

    out = out[:B]
    return out[:, :PI_DIM], out[:, PI_DIM:]


custom_network_forward = jax.jit(
    custom_network_forward, static_argnames=("tile", "vmem_limit", "compute_dtype"))


# ----------------------------------------------------------------------------------------
# parameters + pure-JAX reference (for the correctness check)
# ----------------------------------------------------------------------------------------
def init_params(key):
    ks = jax.random.split(key, 12)
    s = 0.1
    emb_table = jax.random.normal(ks[0], (VOCAB, EMB_DIM), jnp.float32) * s
    emb_table = emb_table.at[0].set(0.0)      # padding_idx=0
    return dict(
        emb_table=emb_table,
        rel_emb=jax.random.normal(ks[1], (NUM_REL, NUM_HEADS), jnp.float32) * s,
        wq=jax.random.normal(ks[2], (NUM_LAYERS, EMB_DIM, QKV_DIM), jnp.float32) * s,
        bq=jnp.zeros((NUM_LAYERS, QKV_DIM), jnp.float32),
        wk=jax.random.normal(ks[3], (NUM_LAYERS, EMB_DIM, QKV_DIM), jnp.float32) * s,
        bk=jnp.zeros((NUM_LAYERS, QKV_DIM), jnp.float32),
        wv=jax.random.normal(ks[4], (NUM_LAYERS, EMB_DIM, QKV_DIM), jnp.float32) * s,
        bv=jnp.zeros((NUM_LAYERS, QKV_DIM), jnp.float32),
        wo=jax.random.normal(ks[5], (NUM_LAYERS, QKV_DIM, EMB_DIM), jnp.float32) * s,
        bo=jnp.zeros((NUM_LAYERS, EMB_DIM), jnp.float32),
        ln_g=jnp.ones((NUM_LAYERS, EMB_DIM), jnp.float32),
        ln_b=jnp.zeros((NUM_LAYERS, EMB_DIM), jnp.float32),
        wpi=jax.random.normal(ks[6], (FEAT_DIM, PI_DIM), jnp.float32) * s,
        bpi=jnp.zeros((1, PI_DIM), jnp.float32),
        wvf=jax.random.normal(ks[7], (FEAT_DIM, VF_DIM), jnp.float32) * s,
        bvf=jnp.zeros((1, VF_DIM), jnp.float32),
    )


def reference_forward(features, params):
    """Plain-JAX reference of the same (assumed) GA forward, in the original layout."""
    B = features.shape[0]
    formula = features[:, :SEQ_LEN].astype(jnp.int32)
    rels = features[:, SEQ_LEN:].reshape(B, SEQ_LEN, SEQ_LEN).astype(jnp.int32)
    x = params['emb_table'][formula]                                  # (B, 10, 16)
    relb = jnp.transpose(params['rel_emb'][rels], (0, 3, 1, 2))       # (B, H, 10, 10)
    scale = 1.0 / jnp.sqrt(jnp.float32(HEAD_DIM))
    hp = jax.lax.Precision.HIGHEST
    for l in range(NUM_LAYERS):
        q = jnp.einsum('bld,de->ble', x, params['wq'][l], precision=hp) + params['bq'][l]
        k = jnp.einsum('bld,de->ble', x, params['wk'][l], precision=hp) + params['bk'][l]
        v = jnp.einsum('bld,de->ble', x, params['wv'][l], precision=hp) + params['bv'][l]
        qh = q.reshape(B, SEQ_LEN, NUM_HEADS, HEAD_DIM)
        kh = k.reshape(B, SEQ_LEN, NUM_HEADS, HEAD_DIM)
        vh = v.reshape(B, SEQ_LEN, NUM_HEADS, HEAD_DIM)
        s = jnp.einsum('blhd,bmhd->bhlm', qh, kh, precision=hp) * scale + relb
        p = jax.nn.softmax(s, axis=-1)
        ctx = jnp.einsum('bhlm,bmhd->blhd', p, vh, precision=hp).reshape(B, SEQ_LEN, QKV_DIM)
        out = jnp.einsum('ble,ed->bld', ctx, params['wo'][l], precision=hp) + params['bo'][l]
        y = x + out
        mu = jnp.mean(y, axis=-1, keepdims=True)
        var = jnp.mean((y - mu) ** 2, axis=-1, keepdims=True)
        x = (y - mu) * jax.lax.rsqrt(var + LN_EPS) * params['ln_g'][l] + params['ln_b'][l]
    flat = x.reshape(B, FEAT_DIM)
    return flat @ params['wpi'] + params['bpi'], flat @ params['wvf'] + params['bvf']


if __name__ == "__main__":
    cfg = _tpu_config()

    key = jax.random.PRNGKey(0)
    k_param, k_formula, k_rels = jax.random.split(key, 3)

    B = 2
    params = init_params(k_param)
    packed = pack_params(params)          # one-time packing, hoisted out of the per-call path

    formula = jax.random.randint(k_formula, (B, SEQ_LEN), 0, VOCAB)
    rels = jax.random.randint(k_rels, (B, SEQ_LEN, SEQ_LEN), 0, NUM_REL)
    features = jnp.concatenate(
        [formula.astype(jnp.float32),
         rels.reshape(B, SEQ_LEN * SEQ_LEN).astype(jnp.float32)],
        axis=1)                                                      # (B, 110)

    latent_pi, latent_vf = custom_network_forward(
        features, packed, tile=cfg["tile"], vmem_limit=cfg["vmem_limit"],
        compute_dtype=cfg["compute_dtype"])
    jax.block_until_ready((latent_pi, latent_vf))

    assert latent_pi.shape == (B, PI_DIM)
    assert latent_vf.shape == (B, VF_DIM)
    assert bool(jnp.all(jnp.isfinite(latent_pi))) and bool(jnp.all(jnp.isfinite(latent_vf)))

    # numeric check against the plain-JAX (Precision.HIGHEST) reference.  The kernel uses default
    # MXU precision, an approximate softmax reciprocal, and (on v6e/v7x) bf16 softmax
    # intermediates, so the tolerance is loose by design.
    ref_pi, ref_vf = reference_forward(features, params)
    tol = 1e-1 if cfg["compute_dtype"] == jnp.float32 else 2e-1
    np.testing.assert_allclose(np.asarray(latent_pi), np.asarray(ref_pi), rtol=tol, atol=tol)
    np.testing.assert_allclose(np.asarray(latent_vf), np.asarray(ref_vf), rtol=tol, atol=tol)

    print("KERNEL_OK")
</pallas_src>

<mosaic_0001>
module attributes {stable_mosaic.version = 11 : i64} {
  func.func @_ga_policy_value_kernel(%arg0: i32, %arg1: memref<1x80x1xi32, #tpu.memory_space<vmem>>, %arg2: memref<1x800x1xi32, #tpu.memory_space<vmem>>, %arg3: memref<14x16xf32, #tpu.memory_space<vmem>>, %arg4: memref<8x128xf32, #tpu.memory_space<vmem>>, %arg5: memref<3x16x384xf32, #tpu.memory_space<vmem>>, %arg6: memref<3x1x384xf32, #tpu.memory_space<vmem>>, %arg7: memref<3x128x16xf32, #tpu.memory_space<vmem>>, %arg8: memref<3x1x16xf32, #tpu.memory_space<vmem>>, %arg9: memref<3x1x16xf32, #tpu.memory_space<vmem>>, %arg10: memref<3x1x16xf32, #tpu.memory_space<vmem>>, %arg11: memref<10x16x128xf32, #tpu.memory_space<vmem>>, %arg12: memref<1x128xf32, #tpu.memory_space<vmem>>, %arg13: memref<8x128xf32, #tpu.memory_space<vmem>>) attributes {dimension_semantics = [#tpu.dimension_semantics<parallel>], iteration_bounds = array<i64: 1>, scalar_prefetch = 0 : i64, scratch_operands = 0 : i64, tpu.core_type = #tpu.core_type<tc>, window_params = [{transform_indices = @transform_0, window_bounds = array<i64: 1, 80, 1>}, {transform_indices = @transform_1, window_bounds = array<i64: 1, 800, 1>}, {pipeline_mode = #tpu.pipeline_mode<synchronous>, transform_indices = @transform_2, window_bounds = array<i64: 14, 16>}, {pipeline_mode = #tpu.pipeline_mode<synchronous>, transform_indices = @transform_3, window_bounds = array<i64: 8, 128>}, {pipeline_mode = #tpu.pipeline_mode<synchronous>, transform_indices = @transform_4, window_bounds = array<i64: 3, 16, 384>}, {pipeline_mode = #tpu.pipeline_mode<synchronous>, transform_indices = @transform_5, window_bounds = array<i64: 3, 1, 384>}, {pipeline_mode = #tpu.pipeline_mode<synchronous>, transform_indices = @transform_6, window_bounds = array<i64: 3, 128, 16>}, {pipeline_mode = #tpu.pipeline_mode<synchronous>, transform_indices = @transform_7, window_bounds = array<i64: 3, 1, 16>}, {pipeline_mode = #tpu.pipeline_mode<synchronous>, transform_indices = @transform_8, window_bounds = array<i64: 3, 1, 16>}, {pipeline_mode = #tpu.pipeline_mode<synchronous>, transform_indices = @transform_9, window_bounds = array<i64: 3, 1, 16>}, {pipeline_mode = #tpu.pipeline_mode<synchronous>, transform_indices = @transform_10, window_bounds = array<i64: 10, 16, 128>}, {pipeline_mode = #tpu.pipeline_mode<synchronous>, transform_indices = @transform_11, window_bounds = array<i64: 1, 128>}, {transform_indices = @transform_12, window_bounds = array<i64: 8, 128>}]} {
    %c0 = arith.constant 0 : index
    %c0_0 = arith.constant 0 : index
    %c0_1 = arith.constant 0 : index
    %0 = vector.load %arg1[%c0, %c0_0, %c0_1] : memref<1x80x1xi32, #tpu.memory_space<vmem>>, vector<1x80x1xi32>
    %1 = vector.shape_cast %0 : vector<1x80x1xi32> to vector<80x1xi32>
    %2 = tpu.iota {dimensions = array<i32: 1>} : vector<80x14xi32>
    %3 = vector.broadcast %1 : vector<80x1xi32> to vector<80x14xi32>
    %4 = arith.cmpi eq, %3, %2 : vector<80x14xi32>
    %5 = arith.extui %4 : vector<80x14xi1> to vector<80x14xi32>
    %6 = arith.sitofp %5 : vector<80x14xi32> to vector<80x14xf32>
    %c0_2 = arith.constant 0 : index
    %c0_3 = arith.constant 0 : index
    %7 = vector.load %arg3[%c0_2, %c0_3] : memref<14x16xf32, #tpu.memory_space<vmem>>, vector<14x16xf32>
    %cst = arith.constant dense<0.000000e+00> : vector<80x16xf32>
    %8 = tpu.matmul %6, %7, %cst {dimension_numbers = #tpu.dot_dimension_numbers<[1], [0], [0], [1], [0, 0, 1, 1], [], []>} : vector<80x14xf32>, vector<14x16xf32>, vector<80x16xf32> -> vector<80x16xf32>
    %c0_4 = arith.constant 0 : index
    %c0_5 = arith.constant 0 : index
    %c0_6 = arith.constant 0 : index
    %9 = vector.load %arg2[%c0_4, %c0_5, %c0_6] : memref<1x800x1xi32, #tpu.memory_space<vmem>>, vector<1x800x1xi32>
    %10 = vector.shape_cast %9 : vector<1x800x1xi32> to vector<800x1xi32>
    %11 = tpu.iota {dimensions = array<i32: 1>} : vector<800x8xi32>
    %12 = vector.broadcast %10 : vector<800x1xi32> to vector<800x8xi32>
    %13 = arith.cmpi eq, %12, %11 : vector<800x8xi32>
    %14 = arith.extui %13 : vector<800x8xi1> to vector<800x8xi32>
    %15 = arith.sitofp %14 : vector<800x8xi32> to vector<800x8xf32>
    %c0_7 = arith.constant 0 : index
    %c0_8 = arith.constant 0 : index
    %16 = vector.load %arg4[%c0_7, %c0_8] : memref<8x128xf32, #tpu.memory_space<vmem>>, vector<8x128xf32>
    %cst_9 = arith.constant dense<0.000000e+00> : vector<800x128xf32>
    %17 = tpu.matmul %15, %16, %cst_9 {dimension_numbers = #tpu.dot_dimension_numbers<[1], [0], [0], [1], [0, 0, 1, 1], [], []>} : vector<800x8xf32>, vector<8x128xf32>, vector<800x128xf32> -> vector<800x128xf32>
    %18 = vector.shape_cast %17 : vector<800x128xf32> to vector<10x10x8x128xf32>
    %c0_10 = arith.constant 0 : index
    %c0_11 = arith.constant 0 : index
    %c0_12 = arith.constant 0 : index
    %19 = vector.load %arg5[%c0_10, %c0_11, %c0_12] : memref<3x16x384xf32, #tpu.memory_space<vmem>>, vector<1x16x384xf32>
    %20 = vector.shape_cast %19 : vector<1x16x384xf32> to vector<16x384xf32>
    %cst_13 = arith.constant dense<0.000000e+00> : vector<80x384xf32>
    %21 = tpu.matmul %8, %20, %cst_13 {dimension_numbers = #tpu.dot_dimension_numbers<[1], [0], [0], [1], [0, 0, 1, 1], [], []>} : vector<80x16xf32>, vector<16x384xf32>, vector<80x384xf32> -> vector<80x384xf32>
    %c0_14 = arith.constant 0 : index
    %c0_15 = arith.constant 0 : index
    %c0_16 = arith.constant 0 : index
    %22 = vector.load %arg6[%c0_14, %c0_15, %c0_16] : memref<3x1x384xf32, #tpu.memory_space<vmem>>, vector<1x1x384xf32>
    %23 = vector.shape_cast %22 : vector<1x1x384xf32> to vector<1x384xf32>
    %24 = vector.broadcast %23 : vector<1x384xf32> to vector<80x384xf32>
    %25 = arith.addf %21, %24 : vector<80x384xf32>
    %26 = vector.shape_cast %25 : vector<80x384xf32> to vector<10x8x384xf32>
    %27 = vector.extract_strided_slice %26 {offsets = [0, 0, 0], sizes = [10, 8, 128], strides = [1, 1, 1]} : vector<10x8x384xf32> to vector<10x8x128xf32>
    %28 = vector.extract_strided_slice %26 {offsets = [0, 0, 128], sizes = [10, 8, 128], strides = [1, 1, 1]} : vector<10x8x384xf32> to vector<10x8x128xf32>
    %29 = vector.extract_strided_slice %26 {offsets = [0, 0, 256], sizes = [10, 8, 128], strides = [1, 1, 1]} : vector<10x8x384xf32> to vector<10x8x128xf32>
    %30 = vector.shape_cast %27 : vector<10x8x128xf32> to vector<10x1x8x128xf32>
    %31 = vector.shape_cast %28 : vector<10x8x128xf32> to vector<1x10x8x128xf32>
    %32 = vector.broadcast %30 : vector<10x1x8x128xf32> to vector<10x10x8x128xf32>
    %33 = vector.broadcast %31 : vector<1x10x8x128xf32> to vector<10x10x8x128xf32>
    %34 = arith.mulf %32, %33 : vector<10x10x8x128xf32>
    %35 = arith.addf %18, %34 : vector<10x10x8x128xf32>
    %c32_i32 = arith.constant 32 : i32
    %36 = tpu.dynamic_rotate %27 by %c32_i32 dim 2 : vector<10x8x128xf32>, i32 -> vector<10x8x128xf32>
    %c32_i32_17 = arith.constant 32 : i32
    %37 = tpu.dynamic_rotate %28 by %c32_i32_17 dim 2 : vector<10x8x128xf32>, i32 -> vector<10x8x128xf32>
    %38 = vector.shape_cast %36 : vector<10x8x128xf32> to vector<10x1x8x128xf32>
    %39 = vector.shape_cast %37 : vector<10x8x128xf32> to vector<1x10x8x128xf32>
    %40 = vector.broadcast %38 : vector<10x1x8x128xf32> to vector<10x10x8x128xf32>
    %41 = vector.broadcast %39 : vector<1x10x8x128xf32> to vector<10x10x8x128xf32>
    %42 = arith.mulf %40, %41 : vector<10x10x8x128xf32>
    %43 = arith.addf %35, %42 : vector<10x10x8x128xf32>
    %c64_i32 = arith.constant 64 : i32
    %44 = tpu.dynamic_rotate %27 by %c64_i32 dim 2 : vector<10x8x128xf32>, i32 -> vector<10x8x128xf32>
    %c64_i32_18 = arith.constant 64 : i32
    %45 = tpu.dynamic_rotate %28 by %c64_i32_18 dim 2 : vector<10x8x128xf32>, i32 -> vector<10x8x128xf32>
    %46 = vector.shape_cast %44 : vector<10x8x128xf32> to vector<10x1x8x128xf32>
    %47 = vector.shape_cast %45 : vector<10x8x128xf32> to vector<1x10x8x128xf32>
    %48 = vector.broadcast %46 : vector<10x1x8x128xf32> to vector<10x10x8x128xf32>
    %49 = vector.broadcast %47 : vector<1x10x8x128xf32> to vector<10x10x8x128xf32>
    %50 = arith.mulf %48, %49 : vector<10x10x8x128xf32>
    %51 = arith.addf %43, %50 : vector<10x10x8x128xf32>
    %c96_i32 = arith.constant 96 : i32
    %52 = tpu.dynamic_rotate %27 by %c96_i32 dim 2 : vector<10x8x128xf32>, i32 -> vector<10x8x128xf32>
    %c96_i32_19 = arith.constant 96 : i32
    %53 = tpu.dynamic_rotate %28 by %c96_i32_19 dim 2 : vector<10x8x128xf32>, i32 -> vector<10x8x128xf32>
    %54 = vector.shape_cast %52 : vector<10x8x128xf32> to vector<10x1x8x128xf32>
    %55 = vector.shape_cast %53 : vector<10x8x128xf32> to vector<1x10x8x128xf32>
    %56 = vector.broadcast %54 : vector<10x1x8x128xf32> to vector<10x10x8x128xf32>
    %57 = vector.broadcast %55 : vector<1x10x8x128xf32> to vector<10x10x8x128xf32>
    %58 = arith.mulf %56, %57 : vector<10x10x8x128xf32>
    %59 = arith.addf %51, %58 : vector<10x10x8x128xf32>
    %cst_20 = arith.constant dense<0xFF800000> : vector<10x8x128xf32>
    %60 = vector.multi_reduction <maximumf>, %59, %cst_20 [1] : vector<10x10x8x128xf32> to vector<10x8x128xf32>
    %61 = vector.shape_cast %60 : vector<10x8x128xf32> to vector<10x1x8x128xf32>
    %62 = vector.broadcast %61 : vector<10x1x8x128xf32> to vector<10x10x8x128xf32>
    %63 = arith.subf %59, %62 : vector<10x10x8x128xf32>
    %64 = math.exp %63 : vector<10x10x8x128xf32>
    %cst_21 = arith.constant dense<0.000000e+00> : vector<10x8x128xf32>
    %65 = vector.multi_reduction <add>, %64, %cst_21 [1] : vector<10x10x8x128xf32> to vector<10x8x128xf32>
    %66 = vector.shape_cast %29 : vector<10x8x128xf32> to vector<1x10x8x128xf32>
    %67 = vector.broadcast %66 : vector<1x10x8x128xf32> to vector<10x10x8x128xf32>
    %68 = arith.mulf %64, %67 : vector<10x10x8x128xf32>
    %cst_22 = arith.constant dense<0.000000e+00> : vector<10x8x128xf32>
    %69 = vector.multi_reduction <add>, %68, %cst_22 [1] : vector<10x10x8x128xf32> to vector<10x8x128xf32>
    %70 = tpu.reciprocal %65 {approx = true} : vector<10x8x128xf32> -> vector<10x8x128xf32>
    %71 = arith.mulf %69, %70 : vector<10x8x128xf32>
    %72 = vector.shape_cast %71 : vector<10x8x128xf32> to vector<80x128xf32>
    %c0_23 = arith.constant 0 : index
    %c0_24 = arith.constant 0 : index
    %c0_25 = arith.constant 0 : index
    %73 = vector.load %arg7[%c0_23, %c0_24, %c0_25] : memref<3x128x16xf32, #tpu.memory_space<vmem>>, vector<1x128x16xf32>
    %74 = vector.shape_cast %73 : vector<1x128x16xf32> to vector<128x16xf32>
    %cst_26 = arith.constant dense<0.000000e+00> : vector<80x16xf32>
    %75 = tpu.matmul %72, %74, %cst_26 {dimension_numbers = #tpu.dot_dimension_numbers<[1], [0], [0], [1], [0, 0, 1, 1], [], []>} : vector<80x128xf32>, vector<128x16xf32>, vector<80x16xf32> -> vector<80x16xf32>
    %c0_27 = arith.constant 0 : index
    %c0_28 = arith.constant 0 : index
    %c0_29 = arith.constant 0 : index
    %76 = vector.load %arg8[%c0_27, %c0_28, %c0_29] : memref<3x1x16xf32, #tpu.memory_space<vmem>>, vector<1x1x16xf32>
    %77 = vector.shape_cast %76 : vector<1x1x16xf32> to vector<1x16xf32>
    %78 = vector.broadcast %77 : vector<1x16xf32> to vector<80x16xf32>
    %79 = arith.addf %75, %78 : vector<80x16xf32>
    %80 = arith.addf %8, %79 : vector<80x16xf32>
    %cst_30 = arith.constant dense<0.000000e+00> : vector<80xf32>
    %81 = vector.multi_reduction <add>, %80, %cst_30 [1] : vector<80x16xf32> to vector<80xf32>
    %82 = vector.shape_cast %81 : vector<80xf32> to vector<80x1xf32>
    %cst_31 = arith.constant 1.600000e+01 : f32
    %83 = vector.broadcast %cst_31 : f32 to vector<80x1xf32>
    %84 = arith.divf %82, %83 : vector<80x1xf32>
    %85 = vector.broadcast %84 : vector<80x1xf32> to vector<80x16xf32>
    %86 = arith.subf %80, %85 : vector<80x16xf32>
    %87 = arith.mulf %86, %86 : vector<80x16xf32>
    %cst_32 = arith.constant dense<0.000000e+00> : vector<80xf32>
    %88 = vector.multi_reduction <add>, %87, %cst_32 [1] : vector<80x16xf32> to vector<80xf32>
    %89 = vector.shape_cast %88 : vector<80xf32> to vector<80x1xf32>
    %cst_33 = arith.constant 1.600000e+01 : f32
    %90 = vector.broadcast %cst_33 : f32 to vector<80x1xf32>
    %91 = arith.divf %89, %90 : vector<80x1xf32>
    %92 = vector.broadcast %84 : vector<80x1xf32> to vector<80x16xf32>
    %93 = arith.subf %80, %92 : vector<80x16xf32>
    %cst_34 = arith.constant 9.99999974E-6 : f32
    %94 = vector.broadcast %cst_34 : f32 to vector<80x1xf32>
    %95 = arith.addf %91, %94 : vector<80x1xf32>
    %96 = math.rsqrt %95 : vector<80x1xf32>
    %97 = vector.broadcast %96 : vector<80x1xf32> to vector<80x16xf32>
    %98 = arith.mulf %93, %97 : vector<80x16xf32>
    %c0_35 = arith.constant 0 : index
    %c0_36 = arith.constant 0 : index
    %c0_37 = arith.constant 0 : index
    %99 = vector.load %arg9[%c0_35, %c0_36, %c0_37] : memref<3x1x16xf32, #tpu.memory_space<vmem>>, vector<1x1x16xf32>
    %100 = vector.shape_cast %99 : vector<1x1x16xf32> to vector<1x16xf32>
    %101 = vector.broadcast %100 : vector<1x16xf32> to vector<80x16xf32>
    %102 = arith.mulf %98, %101 : vector<80x16xf32>
    %c0_38 = arith.constant 0 : index
    %c0_39 = arith.constant 0 : index
    %c0_40 = arith.constant 0 : index
    %103 = vector.load %arg10[%c0_38, %c0_39, %c0_40] : memref<3x1x16xf32, #tpu.memory_space<vmem>>, vector<1x1x16xf32>
    %104 = vector.shape_cast %103 : vector<1x1x16xf32> to vector<1x16xf32>
    %105 = vector.broadcast %104 : vector<1x16xf32> to vector<80x16xf32>
    %106 = arith.addf %102, %105 : vector<80x16xf32>
    %c1 = arith.constant 1 : index
    %c0_41 = arith.constant 0 : index
    %c0_42 = arith.constant 0 : index
    %107 = vector.load %arg5[%c1, %c0_41, %c0_42] : memref<3x16x384xf32, #tpu.memory_space<vmem>>, vector<1x16x384xf32>
    %108 = vector.shape_cast %107 : vector<1x16x384xf32> to vector<16x384xf32>
    %cst_43 = arith.constant dense<0.000000e+00> : vector<80x384xf32>
    %109 = tpu.matmul %106, %108, %cst_43 {dimension_numbers = #tpu.dot_dimension_numbers<[1], [0], [0], [1], [0, 0, 1, 1], [], []>} : vector<80x16xf32>, vector<16x384xf32>, vector<80x384xf32> -> vector<80x384xf32>
    %c1_44 = arith.constant 1 : index
    %c0_45 = arith.constant 0 : index
    %c0_46 = arith.constant 0 : index
    %110 = vector.load %arg6[%c1_44, %c0_45, %c0_46] : memref<3x1x384xf32, #tpu.memory_space<vmem>>, vector<1x1x384xf32>
    %111 = vector.shape_cast %110 : vector<1x1x384xf32> to vector<1x384xf32>
    %112 = vector.broadcast %111 : vector<1x384xf32> to vector<80x384xf32>
    %113 = arith.addf %109, %112 : vector<80x384xf32>
    %114 = vector.shape_cast %113 : vector<80x384xf32> to vector<10x8x384xf32>
    %115 = vector.extract_strided_slice %114 {offsets = [0, 0, 0], sizes = [10, 8, 128], strides = [1, 1, 1]} : vector<10x8x384xf32> to vector<10x8x128xf32>
    %116 = vector.extract_strided_slice %114 {offsets = [0, 0, 128], sizes = [10, 8, 128], strides = [1, 1, 1]} : vector<10x8x384xf32> to vector<10x8x128xf32>
    %117 = vector.extract_strided_slice %114 {offsets = [0, 0, 256], sizes = [10, 8, 128], strides = [1, 1, 1]} : vector<10x8x384xf32> to vector<10x8x128xf32>
    %118 = vector.shape_cast %115 : vector<10x8x128xf32> to vector<10x1x8x128xf32>
    %119 = vector.shape_cast %116 : vector<10x8x128xf32> to vector<1x10x8x128xf32>
    %120 = vector.broadcast %118 : vector<10x1x8x128xf32> to vector<10x10x8x128xf32>
    %121 = vector.broadcast %119 : vector<1x10x8x128xf32> to vector<10x10x8x128xf32>
    %122 = arith.mulf %120, %121 : vector<10x10x8x128xf32>
    %123 = arith.addf %18, %122 : vector<10x10x8x128xf32>
    %c32_i32_47 = arith.constant 32 : i32
    %124 = tpu.dynamic_rotate %115 by %c32_i32_47 dim 2 : vector<10x8x128xf32>, i32 -> vector<10x8x128xf32>
    %c32_i32_48 = arith.constant 32 : i32
    %125 = tpu.dynamic_rotate %116 by %c32_i32_48 dim 2 : vector<10x8x128xf32>, i32 -> vector<10x8x128xf32>
    %126 = vector.shape_cast %124 : vector<10x8x128xf32> to vector<10x1x8x128xf32>
    %127 = vector.shape_cast %125 : vector<10x8x128xf32> to vector<1x10x8x128xf32>
    %128 = vector.broadcast %126 : vector<10x1x8x128xf32> to vector<10x10x8x128xf32>
    %129 = vector.broadcast %127 : vector<1x10x8x128xf32> to vector<10x10x8x128xf32>
    %130 = arith.mulf %128, %129 : vector<10x10x8x128xf32>
    %131 = arith.addf %123, %130 : vector<10x10x8x128xf32>
    %c64_i32_49 = arith.constant 64 : i32
    %132 = tpu.dynamic_rotate %115 by %c64_i32_49 dim 2 : vector<10x8x128xf32>, i32 -> vector<10x8x128xf32>
    %c64_i32_50 = arith.constant 64 : i32
    %133 = tpu.dynamic_rotate %116 by %c64_i32_50 dim 2 : vector<10x8x128xf32>, i32 -> vector<10x8x128xf32>
    %134 = vector.shape_cast %132 : vector<10x8x128xf32> to vector<10x1x8x128xf32>
    %135 = vector.shape_cast %133 : vector<10x8x128xf32> to vector<1x10x8x128xf32>
    %136 = vector.broadcast %134 : vector<10x1x8x128xf32> to vector<10x10x8x128xf32>
    %137 = vector.broadcast %135 : vector<1x10x8x128xf32> to vector<10x10x8x128xf32>
    %138 = arith.mulf %136, %137 : vector<10x10x8x128xf32>
    %139 = arith.addf %131, %138 : vector<10x10x8x128xf32>
    %c96_i32_51 = arith.constant 96 : i32
    %140 = tpu.dynamic_rotate %115 by %c96_i32_51 dim 2 : vector<10x8x128xf32>, i32 -> vector<10x8x128xf32>
    %c96_i32_52 = arith.constant 96 : i32
    %141 = tpu.dynamic_rotate %116 by %c96_i32_52 dim 2 : vector<10x8x128xf32>, i32 -> vector<10x8x128xf32>
    %142 = vector.shape_cast %140 : vector<10x8x128xf32> to vector<10x1x8x128xf32>
    %143 = vector.shape_cast %141 : vector<10x8x128xf32> to vector<1x10x8x128xf32>
    %144 = vector.broadcast %142 : vector<10x1x8x128xf32> to vector<10x10x8x128xf32>
    %145 = vector.broadcast %143 : vector<1x10x8x128xf32> to vector<10x10x8x128xf32>
    %146 = arith.mulf %144, %145 : vector<10x10x8x128xf32>
    %147 = arith.addf %139, %146 : vector<10x10x8x128xf32>
    %cst_53 = arith.constant dense<0xFF800000> : vector<10x8x128xf32>
    %148 = vector.multi_reduction <maximumf>, %147, %cst_53 [1] : vector<10x10x8x128xf32> to vector<10x8x128xf32>
    %149 = vector.shape_cast %148 : vector<10x8x128xf32> to vector<10x1x8x128xf32>
    %150 = vector.broadcast %149 : vector<10x1x8x128xf32> to vector<10x10x8x128xf32>
    %151 = arith.subf %147, %150 : vector<10x10x8x128xf32>
    %152 = math.exp %151 : vector<10x10x8x128xf32>
    %cst_54 = arith.constant dense<0.000000e+00> : vector<10x8x128xf32>
    %153 = vector.multi_reduction <add>, %152, %cst_54 [1] : vector<10x10x8x128xf32> to vector<10x8x128xf32>
    %154 = vector.shape_cast %117 : vector<10x8x128xf32> to vector<1x10x8x128xf32>
    %155 = vector.broadcast %154 : vector<1x10x8x128xf32> to vector<10x10x8x128xf32>
    %156 = arith.mulf %152, %155 : vector<10x10x8x128xf32>
    %cst_55 = arith.constant dense<0.000000e+00> : vector<10x8x128xf32>
    %157 = vector.multi_reduction <add>, %156, %cst_55 [1] : vector<10x10x8x128xf32> to vector<10x8x128xf32>
    %158 = tpu.reciprocal %153 {approx = true} : vector<10x8x128xf32> -> vector<10x8x128xf32>
    %159 = arith.mulf %157, %158 : vector<10x8x128xf32>
    %160 = vector.shape_cast %159 : vector<10x8x128xf32> to vector<80x128xf32>
    %c1_56 = arith.constant 1 : index
    %c0_57 = arith.constant 0 : index
    %c0_58 = arith.constant 0 : index
    %161 = vector.load %arg7[%c1_56, %c0_57, %c0_58] : memref<3x128x16xf32, #tpu.memory_space<vmem>>, vector<1x128x16xf32>
    %162 = vector.shape_cast %161 : vector<1x128x16xf32> to vector<128x16xf32>
    %cst_59 = arith.constant dense<0.000000e+00> : vector<80x16xf32>
    %163 = tpu.matmul %160, %162, %cst_59 {dimension_numbers = #tpu.dot_dimension_numbers<[1], [0], [0], [1], [0, 0, 1, 1], [], []>} : vector<80x128xf32>, vector<128x16xf32>, vector<80x16xf32> -> vector<80x16xf32>
    %c1_60 = arith.constant 1 : index
    %c0_61 = arith.constant 0 : index
    %c0_62 = arith.constant 0 : index
    %164 = vector.load %arg8[%c1_60, %c0_61, %c0_62] : memref<3x1x16xf32, #tpu.memory_space<vmem>>, vector<1x1x16xf32>
    %165 = vector.shape_cast %164 : vector<1x1x16xf32> to vector<1x16xf32>
    %166 = vector.broadcast %165 : vector<1x16xf32> to vector<80x16xf32>
    %167 = arith.addf %163, %166 : vector<80x16xf32>
    %168 = arith.addf %106, %167 : vector<80x16xf32>
    %cst_63 = arith.constant dense<0.000000e+00> : vector<80xf32>
    %169 = vector.multi_reduction <add>, %168, %cst_63 [1] : vector<80x16xf32> to vector<80xf32>
    %170 = vector.shape_cast %169 : vector<80xf32> to vector<80x1xf32>
    %cst_64 = arith.constant 1.600000e+01 : f32
    %171 = vector.broadcast %cst_64 : f32 to vector<80x1xf32>
    %172 = arith.divf %170, %171 : vector<80x1xf32>
    %173 = vector.broadcast %172 : vector<80x1xf32> to vector<80x16xf32>
    %174 = arith.subf %168, %173 : vector<80x16xf32>
    %175 = arith.mulf %174, %174 : vector<80x16xf32>
    %cst_65 = arith.constant dense<0.000000e+00> : vector<80xf32>
    %176 = vector.multi_reduction <add>, %175, %cst_65 [1] : vector<80x16xf32> to vector<80xf32>
    %177 = vector.shape_cast %176 : vector<80xf32> to vector<80x1xf32>
    %cst_66 = arith.constant 1.600000e+01 : f32
    %178 = vector.broadcast %cst_66 : f32 to vector<80x1xf32>
    %179 = arith.divf %177, %178 : vector<80x1xf32>
    %180 = vector.broadcast %172 : vector<80x1xf32> to vector<80x16xf32>
    %181 = arith.subf %168, %180 : vector<80x16xf32>
    %cst_67 = arith.constant 9.99999974E-6 : f32
    %182 = vector.broadcast %cst_67 : f32 to vector<80x1xf32>
    %183 = arith.addf %179, %182 : vector<80x1xf32>
    %184 = math.rsqrt %183 : vector<80x1xf32>
    %185 = vector.broadcast %184 : vector<80x1xf32> to vector<80x16xf32>
    %186 = arith.mulf %181, %185 : vector<80x16xf32>
    %c1_68 = arith.constant 1 : index
    %c0_69 = arith.constant 0 : index
    %c0_70 = arith.constant 0 : index
    %187 = vector.load %arg9[%c1_68, %c0_69, %c0_70] : memref<3x1x16xf32, #tpu.memory_space<vmem>>, vector<1x1x16xf32>
    %188 = vector.shape_cast %187 : vector<1x1x16xf32> to vector<1x16xf32>
    %189 = vector.broadcast %188 : vector<1x16xf32> to vector<80x16xf32>
    %190 = arith.mulf %186, %189 : vector<80x16xf32>
    %c1_71 = arith.constant 1 : index
    %c0_72 = arith.constant 0 : index
    %c0_73 = arith.constant 0 : index
    %191 = vector.load %arg10[%c1_71, %c0_72, %c0_73] : memref<3x1x16xf32, #tpu.memory_space<vmem>>, vector<1x1x16xf32>
    %192 = vector.shape_cast %191 : vector<1x1x16xf32> to vector<1x16xf32>
    %193 = vector.broadcast %192 : vector<1x16xf32> to vector<80x16xf32>
    %194 = arith.addf %190, %193 : vector<80x16xf32>
    %c2 = arith.constant 2 : index
    %c0_74 = arith.constant 0 : index
    %c0_75 = arith.constant 0 : index
    %195 = vector.load %arg5[%c2, %c0_74, %c0_75] : memref<3x16x384xf32, #tpu.memory_space<vmem>>, vector<1x16x384xf32>
    %196 = vector.shape_cast %195 : vector<1x16x384xf32> to vector<16x384xf32>
    %cst_76 = arith.constant dense<0.000000e+00> : vector<80x384xf32>
    %197 = tpu.matmul %194, %196, %cst_76 {dimension_numbers = #tpu.dot_dimension_numbers<[1], [0], [0], [1], [0, 0, 1, 1], [], []>} : vector<80x16xf32>, vector<16x384xf32>, vector<80x384xf32> -> vector<80x384xf32>
    %c2_77 = arith.constant 2 : index
    %c0_78 = arith.constant 0 : index
    %c0_79 = arith.constant 0 : index
    %198 = vector.load %arg6[%c2_77, %c0_78, %c0_79] : memref<3x1x384xf32, #tpu.memory_space<vmem>>, vector<1x1x384xf32>
    %199 = vector.shape_cast %198 : vector<1x1x384xf32> to vector<1x384xf32>
    %200 = vector.broadcast %199 : vector<1x384xf32> to vector<80x384xf32>
    %201 = arith.addf %197, %200 : vector<80x384xf32>
    %202 = vector.shape_cast %201 : vector<80x384xf32> to vector<10x8x384xf32>
    %203 = vector.extract_strided_slice %202 {offsets = [0, 0, 0], sizes = [10, 8, 128], strides = [1, 1, 1]} : vector<10x8x384xf32> to vector<10x8x128xf32>
    %204 = vector.extract_strided_slice %202 {offsets = [0, 0, 128], sizes = [10, 8, 128], strides = [1, 1, 1]} : vector<10x8x384xf32> to vector<10x8x128xf32>
    %205 = vector.extract_strided_slice %202 {offsets = [0, 0, 256], sizes = [10, 8, 128], strides = [1, 1, 1]} : vector<10x8x384xf32> to vector<10x8x128xf32>
    %206 = vector.shape_cast %203 : vector<10x8x128xf32> to vector<10x1x8x128xf32>
    %207 = vector.shape_cast %204 : vector<10x8x128xf32> to vector<1x10x8x128xf32>
    %208 = vector.broadcast %206 : vector<10x1x8x128xf32> to vector<10x10x8x128xf32>
    %209 = vector.broadcast %207 : vector<1x10x8x128xf32> to vector<10x10x8x128xf32>
    %210 = arith.mulf %208, %209 : vector<10x10x8x128xf32>
    %211 = arith.addf %18, %210 : vector<10x10x8x128xf32>
    %c32_i32_80 = arith.constant 32 : i32
    %212 = tpu.dynamic_rotate %203 by %c32_i32_80 dim 2 : vector<10x8x128xf32>, i32 -> vector<10x8x128xf32>
    %c32_i32_81 = arith.constant 32 : i32
    %213 = tpu.dynamic_rotate %204 by %c32_i32_81 dim 2 : vector<10x8x128xf32>, i32 -> vector<10x8x128xf32>
    %214 = vector.shape_cast %212 : vector<10x8x128xf32> to vector<10x1x8x128xf32>
    %215 = vector.shape_cast %213 : vector<10x8x128xf32> to vector<1x10x8x128xf32>
    %216 = vector.broadcast %214 : vector<10x1x8x128xf32> to vector<10x10x8x128xf32>
    %217 = vector.broadcast %215 : vector<1x10x8x128xf32> to vector<10x10x8x128xf32>
    %218 = arith.mulf %216, %217 : vector<10x10x8x128xf32>
    %219 = arith.addf %211, %218 : vector<10x10x8x128xf32>
    %c64_i32_82 = arith.constant 64 : i32
    %220 = tpu.dynamic_rotate %203 by %c64_i32_82 dim 2 : vector<10x8x128xf32>, i32 -> vector<10x8x128xf32>
    %c64_i32_83 = arith.constant 64 : i32
    %221 = tpu.dynamic_rotate %204 by %c64_i32_83 dim 2 : vector<10x8x128xf32>, i32 -> vector<10x8x128xf32>
    %222 = vector.shape_cast %220 : vector<10x8x128xf32> to vector<10x1x8x128xf32>
    %223 = vector.shape_cast %221 : vector<10x8x128xf32> to vector<1x10x8x128xf32>
    %224 = vector.broadcast %222 : vector<10x1x8x128xf32> to vector<10x10x8x128xf32>
    %225 = vector.broadcast %223 : vector<1x10x8x128xf32> to vector<10x10x8x128xf32>
    %226 = arith.mulf %224, %225 : vector<10x10x8x128xf32>
    %227 = arith.addf %219, %226 : vector<10x10x8x128xf32>
    %c96_i32_84 = arith.constant 96 : i32
    %228 = tpu.dynamic_rotate %203 by %c96_i32_84 dim 2 : vector<10x8x128xf32>, i32 -> vector<10x8x128xf32>
    %c96_i32_85 = arith.constant 96 : i32
    %229 = tpu.dynamic_rotate %204 by %c96_i32_85 dim 2 : vector<10x8x128xf32>, i32 -> vector<10x8x128xf32>
    %230 = vector.shape_cast %228 : vector<10x8x128xf32> to vector<10x1x8x128xf32>
    %231 = vector.shape_cast %229 : vector<10x8x128xf32> to vector<1x10x8x128xf32>
    %232 = vector.broadcast %230 : vector<10x1x8x128xf32> to vector<10x10x8x128xf32>
    %233 = vector.broadcast %231 : vector<1x10x8x128xf32> to vector<10x10x8x128xf32>
    %234 = arith.mulf %232, %233 : vector<10x10x8x128xf32>
    %235 = arith.addf %227, %234 : vector<10x10x8x128xf32>
    %cst_86 = arith.constant dense<0xFF800000> : vector<10x8x128xf32>
    %236 = vector.multi_reduction <maximumf>, %235, %cst_86 [1] : vector<10x10x8x128xf32> to vector<10x8x128xf32>
    %237 = vector.shape_cast %236 : vector<10x8x128xf32> to vector<10x1x8x128xf32>
    %238 = vector.broadcast %237 : vector<10x1x8x128xf32> to vector<10x10x8x128xf32>
    %239 = arith.subf %235, %238 : vector<10x10x8x128xf32>
    %240 = math.exp %239 : vector<10x10x8x128xf32>
    %cst_87 = arith.constant dense<0.000000e+00> : vector<10x8x128xf32>
    %241 = vector.multi_reduction <add>, %240, %cst_87 [1] : vector<10x10x8x128xf32> to vector<10x8x128xf32>
    %242 = vector.shape_cast %205 : vector<10x8x128xf32> to vector<1x10x8x128xf32>
    %243 = vector.broadcast %242 : vector<1x10x8x128xf32> to vector<10x10x8x128xf32>
    %244 = arith.mulf %240, %243 : vector<10x10x8x128xf32>
    %cst_88 = arith.constant dense<0.000000e+00> : vector<10x8x128xf32>
    %245 = vector.multi_reduction <add>, %244, %cst_88 [1] : vector<10x10x8x128xf32> to vector<10x8x128xf32>
    %246 = tpu.reciprocal %241 {approx = true} : vector<10x8x128xf32> -> vector<10x8x128xf32>
    %247 = arith.mulf %245, %246 : vector<10x8x128xf32>
    %248 = vector.shape_cast %247 : vector<10x8x128xf32> to vector<80x128xf32>
    %c2_89 = arith.constant 2 : index
    %c0_90 = arith.constant 0 : index
    %c0_91 = arith.constant 0 : index
    %249 = vector.load %arg7[%c2_89, %c0_90, %c0_91] : memref<3x128x16xf32, #tpu.memory_space<vmem>>, vector<1x128x16xf32>
    %250 = vector.shape_cast %249 : vector<1x128x16xf32> to vector<128x16xf32>
    %cst_92 = arith.constant dense<0.000000e+00> : vector<80x16xf32>
    %251 = tpu.matmul %248, %250, %cst_92 {dimension_numbers = #tpu.dot_dimension_numbers<[1], [0], [0], [1], [0, 0, 1, 1], [], []>} : vector<80x128xf32>, vector<128x16xf32>, vector<80x16xf32> -> vector<80x16xf32>
    %c2_93 = arith.constant 2 : index
    %c0_94 = arith.constant 0 : index
    %c0_95 = arith.constant 0 : index
    %252 = vector.load %arg8[%c2_93, %c0_94, %c0_95] : memref<3x1x16xf32, #tpu.memory_space<vmem>>, vector<1x1x16xf32>
    %253 = vector.shape_cast %252 : vector<1x1x16xf32> to vector<1x16xf32>
    %254 = vector.broadcast %253 : vector<1x16xf32> to vector<80x16xf32>
    %255 = arith.addf %251, %254 : vector<80x16xf32>
    %256 = arith.addf %194, %255 : vector<80x16xf32>
    %cst_96 = arith.constant dense<0.000000e+00> : vector<80xf32>
    %257 = vector.multi_reduction <add>, %256, %cst_96 [1] : vector<80x16xf32> to vector<80xf32>
    %258 = vector.shape_cast %257 : vector<80xf32> to vector<80x1xf32>
    %cst_97 = arith.constant 1.600000e+01 : f32
    %259 = vector.broadcast %cst_97 : f32 to vector<80x1xf32>
    %260 = arith.divf %258, %259 : vector<80x1xf32>
    %261 = vector.broadcast %260 : vector<80x1xf32> to vector<80x16xf32>
    %262 = arith.subf %256, %261 : vector<80x16xf32>
    %263 = arith.mulf %262, %262 : vector<80x16xf32>
    %cst_98 = arith.constant dense<0.000000e+00> : vector<80xf32>
    %264 = vector.multi_reduction <add>, %263, %cst_98 [1] : vector<80x16xf32> to vector<80xf32>
    %265 = vector.shape_cast %264 : vector<80xf32> to vector<80x1xf32>
    %cst_99 = arith.constant 1.600000e+01 : f32
    %266 = vector.broadcast %cst_99 : f32 to vector<80x1xf32>
    %267 = arith.divf %265, %266 : vector<80x1xf32>
    %268 = vector.broadcast %260 : vector<80x1xf32> to vector<80x16xf32>
    %269 = arith.subf %256, %268 : vector<80x16xf32>
    %cst_100 = arith.constant 9.99999974E-6 : f32
    %270 = vector.broadcast %cst_100 : f32 to vector<80x1xf32>
    %271 = arith.addf %267, %270 : vector<80x1xf32>
    %272 = math.rsqrt %271 : vector<80x1xf32>
    %273 = vector.broadcast %272 : vector<80x1xf32> to vector<80x16xf32>
    %274 = arith.mulf %269, %273 : vector<80x16xf32>
    %c2_101 = arith.constant 2 : index
    %c0_102 = arith.constant 0 : index
    %c0_103 = arith.constant 0 : index
    %275 = vector.load %arg9[%c2_101, %c0_102, %c0_103] : memref<3x1x16xf32, #tpu.memory_space<vmem>>, vector<1x1x16xf32>
    %276 = vector.shape_cast %275 : vector<1x1x16xf32> to vector<1x16xf32>
    %277 = vector.broadcast %276 : vector<1x16xf32> to vector<80x16xf32>
    %278 = arith.mulf %274, %277 : vector<80x16xf32>
    %c2_104 = arith.constant 2 : index
    %c0_105 = arith.constant 0 : index
    %c0_106 = arith.constant 0 : index
    %279 = vector.load %arg10[%c2_104, %c0_105, %c0_106] : memref<3x1x16xf32, #tpu.memory_space<vmem>>, vector<1x1x16xf32>
    %280 = vector.shape_cast %279 : vector<1x1x16xf32> to vector<1x16xf32>
    %281 = vector.broadcast %280 : vector<1x16xf32> to vector<80x16xf32>
    %282 = arith.addf %278, %281 : vector<80x16xf32>
    %283 = vector.shape_cast %282 : vector<80x16xf32> to vector<10x8x16xf32>
    %cst_107 = arith.constant 0.000000e+00 : f32
    %284 = vector.broadcast %cst_107 : f32 to vector<8x128xf32>
    %285 = vector.extract_strided_slice %283 {offsets = [0, 0, 0], sizes = [1, 8, 16], strides = [1, 1, 1]} : vector<10x8x16xf32> to vector<1x8x16xf32>
    %286 = vector.shape_cast %285 : vector<1x8x16xf32> to vector<8x16xf32>
    %c0_108 = arith.constant 0 : index
    %c0_109 = arith.constant 0 : index
    %c0_110 = arith.constant 0 : index
    %287 = vector.load %arg11[%c0_108, %c0_109, %c0_110] : memref<10x16x128xf32, #tpu.memory_space<vmem>>, vector<1x16x128xf32>
    %288 = vector.shape_cast %287 : vector<1x16x128xf32> to vector<16x128xf32>
    %cst_111 = arith.constant dense<0.000000e+00> : vector<8x128xf32>
    %289 = tpu.matmul %286, %288, %cst_111 {dimension_numbers = #tpu.dot_dimension_numbers<[1], [0], [0], [1], [0, 0, 1, 1], [], []>} : vector<8x16xf32>, vector<16x128xf32>, vector<8x128xf32> -> vector<8x128xf32>
    %290 = arith.addf %284, %289 : vector<8x128xf32>
    %291 = vector.extract_strided_slice %283 {offsets = [1, 0, 0], sizes = [1, 8, 16], strides = [1, 1, 1]} : vector<10x8x16xf32> to vector<1x8x16xf32>
    %292 = vector.shape_cast %291 : vector<1x8x16xf32> to vector<8x16xf32>
    %c1_112 = arith.constant 1 : index
    %c0_113 = arith.constant 0 : index
    %c0_114 = arith.constant 0 : index
    %293 = vector.load %arg11[%c1_112, %c0_113, %c0_114] : memref<10x16x128xf32, #tpu.memory_space<vmem>>, vector<1x16x128xf32>
    %294 = vector.shape_cast %293 : vector<1x16x128xf32> to vector<16x128xf32>
    %cst_115 = arith.constant dense<0.000000e+00> : vector<8x128xf32>
    %295 = tpu.matmul %292, %294, %cst_115 {dimension_numbers = #tpu.dot_dimension_numbers<[1], [0], [0], [1], [0, 0, 1, 1], [], []>} : vector<8x16xf32>, vector<16x128xf32>, vector<8x128xf32> -> vector<8x128xf32>
    %296 = arith.addf %290, %295 : vector<8x128xf32>
    %297 = vector.extract_strided_slice %283 {offsets = [2, 0, 0], sizes = [1, 8, 16], strides = [1, 1, 1]} : vector<10x8x16xf32> to vector<1x8x16xf32>
    %298 = vector.shape_cast %297 : vector<1x8x16xf32> to vector<8x16xf32>
    %c2_116 = arith.constant 2 : index
    %c0_117 = arith.constant 0 : index
    %c0_118 = arith.constant 0 : index
    %299 = vector.load %arg11[%c2_116, %c0_117, %c0_118] : memref<10x16x128xf32, #tpu.memory_space<vmem>>, vector<1x16x128xf32>
    %300 = vector.shape_cast %299 : vector<1x16x128xf32> to vector<16x128xf32>
    %cst_119 = arith.constant dense<0.000000e+00> : vector<8x128xf32>
    %301 = tpu.matmul %298, %300, %cst_119 {dimension_numbers = #tpu.dot_dimension_numbers<[1], [0], [0], [1], [0, 0, 1, 1], [], []>} : vector<8x16xf32>, vector<16x128xf32>, vector<8x128xf32> -> vector<8x128xf32>
    %302 = arith.addf %296, %301 : vector<8x128xf32>
    %303 = vector.extract_strided_slice %283 {offsets = [3, 0, 0], sizes = [1, 8, 16], strides = [1, 1, 1]} : vector<10x8x16xf32> to vector<1x8x16xf32>
    %304 = vector.shape_cast %303 : vector<1x8x16xf32> to vector<8x16xf32>
    %c3 = arith.constant 3 : index
    %c0_120 = arith.constant 0 : index
    %c0_121 = arith.constant 0 : index
    %305 = vector.load %arg11[%c3, %c0_120, %c0_121] : memref<10x16x128xf32, #tpu.memory_space<vmem>>, vector<1x16x128xf32>
    %306 = vector.shape_cast %305 : vector<1x16x128xf32> to vector<16x128xf32>
    %cst_122 = arith.constant dense<0.000000e+00> : vector<8x128xf32>
    %307 = tpu.matmul %304, %306, %cst_122 {dimension_numbers = #tpu.dot_dimension_numbers<[1], [0], [0], [1], [0, 0, 1, 1], [], []>} : vector<8x16xf32>, vector<16x128xf32>, vector<8x128xf32> -> vector<8x128xf32>
    %308 = arith.addf %302, %307 : vector<8x128xf32>
    %309 = vector.extract_strided_slice %283 {offsets = [4, 0, 0], sizes = [1, 8, 16], strides = [1, 1, 1]} : vector<10x8x16xf32> to vector<1x8x16xf32>
    %310 = vector.shape_cast %309 : vector<1x8x16xf32> to vector<8x16xf32>
    %c4 = arith.constant 4 : index
    %c0_123 = arith.constant 0 : index
    %c0_124 = arith.constant 0 : index
    %311 = vector.load %arg11[%c4, %c0_123, %c0_124] : memref<10x16x128xf32, #tpu.memory_space<vmem>>, vector<1x16x128xf32>
    %312 = vector.shape_cast %311 : vector<1x16x128xf32> to vector<16x128xf32>
    %cst_125 = arith.constant dense<0.000000e+00> : vector<8x128xf32>
    %313 = tpu.matmul %310, %312, %cst_125 {dimension_numbers = #tpu.dot_dimension_numbers<[1], [0], [0], [1], [0, 0, 1, 1], [], []>} : vector<8x16xf32>, vector<16x128xf32>, vector<8x128xf32> -> vector<8x128xf32>
    %314 = arith.addf %308, %313 : vector<8x128xf32>
    %315 = vector.extract_strided_slice %283 {offsets = [5, 0, 0], sizes = [1, 8, 16], strides = [1, 1, 1]} : vector<10x8x16xf32> to vector<1x8x16xf32>
    %316 = vector.shape_cast %315 : vector<1x8x16xf32> to vector<8x16xf32>
    %c5 = arith.constant 5 : index
    %c0_126 = arith.constant 0 : index
    %c0_127 = arith.constant 0 : index
    %317 = vector.load %arg11[%c5, %c0_126, %c0_127] : memref<10x16x128xf32, #tpu.memory_space<vmem>>, vector<1x16x128xf32>
    %318 = vector.shape_cast %317 : vector<1x16x128xf32> to vector<16x128xf32>
    %cst_128 = arith.constant dense<0.000000e+00> : vector<8x128xf32>
    %319 = tpu.matmul %316, %318, %cst_128 {dimension_numbers = #tpu.dot_dimension_numbers<[1], [0], [0], [1], [0, 0, 1, 1], [], []>} : vector<8x16xf32>, vector<16x128xf32>, vector<8x128xf32> -> vector<8x128xf32>
    %320 = arith.addf %314, %319 : vector<8x128xf32>
    %321 = vector.extract_strided_slice %283 {offsets = [6, 0, 0], sizes = [1, 8, 16], strides = [1, 1, 1]} : vector<10x8x16xf32> to vector<1x8x16xf32>
    %322 = vector.shape_cast %321 : vector<1x8x16xf32> to vector<8x16xf32>
    %c6 = arith.constant 6 : index
    %c0_129 = arith.constant 0 : index
    %c0_130 = arith.constant 0 : index
    %323 = vector.load %arg11[%c6, %c0_129, %c0_130] : memref<10x16x128xf32, #tpu.memory_space<vmem>>, vector<1x16x128xf32>
    %324 = vector.shape_cast %323 : vector<1x16x128xf32> to vector<16x128xf32>
    %cst_131 = arith.constant dense<0.000000e+00> : vector<8x128xf32>
    %325 = tpu.matmul %322, %324, %cst_131 {dimension_numbers = #tpu.dot_dimension_numbers<[1], [0], [0], [1], [0, 0, 1, 1], [], []>} : vector<8x16xf32>, vector<16x128xf32>, vector<8x128xf32> -> vector<8x128xf32>
    %326 = arith.addf %320, %325 : vector<8x128xf32>
    %327 = vector.extract_strided_slice %283 {offsets = [7, 0, 0], sizes = [1, 8, 16], strides = [1, 1, 1]} : vector<10x8x16xf32> to vector<1x8x16xf32>
    %328 = vector.shape_cast %327 : vector<1x8x16xf32> to vector<8x16xf32>
    %c7 = arith.constant 7 : index
    %c0_132 = arith.constant 0 : index
    %c0_133 = arith.constant 0 : index
    %329 = vector.load %arg11[%c7, %c0_132, %c0_133] : memref<10x16x128xf32, #tpu.memory_space<vmem>>, vector<1x16x128xf32>
    %330 = vector.shape_cast %329 : vector<1x16x128xf32> to vector<16x128xf32>
    %cst_134 = arith.constant dense<0.000000e+00> : vector<8x128xf32>
    %331 = tpu.matmul %328, %330, %cst_134 {dimension_numbers = #tpu.dot_dimension_numbers<[1], [0], [0], [1], [0, 0, 1, 1], [], []>} : vector<8x16xf32>, vector<16x128xf32>, vector<8x128xf32> -> vector<8x128xf32>
    %332 = arith.addf %326, %331 : vector<8x128xf32>
    %333 = vector.extract_strided_slice %283 {offsets = [8, 0, 0], sizes = [1, 8, 16], strides = [1, 1, 1]} : vector<10x8x16xf32> to vector<1x8x16xf32>
    %334 = vector.shape_cast %333 : vector<1x8x16xf32> to vector<8x16xf32>
    %c8 = arith.constant 8 : index
    %c0_135 = arith.constant 0 : index
    %c0_136 = arith.constant 0 : index
    %335 = vector.load %arg11[%c8, %c0_135, %c0_136] : memref<10x16x128xf32, #tpu.memory_space<vmem>>, vector<1x16x128xf32>
    %336 = vector.shape_cast %335 : vector<1x16x128xf32> to vector<16x128xf32>
    %cst_137 = arith.constant dense<0.000000e+00> : vector<8x128xf32>
    %337 = tpu.matmul %334, %336, %cst_137 {dimension_numbers = #tpu.dot_dimension_numbers<[1], [0], [0], [1], [0, 0, 1, 1], [], []>} : vector<8x16xf32>, vector<16x128xf32>, vector<8x128xf32> -> vector<8x128xf32>
    %338 = arith.addf %332, %337 : vector<8x128xf32>
    %339 = vector.extract_strided_slice %283 {offsets = [9, 0, 0], sizes = [1, 8, 16], strides = [1, 1, 1]} : vector<10x8x16xf32> to vector<1x8x16xf32>
    %340 = vector.shape_cast %339 : vector<1x8x16xf32> to vector<8x16xf32>
    %c9 = arith.constant 9 : index
    %c0_138 = arith.constant 0 : index
    %c0_139 = arith.constant 0 : index
    %341 = vector.load %arg11[%c9, %c0_138, %c0_139] : memref<10x16x128xf32, #tpu.memory_space<vmem>>, vector<1x16x128xf32>
    %342 = vector.shape_cast %341 : vector<1x16x128xf32> to vector<16x128xf32>
    %cst_140 = arith.constant dense<0.000000e+00> : vector<8x128xf32>
    %343 = tpu.matmul %340, %342, %cst_140 {dimension_numbers = #tpu.dot_dimension_numbers<[1], [0], [0], [1], [0, 0, 1, 1], [], []>} : vector<8x16xf32>, vector<16x128xf32>, vector<8x128xf32> -> vector<8x128xf32>
    %344 = arith.addf %338, %343 : vector<8x128xf32>
    %c0_141 = arith.constant 0 : index
    %c0_142 = arith.constant 0 : index
    %345 = vector.load %arg12[%c0_141, %c0_142] : memref<1x128xf32, #tpu.memory_space<vmem>>, vector<1x128xf32>
    %346 = vector.broadcast %345 : vector<1x128xf32> to vector<8x128xf32>
    %347 = arith.addf %344, %346 : vector<8x128xf32>
    %c0_143 = arith.constant 0 : index
    %c0_144 = arith.constant 0 : index
    %348 = vector.load %arg13[%c0_143, %c0_144] : memref<8x128xf32, #tpu.memory_space<vmem>>, vector<8x128xf32>
    tpu.vector_store %arg13[%c0_143, %c0_144], %347 {strides = array<i32>} : memref<8x128xf32, #tpu.memory_space<vmem>>, vector<8x128xf32>,
    return
  }
  func.func @transform_0(%arg0: i32) -> (i32, i32, i32) {
    %c0_i32 = arith.constant 0 : i32
    %c0_i32_0 = arith.constant 0 : i32
    %c0_i32_1 = arith.constant 0 : i32
    return %arg0, %c0_i32, %c0_i32_0 : i32, i32, i32
  }
  func.func @transform_1(%arg0: i32) -> (i32, i32, i32) {
    %c0_i32 = arith.constant 0 : i32
    %c0_i32_0 = arith.constant 0 : i32
    %c0_i32_1 = arith.constant 0 : i32
    return %arg0, %c0_i32, %c0_i32_0 : i32, i32, i32
  }
  func.func @transform_2(%arg0: i32) -> (i32, i32) {
    %c0_i32 = arith.constant 0 : i32
    %c0_i32_0 = arith.constant 0 : i32
    %c0_i32_1 = arith.constant 0 : i32
    return %c0_i32, %c0_i32_0 : i32, i32
  }
  func.func @transform_3(%arg0: i32) -> (i32, i32) {
    %c0_i32 = arith.constant 0 : i32
    %c0_i32_0 = arith.constant 0 : i32
    %c0_i32_1 = arith.constant 0 : i32
    return %c0_i32, %c0_i32_0 : i32, i32
  }
  func.func @transform_4(%arg0: i32) -> (i32, i32, i32) {
    %c0_i32 = arith.constant 0 : i32
    %c0_i32_0 = arith.constant 0 : i32
    %c0_i32_1 = arith.constant 0 : i32
    %c0_i32_2 = arith.constant 0 : i32
    return %c0_i32, %c0_i32_0, %c0_i32_1 : i32, i32, i32
  }
  func.func @transform_5(%arg0: i32) -> (i32, i32, i32) {
    %c0_i32 = arith.constant 0 : i32
    %c0_i32_0 = arith.constant 0 : i32
    %c0_i32_1 = arith.constant 0 : i32
    %c0_i32_2 = arith.constant 0 : i32
    return %c0_i32, %c0_i32_0, %c0_i32_1 : i32, i32, i32
  }
  func.func @transform_6(%arg0: i32) -> (i32, i32, i32) {
    %c0_i32 = arith.constant 0 : i32
    %c0_i32_0 = arith.constant 0 : i32
    %c0_i32_1 = arith.constant 0 : i32
    %c0_i32_2 = arith.constant 0 : i32
    return %c0_i32, %c0_i32_0, %c0_i32_1 : i32, i32, i32
  }
  func.func @transform_7(%arg0: i32) -> (i32, i32, i32) {
    %c0_i32 = arith.constant 0 : i32
    %c0_i32_0 = arith.constant 0 : i32
    %c0_i32_1 = arith.constant 0 : i32
    %c0_i32_2 = arith.constant 0 : i32
    return %c0_i32, %c0_i32_0, %c0_i32_1 : i32, i32, i32
  }
  func.func @transform_8(%arg0: i32) -> (i32, i32, i32) {
    %c0_i32 = arith.constant 0 : i32
    %c0_i32_0 = arith.constant 0 : i32
    %c0_i32_1 = arith.constant 0 : i32
    %c0_i32_2 = arith.constant 0 : i32
    return %c0_i32, %c0_i32_0, %c0_i32_1 : i32, i32, i32
  }
  func.func @transform_9(%arg0: i32) -> (i32, i32, i32) {
    %c0_i32 = arith.constant 0 : i32
    %c0_i32_0 = arith.constant 0 : i32
    %c0_i32_1 = arith.constant 0 : i32
    %c0_i32_2 = arith.constant 0 : i32
    return %c0_i32, %c0_i32_0, %c0_i32_1 : i32, i32, i32
  }
  func.func @transform_10(%arg0: i32) -> (i32, i32, i32) {
    %c0_i32 = arith.constant 0 : i32
    %c0_i32_0 = arith.constant 0 : i32
    %c0_i32_1 = arith.constant 0 : i32
    %c0_i32_2 = arith.constant 0 : i32
    return %c0_i32, %c0_i32_0, %c0_i32_1 : i32, i32, i32
  }
  func.func @transform_11(%arg0: i32) -> (i32, i32) {
    %c0_i32 = arith.constant 0 : i32
    %c0_i32_0 = arith.constant 0 : i32
    %c0_i32_1 = arith.constant 0 : i32
    return %c0_i32, %c0_i32_0 : i32, i32
  }
  func.func @transform_12(%arg0: i32) -> (i32, i32) {
    %c0_i32 = arith.constant 0 : i32
    %c0_i32_0 = arith.constant 0 : i32
    return %arg0, %c0_i32 : i32, i32
  }
}

</mosaic_0001>

<llo_original>
// kernel: custom_network_forward.1
$region0: #{custom_network_forward.1}
  #allocation0 [shape = 'u32[]', space=smem, size = 0x4, offset = 0x4, fixed_abs, tag = 'smem constant byte address 0x4 - core index']
  #allocation1 [shape = 'u32[144,128]{1,0:T(1,128)}', space=vmem, size = 0x12000, scoped, tag = 'internal scratch']
  %s0 = inlined_call_operand.vmem [shape: s32[1,80,1], index: 0, kind: input, shape index: {}]
  %s1 = inlined_call_operand.vmem [shape: s32[1,800,1], index: 1, kind: input, shape index: {}]
  %s2 = inlined_call_operand.vmem [shape: f32[14,16], index: 2, kind: input, shape index: {}]
  %s3 = inlined_call_operand.vmem [shape: f32[8,128], index: 3, kind: input, shape index: {}]
  %s4 = inlined_call_operand.vmem [shape: f32[3,16,384], index: 4, kind: input, shape index: {}]
  %s5 = inlined_call_operand.vmem [shape: f32[3,1,384], index: 5, kind: input, shape index: {}]
  %s6 = inlined_call_operand.vmem [shape: f32[3,128,16], index: 6, kind: input, shape index: {}]
  %s7 = inlined_call_operand.vmem [shape: f32[3,1,16], index: 7, kind: input, shape index: {}]
  %s8 = inlined_call_operand.vmem [shape: f32[3,1,16], index: 8, kind: input, shape index: {}]
  %s9 = inlined_call_operand.vmem [shape: f32[3,1,16], index: 9, kind: input, shape index: {}]
  %s10 = inlined_call_operand.vmem [shape: f32[10,16,128], index: 10, kind: input, shape index: {}]
  %s11 = inlined_call_operand.vmem [shape: f32[1,128], index: 11, kind: input, shape index: {}]
  %s12 = inlined_call_operand.vmem [shape: f32[8,128], index: 12, kind: output, shape index: {}]
  %s13 = sld [smem:[#allocation0]]
  $region58: #{custom_network_forward.1} parent=0
    _
  %s15 = ssub.s32 1, %s13
  %s16 = scalar_select 0, %s15, %s13
  // Predicated region
  $region2: #{custom_network_forward.1} parent=0 // pred_check
    _
  $region3: #{custom_network_forward.1} parent=0 // pred_check_branch
    %18 = sbr.rel (0) target = $region5
  $region4: #{custom_network_forward.1} parent=0 // pred_region
    _
  $region5: #{custom_network_forward.1} parent=0 // pred_fallthru
    _
  // Predicated region
  $region6: #{custom_network_forward.1} parent=0 // pred_check
    _
  $region7: #{custom_network_forward.1} parent=0 // pred_check_branch
    %20 = sbr.rel (0) target = $region9
  $region8: #{custom_network_forward.1} parent=0 // pred_region
    _
  $region9: #{custom_network_forward.1} parent=0 // pred_fallthru
    _
  // Predicated region
  $region10: #{custom_network_forward.1} parent=0 // pred_check
    _
  $region11: #{custom_network_forward.1} parent=0 // pred_check_branch
    %22 = sbr.rel (0) target = $region13
  $region12: #{custom_network_forward.1} parent=0 // pred_region
    _
  $region13: #{custom_network_forward.1} parent=0 // pred_fallthru
    _
  // Predicated region
  $region14: #{custom_network_forward.1} parent=0 // pred_check
    _
  $region15: #{custom_network_forward.1} parent=0 // pred_check_branch
    %24 = sbr.rel (0) target = $region17
  $region16: #{custom_network_forward.1} parent=0 // pred_region
    _
  $region17: #{custom_network_forward.1} parent=0 // pred_fallthru
    _
  // Predicated region
  $region18: #{custom_network_forward.1} parent=0 // pred_check
    _
  $region19: #{custom_network_forward.1} parent=0 // pred_check_branch
    %26 = sbr.rel (0) target = $region21
  $region20: #{custom_network_forward.1} parent=0 // pred_region
    _
  $region21: #{custom_network_forward.1} parent=0 // pred_fallthru
    _
  // Predicated region
  $region22: #{custom_network_forward.1} parent=0 // pred_check
    _
  $region23: #{custom_network_forward.1} parent=0 // pred_check_branch
    %28 = sbr.rel (0) target = $region25
  $region24: #{custom_network_forward.1} parent=0 // pred_region
    _
  $region25: #{custom_network_forward.1} parent=0 // pred_fallthru
    _
  // Predicated region
  $region26: #{custom_network_forward.1} parent=0 // pred_check
    _
  $region27: #{custom_network_forward.1} parent=0 // pred_check_branch
    %30 = sbr.rel (0) target = $region29
  $region28: #{custom_network_forward.1} parent=0 // pred_region
    _
  $region29: #{custom_network_forward.1} parent=0 // pred_fallthru
    _
  // Predicated region
  $region30: #{custom_network_forward.1} parent=0 // pred_check
    _
  $region31: #{custom_network_forward.1} parent=0 // pred_check_branch
    %32 = sbr.rel (0) target = $region33
  $region32: #{custom_network_forward.1} parent=0 // pred_region
    _
  $region33: #{custom_network_forward.1} parent=0 // pred_fallthru
    _
  // Predicated region
  $region34: #{custom_network_forward.1} parent=0 // pred_check
    _
  $region35: #{custom_network_forward.1} parent=0 // pred_check_branch
    %34 = sbr.rel (0) target = $region37
  $region36: #{custom_network_forward.1} parent=0 // pred_region
    _
  $region37: #{custom_network_forward.1} parent=0 // pred_fallthru
    _
  // Predicated region
  $region38: #{custom_network_forward.1} parent=0 // pred_check
    _
  $region39: #{custom_network_forward.1} parent=0 // pred_check_branch
    %36 = sbr.rel (0) target = $region41
  $region40: #{custom_network_forward.1} parent=0 // pred_region
    _
  $region41: #{custom_network_forward.1} parent=0 // pred_fallthru
    _
  // Predicated region
  $region42: #{custom_network_forward.1} parent=0 // pred_check
    _
  $region43: #{custom_network_forward.1} parent=0 // pred_check_branch
    %38 = sbr.rel (0) target = $region45
  $region44: #{custom_network_forward.1} parent=0 // pred_region
    _
  $region45: #{custom_network_forward.1} parent=0 // pred_fallthru
    _
  // Predicated region
  $region46: #{custom_network_forward.1} parent=0 // pred_check
    _
  $region47: #{custom_network_forward.1} parent=0 // pred_check_branch
    %40 = sbr.rel (0) target = $region49
  $region48: #{custom_network_forward.1} parent=0 // pred_region
    _
  $region49: #{custom_network_forward.1} parent=0 // pred_fallthru
    _
  %v41 = vld [vmem:[%s0] sm:$0xff]
  %v42 = vld [vmem:[%s0 + $0x8] sm:$0xff]
  %v43 = vld [vmem:[%s0 + $0x10] sm:$0xff]
  %v44 = vld [vmem:[%s0 + $0x18] sm:$0xff]
  %v45 = vld [vmem:[%s0 + $0x20] sm:$0xff]
  %v46 = vld [vmem:[%s0 + $0x28] sm:$0xff]
  %v47 = vld [vmem:[%s0 + $0x30] sm:$0xff]
  %v48 = vld [vmem:[%s0 + $0x38] sm:$0xff]
  %v49 = vld [vmem:[%s0 + $0x40] sm:$0xff]
  %v50 = vld [vmem:[%s0 + $0x48] sm:$0xff]
  %v51 = vlaneseq
  %v52 = vand.u32 %v51, 127
  %53 = vset.pattern.permute.xlu0 0
  %54 = vperm.xlu0 %53, %v41
  %v55 = vpop.permute.xlu0 %54
  %56 = vset.pattern.permute.xlu0 0
  %57 = vperm.xlu0 %56, %v42
  %v58 = vpop.permute.xlu0 %57
  %59 = vset.pattern.permute.xlu0 0
  %60 = vperm.xlu0 %59, %v43
  %v61 = vpop.permute.xlu0 %60
  %62 = vset.pattern.permute.xlu0 0
  %63 = vperm.xlu0 %62, %v44
  %v64 = vpop.permute.xlu0 %63
  %65 = vset.pattern.permute.xlu0 0
  %66 = vperm.xlu0 %65, %v45
  %v67 = vpop.permute.xlu0 %66
  %68 = vset.pattern.permute.xlu0 0
  %69 = vperm.xlu0 %68, %v46
  %v70 = vpop.permute.xlu0 %69
  %71 = vset.pattern.permute.xlu0 0
  %72 = vperm.xlu0 %71, %v47
  %v73 = vpop.permute.xlu0 %72
  %74 = vset.pattern.permute.xlu0 0
  %75 = vperm.xlu0 %74, %v48
  %v76 = vpop.permute.xlu0 %75
  %77 = vset.pattern.permute.xlu0 0
  %78 = vperm.xlu0 %77, %v49
  %v79 = vpop.permute.xlu0 %78
  %80 = vset.pattern.permute.xlu0 0
  %81 = vperm.xlu0 %80, %v50
  %v82 = vpop.permute.xlu0 %81
  %vm83 = vcmp.eq.s32.totalorder %v55, %v52
  %vm84 = vcmp.eq.s32.totalorder %v58, %v52
  %vm85 = vcmp.eq.s32.totalorder %v61, %v52
  %vm86 = vcmp.eq.s32.totalorder %v64, %v52
  %vm87 = vcmp.eq.s32.totalorder %v67, %v52
  %vm88 = vcmp.eq.s32.totalorder %v70, %v52
  %vm89 = vcmp.eq.s32.totalorder %v73, %v52
  %vm90 = vcmp.eq.s32.totalorder %v76, %v52
  %vm91 = vcmp.eq.s32.totalorder %v79, %v52
  %vm92 = vcmp.eq.s32.totalorder %v82, %v52
  %v93 = vsel %vm83, 1, 0
  %v94 = vsel %vm84, 1, 0
  %v95 = vsel %vm85, 1, 0
  %v96 = vsel %vm86, 1, 0
  %v97 = vsel %vm87, 1, 0
  %v98 = vsel %vm88, 1, 0
  %v99 = vsel %vm89, 1, 0
  %v100 = vsel %vm90, 1, 0
  %v101 = vsel %vm91, 1, 0
  %v102 = vsel %vm92, 1, 0
  %v103 = vcvt.s32.f32 %v93
  %v104 = vcvt.s32.f32 %v94
  %v105 = vcvt.s32.f32 %v95
  %v106 = vcvt.s32.f32 %v96
  %v107 = vcvt.s32.f32 %v97
  %v108 = vcvt.s32.f32 %v98
  %v109 = vcvt.s32.f32 %v99
  %v110 = vcvt.s32.f32 %v100
  %v111 = vcvt.s32.f32 %v101
  %v112 = vcvt.s32.f32 %v102
  %v113 = vld [vmem:[%s2] sm:$0xff]
  %v114 = vld [vmem:[%s2 + $0x8] sm:$0x3f]
  %vm115 = vcmask 113664
  %v117 = vsel %vm115, %v103, 0
  %v120 = vsel %vm115, %v104, 0
  %v123 = vsel %vm115, %v105, 0
  %v126 = vsel %vm115, %v106, 0
  %v129 = vsel %vm115, %v107, 0
  %v132 = vsel %vm115, %v108, 0
  %v135 = vsel %vm115, %v109, 0
  %v138 = vsel %vm115, %v110, 0
  %v141 = vsel %vm115, %v111, 0
  %v144 = vsel %vm115, %v112, 0
  %vm146 = vcmask 1045504
  %v148 = vsel %vm146, %v114, 0
  %150 = vmatprep.subr.mxu0 0.0
  %151 = vmatpush1.msra.mxu0 0.0
  %152 = vmatprep.subr.mxu0 0.0
  %153 = vmatpush1.msra.mxu0 0.0
  %154 = vmatprep.subr.mxu0 0.0
  %155 = vmatpush1.msra.mxu0 0.0
  %156 = vmatprep.subr.mxu0 0.0
  %157 = vmatpush1.msra.mxu0 0.0
  %158 = vmatprep.subr.mxu0 0.0
  %159 = vmatpush1.msra.mxu0 0.0
  %160 = vmatprep.subr.mxu0 0.0
  %161 = vmatpush1.msra.mxu0 0.0
  %162 = vmatprep.subr.mxu0 0.0
  %163 = vmatpush1.msra.mxu0 0.0
  %164 = vmatprep.subr.mxu0 0.0
  %165 = vmatpush1.msra.mxu0 0.0
  %166 = vmatprep.subr.mxu0 0.0
  %167 = vmatpush1.msra.mxu0 0.0
  %168 = vmatprep.subr.mxu0 0.0
  %169 = vmatpush1.msra.mxu0 0.0
  %170 = vmatprep.subr.mxu0 0.0
  %171 = vmatpush1.msra.mxu0 0.0
  %172 = vmatprep.subr.mxu0 0.0
  %173 = vmatpush1.msra.mxu0 0.0
  %174 = vmatprep.subr.mxu0 0.0
  %175 = vmatpush1.msra.mxu0 0.0
  %176 = vmatprep.subr.mxu0 0.0
  %177 = vmatpush1.msra.mxu0 0.0
  %178 = vmatprep.subr.mxu0 0.0
  %179 = vmatpush1.msra.mxu0 %v148
  %180 = vmatprep.subr.mxu0 0.0
  %181 = vmatpush1.msra.mxu0 %v113
  %182 = vmatprep.subr.mxu0 0.0
  %183 = vmatpush2.msra.mxu0 0.0
  %184 = vmatprep.subr.mxu0 0.0
  %185 = vmatpush2.msra.mxu0 0.0
  %186 = vmatprep.subr.mxu0 0.0
  %187 = vmatpush2.msra.mxu0 0.0
  %188 = vmatprep.subr.mxu0 0.0
  %189 = vmatpush2.msra.mxu0 0.0
  %190 = vmatprep.subr.mxu0 0.0
  %191 = vmatpush2.msra.mxu0 0.0
  %192 = vmatprep.subr.mxu0 0.0
  %193 = vmatpush2.msra.mxu0 0.0
  %194 = vmatprep.subr.mxu0 0.0
  %195 = vmatpush2.msra.mxu0 0.0
  %196 = vmatprep.subr.mxu0 0.0
  %197 = vmatpush2.msra.mxu0 0.0
  %198 = vmatprep.subr.mxu0 0.0
  %199 = vmatpush2.msra.mxu0 0.0
  %200 = vmatprep.subr.mxu0 0.0
  %201 = vmatpush2.msra.mxu0 0.0
  %202 = vmatprep.subr.mxu0 0.0
  %203 = vmatpush2.msra.mxu0 0.0
  %204 = vmatprep.subr.mxu0 0.0
  %205 = vmatpush2.msra.mxu0 0.0
  %206 = vmatprep.subr.mxu0 0.0
  %207 = vmatpush2.msra.mxu0 0.0
  %208 = vmatprep.subr.mxu0 0.0
  %209 = vmatpush2.msra.mxu0 0.0
  %210 = vmatprep.subr.mxu0 0.0
  %211 = vmatpush2.msra.mxu0 0.0
  %212 = vmatprep.subr.mxu0 0.0
  %213 = vmatpush2.msra.mxu0 0.0
  %214 = vmatprep.mubr.f32.mxu0 0.0
  %215 = vmatmul.mubr.f32.gmra.mxu0 %v117
  %v216 = vpop.f32.mrf.mxu0
  %v217 = vadd.f32 0.0, %v216
  %v218 = vpop.f32.mrf.mxu0
  %219 = vmatprep.mubr.f32.mxu0 0.0
  %220 = vmatmul.mubr.f32.gmra.mxu0 %v120
  %v221 = vpop.f32.mrf.mxu0
  %v222 = vadd.f32 0.0, %v221
  %v223 = vpop.f32.mrf.mxu0
  %224 = vmatprep.mubr.f32.mxu0 0.0
  %225 = vmatmul.mubr.f32.gmra.mxu0 %v123
  %v226 = vpop.f32.mrf.mxu0
  %v227 = vadd.f32 0.0, %v226
  %v228 = vpop.f32.mrf.mxu0
  %229 = vmatprep.mubr.f32.mxu0 0.0
  %230 = vmatmul.mubr.f32.gmra.mxu0 %v126
  %v231 = vpop.f32.mrf.mxu0
  %v232 = vadd.f32 0.0, %v231
  %v233 = vpop.f32.mrf.mxu0
  %234 = vmatprep.mubr.f32.mxu0 0.0
  %235 = vmatmul.mubr.f32.gmra.mxu0 %v129
  %v236 = vpop.f32.mrf.mxu0
  %v237 = vadd.f32 0.0, %v236
  %v238 = vpop.f32.mrf.mxu0
  %239 = vmatprep.mubr.f32.mxu0 0.0
  %240 = vmatmul.mubr.f32.gmra.mxu0 %v132
  %v241 = vpop.f32.mrf.mxu0
  %v242 = vadd.f32 0.0, %v241
  %v243 = vpop.f32.mrf.mxu0
  %244 = vmatprep.mubr.f32.mxu0 0.0
  %245 = vmatmul.mubr.f32.gmra.mxu0 %v135
  %v246 = vpop.f32.mrf.mxu0
  %v247 = vadd.f32 0.0, %v246
  %v248 = vpop.f32.mrf.mxu0
  %249 = vmatprep.mubr.f32.mxu0 0.0
  %250 = vmatmul.mubr.f32.gmra.mxu0 %v138
  %v251 = vpop.f32.mrf.mxu0
  %v252 = vadd.f32 0.0, %v251
  %v253 = vpop.f32.mrf.mxu0
  %254 = vmatprep.mubr.f32.mxu0 0.0
  %255 = vmatmul.mubr.f32.gmra.mxu0 %v141
  %v256 = vpop.f32.mrf.mxu0
  %v257 = vadd.f32 0.0, %v256
  %v258 = vpop.f32.mrf.mxu0
  %259 = vmatprep.mubr.f32.mxu0 0.0
  %260 = vmatmul.mubr.f32.gmra.mxu0 %v144
  %v261 = vpop.f32.mrf.mxu0
  %v262 = vadd.f32 0.0, %v261
  %v263 = vpop.f32.mrf.mxu0
  %264 = vdwg.mxu0
  %v265 = vld [vmem:[%s1] sm:$0xff]
  %v266 = vld [vmem:[%s1 + $0x8] sm:$0xff]
  %v267 = vld [vmem:[%s1 + $0x10] sm:$0xff]
  %v268 = vld [vmem:[%s1 + $0x18] sm:$0xff]
  %v269 = vld [vmem:[%s1 + $0x20] sm:$0xff]
  %v270 = vld [vmem:[%s1 + $0x28] sm:$0xff]
  %v271 = vld [vmem:[%s1 + $0x30] sm:$0xff]
  %v272 = vld [vmem:[%s1 + $0x38] sm:$0xff]
  %v273 = vld [vmem:[%s1 + $0x40] sm:$0xff]
  %v274 = vld [vmem:[%s1 + $0x48] sm:$0xff]
  %v275 = vld [vmem:[%s1 + $0x50] sm:$0xff]
  %v276 = vld [vmem:[%s1 + $0x58] sm:$0xff]
  %v277 = vld [vmem:[%s1 + $0x60] sm:$0xff]
  %v278 = vld [vmem:[%s1 + $0x68] sm:$0xff]
  %v279 = vld [vmem:[%s1 + $0x70] sm:$0xff]
  %v280 = vld [vmem:[%s1 + $0x78] sm:$0xff]
  %v281 = vld [vmem:[%s1 + $0x80] sm:$0xff]
  %v282 = vld [vmem:[%s1 + $0x88] sm:$0xff]
  %v283 = vld [vmem:[%s1 + $0x90] sm:$0xff]
  %v284 = vld [vmem:[%s1 + $0x98] sm:$0xff]
  %v285 = vld [vmem:[%s1 + $0xa0] sm:$0xff]
  %v286 = vld [vmem:[%s1 + $0xa8] sm:$0xff]
  %v287 = vld [vmem:[%s1 + $0xb0] sm:$0xff]
  %v288 = vld [vmem:[%s1 + $0xb8] sm:$0xff]
  %v289 = vld [vmem:[%s1 + $0xc0] sm:$0xff]
  %v290 = vld [vmem:[%s1 + $0xc8] sm:$0xff]
  %v291 = vld [vmem:[%s1 + $0xd0] sm:$0xff]
  %v292 = vld [vmem:[%s1 + $0xd8] sm:$0xff]
  %v293 = vld [vmem:[%s1 + $0xe0] sm:$0xff]
  %v294 = vld [vmem:[%s1 + $0xe8] sm:$0xff]
  %v295 = vld [vmem:[%s1 + $0xf0] sm:$0xff]
  %v296 = vld [vmem:[%s1 + $0xf8] sm:$0xff]
  %v297 = vld [vmem:[%s1 + $0x100] sm:$0xff]
  %v298 = vld [vmem:[%s1 + $0x108] sm:$0xff]
  %v299 = vld [vmem:[%s1 + $0x110] sm:$0xff]
  %v300 = vld [vmem:[%s1 + $0x118] sm:$0xff]
  %v301 = vld [vmem:[%s1 + $0x120] sm:$0xff]
  %v302 = vld [vmem:[%s1 + $0x128] sm:$0xff]
  %v303 = vld [vmem:[%s1 + $0x130] sm:$0xff]
  %v304 = vld [vmem:[%s1 + $0x138] sm:$0xff]
  %v305 = vld [vmem:[%s1 + $0x140] sm:$0xff]
  %v306 = vld [vmem:[%s1 + $0x148] sm:$0xff]
  %v307 = vld [vmem:[%s1 + $0x150] sm:$0xff]
  %v308 = vld [vmem:[%s1 + $0x158] sm:$0xff]
  %v309 = vld [vmem:[%s1 + $0x160] sm:$0xff]
  %v310 = vld [vmem:[%s1 + $0x168] sm:$0xff]
  %v311 = vld [vmem:[%s1 + $0x170] sm:$0xff]
  %v312 = vld [vmem:[%s1 + $0x178] sm:$0xff]
  %v313 = vld [vmem:[%s1 + $0x180] sm:$0xff]
  %v314 = vld [vmem:[%s1 + $0x188] sm:$0xff]
  %v315 = vld [vmem:[%s1 + $0x190] sm:$0xff]
  %v316 = vld [vmem:[%s1 + $0x198] sm:$0xff]
  %v317 = vld [vmem:[%s1 + $0x1a0] sm:$0xff]
  %v318 = vld [vmem:[%s1 + $0x1a8] sm:$0xff]
  %v319 = vld [vmem:[%s1 + $0x1b0] sm:$0xff]
  %v320 = vld [vmem:[%s1 + $0x1b8] sm:$0xff]
  %v321 = vld [vmem:[%s1 + $0x1c0] sm:$0xff]
  %v322 = vld [vmem:[%s1 + $0x1c8] sm:$0xff]
  %v323 = vld [vmem:[%s1 + $0x1d0] sm:$0xff]
  %v324 = vld [vmem:[%s1 + $0x1d8] sm:$0xff]
  %v325 = vld [vmem:[%s1 + $0x1e0] sm:$0xff]
  %v326 = vld [vmem:[%s1 + $0x1e8] sm:$0xff]
  %v327 = vld [vmem:[%s1 + $0x1f0] sm:$0xff]
  %v328 = vld [vmem:[%s1 + $0x1f8] sm:$0xff]
  %v329 = vld [vmem:[%s1 + $0x200] sm:$0xff]
  %v330 = vld [vmem:[%s1 + $0x208] sm:$0xff]
  %v331 = vld [vmem:[%s1 + $0x210] sm:$0xff]
  %v332 = vld [vmem:[%s1 + $0x218] sm:$0xff]
  %v333 = vld [vmem:[%s1 + $0x220] sm:$0xff]
  %v334 = vld [vmem:[%s1 + $0x228] sm:$0xff]
  %v335 = vld [vmem:[%s1 + $0x230] sm:$0xff]
  %v336 = vld [vmem:[%s1 + $0x238] sm:$0xff]
  %v337 = vld [vmem:[%s1 + $0x240] sm:$0xff]
  %v338 = vld [vmem:[%s1 + $0x248] sm:$0xff]
  %v339 = vld [vmem:[%s1 + $0x250] sm:$0xff]
  %v340 = vld [vmem:[%s1 + $0x258] sm:$0xff]
  %v341 = vld [vmem:[%s1 + $0x260] sm:$0xff]
  %v342 = vld [vmem:[%s1 + $0x268] sm:$0xff]
  %v343 = vld [vmem:[%s1 + $0x270] sm:$0xff]
  %v344 = vld [vmem:[%s1 + $0x278] sm:$0xff]
  %v345 = vld [vmem:[%s1 + $0x280] sm:$0xff]
  %v346 = vld [vmem:[%s1 + $0x288] sm:$0xff]
  %v347 = vld [vmem:[%s1 + $0x290] sm:$0xff]
  %v348 = vld [vmem:[%s1 + $0x298] sm:$0xff]
  %v349 = vld [vmem:[%s1 + $0x2a0] sm:$0xff]
  %v350 = vld [vmem:[%s1 + $0x2a8] sm:$0xff]
  %v351 = vld [vmem:[%s1 + $0x2b0] sm:$0xff]
  %v352 = vld [vmem:[%s1 + $0x2b8] sm:$0xff]
  %v353 = vld [vmem:[%s1 + $0x2c0] sm:$0xff]
  %v354 = vld [vmem:[%s1 + $0x2c8] sm:$0xff]
  %v355 = vld [vmem:[%s1 + $0x2d0] sm:$0xff]
  %v356 = vld [vmem:[%s1 + $0x2d8] sm:$0xff]
  %v357 = vld [vmem:[%s1 + $0x2e0] sm:$0xff]
  %v358 = vld [vmem:[%s1 + $0x2e8] sm:$0xff]
  %v359 = vld [vmem:[%s1 + $0x2f0] sm:$0xff]
  %v360 = vld [vmem:[%s1 + $0x2f8] sm:$0xff]
  %v361 = vld [vmem:[%s1 + $0x300] sm:$0xff]
  %v362 = vld [vmem:[%s1 + $0x308] sm:$0xff]
  %v363 = vld [vmem:[%s1 + $0x310] sm:$0xff]
  %v364 = vld [vmem:[%s1 + $0x318] sm:$0xff]
  %365 = vset.pattern.permute.xlu0 0
  %366 = vperm.xlu0 %365, %v265
  %v367 = vpop.permute.xlu0 %366
  %368 = vset.pattern.permute.xlu0 0
  %369 = vperm.xlu0 %368, %v266
  %v370 = vpop.permute.xlu0 %369
  %371 = vset.pattern.permute.xlu0 0
  %372 = vperm.xlu0 %371, %v267
  %v373 = vpop.permute.xlu0 %372
  %374 = vset.pattern.permute.xlu0 0
  %375 = vperm.xlu0 %374, %v268
  %v376 = vpop.permute.xlu0 %375
  %377 = vset.pattern.permute.xlu0 0
  %378 = vperm.xlu0 %377, %v269
  %v379 = vpop.permute.xlu0 %378
  %380 = vset.pattern.permute.xlu0 0
  %381 = vperm.xlu0 %380, %v270
  %v382 = vpop.permute.xlu0 %381
  %383 = vset.pattern.permute.xlu0 0
  %384 = vperm.xlu0 %383, %v271
  %v385 = vpop.permute.xlu0 %384
  %386 = vset.pattern.permute.xlu0 0
  %387 = vperm.xlu0 %386, %v272
  %v388 = vpop.permute.xlu0 %387
  %389 = vset.pattern.permute.xlu0 0
  %390 = vperm.xlu0 %389, %v273
  %v391 = vpop.permute.xlu0 %390
  %392 = vset.pattern.permute.xlu0 0
  %393 = vperm.xlu0 %392, %v274
  %v394 = vpop.permute.xlu0 %393
  %395 = vset.pattern.permute.xlu0 0
  %396 = vperm.xlu0 %395, %v275
  %v397 = vpop.permute.xlu0 %396
  %398 = vset.pattern.permute.xlu0 0
  %399 = vperm.xlu0 %398, %v276
  %v400 = vpop.permute.xlu0 %399
  %401 = vset.pattern.permute.xlu0 0
  %402 = vperm.xlu0 %401, %v277
  %v403 = vpop.permute.xlu0 %402
  %404 = vset.pattern.permute.xlu0 0
  %405 = vperm.xlu0 %404, %v278
  %v406 = vpop.permute.xlu0 %405
  %407 = vset.pattern.permute.xlu0 0
  %408 = vperm.xlu0 %407, %v279
  %v409 = vpop.permute.xlu0 %408
  %410 = vset.pattern.permute.xlu0 0
  %411 = vperm.xlu0 %410, %v280
  %v412 = vpop.permute.xlu0 %411
  %413 = vset.pattern.permute.xlu0 0
  %414 = vperm.xlu0 %413, %v281
  %v415 = vpop.permute.xlu0 %414
  %416 = vset.pattern.permute.xlu0 0
  %417 = vperm.xlu0 %416, %v282
  %v418 = vpop.permute.xlu0 %417
  %419 = vset.pattern.permute.xlu0 0
  %420 = vperm.xlu0 %419, %v283
  %v421 = vpop.permute.xlu0 %420
  %422 = vset.pattern.permute.xlu0 0
  %423 = vperm.xlu0 %422, %v284
  %v424 = vpop.permute.xlu0 %423
  %425 = vset.pattern.permute.xlu0 0
  %426 = vperm.xlu0 %425, %v285
  %v427 = vpop.permute.xlu0 %426
  %428 = vset.pattern.permute.xlu0 0
  %429 = vperm.xlu0 %428, %v286
  %v430 = vpop.permute.xlu0 %429
  %431 = vset.pattern.permute.xlu0 0
  %432 = vperm.xlu0 %431, %v287
  %v433 = vpop.permute.xlu0 %432
  %434 = vset.pattern.permute.xlu0 0
  %435 = vperm.xlu0 %434, %v288
  %v436 = vpop.permute.xlu0 %435
  %437 = vset.pattern.permute.xlu0 0
  %438 = vperm.xlu0 %437, %v289
  %v439 = vpop.permute.xlu0 %438
  %440 = vset.pattern.permute.xlu0 0
  %441 = vperm.xlu0 %440, %v290
  %v442 = vpop.permute.xlu0 %441
  %443 = vset.pattern.permute.xlu0 0
  %444 = vperm.xlu0 %443, %v291
  %v445 = vpop.permute.xlu0 %444
  %446 = vset.pattern.permute.xlu0 0
  %447 = vperm.xlu0 %446, %v292
  %v448 = vpop.permute.xlu0 %447
  %449 = vset.pattern.permute.xlu0 0
  %450 = vperm.xlu0 %449, %v293
  %v451 = vpop.permute.xlu0 %450
  %452 = vset.pattern.permute.xlu0 0
  %453 = vperm.xlu0 %452, %v294
  %v454 = vpop.permute.xlu0 %453
  %455 = vset.pattern.permute.xlu0 0
  %456 = vperm.xlu0 %455, %v295
  %v457 = vpop.permute.xlu0 %456
  %458 = vset.pattern.permute.xlu0 0
  %459 = vperm.xlu0 %458, %v296
  %v460 = vpop.permute.xlu0 %459
  %461 = vset.pattern.permute.xlu0 0
  %462 = vperm.xlu0 %461, %v297
  %v463 = vpop.permute.xlu0 %462
  %464 = vset.pattern.permute.xlu0 0
  %465 = vperm.xlu0 %464, %v298
  %v466 = vpop.permute.xlu0 %465
  %467 = vset.pattern.permute.xlu0 0
  %468 = vperm.xlu0 %467, %v299
  %v469 = vpop.permute.xlu0 %468
  %470 = vset.pattern.permute.xlu0 0
  %471 = vperm.xlu0 %470, %v300
  %v472 = vpop.permute.xlu0 %471
  %473 = vset.pattern.permute.xlu0 0
  %474 = vperm.xlu0 %473, %v301
  %v475 = vpop.permute.xlu0 %474
  %476 = vset.pattern.permute.xlu0 0
  %477 = vperm.xlu0 %476, %v302
  %v478 = vpop.permute.xlu0 %477
  %479 = vset.pattern.permute.xlu0 0
  %480 = vperm.xlu0 %479, %v303
  %v481 = vpop.permute.xlu0 %480
  %482 = vset.pattern.permute.xlu0 0
  %483 = vperm.xlu0 %482, %v304
  %v484 = vpop.permute.xlu0 %483
  %485 = vset.pattern.permute.xlu0 0
  %486 = vperm.xlu0 %485, %v305
  %v487 = vpop.permute.xlu0 %486
  %488 = vset.pattern.permute.xlu0 0
  %489 = vperm.xlu0 %488, %v306
  %v490 = vpop.permute.xlu0 %489
  %491 = vset.pattern.permute.xlu0 0
  %492 = vperm.xlu0 %491, %v307
  %v493 = vpop.permute.xlu0 %492
  %494 = vset.pattern.permute.xlu0 0
  %495 = vperm.xlu0 %494, %v308
  %v496 = vpop.permute.xlu0 %495
  %497 = vset.pattern.permute.xlu0 0
  %498 = vperm.xlu0 %497, %v309
  %v499 = vpop.permute.xlu0 %498
  %500 = vset.pattern.permute.xlu0 0
  %501 = vperm.xlu0 %500, %v310
  %v502 = vpop.permute.xlu0 %501
  %503 = vset.pattern.permute.xlu0 0
  %504 = vperm.xlu0 %503, %v311
  %v505 = vpop.permute.xlu0 %504
  %506 = vset.pattern.permute.xlu0 0
  %507 = vperm.xlu0 %506, %v312
  %v508 = vpop.permute.xlu0 %507
  %509 = vset.pattern.permute.xlu0 0
  %510 = vperm.xlu0 %509, %v313
  %v511 = vpop.permute.xlu0 %510
  %512 = vset.pattern.permute.xlu0 0
  %513 = vperm.xlu0 %512, %v314
  %v514 = vpop.permute.xlu0 %513
  %515 = vset.pattern.permute.xlu0 0
  %516 = vperm.xlu0 %515, %v315
  %v517 = vpop.permute.xlu0 %516
  %518 = vset.pattern.permute.xlu0 0
  %519 = vperm.xlu0 %518, %v316
  %v520 = vpop.permute.xlu0 %519
  %521 = vset.pattern.permute.xlu0 0
  %522 = vperm.xlu0 %521, %v317
  %v523 = vpop.permute.xlu0 %522
  %524 = vset.pattern.permute.xlu0 0
  %525 = vperm.xlu0 %524, %v318
  %v526 = vpop.permute.xlu0 %525
  %527 = vset.pattern.permute.xlu0 0
  %528 = vperm.xlu0 %527, %v319
  %v529 = vpop.permute.xlu0 %528
  %530 = vset.pattern.permute.xlu0 0
  %531 = vperm.xlu0 %530, %v320
  %v532 = vpop.permute.xlu0 %531
  %533 = vset.pattern.permute.xlu0 0
  %534 = vperm.xlu0 %533, %v321
  %v535 = vpop.permute.xlu0 %534
  %536 = vset.pattern.permute.xlu0 0
  %537 = vperm.xlu0 %536, %v322
  %v538 = vpop.permute.xlu0 %537
  %539 = vset.pattern.permute.xlu0 0
  %540 = vperm.xlu0 %539, %v323
  %v541 = vpop.permute.xlu0 %540
  %542 = vset.pattern.permute.xlu0 0
  %543 = vperm.xlu0 %542, %v324
  %v544 = vpop.permute.xlu0 %543
  %545 = vset.pattern.permute.xlu0 0
  %546 = vperm.xlu0 %545, %v325
  %v547 = vpop.permute.xlu0 %546
  %548 = vset.pattern.permute.xlu0 0
  %549 = vperm.xlu0 %548, %v326
  %v550 = vpop.permute.xlu0 %549
  %551 = vset.pattern.permute.xlu0 0
  %552 = vperm.xlu0 %551, %v327
  %v553 = vpop.permute.xlu0 %552
  %554 = vset.pattern.permute.xlu0 0
  %555 = vperm.xlu0 %554, %v328
  %v556 = vpop.permute.xlu0 %555
  %557 = vset.pattern.permute.xlu0 0
  %558 = vperm.xlu0 %557, %v329
  %v559 = vpop.permute.xlu0 %558
  %560 = vset.pattern.permute.xlu0 0
  %561 = vperm.xlu0 %560, %v330
  %v562 = vpop.permute.xlu0 %561
  %563 = vset.pattern.permute.xlu0 0
  %564 = vperm.xlu0 %563, %v331
  %v565 = vpop.permute.xlu0 %564
  %566 = vset.pattern.permute.xlu0 0
  %567 = vperm.xlu0 %566, %v332
  %v568 = vpop.permute.xlu0 %567
  %569 = vset.pattern.permute.xlu0 0
  %570 = vperm.xlu0 %569, %v333
  %v571 = vpop.permute.xlu0 %570
  %572 = vset.pattern.permute.xlu0 0
  %573 = vperm.xlu0 %572, %v334
  %v574 = vpop.permute.xlu0 %573
  %575 = vset.pattern.permute.xlu0 0
  %576 = vperm.xlu0 %575, %v335
  %v577 = vpop.permute.xlu0 %576
  %578 = vset.pattern.permute.xlu0 0
  %579 = vperm.xlu0 %578, %v336
  %v580 = vpop.permute.xlu0 %579
  %581 = vset.pattern.permute.xlu0 0
  %582 = vperm.xlu0 %581, %v337
  %v583 = vpop.permute.xlu0 %582
  %584 = vset.pattern.permute.xlu0 0
  %585 = vperm.xlu0 %584, %v338
  %v586 = vpop.permute.xlu0 %585
  %587 = vset.pattern.permute.xlu0 0
  %588 = vperm.xlu0 %587, %v339
  %v589 = vpop.permute.xlu0 %588
  %590 = vset.pattern.permute.xlu0 0
  %591 = vperm.xlu0 %590, %v340
  %v592 = vpop.permute.xlu0 %591
  %593 = vset.pattern.permute.xlu0 0
  %594 = vperm.xlu0 %593, %v341
  %v595 = vpop.permute.xlu0 %594
  %596 = vset.pattern.permute.xlu0 0
  %597 = vperm.xlu0 %596, %v342
  %v598 = vpop.permute.xlu0 %597
  %599 = vset.pattern.permute.xlu0 0
  %600 = vperm.xlu0 %599, %v343
  %v601 = vpop.permute.xlu0 %600
  %602 = vset.pattern.permute.xlu0 0
  %603 = vperm.xlu0 %602, %v344
  %v604 = vpop.permute.xlu0 %603
  %605 = vset.pattern.permute.xlu0 0
  %606 = vperm.xlu0 %605, %v345
  %v607 = vpop.permute.xlu0 %606
  %608 = vset.pattern.permute.xlu0 0
  %609 = vperm.xlu0 %608, %v346
  %v610 = vpop.permute.xlu0 %609
  %611 = vset.pattern.permute.xlu0 0
  %612 = vperm.xlu0 %611, %v347
  %v613 = vpop.permute.xlu0 %612
  %614 = vset.pattern.permute.xlu0 0
  %615 = vperm.xlu0 %614, %v348
  %v616 = vpop.permute.xlu0 %615
  %617 = vset.pattern.permute.xlu0 0
  %618 = vperm.xlu0 %617, %v349
  %v619 = vpop.permute.xlu0 %618
  %620 = vset.pattern.permute.xlu0 0
  %621 = vperm.xlu0 %620, %v350
  %v622 = vpop.permute.xlu0 %621
  %623 = vset.pattern.permute.xlu0 0
  %624 = vperm.xlu0 %623, %v351
  %v625 = vpop.permute.xlu0 %624
  %626 = vset.pattern.permute.xlu0 0
  %627 = vperm.xlu0 %626, %v352
  %v628 = vpop.permute.xlu0 %627
  %629 = vset.pattern.permute.xlu0 0
  %630 = vperm.xlu0 %629, %v353
  %v631 = vpop.permute.xlu0 %630
  %632 = vset.pattern.permute.xlu0 0
  %633 = vperm.xlu0 %632, %v354
  %v634 = vpop.permute.xlu0 %633
  %635 = vset.pattern.permute.xlu0 0
  %636 = vperm.xlu0 %635, %v355
  %v637 = vpop.permute.xlu0 %636
  %638 = vset.pattern.permute.xlu0 0
  %639 = vperm.xlu0 %638, %v356
  %v640 = vpop.permute.xlu0 %639
  %641 = vset.pattern.permute.xlu0 0
  %642 = vperm.xlu0 %641, %v357
  %v643 = vpop.permute.xlu0 %642
  %644 = vset.pattern.permute.xlu0 0
  %645 = vperm.xlu0 %644, %v358
  %v646 = vpop.permute.xlu0 %645
  %647 = vset.pattern.permute.xlu0 0
  %648 = vperm.xlu0 %647, %v359
  %v649 = vpop.permute.xlu0 %648
  %650 = vset.pattern.permute.xlu0 0
  %651 = vperm.xlu0 %650, %v360
  %v652 = vpop.permute.xlu0 %651
  %653 = vset.pattern.permute.xlu0 0
  %654 = vperm.xlu0 %653, %v361
  %v655 = vpop.permute.xlu0 %654
  %656 = vset.pattern.permute.xlu0 0
  %657 = vperm.xlu0 %656, %v362
  %v658 = vpop.permute.xlu0 %657
  %659 = vset.pattern.permute.xlu0 0
  %660 = vperm.xlu0 %659, %v363
  %v661 = vpop.permute.xlu0 %660
  %662 = vset.pattern.permute.xlu0 0
  %663 = vperm.xlu0 %662, %v364
  %v664 = vpop.permute.xlu0 %663
  %vm665 = vcmp.eq.s32.totalorder %v367, %v52
  %vm666 = vcmp.eq.s32.totalorder %v370, %v52
  %vm667 = vcmp.eq.s32.totalorder %v373, %v52
  %vm668 = vcmp.eq.s32.totalorder %v376, %v52
  %vm669 = vcmp.eq.s32.totalorder %v379, %v52
  %vm670 = vcmp.eq.s32.totalorder %v382, %v52
  %vm671 = vcmp.eq.s32.totalorder %v385, %v52
  %vm672 = vcmp.eq.s32.totalorder %v388, %v52
  %vm673 = vcmp.eq.s32.totalorder %v391, %v52
  %vm674 = vcmp.eq.s32.totalorder %v394, %v52
  %vm675 = vcmp.eq.s32.totalorder %v397, %v52
  %vm676 = vcmp.eq.s32.totalorder %v400, %v52
  %vm677 = vcmp.eq.s32.totalorder %v403, %v52
  %vm678 = vcmp.eq.s32.totalorder %v406, %v52
  %vm679 = vcmp.eq.s32.totalorder %v409, %v52
  %vm680 = vcmp.eq.s32.totalorder %v412, %v52
  %vm681 = vcmp.eq.s32.totalorder %v415, %v52
  %vm682 = vcmp.eq.s32.totalorder %v418, %v52
  %vm683 = vcmp.eq.s32.totalorder %v421, %v52
  %vm684 = vcmp.eq.s32.totalorder %v424, %v52
  %vm685 = vcmp.eq.s32.totalorder %v427, %v52
  %vm686 = vcmp.eq.s32.totalorder %v430, %v52
  %vm687 = vcmp.eq.s32.totalorder %v433, %v52
  %vm688 = vcmp.eq.s32.totalorder %v436, %v52
  %vm689 = vcmp.eq.s32.totalorder %v439, %v52
  %vm690 = vcmp.eq.s32.totalorder %v442, %v52
  %vm691 = vcmp.eq.s32.totalorder %v445, %v52
  %vm692 = vcmp.eq.s32.totalorder %v448, %v52
  %vm693 = vcmp.eq.s32.totalorder %v451, %v52
  %vm694 = vcmp.eq.s32.totalorder %v454, %v52
  %vm695 = vcmp.eq.s32.totalorder %v457, %v52
  %vm696 = vcmp.eq.s32.totalorder %v460, %v52
  %vm697 = vcmp.eq.s32.totalorder %v463, %v52
  %vm698 = vcmp.eq.s32.totalorder %v466, %v52
  %vm699 = vcmp.eq.s32.totalorder %v469, %v52
  %vm700 = vcmp.eq.s32.totalorder %v472, %v52
  %vm701 = vcmp.eq.s32.totalorder %v475, %v52
  %vm702 = vcmp.eq.s32.totalorder %v478, %v52
  %vm703 = vcmp.eq.s32.totalorder %v481, %v52
  %vm704 = vcmp.eq.s32.totalorder %v484, %v52
  %vm705 = vcmp.eq.s32.totalorder %v487, %v52
  %vm706 = vcmp.eq.s32.totalorder %v490, %v52
  %vm707 = vcmp.eq.s32.totalorder %v493, %v52
  %vm708 = vcmp.eq.s32.totalorder %v496, %v52
  %vm709 = vcmp.eq.s32.totalorder %v499, %v52
  %vm710 = vcmp.eq.s32.totalorder %v502, %v52
  %vm711 = vcmp.eq.s32.totalorder %v505, %v52
  %vm712 = vcmp.eq.s32.totalorder %v508, %v52
  %vm713 = vcmp.eq.s32.totalorder %v511, %v52
  %vm714 = vcmp.eq.s32.totalorder %v514, %v52
  %vm715 = vcmp.eq.s32.totalorder %v517, %v52
  %vm716 = vcmp.eq.s32.totalorder %v520, %v52
  %vm717 = vcmp.eq.s32.totalorder %v523, %v52
  %vm718 = vcmp.eq.s32.totalorder %v526, %v52
  %vm719 = vcmp.eq.s32.totalorder %v529, %v52
  %vm720 = vcmp.eq.s32.totalorder %v532, %v52
  %vm721 = vcmp.eq.s32.totalorder %v535, %v52
  %vm722 = vcmp.eq.s32.totalorder %v538, %v52
  %vm723 = vcmp.eq.s32.totalorder %v541, %v52
  %vm724 = vcmp.eq.s32.totalorder %v544, %v52
  %vm725 = vcmp.eq.s32.totalorder %v547, %v52
  %vm726 = vcmp.eq.s32.totalorder %v550, %v52
  %vm727 = vcmp.eq.s32.totalorder %v553, %v52
  %vm728 = vcmp.eq.s32.totalorder %v556, %v52
  %vm729 = vcmp.eq.s32.totalorder %v559, %v52
  %vm730 = vcmp.eq.s32.totalorder %v562, %v52
  %vm731 = vcmp.eq.s32.totalorder %v565, %v52
  %vm732 = vcmp.eq.s32.totalorder %v568, %v52
  %vm733 = vcmp.eq.s32.totalorder %v571, %v52
  %vm734 = vcmp.eq.s32.totalorder %v574, %v52
  %vm735 = vcmp.eq.s32.totalorder %v577, %v52
  %vm736 = vcmp.eq.s32.totalorder %v580, %v52
  %vm737 = vcmp.eq.s32.totalorder %v583, %v52
  %vm738 = vcmp.eq.s32.totalorder %v586, %v52
  %vm739 = vcmp.eq.s32.totalorder %v589, %v52
  %vm740 = vcmp.eq.s32.totalorder %v592, %v52
  %vm741 = vcmp.eq.s32.totalorder %v595, %v52
  %vm742 = vcmp.eq.s32.totalorder %v598, %v52
  %vm743 = vcmp.eq.s32.totalorder %v601, %v52
  %vm744 = vcmp.eq.s32.totalorder %v604, %v52
  %vm745 = vcmp.eq.s32.totalorder %v607, %v52
  %vm746 = vcmp.eq.s32.totalorder %v610, %v52
  %vm747 = vcmp.eq.s32.totalorder %v613, %v52
  %vm748 = vcmp.eq.s32.totalorder %v616, %v52
  %vm749 = vcmp.eq.s32.totalorder %v619, %v52
  %vm750 = vcmp.eq.s32.totalorder %v622, %v52
  %vm751 = vcmp.eq.s32.totalorder %v625, %v52
  %vm752 = vcmp.eq.s32.totalorder %v628, %v52
  %vm753 = vcmp.eq.s32.totalorder %v631, %v52
  %vm754 = vcmp.eq.s32.totalorder %v634, %v52
  %vm755 = vcmp.eq.s32.totalorder %v637, %v52
  %vm756 = vcmp.eq.s32.totalorder %v640, %v52
  %vm757 = vcmp.eq.s32.totalorder %v643, %v52
  %vm758 = vcmp.eq.s32.totalorder %v646, %v52
  %vm759 = vcmp.eq.s32.totalorder %v649, %v52
  %vm760 = vcmp.eq.s32.totalorder %v652, %v52
  %vm761 = vcmp.eq.s32.totalorder %v655, %v52
  %vm762 = vcmp.eq.s32.totalorder %v658, %v52
  %vm763 = vcmp.eq.s32.totalorder %v661, %v52
  %vm764 = vcmp.eq.s32.totalorder %v664, %v52
  %v765 = vsel %vm665, 1, 0
  %v766 = vsel %vm666, 1, 0
  %v767 = vsel %vm667, 1, 0
  %v768 = vsel %vm668, 1, 0
  %v769 = vsel %vm669, 1, 0
  %v770 = vsel %vm670, 1, 0
  %v771 = vsel %vm671, 1, 0
  %v772 = vsel %vm672, 1, 0
  %v773 = vsel %vm673, 1, 0
  %v774 = vsel %vm674, 1, 0
  %v775 = vsel %vm675, 1, 0
  %v776 = vsel %vm676, 1, 0
  %v777 = vsel %vm677, 1, 0
  %v778 = vsel %vm678, 1, 0
  %v779 = vsel %vm679, 1, 0
  %v780 = vsel %vm680, 1, 0
  %v781 = vsel %vm681, 1, 0
  %v782 = vsel %vm682, 1, 0
  %v783 = vsel %vm683, 1, 0
  %v784 = vsel %vm684, 1, 0
  %v785 = vsel %vm685, 1, 0
  %v786 = vsel %vm686, 1, 0
  %v787 = vsel %vm687, 1, 0
  %v788 = vsel %vm688, 1, 0
  %v789 = vsel %vm689, 1, 0
  %v790 = vsel %vm690, 1, 0
  %v791 = vsel %vm691, 1, 0
  %v792 = vsel %vm692, 1, 0
  %v793 = vsel %vm693, 1, 0
  %v794 = vsel %vm694, 1, 0
  %v795 = vsel %vm695, 1, 0
  %v796 = vsel %vm696, 1, 0
  %v797 = vsel %vm697, 1, 0
  %v798 = vsel %vm698, 1, 0
  %v799 = vsel %vm699, 1, 0
  %v800 = vsel %vm700, 1, 0
  %v801 = vsel %vm701, 1, 0
  %v802 = vsel %vm702, 1, 0
  %v803 = vsel %vm703, 1, 0
  %v804 = vsel %vm704, 1, 0
  %v805 = vsel %vm705, 1, 0
  %v806 = vsel %vm706, 1, 0
  %v807 = vsel %vm707, 1, 0
  %v808 = vsel %vm708, 1, 0
  %v809 = vsel %vm709, 1, 0
  %v810 = vsel %vm710, 1, 0
  %v811 = vsel %vm711, 1, 0
  %v812 = vsel %vm712, 1, 0
  %v813 = vsel %vm713, 1, 0
  %v814 = vsel %vm714, 1, 0
  %v815 = vsel %vm715, 1, 0
  %v816 = vsel %vm716, 1, 0
  %v817 = vsel %vm717, 1, 0
  %v818 = vsel %vm718, 1, 0
  %v819 = vsel %vm719, 1, 0
  %v820 = vsel %vm720, 1, 0
  %v821 = vsel %vm721, 1, 0
  %v822 = vsel %vm722, 1, 0
  %v823 = vsel %vm723, 1, 0
  %v824 = vsel %vm724, 1, 0
  %v825 = vsel %vm725, 1, 0
  %v826 = vsel %vm726, 1, 0
  %v827 = vsel %vm727, 1, 0
  %v828 = vsel %vm728, 1, 0
  %v829 = vsel %vm729, 1, 0
  %v830 = vsel %vm730, 1, 0
  %v831 = vsel %vm731, 1, 0
  %v832 = vsel %vm732, 1, 0
  %v833 = vsel %vm733, 1, 0
  %v834 = vsel %vm734, 1, 0
  %v835 = vsel %vm735, 1, 0
  %v836 = vsel %vm736, 1, 0
  %v837 = vsel %vm737, 1, 0
  %v838 = vsel %vm738, 1, 0
  %v839 = vsel %vm739, 1, 0
  %v840 = vsel %vm740, 1, 0
  %v841 = vsel %vm741, 1, 0
  %v842 = vsel %vm742, 1, 0
  %v843 = vsel %vm743, 1, 0
  %v844 = vsel %vm744, 1, 0
  %v845 = vsel %vm745, 1, 0
  %v846 = vsel %vm746, 1, 0
  %v847 = vsel %vm747, 1, 0
  %v848 = vsel %vm748, 1, 0
  %v849 = vsel %vm749, 1, 0
  %v850 = vsel %vm750, 1, 0
  %v851 = vsel %vm751, 1, 0
  %v852 = vsel %vm752, 1, 0
  %v853 = vsel %vm753, 1, 0
  %v854 = vsel %vm754, 1, 0
  %v855 = vsel %vm755, 1, 0
  %v856 = vsel %vm756, 1, 0
  %v857 = vsel %vm757, 1, 0
  %v858 = vsel %vm758, 1, 0
  %v859 = vsel %vm759, 1, 0
  %v860 = vsel %vm760, 1, 0
  %v861 = vsel %vm761, 1, 0
  %v862 = vsel %vm762, 1, 0
  %v863 = vsel %vm763, 1, 0
  %v864 = vsel %vm764, 1, 0
  %v865 = vcvt.s32.f32 %v765
  %v866 = vcvt.s32.f32 %v766
  %v867 = vcvt.s32.f32 %v767
  %v868 = vcvt.s32.f32 %v768
  %v869 = vcvt.s32.f32 %v769
  %v870 = vcvt.s32.f32 %v770
  %v871 = vcvt.s32.f32 %v771
  %v872 = vcvt.s32.f32 %v772
  %v873 = vcvt.s32.f32 %v773
  %v874 = vcvt.s32.f32 %v774
  %v875 = vcvt.s32.f32 %v775
  %v876 = vcvt.s32.f32 %v776
  %v877 = vcvt.s32.f32 %v777
  %v878 = vcvt.s32.f32 %v778
  %v879 = vcvt.s32.f32 %v779
  %v880 = vcvt.s32.f32 %v780
  %v881 = vcvt.s32.f32 %v781
  %v882 = vcvt.s32.f32 %v782
  %v883 = vcvt.s32.f32 %v783
  %v884 = vcvt.s32.f32 %v784
  %v885 = vcvt.s32.f32 %v785
  %v886 = vcvt.s32.f32 %v786
  %v887 = vcvt.s32.f32 %v787
  %v888 = vcvt.s32.f32 %v788
  %v889 = vcvt.s32.f32 %v789
  %v890 = vcvt.s32.f32 %v790
  %v891 = vcvt.s32.f32 %v791
  %v892 = vcvt.s32.f32 %v792
  %v893 = vcvt.s32.f32 %v793
  %v894 = vcvt.s32.f32 %v794
  %v895 = vcvt.s32.f32 %v795
  %v896 = vcvt.s32.f32 %v796
  %v897 = vcvt.s32.f32 %v797
  %v898 = vcvt.s32.f32 %v798
  %v899 = vcvt.s32.f32 %v799
  %v900 = vcvt.s32.f32 %v800
  %v901 = vcvt.s32.f32 %v801
  %v902 = vcvt.s32.f32 %v802
  %v903 = vcvt.s32.f32 %v803
  %v904 = vcvt.s32.f32 %v804
  %v905 = vcvt.s32.f32 %v805
  %v906 = vcvt.s32.f32 %v806
  %v907 = vcvt.s32.f32 %v807
  %v908 = vcvt.s32.f32 %v808
  %v909 = vcvt.s32.f32 %v809
  %v910 = vcvt.s32.f32 %v810
  %v911 = vcvt.s32.f32 %v811
  %v912 = vcvt.s32.f32 %v812
  %v913 = vcvt.s32.f32 %v813
  %v914 = vcvt.s32.f32 %v814
  %v915 = vcvt.s32.f32 %v815
  %v916 = vcvt.s32.f32 %v816
  %v917 = vcvt.s32.f32 %v817
  %v918 = vcvt.s32.f32 %v818
  %v919 = vcvt.s32.f32 %v819
  %v920 = vcvt.s32.f32 %v820
  %v921 = vcvt.s32.f32 %v821
  %v922 = vcvt.s32.f32 %v822
  %v923 = vcvt.s32.f32 %v823
  %v924 = vcvt.s32.f32 %v824
  %v925 = vcvt.s32.f32 %v825
  %v926 = vcvt.s32.f32 %v826
  %v927 = vcvt.s32.f32 %v827
  %v928 = vcvt.s32.f32 %v828
  %v929 = vcvt.s32.f32 %v829
  %v930 = vcvt.s32.f32 %v830
  %v931 = vcvt.s32.f32 %v831
  %v932 = vcvt.s32.f32 %v832
  %v933 = vcvt.s32.f32 %v833
  %v934 = vcvt.s32.f32 %v834
  %v935 = vcvt.s32.f32 %v835
  %v936 = vcvt.s32.f32 %v836
  %v937 = vcvt.s32.f32 %v837
  %v938 = vcvt.s32.f32 %v838
  %v939 = vcvt.s32.f32 %v839
  %v940 = vcvt.s32.f32 %v840
  %v941 = vcvt.s32.f32 %v841
  %v942 = vcvt.s32.f32 %v842
  %v943 = vcvt.s32.f32 %v843
  %v944 = vcvt.s32.f32 %v844
  %v945 = vcvt.s32.f32 %v845
  %v946 = vcvt.s32.f32 %v846
  %v947 = vcvt.s32.f32 %v847
  %v948 = vcvt.s32.f32 %v848
  %v949 = vcvt.s32.f32 %v849
  %v950 = vcvt.s32.f32 %v850
  %v951 = vcvt.s32.f32 %v851
  %v952 = vcvt.s32.f32 %v852
  %v953 = vcvt.s32.f32 %v853
  %v954 = vcvt.s32.f32 %v854
  %v955 = vcvt.s32.f32 %v855
  %v956 = vcvt.s32.f32 %v856
  %v957 = vcvt.s32.f32 %v857
  %v958 = vcvt.s32.f32 %v858
  %v959 = vcvt.s32.f32 %v859
  %v960 = vcvt.s32.f32 %v860
  %v961 = vcvt.s32.f32 %v861
  %v962 = vcvt.s32.f32 %v862
  %v963 = vcvt.s32.f32 %v863
  %v964 = vcvt.s32.f32 %v864
  %v965 = vld [vmem:[%s3] sm:$0xff]
  %vm966 = vcmask 64512
  %v968 = vsel %vm966, %v865, 0
  %v971 = vsel %vm966, %v866, 0
  %v974 = vsel %vm966, %v867, 0
  %v977 = vsel %vm966, %v868, 0
  %v980 = vsel %vm966, %v869, 0
  %v983 = vsel %vm966, %v870, 0
  %v986 = vsel %vm966, %v871, 0
  %v989 = vsel %vm966, %v872, 0
  %v992 = vsel %vm966, %v873, 0
  %v995 = vsel %vm966, %v874, 0
  %v998 = vsel %vm966, %v875, 0
  %v1001 = vsel %vm966, %v876, 0
  %v1004 = vsel %vm966, %v877, 0
  %v1007 = vsel %vm966, %v878, 0
  %v1010 = vsel %vm966, %v879, 0
  %v1013 = vsel %vm966, %v880, 0
  %v1016 = vsel %vm966, %v881, 0
  %v1019 = vsel %vm966, %v882, 0
  %v1022 = vsel %vm966, %v883, 0
  %v1025 = vsel %vm966, %v884, 0
  %v1028 = vsel %vm966, %v885, 0
  %v1031 = vsel %vm966, %v886, 0
  %v1034 = vsel %vm966, %v887, 0
  %v1037 = vsel %vm966, %v888, 0
  %v1040 = vsel %vm966, %v889, 0
  %v1043 = vsel %vm966, %v890, 0
  %v1046 = vsel %vm966, %v891, 0
  %v1049 = vsel %vm966, %v892, 0
  %v1052 = vsel %vm966, %v893, 0
  %v1055 = vsel %vm966, %v894, 0
  %v1058 = vsel %vm966, %v895, 0
  %v1061 = vsel %vm966, %v896, 0
  %v1064 = vsel %vm966, %v897, 0
  %v1067 = vsel %vm966, %v898, 0
  %v1070 = vsel %vm966, %v899, 0
  %v1073 = vsel %vm966, %v900, 0
  %v1076 = vsel %vm966, %v901, 0
  %v1079 = vsel %vm966, %v902, 0
  %v1082 = vsel %vm966, %v903, 0
  %v1085 = vsel %vm966, %v904, 0
  %v1088 = vsel %vm966, %v905, 0
  %v1091 = vsel %vm966, %v906, 0
  %v1094 = vsel %vm966, %v907, 0
  %v1097 = vsel %vm966, %v908, 0
  %v1100 = vsel %vm966, %v909, 0
  %v1103 = vsel %vm966, %v910, 0
  %v1106 = vsel %vm966, %v911, 0
  %v1109 = vsel %vm966, %v912, 0
  %v1112 = vsel %vm966, %v913, 0
  %v1115 = vsel %vm966, %v914, 0
  %v1118 = vsel %vm966, %v915, 0
  %v1121 = vsel %vm966, %v916, 0
  %v1124 = vsel %vm966, %v917, 0
  %v1127 = vsel %vm966, %v918, 0
  %v1130 = vsel %vm966, %v919, 0
  %v1133 = vsel %vm966, %v920, 0
  %v1136 = vsel %vm966, %v921, 0
  %v1139 = vsel %vm966, %v922, 0
  %v1142 = vsel %vm966, %v923, 0
  %v1145 = vsel %vm966, %v924, 0
  %v1148 = vsel %vm966, %v925, 0
  %v1151 = vsel %vm966, %v926, 0
  %v1154 = vsel %vm966, %v927, 0
  %v1157 = vsel %vm966, %v928, 0
  %v1160 = vsel %vm966, %v929, 0
  %v1163 = vsel %vm966, %v930, 0
  %v1166 = vsel %vm966, %v931, 0
  %v1169 = vsel %vm966, %v932, 0
  %v1172 = vsel %vm966, %v933, 0
  %v1175 = vsel %vm966, %v934, 0
  %v1178 = vsel %vm966, %v935, 0
  %v1181 = vsel %vm966, %v936, 0
  %v1184 = vsel %vm966, %v937, 0
  %v1187 = vsel %vm966, %v938, 0
  %v1190 = vsel %vm966, %v939, 0
  %v1193 = vsel %vm966, %v940, 0
  %v1196 = vsel %vm966, %v941, 0
  %v1199 = vsel %vm966, %v942, 0
  %v1202 = vsel %vm966, %v943, 0
  %v1205 = vsel %vm966, %v944, 0
  %v1208 = vsel %vm966, %v945, 0
  %v1211 = vsel %vm966, %v946, 0
  %v1214 = vsel %vm966, %v947, 0
  %v1217 = vsel %vm966, %v948, 0
  %v1220 = vsel %vm966, %v949, 0
  %v1223 = vsel %vm966, %v950, 0
  %v1226 = vsel %vm966, %v951, 0
  %v1229 = vsel %vm966, %v952, 0
  %v1232 = vsel %vm966, %v953, 0
  %v1235 = vsel %vm966, %v954, 0
  %v1238 = vsel %vm966, %v955, 0
  %v1241 = vsel %vm966, %v956, 0
  %v1244 = vsel %vm966, %v957, 0
  %v1247 = vsel %vm966, %v958, 0
  %v1250 = vsel %vm966, %v959, 0
  %v1253 = vsel %vm966, %v960, 0
  %v1256 = vsel %vm966, %v961, 0
  %v1259 = vsel %vm966, %v962, 0
  %v1262 = vsel %vm966, %v963, 0
  %v1265 = vsel %vm966, %v964, 0
  %1267 = vmatprep.subr.mxu0 0.0
  %1268 = vmatpush1.msra.mxu0 0.0
  %1269 = vmatprep.subr.mxu0 0.0
  %1270 = vmatpush1.msra.mxu0 0.0
  %1271 = vmatprep.subr.mxu0 0.0
  %1272 = vmatpush1.msra.mxu0 0.0
  %1273 = vmatprep.subr.mxu0 0.0
  %1274 = vmatpush1.msra.mxu0 0.0
  %1275 = vmatprep.subr.mxu0 0.0
  %1276 = vmatpush1.msra.mxu0 0.0
  %1277 = vmatprep.subr.mxu0 0.0
  %1278 = vmatpush1.msra.mxu0 0.0
  %1279 = vmatprep.subr.mxu0 0.0
  %1280 = vmatpush1.msra.mxu0 0.0
  %1281 = vmatprep.subr.mxu0 0.0
  %1282 = vmatpush1.msra.mxu0 0.0
  %1283 = vmatprep.subr.mxu0 0.0
  %1284 = vmatpush1.msra.mxu0 0.0
  %1285 = vmatprep.subr.mxu0 0.0
  %1286 = vmatpush1.msra.mxu0 0.0
  %1287 = vmatprep.subr.mxu0 0.0
  %1288 = vmatpush1.msra.mxu0 0.0
  %1289 = vmatprep.subr.mxu0 0.0
  %1290 = vmatpush1.msra.mxu0 0.0
  %1291 = vmatprep.subr.mxu0 0.0
  %1292 = vmatpush1.msra.mxu0 0.0
  %1293 = vmatprep.subr.mxu0 0.0
  %1294 = vmatpush1.msra.mxu0 0.0
  %1295 = vmatprep.subr.mxu0 0.0
  %1296 = vmatpush1.msra.mxu0 0.0
  %1297 = vmatprep.subr.mxu0 0.0
  %1298 = vmatpush1.msra.mxu0 %v965
  %1299 = vmatprep.subr.mxu0 0.0
  %1300 = vmatpush2.msra.mxu0 0.0
  %1301 = vmatprep.subr.mxu0 0.0
  %1302 = vmatpush2.msra.mxu0 0.0
  %1303 = vmatprep.subr.mxu0 0.0
  %1304 = vmatpush2.msra.mxu0 0.0
  %1305 = vmatprep.subr.mxu0 0.0
  %1306 = vmatpush2.msra.mxu0 0.0
  %1307 = vmatprep.subr.mxu0 0.0
  %1308 = vmatpush2.msra.mxu0 0.0
  %1309 = vmatprep.subr.mxu0 0.0
  %1310 = vmatpush2.msra.mxu0 0.0
  %1311 = vmatprep.subr.mxu0 0.0
  %1312 = vmatpush2.msra.mxu0 0.0
  %1313 = vmatprep.subr.mxu0 0.0
  %1314 = vmatpush2.msra.mxu0 0.0
  %1315 = vmatprep.subr.mxu0 0.0
  %1316 = vmatpush2.msra.mxu0 0.0
  %1317 = vmatprep.subr.mxu0 0.0
  %1318 = vmatpush2.msra.mxu0 0.0
  %1319 = vmatprep.subr.mxu0 0.0
  %1320 = vmatpush2.msra.mxu0 0.0
  %1321 = vmatprep.subr.mxu0 0.0
  %1322 = vmatpush2.msra.mxu0 0.0
  %1323 = vmatprep.subr.mxu0 0.0
  %1324 = vmatpush2.msra.mxu0 0.0
  %1325 = vmatprep.subr.mxu0 0.0
  %1326 = vmatpush2.msra.mxu0 0.0
  %1327 = vmatprep.subr.mxu0 0.0
  %1328 = vmatpush2.msra.mxu0 0.0
  %1329 = vmatprep.subr.mxu0 0.0
  %1330 = vmatpush2.msra.mxu0 0.0
  %1331 = vmatprep.mubr.f32.mxu0 0.0
  %1332 = vmatmul.mubr.f32.gmra.mxu0 %v968
  %v1333 = vpop.f32.mrf.mxu0
  %v1334 = vadd.f32 0.0, %v1333
  %v1335 = vpop.f32.mrf.mxu0
  %1336 = vmatprep.mubr.f32.mxu0 0.0
  %1337 = vmatmul.mubr.f32.gmra.mxu0 %v971
  %v1338 = vpop.f32.mrf.mxu0
  %v1339 = vadd.f32 0.0, %v1338
  %v1340 = vpop.f32.mrf.mxu0
  %1341 = vmatprep.mubr.f32.mxu0 0.0
  %1342 = vmatmul.mubr.f32.gmra.mxu0 %v974
  %v1343 = vpop.f32.mrf.mxu0
  %v1344 = vadd.f32 0.0, %v1343
  %v1345 = vpop.f32.mrf.mxu0
  %1346 = vmatprep.mubr.f32.mxu0 0.0
  %1347 = vmatmul.mubr.f32.gmra.mxu0 %v977
  %v1348 = vpop.f32.mrf.mxu0
  %v1349 = vadd.f32 0.0, %v1348
  %v1350 = vpop.f32.mrf.mxu0
  %1351 = vmatprep.mubr.f32.mxu0 0.0
  %1352 = vmatmul.mubr.f32.gmra.mxu0 %v980
  %v1353 = vpop.f32.mrf.mxu0
  %v1354 = vadd.f32 0.0, %v1353
  %v1355 = vpop.f32.mrf.mxu0
  %1356 = vmatprep.mubr.f32.mxu0 0.0
  %1357 = vmatmul.mubr.f32.gmra.mxu0 %v983
  %v1358 = vpop.f32.mrf.mxu0
  %v1359 = vadd.f32 0.0, %v1358
  %v1360 = vpop.f32.mrf.mxu0
  %1361 = vmatprep.mubr.f32.mxu0 0.0
  %1362 = vmatmul.mubr.f32.gmra.mxu0 %v986
  %v1363 = vpop.f32.mrf.mxu0
  %v1364 = vadd.f32 0.0, %v1363
  %v1365 = vpop.f32.mrf.mxu0
  %1366 = vmatprep.mubr.f32.mxu0 0.0
  %1367 = vmatmul.mubr.f32.gmra.mxu0 %v989
  %v1368 = vpop.f32.mrf.mxu0
  %v1369 = vadd.f32 0.0, %v1368
  %v1370 = vpop.f32.mrf.mxu0
  %1371 = vmatprep.mubr.f32.mxu0 0.0
  %1372 = vmatmul.mubr.f32.gmra.mxu0 %v992
  %v1373 = vpop.f32.mrf.mxu0
  %v1374 = vadd.f32 0.0, %v1373
  %v1375 = vpop.f32.mrf.mxu0
  %1376 = vmatprep.mubr.f32.mxu0 0.0
  %1377 = vmatmul.mubr.f32.gmra.mxu0 %v995
  %v1378 = vpop.f32.mrf.mxu0
  %v1379 = vadd.f32 0.0, %v1378
  %v1380 = vpop.f32.mrf.mxu0
  %1381 = vmatprep.mubr.f32.mxu0 0.0
  %1382 = vmatmul.mubr.f32.gmra.mxu0 %v998
  %v1383 = vpop.f32.mrf.mxu0
  %v1384 = vadd.f32 0.0, %v1383
  %v1385 = vpop.f32.mrf.mxu0
  %1386 = vmatprep.mubr.f32.mxu0 0.0
  %1387 = vmatmul.mubr.f32.gmra.mxu0 %v1001
  %v1388 = vpop.f32.mrf.mxu0
  %v1389 = vadd.f32 0.0, %v1388
  %v1390 = vpop.f32.mrf.mxu0
  %1391 = vmatprep.mubr.f32.mxu0 0.0
  %1392 = vmatmul.mubr.f32.gmra.mxu0 %v1004
  %v1393 = vpop.f32.mrf.mxu0
  %v1394 = vadd.f32 0.0, %v1393
  %v1395 = vpop.f32.mrf.mxu0
  %1396 = vmatprep.mubr.f32.mxu0 0.0
  %1397 = vmatmul.mubr.f32.gmra.mxu0 %v1007
  %v1398 = vpop.f32.mrf.mxu0
  %v1399 = vadd.f32 0.0, %v1398
  %v1400 = vpop.f32.mrf.mxu0
  %1401 = vmatprep.mubr.f32.mxu0 0.0
  %1402 = vmatmul.mubr.f32.gmra.mxu0 %v1010
  %v1403 = vpop.f32.mrf.mxu0
  %v1404 = vadd.f32 0.0, %v1403
  %v1405 = vpop.f32.mrf.mxu0
  %1406 = vmatprep.mubr.f32.mxu0 0.0
  %1407 = vmatmul.mubr.f32.gmra.mxu0 %v1013
  %v1408 = vpop.f32.mrf.mxu0
  %v1409 = vadd.f32 0.0, %v1408
  %v1410 = vpop.f32.mrf.mxu0
  %1411 = vmatprep.mubr.f32.mxu0 0.0
  %1412 = vmatmul.mubr.f32.gmra.mxu0 %v1016
  %v1413 = vpop.f32.mrf.mxu0
  %v1414 = vadd.f32 0.0, %v1413
  %v1415 = vpop.f32.mrf.mxu0
  %1416 = vmatprep.mubr.f32.mxu0 0.0
  %1417 = vmatmul.mubr.f32.gmra.mxu0 %v1019
  %v1418 = vpop.f32.mrf.mxu0
  %v1419 = vadd.f32 0.0, %v1418
  %v1420 = vpop.f32.mrf.mxu0
  %1421 = vmatprep.mubr.f32.mxu0 0.0
  %1422 = vmatmul.mubr.f32.gmra.mxu0 %v1022
  %v1423 = vpop.f32.mrf.mxu0
  %v1424 = vadd.f32 0.0, %v1423
  %v1425 = vpop.f32.mrf.mxu0
  %1426 = vmatprep.mubr.f32.mxu0 0.0
  %1427 = vmatmul.mubr.f32.gmra.mxu0 %v1025
  %v1428 = vpop.f32.mrf.mxu0
  %v1429 = vadd.f32 0.0, %v1428
  %v1430 = vpop.f32.mrf.mxu0
  %1431 = vmatprep.mubr.f32.mxu0 0.0
  %1432 = vmatmul.mubr.f32.gmra.mxu0 %v1028
  %v1433 = vpop.f32.mrf.mxu0
  %v1434 = vadd.f32 0.0, %v1433
  %v1435 = vpop.f32.mrf.mxu0
  %1436 = vmatprep.mubr.f32.mxu0 0.0
  %1437 = vmatmul.mubr.f32.gmra.mxu0 %v1031
  %v1438 = vpop.f32.mrf.mxu0
  %v1439 = vadd.f32 0.0, %v1438
  %v1440 = vpop.f32.mrf.mxu0
  %1441 = vmatprep.mubr.f32.mxu0 0.0
  %1442 = vmatmul.mubr.f32.gmra.mxu0 %v1034
  %v1443 = vpop.f32.mrf.mxu0
  %v1444 = vadd.f32 0.0, %v1443
  %v1445 = vpop.f32.mrf.mxu0
  %1446 = vmatprep.mubr.f32.mxu0 0.0
  %1447 = vmatmul.mubr.f32.gmra.mxu0 %v1037
  %v1448 = vpop.f32.mrf.mxu0
  %v1449 = vadd.f32 0.0, %v1448
  %v1450 = vpop.f32.mrf.mxu0
  %1451 = vmatprep.mubr.f32.mxu0 0.0
  %1452 = vmatmul.mubr.f32.gmra.mxu0 %v1040
  %v1453 = vpop.f32.mrf.mxu0
  %v1454 = vadd.f32 0.0, %v1453
  %v1455 = vpop.f32.mrf.mxu0
  %1456 = vmatprep.mubr.f32.mxu0 0.0
  %1457 = vmatmul.mubr.f32.gmra.mxu0 %v1043
  %v1458 = vpop.f32.mrf.mxu0
  %v1459 = vadd.f32 0.0, %v1458
  %v1460 = vpop.f32.mrf.mxu0
  %1461 = vmatprep.mubr.f32.mxu0 0.0
  %1462 = vmatmul.mubr.f32.gmra.mxu0 %v1046
  %v1463 = vpop.f32.mrf.mxu0
  %v1464 = vadd.f32 0.0, %v1463
  %v1465 = vpop.f32.mrf.mxu0
  %1466 = vmatprep.mubr.f32.mxu0 0.0
  %1467 = vmatmul.mubr.f32.gmra.mxu0 %v1049
  %v1468 = vpop.f32.mrf.mxu0
  %v1469 = vadd.f32 0.0, %v1468
  %v1470 = vpop.f32.mrf.mxu0
  %1471 = vmatprep.mubr.f32.mxu0 0.0
  %1472 = vmatmul.mubr.f32.gmra.mxu0 %v1052
  %v1473 = vpop.f32.mrf.mxu0
  %v1474 = vadd.f32 0.0, %v1473
  %v1475 = vpop.f32.mrf.mxu0
  %1476 = vmatprep.mubr.f32.mxu0 0.0
  %1477 = vmatmul.mubr.f32.gmra.mxu0 %v1055
  %v1478 = vpop.f32.mrf.mxu0
  %v1479 = vadd.f32 0.0, %v1478
  %v1480 = vpop.f32.mrf.mxu0
  %1481 = vmatprep.mubr.f32.mxu0 0.0
  %1482 = vmatmul.mubr.f32.gmra.mxu0 %v1058
  %v1483 = vpop.f32.mrf.mxu0
  %v1484 = vadd.f32 0.0, %v1483
  %v1485 = vpop.f32.mrf.mxu0
  %1486 = vmatprep.mubr.f32.mxu0 0.0
  %1487 = vmatmul.mubr.f32.gmra.mxu0 %v1061
  %v1488 = vpop.f32.mrf.mxu0
  %v1489 = vadd.f32 0.0, %v1488
  %v1490 = vpop.f32.mrf.mxu0
  %1491 = vmatprep.mubr.f32.mxu0 0.0
  %1492 = vmatmul.mubr.f32.gmra.mxu0 %v1064
  %v1493 = vpop.f32.mrf.mxu0
  %v1494 = vadd.f32 0.0, %v1493
  %v1495 = vpop.f32.mrf.mxu0
  %1496 = vmatprep.mubr.f32.mxu0 0.0
  %1497 = vmatmul.mubr.f32.gmra.mxu0 %v1067
  %v1498 = vpop.f32.mrf.mxu0
  %v1499 = vadd.f32 0.0, %v1498
  %v1500 = vpop.f32.mrf.mxu0
  %1501 = vmatprep.mubr.f32.mxu0 0.0
  %1502 = vmatmul.mubr.f32.gmra.mxu0 %v1070
  %v1503 = vpop.f32.mrf.mxu0
  %v1504 = vadd.f32 0.0, %v1503
  %v1505 = vpop.f32.mrf.mxu0
  %1506 = vmatprep.mubr.f32.mxu0 0.0
  %1507 = vmatmul.mubr.f32.gmra.mxu0 %v1073
  %v1508 = vpop.f32.mrf.mxu0
  %v1509 = vadd.f32 0.0, %v1508
  %v1510 = vpop.f32.mrf.mxu0
  %1511 = vmatprep.mubr.f32.mxu0 0.0
  %1512 = vmatmul.mubr.f32.gmra.mxu0 %v1076
  %v1513 = vpop.f32.mrf.mxu0
  %v1514 = vadd.f32 0.0, %v1513
  %v1515 = vpop.f32.mrf.mxu0
  %1516 = vmatprep.mubr.f32.mxu0 0.0
  %1517 = vmatmul.mubr.f32.gmra.mxu0 %v1079
  %v1518 = vpop.f32.mrf.mxu0
  %v1519 = vadd.f32 0.0, %v1518
  %v1520 = vpop.f32.mrf.mxu0
  %1521 = vmatprep.mubr.f32.mxu0 0.0
  %1522 = vmatmul.mubr.f32.gmra.mxu0 %v1082
  %v1523 = vpop.f32.mrf.mxu0
  %v1524 = vadd.f32 0.0, %v1523
  %v1525 = vpop.f32.mrf.mxu0
  %1526 = vmatprep.mubr.f32.mxu0 0.0
  %1527 = vmatmul.mubr.f32.gmra.mxu0 %v1085
  %v1528 = vpop.f32.mrf.mxu0
  %v1529 = vadd.f32 0.0, %v1528
  %v1530 = vpop.f32.mrf.mxu0
  %1531 = vmatprep.mubr.f32.mxu0 0.0
  %1532 = vmatmul.mubr.f32.gmra.mxu0 %v1088
  %v1533 = vpop.f32.mrf.mxu0
  %v1534 = vadd.f32 0.0, %v1533
  %v1535 = vpop.f32.mrf.mxu0
  %1536 = vmatprep.mubr.f32.mxu0 0.0
  %1537 = vmatmul.mubr.f32.gmra.mxu0 %v1091
  %v1538 = vpop.f32.mrf.mxu0
  %v1539 = vadd.f32 0.0, %v1538
  %v1540 = vpop.f32.mrf.mxu0
  %1541 = vmatprep.mubr.f32.mxu0 0.0
  %1542 = vmatmul.mubr.f32.gmra.mxu0 %v1094
  %v1543 = vpop.f32.mrf.mxu0
  %v1544 = vadd.f32 0.0, %v1543
  %v1545 = vpop.f32.mrf.mxu0
  %1546 = vmatprep.mubr.f32.mxu0 0.0
  %1547 = vmatmul.mubr.f32.gmra.mxu0 %v1097
  %v1548 = vpop.f32.mrf.mxu0
  %v1549 = vadd.f32 0.0, %v1548
  %v1550 = vpop.f32.mrf.mxu0
  %1551 = vmatprep.mubr.f32.mxu0 0.0
  %1552 = vmatmul.mubr.f32.gmra.mxu0 %v1100
  %v1553 = vpop.f32.mrf.mxu0
  %v1554 = vadd.f32 0.0, %v1553
  %v1555 = vpop.f32.mrf.mxu0
  %1556 = vmatprep.mubr.f32.mxu0 0.0
  %1557 = vmatmul.mubr.f32.gmra.mxu0 %v1103
  %v1558 = vpop.f32.mrf.mxu0
  %v1559 = vadd.f32 0.0, %v1558
  %v1560 = vpop.f32.mrf.mxu0
  %1561 = vmatprep.mubr.f32.mxu0 0.0
  %1562 = vmatmul.mubr.f32.gmra.mxu0 %v1106
  %v1563 = vpop.f32.mrf.mxu0
  %v1564 = vadd.f32 0.0, %v1563
  %v1565 = vpop.f32.mrf.mxu0
  %1566 = vmatprep.mubr.f32.mxu0 0.0
  %1567 = vmatmul.mubr.f32.gmra.mxu0 %v1109
  %v1568 = vpop.f32.mrf.mxu0
  %v1569 = vadd.f32 0.0, %v1568
  %v1570 = vpop.f32.mrf.mxu0
  %1571 = vmatprep.mubr.f32.mxu0 0.0
  %1572 = vmatmul.mubr.f32.gmra.mxu0 %v1112
  %v1573 = vpop.f32.mrf.mxu0
  %v1574 = vadd.f32 0.0, %v1573
  %v1575 = vpop.f32.mrf.mxu0
  %1576 = vmatprep.mubr.f32.mxu0 0.0
  %1577 = vmatmul.mubr.f32.gmra.mxu0 %v1115
  %v1578 = vpop.f32.mrf.mxu0
  %v1579 = vadd.f32 0.0, %v1578
  %v1580 = vpop.f32.mrf.mxu0
  %1581 = vmatprep.mubr.f32.mxu0 0.0
  %1582 = vmatmul.mubr.f32.gmra.mxu0 %v1118
  %v1583 = vpop.f32.mrf.mxu0
  %v1584 = vadd.f32 0.0, %v1583
  %v1585 = vpop.f32.mrf.mxu0
  %1586 = vmatprep.mubr.f32.mxu0 0.0
  %1587 = vmatmul.mubr.f32.gmra.mxu0 %v1121
  %v1588 = vpop.f32.mrf.mxu0
  %v1589 = vadd.f32 0.0, %v1588
  %v1590 = vpop.f32.mrf.mxu0
  %1591 = vmatprep.mubr.f32.mxu0 0.0
  %1592 = vmatmul.mubr.f32.gmra.mxu0 %v1124
  %v1593 = vpop.f32.mrf.mxu0
  %v1594 = vadd.f32 0.0, %v1593
  %v1595 = vpop.f32.mrf.mxu0
  %1596 = vmatprep.mubr.f32.mxu0 0.0
  %1597 = vmatmul.mubr.f32.gmra.mxu0 %v1127
  %v1598 = vpop.f32.mrf.mxu0
  %v1599 = vadd.f32 0.0, %v1598
  %v1600 = vpop.f32.mrf.mxu0
  %1601 = vmatprep.mubr.f32.mxu0 0.0
  %1602 = vmatmul.mubr.f32.gmra.mxu0 %v1130
  %v1603 = vpop.f32.mrf.mxu0
  %v1604 = vadd.f32 0.0, %v1603
  %v1605 = vpop.f32.mrf.mxu0
  %1606 = vmatprep.mubr.f32.mxu0 0.0
  %1607 = vmatmul.mubr.f32.gmra.mxu0 %v1133
  %v1608 = vpop.f32.mrf.mxu0
  %v1609 = vadd.f32 0.0, %v1608
  %v1610 = vpop.f32.mrf.mxu0
  %1611 = vmatprep.mubr.f32.mxu0 0.0
  %1612 = vmatmul.mubr.f32.gmra.mxu0 %v1136
  %v1613 = vpop.f32.mrf.mxu0
  %v1614 = vadd.f32 0.0, %v1613
  %v1615 = vpop.f32.mrf.mxu0
  %1616 = vmatprep.mubr.f32.mxu0 0.0
  %1617 = vmatmul.mubr.f32.gmra.mxu0 %v1139
  %v1618 = vpop.f32.mrf.mxu0
  %v1619 = vadd.f32 0.0, %v1618
  %v1620 = vpop.f32.mrf.mxu0
  %1621 = vmatprep.mubr.f32.mxu0 0.0
  %1622 = vmatmul.mubr.f32.gmra.mxu0 %v1142
  %v1623 = vpop.f32.mrf.mxu0
  %v1624 = vadd.f32 0.0, %v1623
  %v1625 = vpop.f32.mrf.mxu0
  %1626 = vmatprep.mubr.f32.mxu0 0.0
  %1627 = vmatmul.mubr.f32.gmra.mxu0 %v1145
  %v1628 = vpop.f32.mrf.mxu0
  %v1629 = vadd.f32 0.0, %v1628
  %v1630 = vpop.f32.mrf.mxu0
  %1631 = vmatprep.mubr.f32.mxu0 0.0
  %1632 = vmatmul.mubr.f32.gmra.mxu0 %v1148
  %v1633 = vpop.f32.mrf.mxu0
  %v1634 = vadd.f32 0.0, %v1633
  %v1635 = vpop.f32.mrf.mxu0
  %1636 = vmatprep.mubr.f32.mxu0 0.0
  %1637 = vmatmul.mubr.f32.gmra.mxu0 %v1151
  %v1638 = vpop.f32.mrf.mxu0
  %v1639 = vadd.f32 0.0, %v1638
  %v1640 = vpop.f32.mrf.mxu0
  %1641 = vmatprep.mubr.f32.mxu0 0.0
  %1642 = vmatmul.mubr.f32.gmra.mxu0 %v1154
  %v1643 = vpop.f32.mrf.mxu0
  %v1644 = vadd.f32 0.0, %v1643
  %v1645 = vpop.f32.mrf.mxu0
  %1646 = vmatprep.mubr.f32.mxu0 0.0
  %1647 = vmatmul.mubr.f32.gmra.mxu0 %v1157
  %v1648 = vpop.f32.mrf.mxu0
  %v1649 = vadd.f32 0.0, %v1648
  %v1650 = vpop.f32.mrf.mxu0
  %1651 = vmatprep.mubr.f32.mxu0 0.0
  %1652 = vmatmul.mubr.f32.gmra.mxu0 %v1160
  %v1653 = vpop.f32.mrf.mxu0
  %v1654 = vadd.f32 0.0, %v1653
  %v1655 = vpop.f32.mrf.mxu0
  %1656 = vmatprep.mubr.f32.mxu0 0.0
  %1657 = vmatmul.mubr.f32.gmra.mxu0 %v1163
  %v1658 = vpop.f32.mrf.mxu0
  %v1659 = vadd.f32 0.0, %v1658
  %v1660 = vpop.f32.mrf.mxu0
  %1661 = vmatprep.mubr.f32.mxu0 0.0
  %1662 = vmatmul.mubr.f32.gmra.mxu0 %v1166
  %v1663 = vpop.f32.mrf.mxu0
  %v1664 = vadd.f32 0.0, %v1663
  %v1665 = vpop.f32.mrf.mxu0
  %1666 = vmatprep.mubr.f32.mxu0 0.0
  %1667 = vmatmul.mubr.f32.gmra.mxu0 %v1169
  %v1668 = vpop.f32.mrf.mxu0
  %v1669 = vadd.f32 0.0, %v1668
  %v1670 = vpop.f32.mrf.mxu0
  %1671 = vmatprep.mubr.f32.mxu0 0.0
  %1672 = vmatmul.mubr.f32.gmra.mxu0 %v1172
  %v1673 = vpop.f32.mrf.mxu0
  %v1674 = vadd.f32 0.0, %v1673
  %v1675 = vpop.f32.mrf.mxu0
  %1676 = vmatprep.mubr.f32.mxu0 0.0
  %1677 = vmatmul.mubr.f32.gmra.mxu0 %v1175
  %v1678 = vpop.f32.mrf.mxu0
  %v1679 = vadd.f32 0.0, %v1678
  %v1680 = vpop.f32.mrf.mxu0
  %1681 = vmatprep.mubr.f32.mxu0 0.0
  %1682 = vmatmul.mubr.f32.gmra.mxu0 %v1178
  %v1683 = vpop.f32.mrf.mxu0
  %v1684 = vadd.f32 0.0, %v1683
  %v1685 = vpop.f32.mrf.mxu0
  %1686 = vmatprep.mubr.f32.mxu0 0.0
  %1687 = vmatmul.mubr.f32.gmra.mxu0 %v1181
  %v1688 = vpop.f32.mrf.mxu0
  %v1689 = vadd.f32 0.0, %v1688
  %v1690 = vpop.f32.mrf.mxu0
  %1691 = vmatprep.mubr.f32.mxu0 0.0
  %1692 = vmatmul.mubr.f32.gmra.mxu0 %v1184
  %v1693 = vpop.f32.mrf.mxu0
  %v1694 = vadd.f32 0.0, %v1693
  %v1695 = vpop.f32.mrf.mxu0
  %1696 = vmatprep.mubr.f32.mxu0 0.0
  %1697 = vmatmul.mubr.f32.gmra.mxu0 %v1187
  %v1698 = vpop.f32.mrf.mxu0
  %v1699 = vadd.f32 0.0, %v1698
  %v1700 = vpop.f32.mrf.mxu0
  %1701 = vmatprep.mubr.f32.mxu0 0.0
  %1702 = vmatmul.mubr.f32.gmra.mxu0 %v1190
  %v1703 = vpop.f32.mrf.mxu0
  %v1704 = vadd.f32 0.0, %v1703
  %v1705 = vpop.f32.mrf.mxu0
  %1706 = vmatprep.mubr.f32.mxu0 0.0
  %1707 = vmatmul.mubr.f32.gmra.mxu0 %v1193
  %v1708 = vpop.f32.mrf.mxu0
  %v1709 = vadd.f32 0.0, %v1708
  %v1710 = vpop.f32.mrf.mxu0
  %1711 = vmatprep.mubr.f32.mxu0 0.0
  %1712 = vmatmul.mubr.f32.gmra.mxu0 %v1196
  %v1713 = vpop.f32.mrf.mxu0
  %v1714 = vadd.f32 0.0, %v1713
  %v1715 = vpop.f32.mrf.mxu0
  %1716 = vmatprep.mubr.f32.mxu0 0.0
  %1717 = vmatmul.mubr.f32.gmra.mxu0 %v1199
  %v1718 = vpop.f32.mrf.mxu0
  %v1719 = vadd.f32 0.0, %v1718
  %v1720 = vpop.f32.mrf.mxu0
  %1721 = vmatprep.mubr.f32.mxu0 0.0
  %1722 = vmatmul.mubr.f32.gmra.mxu0 %v1202
  %v1723 = vpop.f32.mrf.mxu0
  %v1724 = vadd.f32 0.0, %v1723
  %v1725 = vpop.f32.mrf.mxu0
  %1726 = vmatprep.mubr.f32.mxu0 0.0
  %1727 = vmatmul.mubr.f32.gmra.mxu0 %v1205
  %v1728 = vpop.f32.mrf.mxu0
  %v1729 = vadd.f32 0.0, %v1728
  %v1730 = vpop.f32.mrf.mxu0
  %1731 = vmatprep.mubr.f32.mxu0 0.0
  %1732 = vmatmul.mubr.f32.gmra.mxu0 %v1208
  %v1733 = vpop.f32.mrf.mxu0
  %v1734 = vadd.f32 0.0, %v1733
  %v1735 = vpop.f32.mrf.mxu0
  %1736 = vmatprep.mubr.f32.mxu0 0.0
  %1737 = vmatmul.mubr.f32.gmra.mxu0 %v1211
  %v1738 = vpop.f32.mrf.mxu0
  %v1739 = vadd.f32 0.0, %v1738
  %v1740 = vpop.f32.mrf.mxu0
  %1741 = vmatprep.mubr.f32.mxu0 0.0
  %1742 = vmatmul.mubr.f32.gmra.mxu0 %v1214
  %v1743 = vpop.f32.mrf.mxu0
  %v1744 = vadd.f32 0.0, %v1743
  %v1745 = vpop.f32.mrf.mxu0
  %1746 = vmatprep.mubr.f32.mxu0 0.0
  %1747 = vmatmul.mubr.f32.gmra.mxu0 %v1217
  %v1748 = vpop.f32.mrf.mxu0
  %v1749 = vadd.f32 0.0, %v1748
  %v1750 = vpop.f32.mrf.mxu0
  %1751 = vmatprep.mubr.f32.mxu0 0.0
  %1752 = vmatmul.mubr.f32.gmra.mxu0 %v1220
  %v1753 = vpop.f32.mrf.mxu0
  %v1754 = vadd.f32 0.0, %v1753
  %v1755 = vpop.f32.mrf.mxu0
  %1756 = vmatprep.mubr.f32.mxu0 0.0
  %1757 = vmatmul.mubr.f32.gmra.mxu0 %v1223
  %v1758 = vpop.f32.mrf.mxu0
  %v1759 = vadd.f32 0.0, %v1758
  %v1760 = vpop.f32.mrf.mxu0
  %1761 = vmatprep.mubr.f32.mxu0 0.0
  %1762 = vmatmul.mubr.f32.gmra.mxu0 %v1226
  %v1763 = vpop.f32.mrf.mxu0
  %v1764 = vadd.f32 0.0, %v1763
  %v1765 = vpop.f32.mrf.mxu0
  %1766 = vmatprep.mubr.f32.mxu0 0.0
  %1767 = vmatmul.mubr.f32.gmra.mxu0 %v1229
  %v1768 = vpop.f32.mrf.mxu0
  %v1769 = vadd.f32 0.0, %v1768
  %v1770 = vpop.f32.mrf.mxu0
  %1771 = vmatprep.mubr.f32.mxu0 0.0
  %1772 = vmatmul.mubr.f32.gmra.mxu0 %v1232
  %v1773 = vpop.f32.mrf.mxu0
  %v1774 = vadd.f32 0.0, %v1773
  %v1775 = vpop.f32.mrf.mxu0
  %1776 = vmatprep.mubr.f32.mxu0 0.0
  %1777 = vmatmul.mubr.f32.gmra.mxu0 %v1235
  %v1778 = vpop.f32.mrf.mxu0
  %v1779 = vadd.f32 0.0, %v1778
  %v1780 = vpop.f32.mrf.mxu0
  %1781 = vmatprep.mubr.f32.mxu0 0.0
  %1782 = vmatmul.mubr.f32.gmra.mxu0 %v1238
  %v1783 = vpop.f32.mrf.mxu0
  %v1784 = vadd.f32 0.0, %v1783
  %v1785 = vpop.f32.mrf.mxu0
  %1786 = vmatprep.mubr.f32.mxu0 0.0
  %1787 = vmatmul.mubr.f32.gmra.mxu0 %v1241
  %v1788 = vpop.f32.mrf.mxu0
  %v1789 = vadd.f32 0.0, %v1788
  %v1790 = vpop.f32.mrf.mxu0
  %1791 = vmatprep.mubr.f32.mxu0 0.0
  %1792 = vmatmul.mubr.f32.gmra.mxu0 %v1244
  %v1793 = vpop.f32.mrf.mxu0
  %v1794 = vadd.f32 0.0, %v1793
  %v1795 = vpop.f32.mrf.mxu0
  %1796 = vmatprep.mubr.f32.mxu0 0.0
  %1797 = vmatmul.mubr.f32.gmra.mxu0 %v1247
  %v1798 = vpop.f32.mrf.mxu0
  %v1799 = vadd.f32 0.0, %v1798
  %v1800 = vpop.f32.mrf.mxu0
  %1801 = vmatprep.mubr.f32.mxu0 0.0
  %1802 = vmatmul.mubr.f32.gmra.mxu0 %v1250
  %v1803 = vpop.f32.mrf.mxu0
  %v1804 = vadd.f32 0.0, %v1803
  %v1805 = vpop.f32.mrf.mxu0
  %1806 = vmatprep.mubr.f32.mxu0 0.0
  %1807 = vmatmul.mubr.f32.gmra.mxu0 %v1253
  %v1808 = vpop.f32.mrf.mxu0
  %v1809 = vadd.f32 0.0, %v1808
  %v1810 = vpop.f32.mrf.mxu0
  %1811 = vmatprep.mubr.f32.mxu0 0.0
  %1812 = vmatmul.mubr.f32.gmra.mxu0 %v1256
  %v1813 = vpop.f32.mrf.mxu0
  %v1814 = vadd.f32 0.0, %v1813
  %v1815 = vpop.f32.mrf.mxu0
  %1816 = vmatprep.mubr.f32.mxu0 0.0
  %1817 = vmatmul.mubr.f32.gmra.mxu0 %v1259
  %v1818 = vpop.f32.mrf.mxu0
  %v1819 = vadd.f32 0.0, %v1818
  %v1820 = vpop.f32.mrf.mxu0
  %1821 = vmatprep.mubr.f32.mxu0 0.0
  %1822 = vmatmul.mubr.f32.gmra.mxu0 %v1262
  %v1823 = vpop.f32.mrf.mxu0
  %v1824 = vadd.f32 0.0, %v1823
  %v1825 = vpop.f32.mrf.mxu0
  %1826 = vmatprep.mubr.f32.mxu0 0.0
  %1827 = vmatmul.mubr.f32.gmra.mxu0 %v1265
  %v1828 = vpop.f32.mrf.mxu0
  %v1829 = vadd.f32 0.0, %v1828
  %v1830 = vpop.f32.mrf.mxu0
  %1831 = vdwg.mxu0
  %v1832 = vld [vmem:[%s4] sm:$0xff]
  %v1833 = vld [vmem:[%s4 + $0x8] sm:$0xff]
  %v1834 = vld [vmem:[%s4 + $0x10] sm:$0xff]
  %v1835 = vld [vmem:[%s4 + $0x18] sm:$0xff]
  %v1836 = vld [vmem:[%s4 + $0x20] sm:$0xff]
  %v1837 = vld [vmem:[%s4 + $0x28] sm:$0xff]
  %v1838 = vld [vmem:[%s5] sm:$0x7]
  %v1840 = vlaneseq
  %v1841 = vshrl.u32 %v1840, 7
  %v1842 = vsub.s32 0, %v1841
  %v1843 = vrot.slane %v1838, %v1842
  %v1844 = vlaneseq
  %v1845 = vshrl.u32 %v1844, 7
  %v1846 = vsub.s32 1, %v1845
  %v1847 = vrot.slane %v1838, %v1846
  %v1848 = vlaneseq
  %v1849 = vshrl.u32 %v1848, 7
  %v1850 = vsub.s32 2, %v1849
  %v1851 = vrot.slane %v1838, %v1850
  %vm1855 = vcmask 130048
  %v1857 = vsel %vm1855, %v217, 0
  %v1860 = vsel %vm1855, %v222, 0
  %v1863 = vsel %vm1855, %v227, 0
  %v1866 = vsel %vm1855, %v232, 0
  %v1869 = vsel %vm1855, %v237, 0
  %v1872 = vsel %vm1855, %v242, 0
  %v1875 = vsel %vm1855, %v247, 0
  %v1878 = vsel %vm1855, %v252, 0
  %v1881 = vsel %vm1855, %v257, 0
  %v1884 = vsel %vm1855, %v262, 0
  %1886 = vmatprep.subr.mxu0 0.0
  %1887 = vmatpush1.msra.mxu0 0.0
  %1888 = vmatprep.subr.mxu0 0.0
  %1889 = vmatpush1.msra.mxu0 0.0
  %1890 = vmatprep.subr.mxu0 0.0
  %1891 = vmatpush1.msra.mxu0 0.0
  %1892 = vmatprep.subr.mxu0 0.0
  %1893 = vmatpush1.msra.mxu0 0.0
  %1894 = vmatprep.subr.mxu0 0.0
  %1895 = vmatpush1.msra.mxu0 0.0
  %1896 = vmatprep.subr.mxu0 0.0
  %1897 = vmatpush1.msra.mxu0 0.0
  %1898 = vmatprep.subr.mxu0 0.0
  %1899 = vmatpush1.msra.mxu0 0.0
  %1900 = vmatprep.subr.mxu0 0.0
  %1901 = vmatpush1.msra.mxu0 0.0
  %1902 = vmatprep.subr.mxu0 0.0
  %1903 = vmatpush1.msra.mxu0 0.0
  %1904 = vmatprep.subr.mxu0 0.0
  %1905 = vmatpush1.msra.mxu0 0.0
  %1906 = vmatprep.subr.mxu0 0.0
  %1907 = vmatpush1.msra.mxu0 0.0
  %1908 = vmatprep.subr.mxu0 0.0
  %1909 = vmatpush1.msra.mxu0 0.0
  %1910 = vmatprep.subr.mxu0 0.0
  %1911 = vmatpush1.msra.mxu0 0.0
  %1912 = vmatprep.subr.mxu0 0.0
  %1913 = vmatpush1.msra.mxu0 0.0
  %1914 = vmatprep.subr.mxu0 %v1836
  %1915 = vmatpush1.msra.mxu0 %v1835
  %1916 = vmatprep.subr.mxu0 %v1833
  %1917 = vmatpush1.msra.mxu0 %v1832
  %1918 = vmatprep.subr.mxu0 0.0
  %1919 = vmatpush2.msra.mxu0 0.0
  %1920 = vmatprep.subr.mxu0 0.0
  %1921 = vmatpush2.msra.mxu0 0.0
  %1922 = vmatprep.subr.mxu0 0.0
  %1923 = vmatpush2.msra.mxu0 0.0
  %1924 = vmatprep.subr.mxu0 0.0
  %1925 = vmatpush2.msra.mxu0 0.0
  %1926 = vmatprep.subr.mxu0 0.0
  %1927 = vmatpush2.msra.mxu0 0.0
  %1928 = vmatprep.subr.mxu0 0.0
  %1929 = vmatpush2.msra.mxu0 0.0
  %1930 = vmatprep.subr.mxu0 0.0
  %1931 = vmatpush2.msra.mxu0 0.0
  %1932 = vmatprep.subr.mxu0 0.0
  %1933 = vmatpush2.msra.mxu0 0.0
  %1934 = vmatprep.subr.mxu0 0.0
  %1935 = vmatpush2.msra.mxu0 0.0
  %1936 = vmatprep.subr.mxu0 0.0
  %1937 = vmatpush2.msra.mxu0 0.0
  %1938 = vmatprep.subr.mxu0 0.0
  %1939 = vmatpush2.msra.mxu0 0.0
  %1940 = vmatprep.subr.mxu0 0.0
  %1941 = vmatpush2.msra.mxu0 0.0
  %1942 = vmatprep.subr.mxu0 0.0
  %1943 = vmatpush2.msra.mxu0 0.0
  %1944 = vmatprep.subr.mxu0 0.0
  %1945 = vmatpush2.msra.mxu0 0.0
  %1946 = vmatprep.subr.mxu0 0.0
  %1947 = vmatpush2.msra.mxu0 0.0
  %1948 = vmatprep.subr.mxu0 0.0
  %1949 = vmatpush2.msra.mxu0 0.0
  %1950 = vmatprep.mubr.f32.mxu0 0.0
  %1951 = vmatmul.mubr.f32.gmra.mxu0 %v1857
  %v1952 = vpop.f32.mrf.mxu0
  %v1953 = vadd.f32 %v1843, %v1952
  %v1954 = vpop.f32.mrf.mxu0
  %v1955 = vadd.f32 %v1847, %v1954
  %1956 = vmatprep.mubr.f32.mxu0 0.0
  %1957 = vmatmul.mubr.f32.gmra.mxu0 %v1860
  %v1958 = vpop.f32.mrf.mxu0
  %v1959 = vadd.f32 %v1843, %v1958
  %v1960 = vpop.f32.mrf.mxu0
  %v1961 = vadd.f32 %v1847, %v1960
  %1962 = vmatprep.mubr.f32.mxu0 0.0
  %1963 = vmatmul.mubr.f32.gmra.mxu0 %v1863
  %v1964 = vpop.f32.mrf.mxu0
  %v1965 = vadd.f32 %v1843, %v1964
  %v1966 = vpop.f32.mrf.mxu0
  %v1967 = vadd.f32 %v1847, %v1966
  %1968 = vmatprep.mubr.f32.mxu0 0.0
  %1969 = vmatmul.mubr.f32.gmra.mxu0 %v1866
  %v1970 = vpop.f32.mrf.mxu0
  %v1971 = vadd.f32 %v1843, %v1970
  %v1972 = vpop.f32.mrf.mxu0
  %v1973 = vadd.f32 %v1847, %v1972
  %1974 = vmatprep.mubr.f32.mxu0 0.0
  %1975 = vmatmul.mubr.f32.gmra.mxu0 %v1869
  %v1976 = vpop.f32.mrf.mxu0
  %v1977 = vadd.f32 %v1843, %v1976
  %v1978 = vpop.f32.mrf.mxu0
  %v1979 = vadd.f32 %v1847, %v1978
  %1980 = vmatprep.mubr.f32.mxu0 0.0
  %1981 = vmatmul.mubr.f32.gmra.mxu0 %v1872
  %v1982 = vpop.f32.mrf.mxu0
  %v1983 = vadd.f32 %v1843, %v1982
  %v1984 = vpop.f32.mrf.mxu0
  %v1985 = vadd.f32 %v1847, %v1984
  %1986 = vmatprep.mubr.f32.mxu0 0.0
  %1987 = vmatmul.mubr.f32.gmra.mxu0 %v1875
  %v1988 = vpop.f32.mrf.mxu0
  %v1989 = vadd.f32 %v1843, %v1988
  %v1990 = vpop.f32.mrf.mxu0
  %v1991 = vadd.f32 %v1847, %v1990
  %1992 = vmatprep.mubr.f32.mxu0 0.0
  %1993 = vmatmul.mubr.f32.gmra.mxu0 %v1878
  %v1994 = vpop.f32.mrf.mxu0
  %v1995 = vadd.f32 %v1843, %v1994
  %v1996 = vpop.f32.mrf.mxu0
  %v1997 = vadd.f32 %v1847, %v1996
  %1998 = vmatprep.mubr.f32.mxu0 0.0
  %1999 = vmatmul.mubr.f32.gmra.mxu0 %v1881
  %v2000 = vpop.f32.mrf.mxu0
  %v2001 = vadd.f32 %v1843, %v2000
  %v2002 = vpop.f32.mrf.mxu0
  %v2003 = vadd.f32 %v1847, %v2002
  %2004 = vmatprep.mubr.f32.mxu0 0.0
  %2005 = vmatmul.mubr.f32.gmra.mxu0 %v1884
  %v2006 = vpop.f32.mrf.mxu0
  %v2007 = vadd.f32 %v1843, %v2006
  %v2008 = vpop.f32.mrf.mxu0
  %v2009 = vadd.f32 %v1847, %v2008
  %2010 = vdwg.mxu0
  %2011 = vmatprep.subr.mxu0 0.0
  %2012 = vmatpush1.msra.mxu0 0.0
  %2013 = vmatprep.subr.mxu0 0.0
  %2014 = vmatpush1.msra.mxu0 0.0
  %2015 = vmatprep.subr.mxu0 0.0
  %2016 = vmatpush1.msra.mxu0 0.0
  %2017 = vmatprep.subr.mxu0 0.0
  %2018 = vmatpush1.msra.mxu0 0.0
  %2019 = vmatprep.subr.mxu0 0.0
  %2020 = vmatpush1.msra.mxu0 0.0
  %2021 = vmatprep.subr.mxu0 0.0
  %2022 = vmatpush1.msra.mxu0 0.0
  %2023 = vmatprep.subr.mxu0 0.0
  %2024 = vmatpush1.msra.mxu0 0.0
  %2025 = vmatprep.subr.mxu0 0.0
  %2026 = vmatpush1.msra.mxu0 0.0
  %2027 = vmatprep.subr.mxu0 0.0
  %2028 = vmatpush1.msra.mxu0 0.0
  %2029 = vmatprep.subr.mxu0 0.0
  %2030 = vmatpush1.msra.mxu0 0.0
  %2031 = vmatprep.subr.mxu0 0.0
  %2032 = vmatpush1.msra.mxu0 0.0
  %2033 = vmatprep.subr.mxu0 0.0
  %2034 = vmatpush1.msra.mxu0 0.0
  %2035 = vmatprep.subr.mxu0 0.0
  %2036 = vmatpush1.msra.mxu0 0.0
  %2037 = vmatprep.subr.mxu0 0.0
  %2038 = vmatpush1.msra.mxu0 0.0
  %2039 = vmatprep.subr.mxu0 0.0
  %2040 = vmatpush1.msra.mxu0 %v1837
  %2041 = vmatprep.subr.mxu0 0.0
  %2042 = vmatpush1.msra.mxu0 %v1834
  %2043 = vmatprep.subr.mxu0 0.0
  %2044 = vmatpush2.msra.mxu0 0.0
  %2045 = vmatprep.subr.mxu0 0.0
  %2046 = vmatpush2.msra.mxu0 0.0
  %2047 = vmatprep.subr.mxu0 0.0
  %2048 = vmatpush2.msra.mxu0 0.0
  %2049 = vmatprep.subr.mxu0 0.0
  %2050 = vmatpush2.msra.mxu0 0.0
  %2051 = vmatprep.subr.mxu0 0.0
  %2052 = vmatpush2.msra.mxu0 0.0
  %2053 = vmatprep.subr.mxu0 0.0
  %2054 = vmatpush2.msra.mxu0 0.0
  %2055 = vmatprep.subr.mxu0 0.0
  %2056 = vmatpush2.msra.mxu0 0.0
  %2057 = vmatprep.subr.mxu0 0.0
  %2058 = vmatpush2.msra.mxu0 0.0
  %2059 = vmatprep.subr.mxu0 0.0
  %2060 = vmatpush2.msra.mxu0 0.0
  %2061 = vmatprep.subr.mxu0 0.0
  %2062 = vmatpush2.msra.mxu0 0.0
  %2063 = vmatprep.subr.mxu0 0.0
  %2064 = vmatpush2.msra.mxu0 0.0
  %2065 = vmatprep.subr.mxu0 0.0
  %2066 = vmatpush2.msra.mxu0 0.0
  %2067 = vmatprep.subr.mxu0 0.0
  %2068 = vmatpush2.msra.mxu0 0.0
  %2069 = vmatprep.subr.mxu0 0.0
  %2070 = vmatpush2.msra.mxu0 0.0
  %2071 = vmatprep.subr.mxu0 0.0
  %2072 = vmatpush2.msra.mxu0 0.0
  %2073 = vmatprep.subr.mxu0 0.0
  %2074 = vmatpush2.msra.mxu0 0.0
  %2075 = vmatprep.mubr.f32.mxu0 0.0
  %2076 = vmatmul.mubr.f32.gmra.mxu0 %v1857
  %v2077 = vpop.f32.mrf.mxu0
  %v2078 = vadd.f32 %v1851, %v2077
  %v2079 = vpop.f32.mrf.mxu0
  %2080 = vmatprep.mubr.f32.mxu0 0.0
  %2081 = vmatmul.mubr.f32.gmra.mxu0 %v1860
  %v2082 = vpop.f32.mrf.mxu0
  %v2083 = vadd.f32 %v1851, %v2082
  %v2084 = vpop.f32.mrf.mxu0
  %2085 = vmatprep.mubr.f32.mxu0 0.0
  %2086 = vmatmul.mubr.f32.gmra.mxu0 %v1863
  %v2087 = vpop.f32.mrf.mxu0
  %v2088 = vadd.f32 %v1851, %v2087
  %v2089 = vpop.f32.mrf.mxu0
  %2090 = vmatprep.mubr.f32.mxu0 0.0
  %2091 = vmatmul.mubr.f32.gmra.mxu0 %v1866
  %v2092 = vpop.f32.mrf.mxu0
  %v2093 = vadd.f32 %v1851, %v2092
  %v2094 = vpop.f32.mrf.mxu0
  %2095 = vmatprep.mubr.f32.mxu0 0.0
  %2096 = vmatmul.mubr.f32.gmra.mxu0 %v1869
  %v2097 = vpop.f32.mrf.mxu0
  %v2098 = vadd.f32 %v1851, %v2097
  %v2099 = vpop.f32.mrf.mxu0
  %2100 = vmatprep.mubr.f32.mxu0 0.0
  %2101 = vmatmul.mubr.f32.gmra.mxu0 %v1872
  %v2102 = vpop.f32.mrf.mxu0
  %v2103 = vadd.f32 %v1851, %v2102
  %v2104 = vpop.f32.mrf.mxu0
  %2105 = vmatprep.mubr.f32.mxu0 0.0
  %2106 = vmatmul.mubr.f32.gmra.mxu0 %v1875
  %v2107 = vpop.f32.mrf.mxu0
  %v2108 = vadd.f32 %v1851, %v2107
  %v2109 = vpop.f32.mrf.mxu0
  %2110 = vmatprep.mubr.f32.mxu0 0.0
  %2111 = vmatmul.mubr.f32.gmra.mxu0 %v1878
  %v2112 = vpop.f32.mrf.mxu0
  %v2113 = vadd.f32 %v1851, %v2112
  %v2114 = vpop.f32.mrf.mxu0
  %2115 = vmatprep.mubr.f32.mxu0 0.0
  %2116 = vmatmul.mubr.f32.gmra.mxu0 %v1881
  %v2117 = vpop.f32.mrf.mxu0
  %v2118 = vadd.f32 %v1851, %v2117
  %v2119 = vpop.f32.mrf.mxu0
  %2120 = vmatprep.mubr.f32.mxu0 0.0
  %2121 = vmatmul.mubr.f32.gmra.mxu0 %v1884
  %v2122 = vpop.f32.mrf.mxu0
  %v2123 = vadd.f32 %v1851, %v2122
  %v2124 = vpop.f32.mrf.mxu0
  %2125 = vdwg.mxu0
  %v2126 = vmul.f32 %v1953, %v1955
  %v2127 = vmul.f32 %v1953, %v1961
  %v2128 = vmul.f32 %v1953, %v1967
  %v2129 = vmul.f32 %v1953, %v1973
  %v2130 = vmul.f32 %v1953, %v1979
  %v2131 = vmul.f32 %v1953, %v1985
  %v2132 = vmul.f32 %v1953, %v1991
  %v2133 = vmul.f32 %v1953, %v1997
  %v2134 = vmul.f32 %v1953, %v2003
  %v2135 = vmul.f32 %v1953, %v2009
  %v2136 = vmul.f32 %v1959, %v1955
  %v2137 = vmul.f32 %v1959, %v1961
  %v2138 = vmul.f32 %v1959, %v1967
  %v2139 = vmul.f32 %v1959, %v1973
  %v2140 = vmul.f32 %v1959, %v1979
  %v2141 = vmul.f32 %v1959, %v1985
  %v2142 = vmul.f32 %v1959, %v1991
  %v2143 = vmul.f32 %v1959, %v1997
  %v2144 = vmul.f32 %v1959, %v2003
  %v2145 = vmul.f32 %v1959, %v2009
  %v2146 = vmul.f32 %v1965, %v1955
  %v2147 = vmul.f32 %v1965, %v1961
  %v2148 = vmul.f32 %v1965, %v1967
  %v2149 = vmul.f32 %v1965, %v1973
  %v2150 = vmul.f32 %v1965, %v1979
  %v2151 = vmul.f32 %v1965, %v1985
  %v2152 = vmul.f32 %v1965, %v1991
  %v2153 = vmul.f32 %v1965, %v1997
  %v2154 = vmul.f32 %v1965, %v2003
  %v2155 = vmul.f32 %v1965, %v2009
  %v2156 = vmul.f32 %v1971, %v1955
  %v2157 = vmul.f32 %v1971, %v1961
  %v2158 = vmul.f32 %v1971, %v1967
  %v2159 = vmul.f32 %v1971, %v1973
  %v2160 = vmul.f32 %v1971, %v1979
  %v2161 = vmul.f32 %v1971, %v1985
  %v2162 = vmul.f32 %v1971, %v1991
  %v2163 = vmul.f32 %v1971, %v1997
  %v2164 = vmul.f32 %v1971, %v2003
  %v2165 = vmul.f32 %v1971, %v2009
  %v2166 = vmul.f32 %v1977, %v1955
  %v2167 = vmul.f32 %v1977, %v1961
  %v2168 = vmul.f32 %v1977, %v1967
  %v2169 = vmul.f32 %v1977, %v1973
  %v2170 = vmul.f32 %v1977, %v1979
  %v2171 = vmul.f32 %v1977, %v1985
  %v2172 = vmul.f32 %v1977, %v1991
  %v2173 = vmul.f32 %v1977, %v1997
  %v2174 = vmul.f32 %v1977, %v2003
  %v2175 = vmul.f32 %v1977, %v2009
  %v2176 = vmul.f32 %v1983, %v1955
  %v2177 = vmul.f32 %v1983, %v1961
  %v2178 = vmul.f32 %v1983, %v1967
  %v2179 = vmul.f32 %v1983, %v1973
  %v2180 = vmul.f32 %v1983, %v1979
  %v2181 = vmul.f32 %v1983, %v1985
  %v2182 = vmul.f32 %v1983, %v1991
  %v2183 = vmul.f32 %v1983, %v1997
  %v2184 = vmul.f32 %v1983, %v2003
  %v2185 = vmul.f32 %v1983, %v2009
  %v2186 = vmul.f32 %v1989, %v1955
  %v2187 = vmul.f32 %v1989, %v1961
  %v2188 = vmul.f32 %v1989, %v1967
  %v2189 = vmul.f32 %v1989, %v1973
  %v2190 = vmul.f32 %v1989, %v1979
  %v2191 = vmul.f32 %v1989, %v1985
  %v2192 = vmul.f32 %v1989, %v1991
  %v2193 = vmul.f32 %v1989, %v1997
  %v2194 = vmul.f32 %v1989, %v2003
  %v2195 = vmul.f32 %v1989, %v2009
  %v2196 = vmul.f32 %v1995, %v1955
  %v2197 = vmul.f32 %v1995, %v1961
  %v2198 = vmul.f32 %v1995, %v1967
  %v2199 = vmul.f32 %v1995, %v1973
  %v2200 = vmul.f32 %v1995, %v1979
  %v2201 = vmul.f32 %v1995, %v1985
  %v2202 = vmul.f32 %v1995, %v1991
  %v2203 = vmul.f32 %v1995, %v1997
  %v2204 = vmul.f32 %v1995, %v2003
  %v2205 = vmul.f32 %v1995, %v2009
  %v2206 = vmul.f32 %v2001, %v1955
  %v2207 = vmul.f32 %v2001, %v1961
  %v2208 = vmul.f32 %v2001, %v1967
  %v2209 = vmul.f32 %v2001, %v1973
  %v2210 = vmul.f32 %v2001, %v1979
  %v2211 = vmul.f32 %v2001, %v1985
  %v2212 = vmul.f32 %v2001, %v1991
  %v2213 = vmul.f32 %v2001, %v1997
  %v2214 = vmul.f32 %v2001, %v2003
  %v2215 = vmul.f32 %v2001, %v2009
  %v2216 = vmul.f32 %v2007, %v1955
  %v2217 = vmul.f32 %v2007, %v1961
  %v2218 = vmul.f32 %v2007, %v1967
  %v2219 = vmul.f32 %v2007, %v1973
  %v2220 = vmul.f32 %v2007, %v1979
  %v2221 = vmul.f32 %v2007, %v1985
  %v2222 = vmul.f32 %v2007, %v1991
  %v2223 = vmul.f32 %v2007, %v1997
  %v2224 = vmul.f32 %v2007, %v2003
  %v2225 = vmul.f32 %v2007, %v2009
  %v2226 = vadd.f32 %v1334, %v2126
  %v2227 = vadd.f32 %v1339, %v2127
  %v2228 = vadd.f32 %v1344, %v2128
  %v2229 = vadd.f32 %v1349, %v2129
  %v2230 = vadd.f32 %v1354, %v2130
  %v2231 = vadd.f32 %v1359, %v2131
  %v2232 = vadd.f32 %v1364, %v2132
  %v2233 = vadd.f32 %v1369, %v2133
  %v2234 = vadd.f32 %v1374, %v2134
  %v2235 = vadd.f32 %v1379, %v2135
  %v2236 = vadd.f32 %v1384, %v2136
  %v2237 = vadd.f32 %v1389, %v2137
  %v2238 = vadd.f32 %v1394, %v2138
  %v2239 = vadd.f32 %v1399, %v2139
  %v2240 = vadd.f32 %v1404, %v2140
  %v2241 = vadd.f32 %v1409, %v2141
  %v2242 = vadd.f32 %v1414, %v2142
  %v2243 = vadd.f32 %v1419, %v2143
  %v2244 = vadd.f32 %v1424, %v2144
  %v2245 = vadd.f32 %v1429, %v2145
  %v2246 = vadd.f32 %v1434, %v2146
  %v2247 = vadd.f32 %v1439, %v2147
  %v2248 = vadd.f32 %v1444, %v2148
  %v2249 = vadd.f32 %v1449, %v2149
  %v2250 = vadd.f32 %v1454, %v2150
  %v2251 = vadd.f32 %v1459, %v2151
  %v2252 = vadd.f32 %v1464, %v2152
  %v2253 = vadd.f32 %v1469, %v2153
  %v2254 = vadd.f32 %v1474, %v2154
  %v2255 = vadd.f32 %v1479, %v2155
  %v2256 = vadd.f32 %v1484, %v2156
  %v2257 = vadd.f32 %v1489, %v2157
  %v2258 = vadd.f32 %v1494, %v2158
  %v2259 = vadd.f32 %v1499, %v2159
  %v2260 = vadd.f32 %v1504, %v2160
  %v2261 = vadd.f32 %v1509, %v2161
  %v2262 = vadd.f32 %v1514, %v2162
  %v2263 = vadd.f32 %v1519, %v2163
  %v2264 = vadd.f32 %v1524, %v2164
  %v2265 = vadd.f32 %v1529, %v2165
  %v2266 = vadd.f32 %v1534, %v2166
  %v2267 = vadd.f32 %v1539, %v2167
  %v2268 = vadd.f32 %v1544, %v2168
  %v2269 = vadd.f32 %v1549, %v2169
  %v2270 = vadd.f32 %v1554, %v2170
  %v2271 = vadd.f32 %v1559, %v2171
  %v2272 = vadd.f32 %v1564, %v2172
  %v2273 = vadd.f32 %v1569, %v2173
  %v2274 = vadd.f32 %v1574, %v2174
  %v2275 = vadd.f32 %v1579, %v2175
  %v2276 = vadd.f32 %v1584, %v2176
  %v2277 = vadd.f32 %v1589, %v2177
  %v2278 = vadd.f32 %v1594, %v2178
  %v2279 = vadd.f32 %v1599, %v2179
  %v2280 = vadd.f32 %v1604, %v2180
  %v2281 = vadd.f32 %v1609, %v2181
  %v2282 = vadd.f32 %v1614, %v2182
  %v2283 = vadd.f32 %v1619, %v2183
  %v2284 = vadd.f32 %v1624, %v2184
  %v2285 = vadd.f32 %v1629, %v2185
  %v2286 = vadd.f32 %v1634, %v2186
  %v2287 = vadd.f32 %v1639, %v2187
  %v2288 = vadd.f32 %v1644, %v2188
  %v2289 = vadd.f32 %v1649, %v2189
  %v2290 = vadd.f32 %v1654, %v2190
  %v2291 = vadd.f32 %v1659, %v2191
  %v2292 = vadd.f32 %v1664, %v2192
  %v2293 = vadd.f32 %v1669, %v2193
  %v2294 = vadd.f32 %v1674, %v2194
  %v2295 = vadd.f32 %v1679, %v2195
  %v2296 = vadd.f32 %v1684, %v2196
  %v2297 = vadd.f32 %v1689, %v2197
  %v2298 = vadd.f32 %v1694, %v2198
  %v2299 = vadd.f32 %v1699, %v2199
  %v2300 = vadd.f32 %v1704, %v2200
  %v2301 = vadd.f32 %v1709, %v2201
  %v2302 = vadd.f32 %v1714, %v2202
  %v2303 = vadd.f32 %v1719, %v2203
  %v2304 = vadd.f32 %v1724, %v2204
  %v2305 = vadd.f32 %v1729, %v2205
  %v2306 = vadd.f32 %v1734, %v2206
  %v2307 = vadd.f32 %v1739, %v2207
  %v2308 = vadd.f32 %v1744, %v2208
  %v2309 = vadd.f32 %v1749, %v2209
  %v2310 = vadd.f32 %v1754, %v2210
  %v2311 = vadd.f32 %v1759, %v2211
  %v2312 = vadd.f32 %v1764, %v2212
  %v2313 = vadd.f32 %v1769, %v2213
  %v2314 = vadd.f32 %v1774, %v2214
  %v2315 = vadd.f32 %v1779, %v2215
  %v2316 = vadd.f32 %v1784, %v2216
  %v2317 = vadd.f32 %v1789, %v2217
  %v2318 = vadd.f32 %v1794, %v2218
  %v2319 = vadd.f32 %v1799, %v2219
  %v2320 = vadd.f32 %v1804, %v2220
  %v2321 = vadd.f32 %v1809, %v2221
  %v2322 = vadd.f32 %v1814, %v2222
  %v2323 = vadd.f32 %v1819, %v2223
  %v2324 = vadd.f32 %v1824, %v2224
  %v2325 = vadd.f32 %v1829, %v2225
  %2326 = vrot.lane.b32.xlu0 %v1953, 32
  %v2327 = vpop.permute.xlu0 %2326
  %2328 = vrot.lane.b32.xlu0 %v1959, 32
  %v2329 = vpop.permute.xlu0 %2328
  %2330 = vrot.lane.b32.xlu0 %v1965, 32
  %v2331 = vpop.permute.xlu0 %2330
  %2332 = vrot.lane.b32.xlu0 %v1971, 32
  %v2333 = vpop.permute.xlu0 %2332
  %2334 = vrot.lane.b32.xlu0 %v1977, 32
  %v2335 = vpop.permute.xlu0 %2334
  %2336 = vrot.lane.b32.xlu0 %v1983, 32
  %v2337 = vpop.permute.xlu0 %2336
  %2338 = vrot.lane.b32.xlu0 %v1989, 32
  %v2339 = vpop.permute.xlu0 %2338
  %2340 = vrot.lane.b32.xlu0 %v1995, 32
  %v2341 = vpop.permute.xlu0 %2340
  %2342 = vrot.lane.b32.xlu0 %v2001, 32
  %v2343 = vpop.permute.xlu0 %2342
  %2344 = vrot.lane.b32.xlu0 %v2007, 32
  %v2345 = vpop.permute.xlu0 %2344
  %2346 = vrot.lane.b32.xlu0 %v1955, 32
  %v2347 = vpop.permute.xlu0 %2346
  %2348 = vrot.lane.b32.xlu0 %v1961, 32
  %v2349 = vpop.permute.xlu0 %2348
  %2350 = vrot.lane.b32.xlu0 %v1967, 32
  %v2351 = vpop.permute.xlu0 %2350
  %2352 = vrot.lane.b32.xlu0 %v1973, 32
  %v2353 = vpop.permute.xlu0 %2352
  %2354 = vrot.lane.b32.xlu0 %v1979, 32
  %v2355 = vpop.permute.xlu0 %2354
  %2356 = vrot.lane.b32.xlu0 %v1985, 32
  %v2357 = vpop.permute.xlu0 %2356
  %2358 = vrot.lane.b32.xlu0 %v1991, 32
  %v2359 = vpop.permute.xlu0 %2358
  %2360 = vrot.lane.b32.xlu0 %v1997, 32
  %v2361 = vpop.permute.xlu0 %2360
  %2362 = vrot.lane.b32.xlu0 %v2003, 32
  %v2363 = vpop.permute.xlu0 %2362
  %2364 = vrot.lane.b32.xlu0 %v2009, 32
  %v2365 = vpop.permute.xlu0 %2364
  %v2366 = vmul.f32 %v2327, %v2347
  %v2367 = vmul.f32 %v2327, %v2349
  %v2368 = vmul.f32 %v2327, %v2351
  %v2369 = vmul.f32 %v2327, %v2353
  %v2370 = vmul.f32 %v2327, %v2355
  %v2371 = vmul.f32 %v2327, %v2357
  %v2372 = vmul.f32 %v2327, %v2359
  %v2373 = vmul.f32 %v2327, %v2361
  %v2374 = vmul.f32 %v2327, %v2363
  %v2375 = vmul.f32 %v2327, %v2365
  %v2376 = vmul.f32 %v2329, %v2347
  %v2377 = vmul.f32 %v2329, %v2349
  %v2378 = vmul.f32 %v2329, %v2351
  %v2379 = vmul.f32 %v2329, %v2353
  %v2380 = vmul.f32 %v2329, %v2355
  %v2381 = vmul.f32 %v2329, %v2357
  %v2382 = vmul.f32 %v2329, %v2359
  %v2383 = vmul.f32 %v2329, %v2361
  %v2384 = vmul.f32 %v2329, %v2363
  %v2385 = vmul.f32 %v2329, %v2365
  %v2386 = vmul.f32 %v2331, %v2347
  %v2387 = vmul.f32 %v2331, %v2349
  %v2388 = vmul.f32 %v2331, %v2351
  %v2389 = vmul.f32 %v2331, %v2353
  %v2390 = vmul.f32 %v2331, %v2355
  %v2391 = vmul.f32 %v2331, %v2357
  %v2392 = vmul.f32 %v2331, %v2359
  %v2393 = vmul.f32 %v2331, %v2361
  %v2394 = vmul.f32 %v2331, %v2363
  %v2395 = vmul.f32 %v2331, %v2365
  %v2396 = vmul.f32 %v2333, %v2347
  %v2397 = vmul.f32 %v2333, %v2349
  %v2398 = vmul.f32 %v2333, %v2351
  %v2399 = vmul.f32 %v2333, %v2353
  %v2400 = vmul.f32 %v2333, %v2355
  %v2401 = vmul.f32 %v2333, %v2357
  %v2402 = vmul.f32 %v2333, %v2359
  %v2403 = vmul.f32 %v2333, %v2361
  %v2404 = vmul.f32 %v2333, %v2363
  %v2405 = vmul.f32 %v2333, %v2365
  %v2406 = vmul.f32 %v2335, %v2347
  %v2407 = vmul.f32 %v2335, %v2349
  %v2408 = vmul.f32 %v2335, %v2351
  %v2409 = vmul.f32 %v2335, %v2353
  %v2410 = vmul.f32 %v2335, %v2355
  %v2411 = vmul.f32 %v2335, %v2357
  %v2412 = vmul.f32 %v2335, %v2359
  %v2413 = vmul.f32 %v2335, %v2361
  %v2414 = vmul.f32 %v2335, %v2363
  %v2415 = vmul.f32 %v2335, %v2365
  %v2416 = vmul.f32 %v2337, %v2347
  %v2417 = vmul.f32 %v2337, %v2349
  %v2418 = vmul.f32 %v2337, %v2351
  %v2419 = vmul.f32 %v2337, %v2353
  %v2420 = vmul.f32 %v2337, %v2355
  %v2421 = vmul.f32 %v2337, %v2357
  %v2422 = vmul.f32 %v2337, %v2359
  %v2423 = vmul.f32 %v2337, %v2361
  %v2424 = vmul.f32 %v2337, %v2363
  %v2425 = vmul.f32 %v2337, %v2365
  %v2426 = vmul.f32 %v2339, %v2347
  %v2427 = vmul.f32 %v2339, %v2349
  %v2428 = vmul.f32 %v2339, %v2351
  %v2429 = vmul.f32 %v2339, %v2353
  %v2430 = vmul.f32 %v2339, %v2355
  %v2431 = vmul.f32 %v2339, %v2357
  %v2432 = vmul.f32 %v2339, %v2359
  %v2433 = vmul.f32 %v2339, %v2361
  %v2434 = vmul.f32 %v2339, %v2363
  %v2435 = vmul.f32 %v2339, %v2365
  %v2436 = vmul.f32 %v2341, %v2347
  %v2437 = vmul.f32 %v2341, %v2349
  %v2438 = vmul.f32 %v2341, %v2351
  %v2439 = vmul.f32 %v2341, %v2353
  %v2440 = vmul.f32 %v2341, %v2355
  %v2441 = vmul.f32 %v2341, %v2357
  %v2442 = vmul.f32 %v2341, %v2359
  %v2443 = vmul.f32 %v2341, %v2361
  %v2444 = vmul.f32 %v2341, %v2363
  %v2445 = vmul.f32 %v2341, %v2365
  %v2446 = vmul.f32 %v2343, %v2347
  %v2447 = vmul.f32 %v2343, %v2349
  %v2448 = vmul.f32 %v2343, %v2351
  %v2449 = vmul.f32 %v2343, %v2353
  %v2450 = vmul.f32 %v2343, %v2355
  %v2451 = vmul.f32 %v2343, %v2357
  %v2452 = vmul.f32 %v2343, %v2359
  %v2453 = vmul.f32 %v2343, %v2361
  %v2454 = vmul.f32 %v2343, %v2363
  %v2455 = vmul.f32 %v2343, %v2365
  %v2456 = vmul.f32 %v2345, %v2347
  %v2457 = vmul.f32 %v2345, %v2349
  %v2458 = vmul.f32 %v2345, %v2351
  %v2459 = vmul.f32 %v2345, %v2353
  %v2460 = vmul.f32 %v2345, %v2355
  %v2461 = vmul.f32 %v2345, %v2357
  %v2462 = vmul.f32 %v2345, %v2359
  %v2463 = vmul.f32 %v2345, %v2361
  %v2464 = vmul.f32 %v2345, %v2363
  %v2465 = vmul.f32 %v2345, %v2365
  %v2466 = vadd.f32 %v2226, %v2366
  %v2467 = vadd.f32 %v2227, %v2367
  %v2468 = vadd.f32 %v2228, %v2368
  %v2469 = vadd.f32 %v2229, %v2369
  %v2470 = vadd.f32 %v2230, %v2370
  %v2471 = vadd.f32 %v2231, %v2371
  %v2472 = vadd.f32 %v2232, %v2372
  %v2473 = vadd.f32 %v2233, %v2373
  %v2474 = vadd.f32 %v2234, %v2374
  %v2475 = vadd.f32 %v2235, %v2375
  %v2476 = vadd.f32 %v2236, %v2376
  %v2477 = vadd.f32 %v2237, %v2377
  %v2478 = vadd.f32 %v2238, %v2378
  %v2479 = vadd.f32 %v2239, %v2379
  %v2480 = vadd.f32 %v2240, %v2380
  %v2481 = vadd.f32 %v2241, %v2381
  %v2482 = vadd.f32 %v2242, %v2382
  %v2483 = vadd.f32 %v2243, %v2383
  %v2484 = vadd.f32 %v2244, %v2384
  %v2485 = vadd.f32 %v2245, %v2385
  %v2486 = vadd.f32 %v2246, %v2386
  %v2487 = vadd.f32 %v2247, %v2387
  %v2488 = vadd.f32 %v2248, %v2388
  %v2489 = vadd.f32 %v2249, %v2389
  %v2490 = vadd.f32 %v2250, %v2390
  %v2491 = vadd.f32 %v2251, %v2391
  %v2492 = vadd.f32 %v2252, %v2392
  %v2493 = vadd.f32 %v2253, %v2393
  %v2494 = vadd.f32 %v2254, %v2394
  %v2495 = vadd.f32 %v2255, %v2395
  %v2496 = vadd.f32 %v2256, %v2396
  %v2497 = vadd.f32 %v2257, %v2397
  %v2498 = vadd.f32 %v2258, %v2398
  %v2499 = vadd.f32 %v2259, %v2399
  %v2500 = vadd.f32 %v2260, %v2400
  %v2501 = vadd.f32 %v2261, %v2401
  %v2502 = vadd.f32 %v2262, %v2402
  %v2503 = vadd.f32 %v2263, %v2403
  %v2504 = vadd.f32 %v2264, %v2404
  %v2505 = vadd.f32 %v2265, %v2405
  %v2506 = vadd.f32 %v2266, %v2406
  %v2507 = vadd.f32 %v2267, %v2407
  %v2508 = vadd.f32 %v2268, %v2408
  %v2509 = vadd.f32 %v2269, %v2409
  %v2510 = vadd.f32 %v2270, %v2410
  %v2511 = vadd.f32 %v2271, %v2411
  %v2512 = vadd.f32 %v2272, %v2412
  %v2513 = vadd.f32 %v2273, %v2413
  %v2514 = vadd.f32 %v2274, %v2414
  %v2515 = vadd.f32 %v2275, %v2415
  %v2516 = vadd.f32 %v2276, %v2416
  %v2517 = vadd.f32 %v2277, %v2417
  %v2518 = vadd.f32 %v2278, %v2418
  %v2519 = vadd.f32 %v2279, %v2419
  %v2520 = vadd.f32 %v2280, %v2420
  %v2521 = vadd.f32 %v2281, %v2421
  %v2522 = vadd.f32 %v2282, %v2422
  %v2523 = vadd.f32 %v2283, %v2423
  %v2524 = vadd.f32 %v2284, %v2424
  %v2525 = vadd.f32 %v2285, %v2425
  %v2526 = vadd.f32 %v2286, %v2426
  %v2527 = vadd.f32 %v2287, %v2427
  %v2528 = vadd.f32 %v2288, %v2428
  %v2529 = vadd.f32 %v2289, %v2429
  %v2530 = vadd.f32 %v2290, %v2430
  %v2531 = vadd.f32 %v2291, %v2431
  %v2532 = vadd.f32 %v2292, %v2432
  %v2533 = vadd.f32 %v2293, %v2433
  %v2534 = vadd.f32 %v2294, %v2434
  %v2535 = vadd.f32 %v2295, %v2435
  %v2536 = vadd.f32 %v2296, %v2436
  %v2537 = vadd.f32 %v2297, %v2437
  %v2538 = vadd.f32 %v2298, %v2438
  %v2539 = vadd.f32 %v2299, %v2439
  %v2540 = vadd.f32 %v2300, %v2440
  %v2541 = vadd.f32 %v2301, %v2441
  %v2542 = vadd.f32 %v2302, %v2442
  %v2543 = vadd.f32 %v2303, %v2443
  %v2544 = vadd.f32 %v2304, %v2444
  %v2545 = vadd.f32 %v2305, %v2445
  %v2546 = vadd.f32 %v2306, %v2446
  %v2547 = vadd.f32 %v2307, %v2447
  %v2548 = vadd.f32 %v2308, %v2448
  %v2549 = vadd.f32 %v2309, %v2449
  %v2550 = vadd.f32 %v2310, %v2450
  %v2551 = vadd.f32 %v2311, %v2451
  %v2552 = vadd.f32 %v2312, %v2452
  %v2553 = vadd.f32 %v2313, %v2453
  %v2554 = vadd.f32 %v2314, %v2454
  %v2555 = vadd.f32 %v2315, %v2455
  %v2556 = vadd.f32 %v2316, %v2456
  %v2557 = vadd.f32 %v2317, %v2457
  %v2558 = vadd.f32 %v2318, %v2458
  %v2559 = vadd.f32 %v2319, %v2459
  %v2560 = vadd.f32 %v2320, %v2460
  %v2561 = vadd.f32 %v2321, %v2461
  %v2562 = vadd.f32 %v2322, %v2462
  %v2563 = vadd.f32 %v2323, %v2463
  %v2564 = vadd.f32 %v2324, %v2464
  %v2565 = vadd.f32 %v2325, %v2465
  %2566 = vrot.lane.b32.xlu0 %v1953, 64
  %v2567 = vpop.permute.xlu0 %2566
  %2568 = vrot.lane.b32.xlu0 %v1959, 64
  %v2569 = vpop.permute.xlu0 %2568
  %2570 = vrot.lane.b32.xlu0 %v1965, 64
  %v2571 = vpop.permute.xlu0 %2570
  %2572 = vrot.lane.b32.xlu0 %v1971, 64
  %v2573 = vpop.permute.xlu0 %2572
  %2574 = vrot.lane.b32.xlu0 %v1977, 64
  %v2575 = vpop.permute.xlu0 %2574
  %2576 = vrot.lane.b32.xlu0 %v1983, 64
  %v2577 = vpop.permute.xlu0 %2576
  %2578 = vrot.lane.b32.xlu0 %v1989, 64
  %v2579 = vpop.permute.xlu0 %2578
  %2580 = vrot.lane.b32.xlu0 %v1995, 64
  %v2581 = vpop.permute.xlu0 %2580
  %2582 = vrot.lane.b32.xlu0 %v2001, 64
  %v2583 = vpop.permute.xlu0 %2582
  %2584 = vrot.lane.b32.xlu0 %v2007, 64
  %v2585 = vpop.permute.xlu0 %2584
  %2586 = vrot.lane.b32.xlu0 %v1955, 64
  %v2587 = vpop.permute.xlu0 %2586
  %2588 = vrot.lane.b32.xlu0 %v1961, 64
  %v2589 = vpop.permute.xlu0 %2588
  %2590 = vrot.lane.b32.xlu0 %v1967, 64
  %v2591 = vpop.permute.xlu0 %2590
  %2592 = vrot.lane.b32.xlu0 %v1973, 64
  %v2593 = vpop.permute.xlu0 %2592
  %2594 = vrot.lane.b32.xlu0 %v1979, 64
  %v2595 = vpop.permute.xlu0 %2594
  %2596 = vrot.lane.b32.xlu0 %v1985, 64
  %v2597 = vpop.permute.xlu0 %2596
  %2598 = vrot.lane.b32.xlu0 %v1991, 64
  %v2599 = vpop.permute.xlu0 %2598
  %2600 = vrot.lane.b32.xlu0 %v1997, 64
  %v2601 = vpop.permute.xlu0 %2600
  %2602 = vrot.lane.b32.xlu0 %v2003, 64
  %v2603 = vpop.permute.xlu0 %2602
  %2604 = vrot.lane.b32.xlu0 %v2009, 64
  %v2605 = vpop.permute.xlu0 %2604
  %v2606 = vmul.f32 %v2567, %v2587
  %v2607 = vmul.f32 %v2567, %v2589
  %v2608 = vmul.f32 %v2567, %v2591
  %v2609 = vmul.f32 %v2567, %v2593
  %v2610 = vmul.f32 %v2567, %v2595
  %v2611 = vmul.f32 %v2567, %v2597
  %v2612 = vmul.f32 %v2567, %v2599
  %v2613 = vmul.f32 %v2567, %v2601
  %v2614 = vmul.f32 %v2567, %v2603
  %v2615 = vmul.f32 %v2567, %v2605
  %v2616 = vmul.f32 %v2569, %v2587
  %v2617 = vmul.f32 %v2569, %v2589
  %v2618 = vmul.f32 %v2569, %v2591
  %v2619 = vmul.f32 %v2569, %v2593
  %v2620 = vmul.f32 %v2569, %v2595
  %v2621 = vmul.f32 %v2569, %v2597
  %v2622 = vmul.f32 %v2569, %v2599
  %v2623 = vmul.f32 %v2569, %v2601
  %v2624 = vmul.f32 %v2569, %v2603
  %v2625 = vmul.f32 %v2569, %v2605
  %v2626 = vmul.f32 %v2571, %v2587
  %v2627 = vmul.f32 %v2571, %v2589
  %v2628 = vmul.f32 %v2571, %v2591
  %v2629 = vmul.f32 %v2571, %v2593
  %v2630 = vmul.f32 %v2571, %v2595
  %v2631 = vmul.f32 %v2571, %v2597
  %v2632 = vmul.f32 %v2571, %v2599
  %v2633 = vmul.f32 %v2571, %v2601
  %v2634 = vmul.f32 %v2571, %v2603
  %v2635 = vmul.f32 %v2571, %v2605
  %v2636 = vmul.f32 %v2573, %v2587
  %v2637 = vmul.f32 %v2573, %v2589
  %v2638 = vmul.f32 %v2573, %v2591
  %v2639 = vmul.f32 %v2573, %v2593
  %v2640 = vmul.f32 %v2573, %v2595
  %v2641 = vmul.f32 %v2573, %v2597
  %v2642 = vmul.f32 %v2573, %v2599
  %v2643 = vmul.f32 %v2573, %v2601
  %v2644 = vmul.f32 %v2573, %v2603
  %v2645 = vmul.f32 %v2573, %v2605
  %v2646 = vmul.f32 %v2575, %v2587
  %v2647 = vmul.f32 %v2575, %v2589
  %v2648 = vmul.f32 %v2575, %v2591
  %v2649 = vmul.f32 %v2575, %v2593
  %v2650 = vmul.f32 %v2575, %v2595
  %v2651 = vmul.f32 %v2575, %v2597
  %v2652 = vmul.f32 %v2575, %v2599
  %v2653 = vmul.f32 %v2575, %v2601
  %v2654 = vmul.f32 %v2575, %v2603
  %v2655 = vmul.f32 %v2575, %v2605
  %v2656 = vmul.f32 %v2577, %v2587
  %v2657 = vmul.f32 %v2577, %v2589
  %v2658 = vmul.f32 %v2577, %v2591
  %v2659 = vmul.f32 %v2577, %v2593
  %v2660 = vmul.f32 %v2577, %v2595
  %v2661 = vmul.f32 %v2577, %v2597
  %v2662 = vmul.f32 %v2577, %v2599
  %v2663 = vmul.f32 %v2577, %v2601
  %v2664 = vmul.f32 %v2577, %v2603
  %v2665 = vmul.f32 %v2577, %v2605
  %v2666 = vmul.f32 %v2579, %v2587
  %v2667 = vmul.f32 %v2579, %v2589
  %v2668 = vmul.f32 %v2579, %v2591
  %v2669 = vmul.f32 %v2579, %v2593
  %v2670 = vmul.f32 %v2579, %v2595
  %v2671 = vmul.f32 %v2579, %v2597
  %v2672 = vmul.f32 %v2579, %v2599
  %v2673 = vmul.f32 %v2579, %v2601
  %v2674 = vmul.f32 %v2579, %v2603
  %v2675 = vmul.f32 %v2579, %v2605
  %v2676 = vmul.f32 %v2581, %v2587
  %v2677 = vmul.f32 %v2581, %v2589
  %v2678 = vmul.f32 %v2581, %v2591
  %v2679 = vmul.f32 %v2581, %v2593
  %v2680 = vmul.f32 %v2581, %v2595
  %v2681 = vmul.f32 %v2581, %v2597
  %v2682 = vmul.f32 %v2581, %v2599
  %v2683 = vmul.f32 %v2581, %v2601
  %v2684 = vmul.f32 %v2581, %v2603
  %v2685 = vmul.f32 %v2581, %v2605
  %v2686 = vmul.f32 %v2583, %v2587
  %v2687 = vmul.f32 %v2583, %v2589
  %v2688 = vmul.f32 %v2583, %v2591
  %v2689 = vmul.f32 %v2583, %v2593
  %v2690 = vmul.f32 %v2583, %v2595
  %v2691 = vmul.f32 %v2583, %v2597
  %v2692 = vmul.f32 %v2583, %v2599
  %v2693 = vmul.f32 %v2583, %v2601
  %v2694 = vmul.f32 %v2583, %v2603
  %v2695 = vmul.f32 %v2583, %v2605
  %v2696 = vmul.f32 %v2585, %v2587
  %v2697 = vmul.f32 %v2585, %v2589
  %v2698 = vmul.f32 %v2585, %v2591
  %v2699 = vmul.f32 %v2585, %v2593
  %v2700 = vmul.f32 %v2585, %v2595
  %v2701 = vmul.f32 %v2585, %v2597
  %v2702 = vmul.f32 %v2585, %v2599
  %v2703 = vmul.f32 %v2585, %v2601
  %v2704 = vmul.f32 %v2585, %v2603
  %v2705 = vmul.f32 %v2585, %v2605
  %v2706 = vadd.f32 %v2466, %v2606
  %v2707 = vadd.f32 %v2467, %v2607
  %v2708 = vadd.f32 %v2468, %v2608
  %v2709 = vadd.f32 %v2469, %v2609
  %v2710 = vadd.f32 %v2470, %v2610
  %v2711 = vadd.f32 %v2471, %v2611
  %v2712 = vadd.f32 %v2472, %v2612
  %v2713 = vadd.f32 %v2473, %v2613
  %v2714 = vadd.f32 %v2474, %v2614
  %v2715 = vadd.f32 %v2475, %v2615
  %v2716 = vadd.f32 %v2476, %v2616
  %v2717 = vadd.f32 %v2477, %v2617
  %v2718 = vadd.f32 %v2478, %v2618
  %v2719 = vadd.f32 %v2479, %v2619
  %v2720 = vadd.f32 %v2480, %v2620
  %v2721 = vadd.f32 %v2481, %v2621
  %v2722 = vadd.f32 %v2482, %v2622
  %v2723 = vadd.f32 %v2483, %v2623
  %v2724 = vadd.f32 %v2484, %v2624
  %v2725 = vadd.f32 %v2485, %v2625
  %v2726 = vadd.f32 %v2486, %v2626
  %v2727 = vadd.f32 %v2487, %v2627
  %v2728 = vadd.f32 %v2488, %v2628
  %v2729 = vadd.f32 %v2489, %v2629
  %v2730 = vadd.f32 %v2490, %v2630
  %v2731 = vadd.f32 %v2491, %v2631
  %v2732 = vadd.f32 %v2492, %v2632
  %v2733 = vadd.f32 %v2493, %v2633
  %v2734 = vadd.f32 %v2494, %v2634
  %v2735 = vadd.f32 %v2495, %v2635
  %v2736 = vadd.f32 %v2496, %v2636
  %v2737 = vadd.f32 %v2497, %v2637
  %v2738 = vadd.f32 %v2498, %v2638
  %v2739 = vadd.f32 %v2499, %v2639
  %v2740 = vadd.f32 %v2500, %v2640
  %v2741 = vadd.f32 %v2501, %v2641
  %v2742 = vadd.f32 %v2502, %v2642
  %v2743 = vadd.f32 %v2503, %v2643
  %v2744 = vadd.f32 %v2504, %v2644
  %v2745 = vadd.f32 %v2505, %v2645
  %v2746 = vadd.f32 %v2506, %v2646
  %v2747 = vadd.f32 %v2507, %v2647
  %v2748 = vadd.f32 %v2508, %v2648
  %v2749 = vadd.f32 %v2509, %v2649
  %v2750 = vadd.f32 %v2510, %v2650
  %v2751 = vadd.f32 %v2511, %v2651
  %v2752 = vadd.f32 %v2512, %v2652
  %v2753 = vadd.f32 %v2513, %v2653
  %v2754 = vadd.f32 %v2514, %v2654
  %v2755 = vadd.f32 %v2515, %v2655
  %v2756 = vadd.f32 %v2516, %v2656
  %v2757 = vadd.f32 %v2517, %v2657
  %v2758 = vadd.f32 %v2518, %v2658
  %v2759 = vadd.f32 %v2519, %v2659
  %v2760 = vadd.f32 %v2520, %v2660
  %v2761 = vadd.f32 %v2521, %v2661
  %v2762 = vadd.f32 %v2522, %v2662
  %v2763 = vadd.f32 %v2523, %v2663
  %v2764 = vadd.f32 %v2524, %v2664
  %v2765 = vadd.f32 %v2525, %v2665
  %v2766 = vadd.f32 %v2526, %v2666
  %v2767 = vadd.f32 %v2527, %v2667
  %v2768 = vadd.f32 %v2528, %v2668
  %v2769 = vadd.f32 %v2529, %v2669
  %v2770 = vadd.f32 %v2530, %v2670
  %v2771 = vadd.f32 %v2531, %v2671
  %v2772 = vadd.f32 %v2532, %v2672
  %v2773 = vadd.f32 %v2533, %v2673
  %v2774 = vadd.f32 %v2534, %v2674
  %v2775 = vadd.f32 %v2535, %v2675
  %v2776 = vadd.f32 %v2536, %v2676
  %v2777 = vadd.f32 %v2537, %v2677
  %v2778 = vadd.f32 %v2538, %v2678
  %v2779 = vadd.f32 %v2539, %v2679
  %v2780 = vadd.f32 %v2540, %v2680
  %v2781 = vadd.f32 %v2541, %v2681
  %v2782 = vadd.f32 %v2542, %v2682
  %v2783 = vadd.f32 %v2543, %v2683
  %v2784 = vadd.f32 %v2544, %v2684
  %v2785 = vadd.f32 %v2545, %v2685
  %v2786 = vadd.f32 %v2546, %v2686
  %v2787 = vadd.f32 %v2547, %v2687
  %v2788 = vadd.f32 %v2548, %v2688
  %v2789 = vadd.f32 %v2549, %v2689
  %v2790 = vadd.f32 %v2550, %v2690
  %v2791 = vadd.f32 %v2551, %v2691
  %v2792 = vadd.f32 %v2552, %v2692
  %v2793 = vadd.f32 %v2553, %v2693
  %v2794 = vadd.f32 %v2554, %v2694
  %v2795 = vadd.f32 %v2555, %v2695
  %v2796 = vadd.f32 %v2556, %v2696
  %v2797 = vadd.f32 %v2557, %v2697
  %v2798 = vadd.f32 %v2558, %v2698
  %v2799 = vadd.f32 %v2559, %v2699
  %v2800 = vadd.f32 %v2560, %v2700
  %v2801 = vadd.f32 %v2561, %v2701
  %v2802 = vadd.f32 %v2562, %v2702
  %v2803 = vadd.f32 %v2563, %v2703
  %v2804 = vadd.f32 %v2564, %v2704
  %v2805 = vadd.f32 %v2565, %v2705
  %2806 = vrot.lane.b32.xlu0 %v1953, 96
  %v2807 = vpop.permute.xlu0 %2806
  %2808 = vrot.lane.b32.xlu0 %v1959, 96
  %v2809 = vpop.permute.xlu0 %2808
  %2810 = vrot.lane.b32.xlu0 %v1965, 96
  %v2811 = vpop.permute.xlu0 %2810
  %2812 = vrot.lane.b32.xlu0 %v1971, 96
  %v2813 = vpop.permute.xlu0 %2812
  %2814 = vrot.lane.b32.xlu0 %v1977, 96
  %v2815 = vpop.permute.xlu0 %2814
  %2816 = vrot.lane.b32.xlu0 %v1983, 96
  %v2817 = vpop.permute.xlu0 %2816
  %2818 = vrot.lane.b32.xlu0 %v1989, 96
  %v2819 = vpop.permute.xlu0 %2818
  %2820 = vrot.lane.b32.xlu0 %v1995, 96
  %v2821 = vpop.permute.xlu0 %2820
  %2822 = vrot.lane.b32.xlu0 %v2001, 96
  %v2823 = vpop.permute.xlu0 %2822
  %2824 = vrot.lane.b32.xlu0 %v2007, 96
  %v2825 = vpop.permute.xlu0 %2824
  %2826 = vrot.lane.b32.xlu0 %v1955, 96
  %v2827 = vpop.permute.xlu0 %2826
  %2828 = vrot.lane.b32.xlu0 %v1961, 96
  %v2829 = vpop.permute.xlu0 %2828
  %2830 = vrot.lane.b32.xlu0 %v1967, 96
  %v2831 = vpop.permute.xlu0 %2830
  %2832 = vrot.lane.b32.xlu0 %v1973, 96
  %v2833 = vpop.permute.xlu0 %2832
  %2834 = vrot.lane.b32.xlu0 %v1979, 96
  %v2835 = vpop.permute.xlu0 %2834
  %2836 = vrot.lane.b32.xlu0 %v1985, 96
  %v2837 = vpop.permute.xlu0 %2836
  %2838 = vrot.lane.b32.xlu0 %v1991, 96
  %v2839 = vpop.permute.xlu0 %2838
  %2840 = vrot.lane.b32.xlu0 %v1997, 96
  %v2841 = vpop.permute.xlu0 %2840
  %2842 = vrot.lane.b32.xlu0 %v2003, 96
  %v2843 = vpop.permute.xlu0 %2842
  %2844 = vrot.lane.b32.xlu0 %v2009, 96
  %v2845 = vpop.permute.xlu0 %2844
  %v2846 = vmul.f32 %v2807, %v2827
  %v2847 = vmul.f32 %v2807, %v2829
  %v2848 = vmul.f32 %v2807, %v2831
  %v2849 = vmul.f32 %v2807, %v2833
  %v2850 = vmul.f32 %v2807, %v2835
  %v2851 = vmul.f32 %v2807, %v2837
  %v2852 = vmul.f32 %v2807, %v2839
  %v2853 = vmul.f32 %v2807, %v2841
  %v2854 = vmul.f32 %v2807, %v2843
  %v2855 = vmul.f32 %v2807, %v2845
  %v2856 = vmul.f32 %v2809, %v2827
  %v2857 = vmul.f32 %v2809, %v2829
  %v2858 = vmul.f32 %v2809, %v2831
  %v2859 = vmul.f32 %v2809, %v2833
  %v2860 = vmul.f32 %v2809, %v2835
  %v2861 = vmul.f32 %v2809, %v2837
  %v2862 = vmul.f32 %v2809, %v2839
  %v2863 = vmul.f32 %v2809, %v2841
  %v2864 = vmul.f32 %v2809, %v2843
  %v2865 = vmul.f32 %v2809, %v2845
  %v2866 = vmul.f32 %v2811, %v2827
  %v2867 = vmul.f32 %v2811, %v2829
  %v2868 = vmul.f32 %v2811, %v2831
  %v2869 = vmul.f32 %v2811, %v2833
  %v2870 = vmul.f32 %v2811, %v2835
  %v2871 = vmul.f32 %v2811, %v2837
  %v2872 = vmul.f32 %v2811, %v2839
  %v2873 = vmul.f32 %v2811, %v2841
  %v2874 = vmul.f32 %v2811, %v2843
  %v2875 = vmul.f32 %v2811, %v2845
  %v2876 = vmul.f32 %v2813, %v2827
  %v2877 = vmul.f32 %v2813, %v2829
  %v2878 = vmul.f32 %v2813, %v2831
  %v2879 = vmul.f32 %v2813, %v2833
  %v2880 = vmul.f32 %v2813, %v2835
  %v2881 = vmul.f32 %v2813, %v2837
  %v2882 = vmul.f32 %v2813, %v2839
  %v2883 = vmul.f32 %v2813, %v2841
  %v2884 = vmul.f32 %v2813, %v2843
  %v2885 = vmul.f32 %v2813, %v2845
  %v2886 = vmul.f32 %v2815, %v2827
  %v2887 = vmul.f32 %v2815, %v2829
  %v2888 = vmul.f32 %v2815, %v2831
  %v2889 = vmul.f32 %v2815, %v2833
  %v2890 = vmul.f32 %v2815, %v2835
  %v2891 = vmul.f32 %v2815, %v2837
  %v2892 = vmul.f32 %v2815, %v2839
  %v2893 = vmul.f32 %v2815, %v2841
  %v2894 = vmul.f32 %v2815, %v2843
  %v2895 = vmul.f32 %v2815, %v2845
  %v2896 = vmul.f32 %v2817, %v2827
  %v2897 = vmul.f32 %v2817, %v2829
  %v2898 = vmul.f32 %v2817, %v2831
  %v2899 = vmul.f32 %v2817, %v2833
  %v2900 = vmul.f32 %v2817, %v2835
  %v2901 = vmul.f32 %v2817, %v2837
  %v2902 = vmul.f32 %v2817, %v2839
  %v2903 = vmul.f32 %v2817, %v2841
  %v2904 = vmul.f32 %v2817, %v2843
  %v2905 = vmul.f32 %v2817, %v2845
  %v2906 = vmul.f32 %v2819, %v2827
  %v2907 = vmul.f32 %v2819, %v2829
  %v2908 = vmul.f32 %v2819, %v2831
  %v2909 = vmul.f32 %v2819, %v2833
  %v2910 = vmul.f32 %v2819, %v2835
  %v2911 = vmul.f32 %v2819, %v2837
  %v2912 = vmul.f32 %v2819, %v2839
  %v2913 = vmul.f32 %v2819, %v2841
  %v2914 = vmul.f32 %v2819, %v2843
  %v2915 = vmul.f32 %v2819, %v2845
  %v2916 = vmul.f32 %v2821, %v2827
  %v2917 = vmul.f32 %v2821, %v2829
  %v2918 = vmul.f32 %v2821, %v2831
  %v2919 = vmul.f32 %v2821, %v2833
  %v2920 = vmul.f32 %v2821, %v2835
  %v2921 = vmul.f32 %v2821, %v2837
  %v2922 = vmul.f32 %v2821, %v2839
  %v2923 = vmul.f32 %v2821, %v2841
  %v2924 = vmul.f32 %v2821, %v2843
  %v2925 = vmul.f32 %v2821, %v2845
  %v2926 = vmul.f32 %v2823, %v2827
  %v2927 = vmul.f32 %v2823, %v2829
  %v2928 = vmul.f32 %v2823, %v2831
  %v2929 = vmul.f32 %v2823, %v2833
  %v2930 = vmul.f32 %v2823, %v2835
  %v2931 = vmul.f32 %v2823, %v2837
  %v2932 = vmul.f32 %v2823, %v2839
  %v2933 = vmul.f32 %v2823, %v2841
  %v2934 = vmul.f32 %v2823, %v2843
  %v2935 = vmul.f32 %v2823, %v2845
  %v2936 = vmul.f32 %v2825, %v2827
  %v2937 = vmul.f32 %v2825, %v2829
  %v2938 = vmul.f32 %v2825, %v2831
  %v2939 = vmul.f32 %v2825, %v2833
  %v2940 = vmul.f32 %v2825, %v2835
  %v2941 = vmul.f32 %v2825, %v2837
  %v2942 = vmul.f32 %v2825, %v2839
  %v2943 = vmul.f32 %v2825, %v2841
  %v2944 = vmul.f32 %v2825, %v2843
  %v2945 = vmul.f32 %v2825, %v2845
  %v2946 = vadd.f32 %v2706, %v2846
  %v2947 = vadd.f32 %v2707, %v2847
  %v2948 = vadd.f32 %v2708, %v2848
  %v2949 = vadd.f32 %v2709, %v2849
  %v2950 = vadd.f32 %v2710, %v2850
  %v2951 = vadd.f32 %v2711, %v2851
  %v2952 = vadd.f32 %v2712, %v2852
  %v2953 = vadd.f32 %v2713, %v2853
  %v2954 = vadd.f32 %v2714, %v2854
  %v2955 = vadd.f32 %v2715, %v2855
  %v2956 = vadd.f32 %v2716, %v2856
  %v2957 = vadd.f32 %v2717, %v2857
  %v2958 = vadd.f32 %v2718, %v2858
  %v2959 = vadd.f32 %v2719, %v2859
  %v2960 = vadd.f32 %v2720, %v2860
  %v2961 = vadd.f32 %v2721, %v2861
  %v2962 = vadd.f32 %v2722, %v2862
  %v2963 = vadd.f32 %v2723, %v2863
  %v2964 = vadd.f32 %v2724, %v2864
  %v2965 = vadd.f32 %v2725, %v2865
  %v2966 = vadd.f32 %v2726, %v2866
  %v2967 = vadd.f32 %v2727, %v2867
  %v2968 = vadd.f32 %v2728, %v2868
  %v2969 = vadd.f32 %v2729, %v2869
  %v2970 = vadd.f32 %v2730, %v2870
  %v2971 = vadd.f32 %v2731, %v2871
  %v2972 = vadd.f32 %v2732, %v2872
  %v2973 = vadd.f32 %v2733, %v2873
  %v2974 = vadd.f32 %v2734, %v2874
  %v2975 = vadd.f32 %v2735, %v2875
  %v2976 = vadd.f32 %v2736, %v2876
  %v2977 = vadd.f32 %v2737, %v2877
  %v2978 = vadd.f32 %v2738, %v2878
  %v2979 = vadd.f32 %v2739, %v2879
  %v2980 = vadd.f32 %v2740, %v2880
  %v2981 = vadd.f32 %v2741, %v2881
  %v2982 = vadd.f32 %v2742, %v2882
  %v2983 = vadd.f32 %v2743, %v2883
  %v2984 = vadd.f32 %v2744, %v2884
  %v2985 = vadd.f32 %v2745, %v2885
  %v2986 = vadd.f32 %v2746, %v2886
  %v2987 = vadd.f32 %v2747, %v2887
  %v2988 = vadd.f32 %v2748, %v2888
  %v2989 = vadd.f32 %v2749, %v2889
  %v2990 = vadd.f32 %v2750, %v2890
  %v2991 = vadd.f32 %v2751, %v2891
  %v2992 = vadd.f32 %v2752, %v2892
  %v2993 = vadd.f32 %v2753, %v2893
  %v2994 = vadd.f32 %v2754, %v2894
  %v2995 = vadd.f32 %v2755, %v2895
  %v2996 = vadd.f32 %v2756, %v2896
  %v2997 = vadd.f32 %v2757, %v2897
  %v2998 = vadd.f32 %v2758, %v2898
  %v2999 = vadd.f32 %v2759, %v2899
  %v3000 = vadd.f32 %v2760, %v2900
  %v3001 = vadd.f32 %v2761, %v2901
  %v3002 = vadd.f32 %v2762, %v2902
  %v3003 = vadd.f32 %v2763, %v2903
  %v3004 = vadd.f32 %v2764, %v2904
  %v3005 = vadd.f32 %v2765, %v2905
  %v3006 = vadd.f32 %v2766, %v2906
  %v3007 = vadd.f32 %v2767, %v2907
  %v3008 = vadd.f32 %v2768, %v2908
  %v3009 = vadd.f32 %v2769, %v2909
  %v3010 = vadd.f32 %v2770, %v2910
  %v3011 = vadd.f32 %v2771, %v2911
  %v3012 = vadd.f32 %v2772, %v2912
  %v3013 = vadd.f32 %v2773, %v2913
  %v3014 = vadd.f32 %v2774, %v2914
  %v3015 = vadd.f32 %v2775, %v2915
  %v3016 = vadd.f32 %v2776, %v2916
  %v3017 = vadd.f32 %v2777, %v2917
  %v3018 = vadd.f32 %v2778, %v2918
  %v3019 = vadd.f32 %v2779, %v2919
  %v3020 = vadd.f32 %v2780, %v2920
  %v3021 = vadd.f32 %v2781, %v2921
  %v3022 = vadd.f32 %v2782, %v2922
  %v3023 = vadd.f32 %v2783, %v2923
  %v3024 = vadd.f32 %v2784, %v2924
  %v3025 = vadd.f32 %v2785, %v2925
  %v3026 = vadd.f32 %v2786, %v2926
  %v3027 = vadd.f32 %v2787, %v2927
  %v3028 = vadd.f32 %v2788, %v2928
  %v3029 = vadd.f32 %v2789, %v2929
  %v3030 = vadd.f32 %v2790, %v2930
  %v3031 = vadd.f32 %v2791, %v2931
  %v3032 = vadd.f32 %v2792, %v2932
  %v3033 = vadd.f32 %v2793, %v2933
  %v3034 = vadd.f32 %v2794, %v2934
  %v3035 = vadd.f32 %v2795, %v2935
  %v3036 = vadd.f32 %v2796, %v2936
  %v3037 = vadd.f32 %v2797, %v2937
  %v3038 = vadd.f32 %v2798, %v2938
  %v3039 = vadd.f32 %v2799, %v2939
  %v3040 = vadd.f32 %v2800, %v2940
  %v3041 = vadd.f32 %v2801, %v2941
  %v3042 = vadd.f32 %v2802, %v2942
  %v3043 = vadd.f32 %v2803, %v2943
  %v3044 = vadd.f32 %v2804, %v2944
  %v3045 = vadd.f32 %v2805, %v2945
  %v3046 = vmax.f32 %v2946, %v2947
  %v3047 = vmax.f32 %v3046, %v2948
  %v3048 = vmax.f32 %v3047, %v2949
  %v3049 = vmax.f32 %v3048, %v2950
  %v3050 = vmax.f32 %v3049, %v2951
  %v3051 = vmax.f32 %v3050, %v2952
  %v3052 = vmax.f32 %v3051, %v2953
  %v3053 = vmax.f32 %v3052, %v2954
  %v3054 = vmax.f32 %v3053, %v2955
  %v3055 = vmax.f32 %v2956, %v2957
  %v3056 = vmax.f32 %v3055, %v2958
  %v3057 = vmax.f32 %v3056, %v2959
  %v3058 = vmax.f32 %v3057, %v2960
  %v3059 = vmax.f32 %v3058, %v2961
  %v3060 = vmax.f32 %v3059, %v2962
  %v3061 = vmax.f32 %v3060, %v2963
  %v3062 = vmax.f32 %v3061, %v2964
  %v3063 = vmax.f32 %v3062, %v2965
  %v3064 = vmax.f32 %v2966, %v2967
  %v3065 = vmax.f32 %v3064, %v2968
  %v3066 = vmax.f32 %v3065, %v2969
  %v3067 = vmax.f32 %v3066, %v2970
  %v3068 = vmax.f32 %v3067, %v2971
  %v3069 = vmax.f32 %v3068, %v2972
  %v3070 = vmax.f32 %v3069, %v2973
  %v3071 = vmax.f32 %v3070, %v2974
  %v3072 = vmax.f32 %v3071, %v2975
  %v3073 = vmax.f32 %v2976, %v2977
  %v3074 = vmax.f32 %v3073, %v2978
  %v3075 = vmax.f32 %v3074, %v2979
  %v3076 = vmax.f32 %v3075, %v2980
  %v3077 = vmax.f32 %v3076, %v2981
  %v3078 = vmax.f32 %v3077, %v2982
  %v3079 = vmax.f32 %v3078, %v2983
  %v3080 = vmax.f32 %v3079, %v2984
  %v3081 = vmax.f32 %v3080, %v2985
  %v3082 = vmax.f32 %v2986, %v2987
  %v3083 = vmax.f32 %v3082, %v2988
  %v3084 = vmax.f32 %v3083, %v2989
  %v3085 = vmax.f32 %v3084, %v2990
  %v3086 = vmax.f32 %v3085, %v2991
  %v3087 = vmax.f32 %v3086, %v2992
  %v3088 = vmax.f32 %v3087, %v2993
  %v3089 = vmax.f32 %v3088, %v2994
  %v3090 = vmax.f32 %v3089, %v2995
  %v3091 = vmax.f32 %v2996, %v2997
  %v3092 = vmax.f32 %v3091, %v2998
  %v3093 = vmax.f32 %v3092, %v2999
  %v3094 = vmax.f32 %v3093, %v3000
  %v3095 = vmax.f32 %v3094, %v3001
  %v3096 = vmax.f32 %v3095, %v3002
  %v3097 = vmax.f32 %v3096, %v3003
  %v3098 = vmax.f32 %v3097, %v3004
  %v3099 = vmax.f32 %v3098, %v3005
  %v3100 = vmax.f32 %v3006, %v3007
  %v3101 = vmax.f32 %v3100, %v3008
  %v3102 = vmax.f32 %v3101, %v3009
  %v3103 = vmax.f32 %v3102, %v3010
  %v3104 = vmax.f32 %v3103, %v3011
  %v3105 = vmax.f32 %v3104, %v3012
  %v3106 = vmax.f32 %v3105, %v3013
  %v3107 = vmax.f32 %v3106, %v3014
  %v3108 = vmax.f32 %v3107, %v3015
  %v3109 = vmax.f32 %v3016, %v3017
  %v3110 = vmax.f32 %v3109, %v3018
  %v3111 = vmax.f32 %v3110, %v3019
  %v3112 = vmax.f32 %v3111, %v3020
  %v3113 = vmax.f32 %v3112, %v3021
  %v3114 = vmax.f32 %v3113, %v3022
  %v3115 = vmax.f32 %v3114, %v3023
  %v3116 = vmax.f32 %v3115, %v3024
  %v3117 = vmax.f32 %v3116, %v3025
  %v3118 = vmax.f32 %v3026, %v3027
  %v3119 = vmax.f32 %v3118, %v3028
  %v3120 = vmax.f32 %v3119, %v3029
  %v3121 = vmax.f32 %v3120, %v3030
  %v3122 = vmax.f32 %v3121, %v3031
  %v3123 = vmax.f32 %v3122, %v3032
  %v3124 = vmax.f32 %v3123, %v3033
  %v3125 = vmax.f32 %v3124, %v3034
  %v3126 = vmax.f32 %v3125, %v3035
  %v3127 = vmax.f32 %v3036, %v3037
  %v3128 = vmax.f32 %v3127, %v3038
  %v3129 = vmax.f32 %v3128, %v3039
  %v3130 = vmax.f32 %v3129, %v3040
  %v3131 = vmax.f32 %v3130, %v3041
  %v3132 = vmax.f32 %v3131, %v3042
  %v3133 = vmax.f32 %v3132, %v3043
  %v3134 = vmax.f32 %v3133, %v3044
  %v3135 = vmax.f32 %v3134, %v3045
  %v3136 = vsub.f32 %v2946, %v3054
  %v3137 = vsub.f32 %v2947, %v3054
  %v3138 = vsub.f32 %v2948, %v3054
  %v3139 = vsub.f32 %v2949, %v3054
  %v3140 = vsub.f32 %v2950, %v3054
  %v3141 = vsub.f32 %v2951, %v3054
  %v3142 = vsub.f32 %v2952, %v3054
  %v3143 = vsub.f32 %v2953, %v3054
  %v3144 = vsub.f32 %v2954, %v3054
  %v3145 = vsub.f32 %v2955, %v3054
  %v3146 = vsub.f32 %v2956, %v3063
  %v3147 = vsub.f32 %v2957, %v3063
  %v3148 = vsub.f32 %v2958, %v3063
  %v3149 = vsub.f32 %v2959, %v3063
  %v3150 = vsub.f32 %v2960, %v3063
  %v3151 = vsub.f32 %v2961, %v3063
  %v3152 = vsub.f32 %v2962, %v3063
  %v3153 = vsub.f32 %v2963, %v3063
  %v3154 = vsub.f32 %v2964, %v3063
  %v3155 = vsub.f32 %v2965, %v3063
  %v3156 = vsub.f32 %v2966, %v3072
  %v3157 = vsub.f32 %v2967, %v3072
  %v3158 = vsub.f32 %v2968, %v3072
  %v3159 = vsub.f32 %v2969, %v3072
  %v3160 = vsub.f32 %v2970, %v3072
  %v3161 = vsub.f32 %v2971, %v3072
  %v3162 = vsub.f32 %v2972, %v3072
  %v3163 = vsub.f32 %v2973, %v3072
  %v3164 = vsub.f32 %v2974, %v3072
  %v3165 = vsub.f32 %v2975, %v3072
  %v3166 = vsub.f32 %v2976, %v3081
  %v3167 = vsub.f32 %v2977, %v3081
  %v3168 = vsub.f32 %v2978, %v3081
  %v3169 = vsub.f32 %v2979, %v3081
  %v3170 = vsub.f32 %v2980, %v3081
  %v3171 = vsub.f32 %v2981, %v3081
  %v3172 = vsub.f32 %v2982, %v3081
  %v3173 = vsub.f32 %v2983, %v3081
  %v3174 = vsub.f32 %v2984, %v3081
  %v3175 = vsub.f32 %v2985, %v3081
  %v3176 = vsub.f32 %v2986, %v3090
  %v3177 = vsub.f32 %v2987, %v3090
  %v3178 = vsub.f32 %v2988, %v3090
  %v3179 = vsub.f32 %v2989, %v3090
  %v3180 = vsub.f32 %v2990, %v3090
  %v3181 = vsub.f32 %v2991, %v3090
  %v3182 = vsub.f32 %v2992, %v3090
  %v3183 = vsub.f32 %v2993, %v3090
  %v3184 = vsub.f32 %v2994, %v3090
  %v3185 = vsub.f32 %v2995, %v3090
  %v3186 = vsub.f32 %v2996, %v3099
  %v3187 = vsub.f32 %v2997, %v3099
  %v3188 = vsub.f32 %v2998, %v3099
  %v3189 = vsub.f32 %v2999, %v3099
  %v3190 = vsub.f32 %v3000, %v3099
  %v3191 = vsub.f32 %v3001, %v3099
  %v3192 = vsub.f32 %v3002, %v3099
  %v3193 = vsub.f32 %v3003, %v3099
  %v3194 = vsub.f32 %v3004, %v3099
  %v3195 = vsub.f32 %v3005, %v3099
  %v3196 = vsub.f32 %v3006, %v3108
  %v3197 = vsub.f32 %v3007, %v3108
  %v3198 = vsub.f32 %v3008, %v3108
  %v3199 = vsub.f32 %v3009, %v3108
  %v3200 = vsub.f32 %v3010, %v3108
  %v3201 = vsub.f32 %v3011, %v3108
  %v3202 = vsub.f32 %v3012, %v3108
  %v3203 = vsub.f32 %v3013, %v3108
  %v3204 = vsub.f32 %v3014, %v3108
  %v3205 = vsub.f32 %v3015, %v3108
  %v3206 = vsub.f32 %v3016, %v3117
  %v3207 = vsub.f32 %v3017, %v3117
  %v3208 = vsub.f32 %v3018, %v3117
  %v3209 = vsub.f32 %v3019, %v3117
  %v3210 = vsub.f32 %v3020, %v3117
  %v3211 = vsub.f32 %v3021, %v3117
  %v3212 = vsub.f32 %v3022, %v3117
  %v3213 = vsub.f32 %v3023, %v3117
  %v3214 = vsub.f32 %v3024, %v3117
  %v3215 = vsub.f32 %v3025, %v3117
  %v3216 = vsub.f32 %v3026, %v3126
  %v3217 = vsub.f32 %v3027, %v3126
  %v3218 = vsub.f32 %v3028, %v3126
  %v3219 = vsub.f32 %v3029, %v3126
  %v3220 = vsub.f32 %v3030, %v3126
  %v3221 = vsub.f32 %v3031, %v3126
  %v3222 = vsub.f32 %v3032, %v3126
  %v3223 = vsub.f32 %v3033, %v3126
  %v3224 = vsub.f32 %v3034, %v3126
  %v3225 = vsub.f32 %v3035, %v3126
  %v3226 = vsub.f32 %v3036, %v3135
  %v3227 = vsub.f32 %v3037, %v3135
  %v3228 = vsub.f32 %v3038, %v3135
  %v3229 = vsub.f32 %v3039, %v3135
  %v3230 = vsub.f32 %v3040, %v3135
  %v3231 = vsub.f32 %v3041, %v3135
  %v3232 = vsub.f32 %v3042, %v3135
  %v3233 = vsub.f32 %v3043, %v3135
  %v3234 = vsub.f32 %v3044, %v3135
  %v3235 = vsub.f32 %v3045, %v3135
  %v3236 = vmul.f32 %v3136, 1.442695
  %v3237 = vpow.pop %v3236
  %v3238 = vmul.f32 %v3137, 1.442695
  %v3239 = vpow.pop %v3238
  %v3240 = vmul.f32 %v3138, 1.442695
  %v3241 = vpow.pop %v3240
  %v3242 = vmul.f32 %v3139, 1.442695
  %v3243 = vpow.pop %v3242
  %v3244 = vmul.f32 %v3140, 1.442695
  %v3245 = vpow.pop %v3244
  %v3246 = vmul.f32 %v3141, 1.442695
  %v3247 = vpow.pop %v3246
  %v3248 = vmul.f32 %v3142, 1.442695
  %v3249 = vpow.pop %v3248
  %v3250 = vmul.f32 %v3143, 1.442695
  %v3251 = vpow.pop %v3250
  %v3252 = vmul.f32 %v3144, 1.442695
  %v3253 = vpow.pop %v3252
  %v3254 = vmul.f32 %v3145, 1.442695
  %v3255 = vpow.pop %v3254
  %v3256 = vmul.f32 %v3146, 1.442695
  %v3257 = vpow.pop %v3256
  %v3258 = vmul.f32 %v3147, 1.442695
  %v3259 = vpow.pop %v3258
  %v3260 = vmul.f32 %v3148, 1.442695
  %v3261 = vpow.pop %v3260
  %v3262 = vmul.f32 %v3149, 1.442695
  %v3263 = vpow.pop %v3262
  %v3264 = vmul.f32 %v3150, 1.442695
  %v3265 = vpow.pop %v3264
  %v3266 = vmul.f32 %v3151, 1.442695
  %v3267 = vpow.pop %v3266
  %v3268 = vmul.f32 %v3152, 1.442695
  %v3269 = vpow.pop %v3268
  %v3270 = vmul.f32 %v3153, 1.442695
  %v3271 = vpow.pop %v3270
  %v3272 = vmul.f32 %v3154, 1.442695
  %v3273 = vpow.pop %v3272
  %v3274 = vmul.f32 %v3155, 1.442695
  %v3275 = vpow.pop %v3274
  %v3276 = vmul.f32 %v3156, 1.442695
  %v3277 = vpow.pop %v3276
  %v3278 = vmul.f32 %v3157, 1.442695
  %v3279 = vpow.pop %v3278
  %v3280 = vmul.f32 %v3158, 1.442695
  %v3281 = vpow.pop %v3280
  %v3282 = vmul.f32 %v3159, 1.442695
  %v3283 = vpow.pop %v3282
  %v3284 = vmul.f32 %v3160, 1.442695
  %v3285 = vpow.pop %v3284
  %v3286 = vmul.f32 %v3161, 1.442695
  %v3287 = vpow.pop %v3286
  %v3288 = vmul.f32 %v3162, 1.442695
  %v3289 = vpow.pop %v3288
  %v3290 = vmul.f32 %v3163, 1.442695
  %v3291 = vpow.pop %v3290
  %v3292 = vmul.f32 %v3164, 1.442695
  %v3293 = vpow.pop %v3292
  %v3294 = vmul.f32 %v3165, 1.442695
  %v3295 = vpow.pop %v3294
  %v3296 = vmul.f32 %v3166, 1.442695
  %v3297 = vpow.pop %v3296
  %v3298 = vmul.f32 %v3167, 1.442695
  %v3299 = vpow.pop %v3298
  %v3300 = vmul.f32 %v3168, 1.442695
  %v3301 = vpow.pop %v3300
  %v3302 = vmul.f32 %v3169, 1.442695
  %v3303 = vpow.pop %v3302
  %v3304 = vmul.f32 %v3170, 1.442695
  %v3305 = vpow.pop %v3304
  %v3306 = vmul.f32 %v3171, 1.442695
  %v3307 = vpow.pop %v3306
  %v3308 = vmul.f32 %v3172, 1.442695
  %v3309 = vpow.pop %v3308
  %v3310 = vmul.f32 %v3173, 1.442695
  %v3311 = vpow.pop %v3310
  %v3312 = vmul.f32 %v3174, 1.442695
  %v3313 = vpow.pop %v3312
  %v3314 = vmul.f32 %v3175, 1.442695
  %v3315 = vpow.pop %v3314
  %v3316 = vmul.f32 %v3176, 1.442695
  %v3317 = vpow.pop %v3316
  %v3318 = vmul.f32 %v3177, 1.442695
  %v3319 = vpow.pop %v3318
  %v3320 = vmul.f32 %v3178, 1.442695
  %v3321 = vpow.pop %v3320
  %v3322 = vmul.f32 %v3179, 1.442695
  %v3323 = vpow.pop %v3322
  %v3324 = vmul.f32 %v3180, 1.442695
  %v3325 = vpow.pop %v3324
  %v3326 = vmul.f32 %v3181, 1.442695
  %v3327 = vpow.pop %v3326
  %v3328 = vmul.f32 %v3182, 1.442695
  %v3329 = vpow.pop %v3328
  %v3330 = vmul.f32 %v3183, 1.442695
  %v3331 = vpow.pop %v3330
  %v3332 = vmul.f32 %v3184, 1.442695
  %v3333 = vpow.pop %v3332
  %v3334 = vmul.f32 %v3185, 1.442695
  %v3335 = vpow.pop %v3334
  %v3336 = vmul.f32 %v3186, 1.442695
  %v3337 = vpow.pop %v3336
  %v3338 = vmul.f32 %v3187, 1.442695
  %v3339 = vpow.pop %v3338
  %v3340 = vmul.f32 %v3188, 1.442695
  %v3341 = vpow.pop %v3340
  %v3342 = vmul.f32 %v3189, 1.442695
  %v3343 = vpow.pop %v3342
  %v3344 = vmul.f32 %v3190, 1.442695
  %v3345 = vpow.pop %v3344
  %v3346 = vmul.f32 %v3191, 1.442695
  %v3347 = vpow.pop %v3346
  %v3348 = vmul.f32 %v3192, 1.442695
  %v3349 = vpow.pop %v3348
  %v3350 = vmul.f32 %v3193, 1.442695
  %v3351 = vpow.pop %v3350
  %v3352 = vmul.f32 %v3194, 1.442695
  %v3353 = vpow.pop %v3352
  %v3354 = vmul.f32 %v3195, 1.442695
  %v3355 = vpow.pop %v3354
  %v3356 = vmul.f32 %v3196, 1.442695
  %v3357 = vpow.pop %v3356
  %v3358 = vmul.f32 %v3197, 1.442695
  %v3359 = vpow.pop %v3358
  %v3360 = vmul.f32 %v3198, 1.442695
  %v3361 = vpow.pop %v3360
  %v3362 = vmul.f32 %v3199, 1.442695
  %v3363 = vpow.pop %v3362
  %v3364 = vmul.f32 %v3200, 1.442695
  %v3365 = vpow.pop %v3364
  %v3366 = vmul.f32 %v3201, 1.442695
  %v3367 = vpow.pop %v3366
  %v3368 = vmul.f32 %v3202, 1.442695
  %v3369 = vpow.pop %v3368
  %v3370 = vmul.f32 %v3203, 1.442695
  %v3371 = vpow.pop %v3370
  %v3372 = vmul.f32 %v3204, 1.442695
  %v3373 = vpow.pop %v3372
  %v3374 = vmul.f32 %v3205, 1.442695
  %v3375 = vpow.pop %v3374
  %v3376 = vmul.f32 %v3206, 1.442695
  %v3377 = vpow.pop %v3376
  %v3378 = vmul.f32 %v3207, 1.442695
  %v3379 = vpow.pop %v3378
  %v3380 = vmul.f32 %v3208, 1.442695
  %v3381 = vpow.pop %v3380
  %v3382 = vmul.f32 %v3209, 1.442695
  %v3383 = vpow.pop %v3382
  %v3384 = vmul.f32 %v3210, 1.442695
  %v3385 = vpow.pop %v3384
  %v3386 = vmul.f32 %v3211, 1.442695
  %v3387 = vpow.pop %v3386
  %v3388 = vmul.f32 %v3212, 1.442695
  %v3389 = vpow.pop %v3388
  %v3390 = vmul.f32 %v3213, 1.442695
  %v3391 = vpow.pop %v3390
  %v3392 = vmul.f32 %v3214, 1.442695
  %v3393 = vpow.pop %v3392
  %v3394 = vmul.f32 %v3215, 1.442695
  %v3395 = vpow.pop %v3394
  %v3396 = vmul.f32 %v3216, 1.442695
  %v3397 = vpow.pop %v3396
  %v3398 = vmul.f32 %v3217, 1.442695
  %v3399 = vpow.pop %v3398
  %v3400 = vmul.f32 %v3218, 1.442695
  %v3401 = vpow.pop %v3400
  %v3402 = vmul.f32 %v3219, 1.442695
  %v3403 = vpow.pop %v3402
  %v3404 = vmul.f32 %v3220, 1.442695
  %v3405 = vpow.pop %v3404
  %v3406 = vmul.f32 %v3221, 1.442695
  %v3407 = vpow.pop %v3406
  %v3408 = vmul.f32 %v3222, 1.442695
  %v3409 = vpow.pop %v3408
  %v3410 = vmul.f32 %v3223, 1.442695
  %v3411 = vpow.pop %v3410
  %v3412 = vmul.f32 %v3224, 1.442695
  %v3413 = vpow.pop %v3412
  %v3414 = vmul.f32 %v3225, 1.442695
  %v3415 = vpow.pop %v3414
  %v3416 = vmul.f32 %v3226, 1.442695
  %v3417 = vpow.pop %v3416
  %v3418 = vmul.f32 %v3227, 1.442695
  %v3419 = vpow.pop %v3418
  %v3420 = vmul.f32 %v3228, 1.442695
  %v3421 = vpow.pop %v3420
  %v3422 = vmul.f32 %v3229, 1.442695
  %v3423 = vpow.pop %v3422
  %v3424 = vmul.f32 %v3230, 1.442695
  %v3425 = vpow.pop %v3424
  %v3426 = vmul.f32 %v3231, 1.442695
  %v3427 = vpow.pop %v3426
  %v3428 = vmul.f32 %v3232, 1.442695
  %v3429 = vpow.pop %v3428
  %v3430 = vmul.f32 %v3233, 1.442695
  %v3431 = vpow.pop %v3430
  %v3432 = vmul.f32 %v3234, 1.442695
  %v3433 = vpow.pop %v3432
  %v3434 = vmul.f32 %v3235, 1.442695
  %v3435 = vpow.pop %v3434
  %v3436 = vadd.f32 %v3237, %v3239
  %v3437 = vadd.f32 %v3436, %v3241
  %v3438 = vadd.f32 %v3437, %v3243
  %v3439 = vadd.f32 %v3438, %v3245
  %v3440 = vadd.f32 %v3439, %v3247
  %v3441 = vadd.f32 %v3440, %v3249
  %v3442 = vadd.f32 %v3441, %v3251
  %v3443 = vadd.f32 %v3442, %v3253
  %v3444 = vadd.f32 %v3443, %v3255
  %v3445 = vadd.f32 %v3257, %v3259
  %v3446 = vadd.f32 %v3445, %v3261
  %v3447 = vadd.f32 %v3446, %v3263
  %v3448 = vadd.f32 %v3447, %v3265
  %v3449 = vadd.f32 %v3448, %v3267
  %v3450 = vadd.f32 %v3449, %v3269
  %v3451 = vadd.f32 %v3450, %v3271
  %v3452 = vadd.f32 %v3451, %v3273
  %v3453 = vadd.f32 %v3452, %v3275
  %v3454 = vadd.f32 %v3277, %v3279
  %v3455 = vadd.f32 %v3454, %v3281
  %v3456 = vadd.f32 %v3455, %v3283
  %v3457 = vadd.f32 %v3456, %v3285
  %v3458 = vadd.f32 %v3457, %v3287
  %v3459 = vadd.f32 %v3458, %v3289
  %v3460 = vadd.f32 %v3459, %v3291
  %v3461 = vadd.f32 %v3460, %v3293
  %v3462 = vadd.f32 %v3461, %v3295
  %v3463 = vadd.f32 %v3297, %v3299
  %v3464 = vadd.f32 %v3463, %v3301
  %v3465 = vadd.f32 %v3464, %v3303
  %v3466 = vadd.f32 %v3465, %v3305
  %v3467 = vadd.f32 %v3466, %v3307
  %v3468 = vadd.f32 %v3467, %v3309
  %v3469 = vadd.f32 %v3468, %v3311
  %v3470 = vadd.f32 %v3469, %v3313
  %v3471 = vadd.f32 %v3470, %v3315
  %v3472 = vadd.f32 %v3317, %v3319
  %v3473 = vadd.f32 %v3472, %v3321
  %v3474 = vadd.f32 %v3473, %v3323
  %v3475 = vadd.f32 %v3474, %v3325
  %v3476 = vadd.f32 %v3475, %v3327
  %v3477 = vadd.f32 %v3476, %v3329
  %v3478 = vadd.f32 %v3477, %v3331
  %v3479 = vadd.f32 %v3478, %v3333
  %v3480 = vadd.f32 %v3479, %v3335
  %v3481 = vadd.f32 %v3337, %v3339
  %v3482 = vadd.f32 %v3481, %v3341
  %v3483 = vadd.f32 %v3482, %v3343
  %v3484 = vadd.f32 %v3483, %v3345
  %v3485 = vadd.f32 %v3484, %v3347
  %v3486 = vadd.f32 %v3485, %v3349
  %v3487 = vadd.f32 %v3486, %v3351
  %v3488 = vadd.f32 %v3487, %v3353
  %v3489 = vadd.f32 %v3488, %v3355
  %v3490 = vadd.f32 %v3357, %v3359
  %v3491 = vadd.f32 %v3490, %v3361
  %v3492 = vadd.f32 %v3491, %v3363
  %v3493 = vadd.f32 %v3492, %v3365
  %v3494 = vadd.f32 %v3493, %v3367
  %v3495 = vadd.f32 %v3494, %v3369
  %v3496 = vadd.f32 %v3495, %v3371
  %v3497 = vadd.f32 %v3496, %v3373
  %v3498 = vadd.f32 %v3497, %v3375
  %v3499 = vadd.f32 %v3377, %v3379
  %v3500 = vadd.f32 %v3499, %v3381
  %v3501 = vadd.f32 %v3500, %v3383
  %v3502 = vadd.f32 %v3501, %v3385
  %v3503 = vadd.f32 %v3502, %v3387
  %v3504 = vadd.f32 %v3503, %v3389
  %v3505 = vadd.f32 %v3504, %v3391
  %v3506 = vadd.f32 %v3505, %v3393
  %v3507 = vadd.f32 %v3506, %v3395
  %v3508 = vadd.f32 %v3397, %v3399
  %v3509 = vadd.f32 %v3508, %v3401
  %v3510 = vadd.f32 %v3509, %v3403
  %v3511 = vadd.f32 %v3510, %v3405
  %v3512 = vadd.f32 %v3511, %v3407
  %v3513 = vadd.f32 %v3512, %v3409
  %v3514 = vadd.f32 %v3513, %v3411
  %v3515 = vadd.f32 %v3514, %v3413
  %v3516 = vadd.f32 %v3515, %v3415
  %v3517 = vadd.f32 %v3417, %v3419
  %v3518 = vadd.f32 %v3517, %v3421
  %v3519 = vadd.f32 %v3518, %v3423
  %v3520 = vadd.f32 %v3519, %v3425
  %v3521 = vadd.f32 %v3520, %v3427
  %v3522 = vadd.f32 %v3521, %v3429
  %v3523 = vadd.f32 %v3522, %v3431
  %v3524 = vadd.f32 %v3523, %v3433
  %v3525 = vadd.f32 %v3524, %v3435
  %v3526 = vmul.f32 %v3237, %v2078
  %v3527 = vmul.f32 %v3239, %v2083
  %v3528 = vmul.f32 %v3241, %v2088
  %v3529 = vmul.f32 %v3243, %v2093
  %v3530 = vmul.f32 %v3245, %v2098
  %v3531 = vmul.f32 %v3247, %v2103
  %v3532 = vmul.f32 %v3249, %v2108
  %v3533 = vmul.f32 %v3251, %v2113
  %v3534 = vmul.f32 %v3253, %v2118
  %v3535 = vmul.f32 %v3255, %v2123
  %v3536 = vmul.f32 %v3257, %v2078
  %v3537 = vmul.f32 %v3259, %v2083
  %v3538 = vmul.f32 %v3261, %v2088
  %v3539 = vmul.f32 %v3263, %v2093
  %v3540 = vmul.f32 %v3265, %v2098
  %v3541 = vmul.f32 %v3267, %v2103
  %v3542 = vmul.f32 %v3269, %v2108
  %v3543 = vmul.f32 %v3271, %v2113
  %v3544 = vmul.f32 %v3273, %v2118
  %v3545 = vmul.f32 %v3275, %v2123
  %v3546 = vmul.f32 %v3277, %v2078
  %v3547 = vmul.f32 %v3279, %v2083
  %v3548 = vmul.f32 %v3281, %v2088
  %v3549 = vmul.f32 %v3283, %v2093
  %v3550 = vmul.f32 %v3285, %v2098
  %v3551 = vmul.f32 %v3287, %v2103
  %v3552 = vmul.f32 %v3289, %v2108
  %v3553 = vmul.f32 %v3291, %v2113
  %v3554 = vmul.f32 %v3293, %v2118
  %v3555 = vmul.f32 %v3295, %v2123
  %v3556 = vmul.f32 %v3297, %v2078
  %v3557 = vmul.f32 %v3299, %v2083
  %v3558 = vmul.f32 %v3301, %v2088
  %v3559 = vmul.f32 %v3303, %v2093
  %v3560 = vmul.f32 %v3305, %v2098
  %v3561 = vmul.f32 %v3307, %v2103
  %v3562 = vmul.f32 %v3309, %v2108
  %v3563 = vmul.f32 %v3311, %v2113
  %v3564 = vmul.f32 %v3313, %v2118
  %v3565 = vmul.f32 %v3315, %v2123
  %v3566 = vmul.f32 %v3317, %v2078
  %v3567 = vmul.f32 %v3319, %v2083
  %v3568 = vmul.f32 %v3321, %v2088
  %v3569 = vmul.f32 %v3323, %v2093
  %v3570 = vmul.f32 %v3325, %v2098
  %v3571 = vmul.f32 %v3327, %v2103
  %v3572 = vmul.f32 %v3329, %v2108
  %v3573 = vmul.f32 %v3331, %v2113
  %v3574 = vmul.f32 %v3333, %v2118
  %v3575 = vmul.f32 %v3335, %v2123
  %v3576 = vmul.f32 %v3337, %v2078
  %v3577 = vmul.f32 %v3339, %v2083
  %v3578 = vmul.f32 %v3341, %v2088
  %v3579 = vmul.f32 %v3343, %v2093
  %v3580 = vmul.f32 %v3345, %v2098
  %v3581 = vmul.f32 %v3347, %v2103
  %v3582 = vmul.f32 %v3349, %v2108
  %v3583 = vmul.f32 %v3351, %v2113
  %v3584 = vmul.f32 %v3353, %v2118
  %v3585 = vmul.f32 %v3355, %v2123
  %v3586 = vmul.f32 %v3357, %v2078
  %v3587 = vmul.f32 %v3359, %v2083
  %v3588 = vmul.f32 %v3361, %v2088
  %v3589 = vmul.f32 %v3363, %v2093
  %v3590 = vmul.f32 %v3365, %v2098
  %v3591 = vmul.f32 %v3367, %v2103
  %v3592 = vmul.f32 %v3369, %v2108
  %v3593 = vmul.f32 %v3371, %v2113
  %v3594 = vmul.f32 %v3373, %v2118
  %v3595 = vmul.f32 %v3375, %v2123
  %v3596 = vmul.f32 %v3377, %v2078
  %v3597 = vmul.f32 %v3379, %v2083
  %v3598 = vmul.f32 %v3381, %v2088
  %v3599 = vmul.f32 %v3383, %v2093
  %v3600 = vmul.f32 %v3385, %v2098
  %v3601 = vmul.f32 %v3387, %v2103
  %v3602 = vmul.f32 %v3389, %v2108
  %v3603 = vmul.f32 %v3391, %v2113
  %v3604 = vmul.f32 %v3393, %v2118
  %v3605 = vmul.f32 %v3395, %v2123
  %v3606 = vmul.f32 %v3397, %v2078
  %v3607 = vmul.f32 %v3399, %v2083
  %v3608 = vmul.f32 %v3401, %v2088
  %v3609 = vmul.f32 %v3403, %v2093
  %v3610 = vmul.f32 %v3405, %v2098
  %v3611 = vmul.f32 %v3407, %v2103
  %v3612 = vmul.f32 %v3409, %v2108
  %v3613 = vmul.f32 %v3411, %v2113
  %v3614 = vmul.f32 %v3413, %v2118
  %v3615 = vmul.f32 %v3415, %v2123
  %v3616 = vmul.f32 %v3417, %v2078
  %v3617 = vmul.f32 %v3419, %v2083
  %v3618 = vmul.f32 %v3421, %v2088
  %v3619 = vmul.f32 %v3423, %v2093
  %v3620 = vmul.f32 %v3425, %v2098
  %v3621 = vmul.f32 %v3427, %v2103
  %v3622 = vmul.f32 %v3429, %v2108
  %v3623 = vmul.f32 %v3431, %v2113
  %v3624 = vmul.f32 %v3433, %v2118
  %v3625 = vmul.f32 %v3435, %v2123
  %v3626 = vadd.f32 %v3526, %v3527
  %v3627 = vadd.f32 %v3626, %v3528
  %v3628 = vadd.f32 %v3627, %v3529
  %v3629 = vadd.f32 %v3628, %v3530
  %v3630 = vadd.f32 %v3629, %v3531
  %v3631 = vadd.f32 %v3630, %v3532
  %v3632 = vadd.f32 %v3631, %v3533
  %v3633 = vadd.f32 %v3632, %v3534
  %v3634 = vadd.f32 %v3633, %v3535
  %v3635 = vadd.f32 %v3536, %v3537
  %v3636 = vadd.f32 %v3635, %v3538
  %v3637 = vadd.f32 %v3636, %v3539
  %v3638 = vadd.f32 %v3637, %v3540
  %v3639 = vadd.f32 %v3638, %v3541
  %v3640 = vadd.f32 %v3639, %v3542
  %v3641 = vadd.f32 %v3640, %v3543
  %v3642 = vadd.f32 %v3641, %v3544
  %v3643 = vadd.f32 %v3642, %v3545
  %v3644 = vadd.f32 %v3546, %v3547
  %v3645 = vadd.f32 %v3644, %v3548
  %v3646 = vadd.f32 %v3645, %v3549
  %v3647 = vadd.f32 %v3646, %v3550
  %v3648 = vadd.f32 %v3647, %v3551
  %v3649 = vadd.f32 %v3648, %v3552
  %v3650 = vadd.f32 %v3649, %v3553
  %v3651 = vadd.f32 %v3650, %v3554
  %v3652 = vadd.f32 %v3651, %v3555
  %v3653 = vadd.f32 %v3556, %v3557
  %v3654 = vadd.f32 %v3653, %v3558
  %v3655 = vadd.f32 %v3654, %v3559
  %v3656 = vadd.f32 %v3655, %v3560
  %v3657 = vadd.f32 %v3656, %v3561
  %v3658 = vadd.f32 %v3657, %v3562
  %v3659 = vadd.f32 %v3658, %v3563
  %v3660 = vadd.f32 %v3659, %v3564
  %v3661 = vadd.f32 %v3660, %v3565
  %v3662 = vadd.f32 %v3566, %v3567
  %v3663 = vadd.f32 %v3662, %v3568
  %v3664 = vadd.f32 %v3663, %v3569
  %v3665 = vadd.f32 %v3664, %v3570
  %v3666 = vadd.f32 %v3665, %v3571
  %v3667 = vadd.f32 %v3666, %v3572
  %v3668 = vadd.f32 %v3667, %v3573
  %v3669 = vadd.f32 %v3668, %v3574
  %v3670 = vadd.f32 %v3669, %v3575
  %v3671 = vadd.f32 %v3576, %v3577
  %v3672 = vadd.f32 %v3671, %v3578
  %v3673 = vadd.f32 %v3672, %v3579
  %v3674 = vadd.f32 %v3673, %v3580
  %v3675 = vadd.f32 %v3674, %v3581
  %v3676 = vadd.f32 %v3675, %v3582
  %v3677 = vadd.f32 %v3676, %v3583
  %v3678 = vadd.f32 %v3677, %v3584
  %v3679 = vadd.f32 %v3678, %v3585
  %v3680 = vadd.f32 %v3586, %v3587
  %v3681 = vadd.f32 %v3680, %v3588
  %v3682 = vadd.f32 %v3681, %v3589
  %v3683 = vadd.f32 %v3682, %v3590
  %v3684 = vadd.f32 %v3683, %v3591
  %v3685 = vadd.f32 %v3684, %v3592
  %v3686 = vadd.f32 %v3685, %v3593
  %v3687 = vadd.f32 %v3686, %v3594
  %v3688 = vadd.f32 %v3687, %v3595
  %v3689 = vadd.f32 %v3596, %v3597
  %v3690 = vadd.f32 %v3689, %v3598
  %v3691 = vadd.f32 %v3690, %v3599
  %v3692 = vadd.f32 %v3691, %v3600
  %v3693 = vadd.f32 %v3692, %v3601
  %v3694 = vadd.f32 %v3693, %v3602
  %v3695 = vadd.f32 %v3694, %v3603
  %v3696 = vadd.f32 %v3695, %v3604
  %v3697 = vadd.f32 %v3696, %v3605
  %v3698 = vadd.f32 %v3606, %v3607
  %v3699 = vadd.f32 %v3698, %v3608
  %v3700 = vadd.f32 %v3699, %v3609
  %v3701 = vadd.f32 %v3700, %v3610
  %v3702 = vadd.f32 %v3701, %v3611
  %v3703 = vadd.f32 %v3702, %v3612
  %v3704 = vadd.f32 %v3703, %v3613
  %v3705 = vadd.f32 %v3704, %v3614
  %v3706 = vadd.f32 %v3705, %v3615
  %v3707 = vadd.f32 %v3616, %v3617
  %v3708 = vadd.f32 %v3707, %v3618
  %v3709 = vadd.f32 %v3708, %v3619
  %v3710 = vadd.f32 %v3709, %v3620
  %v3711 = vadd.f32 %v3710, %v3621
  %v3712 = vadd.f32 %v3711, %v3622
  %v3713 = vadd.f32 %v3712, %v3623
  %v3714 = vadd.f32 %v3713, %v3624
  %v3715 = vadd.f32 %v3714, %v3625
  %v3716 = vrcp.pop %v3444
  %v3717 = vrcp.pop %v3453
  %v3718 = vrcp.pop %v3462
  %v3719 = vrcp.pop %v3471
  %v3720 = vrcp.pop %v3480
  %v3721 = vrcp.pop %v3489
  %v3722 = vrcp.pop %v3498
  %v3723 = vrcp.pop %v3507
  %v3724 = vrcp.pop %v3516
  %v3725 = vrcp.pop %v3525
  %v3726 = vmul.f32 %v3634, %v3716
  %v3727 = vmul.f32 %v3643, %v3717
  %v3728 = vmul.f32 %v3652, %v3718
  %v3729 = vmul.f32 %v3661, %v3719
  %v3730 = vmul.f32 %v3670, %v3720
  %v3731 = vmul.f32 %v3679, %v3721
  %v3732 = vmul.f32 %v3688, %v3722
  %v3733 = vmul.f32 %v3697, %v3723
  %v3734 = vmul.f32 %v3706, %v3724
  %v3735 = vmul.f32 %v3715, %v3725
  %v3736 = vld [vmem:[%s6] sm:$0xff]
  %v3737 = vld [vmem:[%s6 + $0x8] sm:$0xff]
  %v3738 = vld [vmem:[%s6 + $0x10] sm:$0xff]
  %v3739 = vld [vmem:[%s6 + $0x18] sm:$0xff]
  %v3740 = vld [vmem:[%s6 + $0x20] sm:$0xff]
  %v3741 = vld [vmem:[%s6 + $0x28] sm:$0xff]
  %v3742 = vld [vmem:[%s6 + $0x30] sm:$0xff]
  %v3743 = vld [vmem:[%s6 + $0x38] sm:$0xff]
  %v3744 = vld [vmem:[%s6 + $0x40] sm:$0xff]
  %v3745 = vld [vmem:[%s6 + $0x48] sm:$0xff]
  %v3746 = vld [vmem:[%s6 + $0x50] sm:$0xff]
  %v3747 = vld [vmem:[%s6 + $0x58] sm:$0xff]
  %v3748 = vld [vmem:[%s6 + $0x60] sm:$0xff]
  %v3749 = vld [vmem:[%s6 + $0x68] sm:$0xff]
  %v3750 = vld [vmem:[%s6 + $0x70] sm:$0xff]
  %v3751 = vld [vmem:[%s6 + $0x78] sm:$0xff]
  %v3752 = vld [vmem:[%s7] sm:$0x1]
  %v3754 = vlaneseq
  %v3755 = vshrl.u32 %v3754, 7
  %v3756 = vsub.s32 0, %v3755
  %v3757 = vrot.slane %v3752, %v3756
  %3759 = vmatprep.subr.mxu0 0.0
  %3760 = vmatpush1.msra.mxu0 %v3751
  %3761 = vmatprep.subr.mxu0 0.0
  %3762 = vmatpush1.msra.mxu0 %v3750
  %3763 = vmatprep.subr.mxu0 0.0
  %3764 = vmatpush1.msra.mxu0 %v3749
  %3765 = vmatprep.subr.mxu0 0.0
  %3766 = vmatpush1.msra.mxu0 %v3748
  %3767 = vmatprep.subr.mxu0 0.0
  %3768 = vmatpush1.msra.mxu0 %v3747
  %3769 = vmatprep.subr.mxu0 0.0
  %3770 = vmatpush1.msra.mxu0 %v3746
  %3771 = vmatprep.subr.mxu0 0.0
  %3772 = vmatpush1.msra.mxu0 %v3745
  %3773 = vmatprep.subr.mxu0 0.0
  %3774 = vmatpush1.msra.mxu0 %v3744
  %3775 = vmatprep.subr.mxu0 0.0
  %3776 = vmatpush1.msra.mxu0 %v3743
  %3777 = vmatprep.subr.mxu0 0.0
  %3778 = vmatpush1.msra.mxu0 %v3742
  %3779 = vmatprep.subr.mxu0 0.0
  %3780 = vmatpush1.msra.mxu0 %v3741
  %3781 = vmatprep.subr.mxu0 0.0
  %3782 = vmatpush1.msra.mxu0 %v3740
  %3783 = vmatprep.subr.mxu0 0.0
  %3784 = vmatpush1.msra.mxu0 %v3739
  %3785 = vmatprep.subr.mxu0 0.0
  %3786 = vmatpush1.msra.mxu0 %v3738
  %3787 = vmatprep.subr.mxu0 0.0
  %3788 = vmatpush1.msra.mxu0 %v3737
  %3789 = vmatprep.subr.mxu0 0.0
  %3790 = vmatpush1.msra.mxu0 %v3736
  %3791 = vmatprep.subr.mxu0 0.0
  %3792 = vmatpush2.msra.mxu0 0.0
  %3793 = vmatprep.subr.mxu0 0.0
  %3794 = vmatpush2.msra.mxu0 0.0
  %3795 = vmatprep.subr.mxu0 0.0
  %3796 = vmatpush2.msra.mxu0 0.0
  %3797 = vmatprep.subr.mxu0 0.0
  %3798 = vmatpush2.msra.mxu0 0.0
  %3799 = vmatprep.subr.mxu0 0.0
  %3800 = vmatpush2.msra.mxu0 0.0
  %3801 = vmatprep.subr.mxu0 0.0
  %3802 = vmatpush2.msra.mxu0 0.0
  %3803 = vmatprep.subr.mxu0 0.0
  %3804 = vmatpush2.msra.mxu0 0.0
  %3805 = vmatprep.subr.mxu0 0.0
  %3806 = vmatpush2.msra.mxu0 0.0
  %3807 = vmatprep.subr.mxu0 0.0
  %3808 = vmatpush2.msra.mxu0 0.0
  %3809 = vmatprep.subr.mxu0 0.0
  %3810 = vmatpush2.msra.mxu0 0.0
  %3811 = vmatprep.subr.mxu0 0.0
  %3812 = vmatpush2.msra.mxu0 0.0
  %3813 = vmatprep.subr.mxu0 0.0
  %3814 = vmatpush2.msra.mxu0 0.0
  %3815 = vmatprep.subr.mxu0 0.0
  %3816 = vmatpush2.msra.mxu0 0.0
  %3817 = vmatprep.subr.mxu0 0.0
  %3818 = vmatpush2.msra.mxu0 0.0
  %3819 = vmatprep.subr.mxu0 0.0
  %3820 = vmatpush2.msra.mxu0 0.0
  %3821 = vmatprep.subr.mxu0 0.0
  %3822 = vmatpush2.msra.mxu0 0.0
  %3823 = vmatprep.mubr.f32.mxu0 0.0
  %3824 = vmatmul.mubr.f32.gmra.mxu0 %v3726
  %v3825 = vpop.f32.mrf.mxu0
  %v3826 = vadd.f32 %v3757, %v3825
  %v3827 = vpop.f32.mrf.mxu0
  %3828 = vmatprep.mubr.f32.mxu0 0.0
  %3829 = vmatmul.mubr.f32.gmra.mxu0 %v3727
  %v3830 = vpop.f32.mrf.mxu0
  %v3831 = vadd.f32 %v3757, %v3830
  %v3832 = vpop.f32.mrf.mxu0
  %3833 = vmatprep.mubr.f32.mxu0 0.0
  %3834 = vmatmul.mubr.f32.gmra.mxu0 %v3728
  %v3835 = vpop.f32.mrf.mxu0
  %v3836 = vadd.f32 %v3757, %v3835
  %v3837 = vpop.f32.mrf.mxu0
  %3838 = vmatprep.mubr.f32.mxu0 0.0
  %3839 = vmatmul.mubr.f32.gmra.mxu0 %v3729
  %v3840 = vpop.f32.mrf.mxu0
  %v3841 = vadd.f32 %v3757, %v3840
  %v3842 = vpop.f32.mrf.mxu0
  %3843 = vmatprep.mubr.f32.mxu0 0.0
  %3844 = vmatmul.mubr.f32.gmra.mxu0 %v3730
  %v3845 = vpop.f32.mrf.mxu0
  %v3846 = vadd.f32 %v3757, %v3845
  %v3847 = vpop.f32.mrf.mxu0
  %3848 = vmatprep.mubr.f32.mxu0 0.0
  %3849 = vmatmul.mubr.f32.gmra.mxu0 %v3731
  %v3850 = vpop.f32.mrf.mxu0
  %v3851 = vadd.f32 %v3757, %v3850
  %v3852 = vpop.f32.mrf.mxu0
  %3853 = vmatprep.mubr.f32.mxu0 0.0
  %3854 = vmatmul.mubr.f32.gmra.mxu0 %v3732
  %v3855 = vpop.f32.mrf.mxu0
  %v3856 = vadd.f32 %v3757, %v3855
  %v3857 = vpop.f32.mrf.mxu0
  %3858 = vmatprep.mubr.f32.mxu0 0.0
  %3859 = vmatmul.mubr.f32.gmra.mxu0 %v3733
  %v3860 = vpop.f32.mrf.mxu0
  %v3861 = vadd.f32 %v3757, %v3860
  %v3862 = vpop.f32.mrf.mxu0
  %3863 = vmatprep.mubr.f32.mxu0 0.0
  %3864 = vmatmul.mubr.f32.gmra.mxu0 %v3734
  %v3865 = vpop.f32.mrf.mxu0
  %v3866 = vadd.f32 %v3757, %v3865
  %v3867 = vpop.f32.mrf.mxu0
  %3868 = vmatprep.mubr.f32.mxu0 0.0
  %3869 = vmatmul.mubr.f32.gmra.mxu0 %v3735
  %v3870 = vpop.f32.mrf.mxu0
  %v3871 = vadd.f32 %v3757, %v3870
  %v3872 = vpop.f32.mrf.mxu0
  %3873 = vdwg.mxu0
  %v3874 = vadd.f32 %v217, %v3826
  %v3875 = vadd.f32 %v222, %v3831
  %v3876 = vadd.f32 %v227, %v3836
  %v3877 = vadd.f32 %v232, %v3841
  %v3878 = vadd.f32 %v237, %v3846
  %v3879 = vadd.f32 %v242, %v3851
  %v3880 = vadd.f32 %v247, %v3856
  %v3881 = vadd.f32 %v252, %v3861
  %v3882 = vadd.f32 %v257, %v3866
  %v3883 = vadd.f32 %v262, %v3871
  %v3884 = vsel %vm1855, %v3874, 0.0
  %3885 = vadd.xlane.f32.xlu0 %v3884
  %v3886 = vpop.xlane.xlu0 %3885
  %v3887 = vsel %vm1855, %v3875, 0.0
  %3888 = vadd.xlane.f32.xlu0 %v3887
  %v3889 = vpop.xlane.xlu0 %3888
  %v3890 = vsel %vm1855, %v3876, 0.0
  %3891 = vadd.xlane.f32.xlu0 %v3890
  %v3892 = vpop.xlane.xlu0 %3891
  %v3893 = vsel %vm1855, %v3877, 0.0
  %3894 = vadd.xlane.f32.xlu0 %v3893
  %v3895 = vpop.xlane.xlu0 %3894
  %v3896 = vsel %vm1855, %v3878, 0.0
  %3897 = vadd.xlane.f32.xlu0 %v3896
  %v3898 = vpop.xlane.xlu0 %3897
  %v3899 = vsel %vm1855, %v3879, 0.0
  %3900 = vadd.xlane.f32.xlu0 %v3899
  %v3901 = vpop.xlane.xlu0 %3900
  %v3902 = vsel %vm1855, %v3880, 0.0
  %3903 = vadd.xlane.f32.xlu0 %v3902
  %v3904 = vpop.xlane.xlu0 %3903
  %v3905 = vsel %vm1855, %v3881, 0.0
  %3906 = vadd.xlane.f32.xlu0 %v3905
  %v3907 = vpop.xlane.xlu0 %3906
  %v3908 = vsel %vm1855, %v3882, 0.0
  %3909 = vadd.xlane.f32.xlu0 %v3908
  %v3910 = vpop.xlane.xlu0 %3909
  %v3911 = vsel %vm1855, %v3883, 0.0
  %3912 = vadd.xlane.f32.xlu0 %v3911
  %v3913 = vpop.xlane.xlu0 %3912
  %v3914 = vrcp.pop 16.0
  %v3915 = vmul.f32 %v3886, %v3914
  %v3916 = vmul.f32 %v3889, %v3914
  %v3917 = vmul.f32 %v3892, %v3914
  %v3918 = vmul.f32 %v3895, %v3914
  %v3919 = vmul.f32 %v3898, %v3914
  %v3920 = vmul.f32 %v3901, %v3914
  %v3921 = vmul.f32 %v3904, %v3914
  %v3922 = vmul.f32 %v3907, %v3914
  %v3923 = vmul.f32 %v3910, %v3914
  %v3924 = vmul.f32 %v3913, %v3914
  %v3925 = vsub.f32 %v3874, %v3915
  %v3926 = vsub.f32 %v3875, %v3916
  %v3927 = vsub.f32 %v3876, %v3917
  %v3928 = vsub.f32 %v3877, %v3918
  %v3929 = vsub.f32 %v3878, %v3919
  %v3930 = vsub.f32 %v3879, %v3920
  %v3931 = vsub.f32 %v3880, %v3921
  %v3932 = vsub.f32 %v3881, %v3922
  %v3933 = vsub.f32 %v3882, %v3923
  %v3934 = vsub.f32 %v3883, %v3924
  %v3935 = vmul.f32 %v3925, %v3925
  %v3936 = vmul.f32 %v3926, %v3926
  %v3937 = vmul.f32 %v3927, %v3927
  %v3938 = vmul.f32 %v3928, %v3928
  %v3939 = vmul.f32 %v3929, %v3929
  %v3940 = vmul.f32 %v3930, %v3930
  %v3941 = vmul.f32 %v3931, %v3931
  %v3942 = vmul.f32 %v3932, %v3932
  %v3943 = vmul.f32 %v3933, %v3933
  %v3944 = vmul.f32 %v3934, %v3934
  %v3945 = vsel %vm1855, %v3935, 0.0
  %3946 = vadd.xlane.f32.xlu0 %v3945
  %v3947 = vpop.xlane.xlu0 %3946
  %v3948 = vsel %vm1855, %v3936, 0.0
  %3949 = vadd.xlane.f32.xlu0 %v3948
  %v3950 = vpop.xlane.xlu0 %3949
  %v3951 = vsel %vm1855, %v3937, 0.0
  %3952 = vadd.xlane.f32.xlu0 %v3951
  %v3953 = vpop.xlane.xlu0 %3952
  %v3954 = vsel %vm1855, %v3938, 0.0
  %3955 = vadd.xlane.f32.xlu0 %v3954
  %v3956 = vpop.xlane.xlu0 %3955
  %v3957 = vsel %vm1855, %v3939, 0.0
  %3958 = vadd.xlane.f32.xlu0 %v3957
  %v3959 = vpop.xlane.xlu0 %3958
  %v3960 = vsel %vm1855, %v3940, 0.0
  %3961 = vadd.xlane.f32.xlu0 %v3960
  %v3962 = vpop.xlane.xlu0 %3961
  %v3963 = vsel %vm1855, %v3941, 0.0
  %3964 = vadd.xlane.f32.xlu0 %v3963
  %v3965 = vpop.xlane.xlu0 %3964
  %v3966 = vsel %vm1855, %v3942, 0.0
  %3967 = vadd.xlane.f32.xlu0 %v3966
  %v3968 = vpop.xlane.xlu0 %3967
  %v3969 = vsel %vm1855, %v3943, 0.0
  %3970 = vadd.xlane.f32.xlu0 %v3969
  %v3971 = vpop.xlane.xlu0 %3970
  %v3972 = vsel %vm1855, %v3944, 0.0
  %3973 = vadd.xlane.f32.xlu0 %v3972
  %v3974 = vpop.xlane.xlu0 %3973
  %v3975 = vmul.f32 %v3947, %v3914
  %v3976 = vmul.f32 %v3950, %v3914
  %v3977 = vmul.f32 %v3953, %v3914
  %v3978 = vmul.f32 %v3956, %v3914
  %v3979 = vmul.f32 %v3959, %v3914
  %v3980 = vmul.f32 %v3962, %v3914
  %v3981 = vmul.f32 %v3965, %v3914
  %v3982 = vmul.f32 %v3968, %v3914
  %v3983 = vmul.f32 %v3971, %v3914
  %v3984 = vmul.f32 %v3974, %v3914
  %v3985 = vadd.f32 %v3975, 1e-05
  %v3986 = vadd.f32 %v3976, 1e-05
  %v3987 = vadd.f32 %v3977, 1e-05
  %v3988 = vadd.f32 %v3978, 1e-05
  %v3989 = vadd.f32 %v3979, 1e-05
  %v3990 = vadd.f32 %v3980, 1e-05
  %v3991 = vadd.f32 %v3981, 1e-05
  %v3992 = vadd.f32 %v3982, 1e-05
  %v3993 = vadd.f32 %v3983, 1e-05
  %v3994 = vadd.f32 %v3984, 1e-05
  %v3995 = vrsqrt.pop %v3985
  %v3996 = vrsqrt.pop %v3986
  %v3997 = vrsqrt.pop %v3987
  %v3998 = vrsqrt.pop %v3988
  %v3999 = vrsqrt.pop %v3989
  %v4000 = vrsqrt.pop %v3990
  %v4001 = vrsqrt.pop %v3991
  %v4002 = vrsqrt.pop %v3992
  %v4003 = vrsqrt.pop %v3993
  %v4004 = vrsqrt.pop %v3994
  %v4005 = vmul.f32 %v3925, %v3995
  %v4006 = vmul.f32 %v3926, %v3996
  %v4007 = vmul.f32 %v3927, %v3997
  %v4008 = vmul.f32 %v3928, %v3998
  %v4009 = vmul.f32 %v3929, %v3999
  %v4010 = vmul.f32 %v3930, %v4000
  %v4011 = vmul.f32 %v3931, %v4001
  %v4012 = vmul.f32 %v3932, %v4002
  %v4013 = vmul.f32 %v3933, %v4003
  %v4014 = vmul.f32 %v3934, %v4004
  %v4015 = vld [vmem:[%s8] sm:$0x1]
  %v4017 = vlaneseq
  %v4018 = vshrl.u32 %v4017, 7
  %v4019 = vsub.s32 0, %v4018
  %v4020 = vrot.slane %v4015, %v4019
  %v4022 = vmul.f32 %v4005, %v4020
  %v4023 = vmul.f32 %v4006, %v4020
  %v4024 = vmul.f32 %v4007, %v4020
  %v4025 = vmul.f32 %v4008, %v4020
  %v4026 = vmul.f32 %v4009, %v4020
  %v4027 = vmul.f32 %v4010, %v4020
  %v4028 = vmul.f32 %v4011, %v4020
  %v4029 = vmul.f32 %v4012, %v4020
  %v4030 = vmul.f32 %v4013, %v4020
  %v4031 = vmul.f32 %v4014, %v4020
  %v4032 = vld [vmem:[%s9] sm:$0x1]
  %v4034 = vlaneseq
  %v4035 = vshrl.u32 %v4034, 7
  %v4036 = vsub.s32 0, %v4035
  %v4037 = vrot.slane %v4032, %v4036
  %v4039 = vadd.f32 %v4022, %v4037
  %v4040 = vadd.f32 %v4023, %v4037
  %v4041 = vadd.f32 %v4024, %v4037
  %v4042 = vadd.f32 %v4025, %v4037
  %v4043 = vadd.f32 %v4026, %v4037
  %v4044 = vadd.f32 %v4027, %v4037
  %v4045 = vadd.f32 %v4028, %v4037
  %v4046 = vadd.f32 %v4029, %v4037
  %v4047 = vadd.f32 %v4030, %v4037
  %v4048 = vadd.f32 %v4031, %v4037
  %s4049 = scalar_lea.vmem %s4, 48
  %v4050 = vld [vmem:[%s4049] sm:$0xff]
  %v4051 = vld [vmem:[%s4049 + $0x8] sm:$0xff]
  %v4052 = vld [vmem:[%s4049 + $0x10] sm:$0xff]
  %v4053 = vld [vmem:[%s4049 + $0x18] sm:$0xff]
  %v4054 = vld [vmem:[%s4049 + $0x20] sm:$0xff]
  %v4055 = vld [vmem:[%s4049 + $0x28] sm:$0xff]
  %s4056 = scalar_lea.vmem %s5, 3
  %v4057 = vld [vmem:[%s4056] sm:$0x7]
  %v4059 = vlaneseq
  %v4060 = vshrl.u32 %v4059, 7
  %v4061 = vsub.s32 0, %v4060
  %v4062 = vrot.slane %v4057, %v4061
  %v4063 = vlaneseq
  %v4064 = vshrl.u32 %v4063, 7
  %v4065 = vsub.s32 1, %v4064
  %v4066 = vrot.slane %v4057, %v4065
  %v4067 = vlaneseq
  %v4068 = vshrl.u32 %v4067, 7
  %v4069 = vsub.s32 2, %v4068
  %v4070 = vrot.slane %v4057, %v4069
  %v4075 = vsel %vm1855, %v4039, 0
  %v4078 = vsel %vm1855, %v4040, 0
  %v4081 = vsel %vm1855, %v4041, 0
  %v4084 = vsel %vm1855, %v4042, 0
  %v4087 = vsel %vm1855, %v4043, 0
  %v4090 = vsel %vm1855, %v4044, 0
  %v4093 = vsel %vm1855, %v4045, 0
  %v4096 = vsel %vm1855, %v4046, 0
  %v4099 = vsel %vm1855, %v4047, 0
  %v4102 = vsel %vm1855, %v4048, 0
  %4104 = vmatprep.subr.mxu0 0.0
  %4105 = vmatpush1.msra.mxu0 0.0
  %4106 = vmatprep.subr.mxu0 0.0
  %4107 = vmatpush1.msra.mxu0 0.0
  %4108 = vmatprep.subr.mxu0 0.0
  %4109 = vmatpush1.msra.mxu0 0.0
  %4110 = vmatprep.subr.mxu0 0.0
  %4111 = vmatpush1.msra.mxu0 0.0
  %4112 = vmatprep.subr.mxu0 0.0
  %4113 = vmatpush1.msra.mxu0 0.0
  %4114 = vmatprep.subr.mxu0 0.0
  %4115 = vmatpush1.msra.mxu0 0.0
  %4116 = vmatprep.subr.mxu0 0.0
  %4117 = vmatpush1.msra.mxu0 0.0
  %4118 = vmatprep.subr.mxu0 0.0
  %4119 = vmatpush1.msra.mxu0 0.0
  %4120 = vmatprep.subr.mxu0 0.0
  %4121 = vmatpush1.msra.mxu0 0.0
  %4122 = vmatprep.subr.mxu0 0.0
  %4123 = vmatpush1.msra.mxu0 0.0
  %4124 = vmatprep.subr.mxu0 0.0
  %4125 = vmatpush1.msra.mxu0 0.0
  %4126 = vmatprep.subr.mxu0 0.0
  %4127 = vmatpush1.msra.mxu0 0.0
  %4128 = vmatprep.subr.mxu0 0.0
  %4129 = vmatpush1.msra.mxu0 0.0
  %4130 = vmatprep.subr.mxu0 0.0
  %4131 = vmatpush1.msra.mxu0 0.0
  %4132 = vmatprep.subr.mxu0 %v4054
  %4133 = vmatpush1.msra.mxu0 %v4053
  %4134 = vmatprep.subr.mxu0 %v4051
  %4135 = vmatpush1.msra.mxu0 %v4050
  %4136 = vmatprep.subr.mxu0 0.0
  %4137 = vmatpush2.msra.mxu0 0.0
  %4138 = vmatprep.subr.mxu0 0.0
  %4139 = vmatpush2.msra.mxu0 0.0
  %4140 = vmatprep.subr.mxu0 0.0
  %4141 = vmatpush2.msra.mxu0 0.0
  %4142 = vmatprep.subr.mxu0 0.0
  %4143 = vmatpush2.msra.mxu0 0.0
  %4144 = vmatprep.subr.mxu0 0.0
  %4145 = vmatpush2.msra.mxu0 0.0
  %4146 = vmatprep.subr.mxu0 0.0
  %4147 = vmatpush2.msra.mxu0 0.0
  %4148 = vmatprep.subr.mxu0 0.0
  %4149 = vmatpush2.msra.mxu0 0.0
  %4150 = vmatprep.subr.mxu0 0.0
  %4151 = vmatpush2.msra.mxu0 0.0
  %4152 = vmatprep.subr.mxu0 0.0
  %4153 = vmatpush2.msra.mxu0 0.0
  %4154 = vmatprep.subr.mxu0 0.0
  %4155 = vmatpush2.msra.mxu0 0.0
  %4156 = vmatprep.subr.mxu0 0.0
  %4157 = vmatpush2.msra.mxu0 0.0
  %4158 = vmatprep.subr.mxu0 0.0
  %4159 = vmatpush2.msra.mxu0 0.0
  %4160 = vmatprep.subr.mxu0 0.0
  %4161 = vmatpush2.msra.mxu0 0.0
  %4162 = vmatprep.subr.mxu0 0.0
  %4163 = vmatpush2.msra.mxu0 0.0
  %4164 = vmatprep.subr.mxu0 0.0
  %4165 = vmatpush2.msra.mxu0 0.0
  %4166 = vmatprep.subr.mxu0 0.0
  %4167 = vmatpush2.msra.mxu0 0.0
  %4168 = vmatprep.mubr.f32.mxu0 0.0
  %4169 = vmatmul.mubr.f32.gmra.mxu0 %v4075
  %v4170 = vpop.f32.mrf.mxu0
  %v4171 = vadd.f32 %v4062, %v4170
  %v4172 = vpop.f32.mrf.mxu0
  %v4173 = vadd.f32 %v4066, %v4172
  %4174 = vmatprep.mubr.f32.mxu0 0.0
  %4175 = vmatmul.mubr.f32.gmra.mxu0 %v4078
  %v4176 = vpop.f32.mrf.mxu0
  %v4177 = vadd.f32 %v4062, %v4176
  %v4178 = vpop.f32.mrf.mxu0
  %v4179 = vadd.f32 %v4066, %v4178
  %4180 = vmatprep.mubr.f32.mxu0 0.0
  %4181 = vmatmul.mubr.f32.gmra.mxu0 %v4081
  %v4182 = vpop.f32.mrf.mxu0
  %v4183 = vadd.f32 %v4062, %v4182
  %v4184 = vpop.f32.mrf.mxu0
  %v4185 = vadd.f32 %v4066, %v4184
  %4186 = vmatprep.mubr.f32.mxu0 0.0
  %4187 = vmatmul.mubr.f32.gmra.mxu0 %v4084
  %v4188 = vpop.f32.mrf.mxu0
  %v4189 = vadd.f32 %v4062, %v4188
  %v4190 = vpop.f32.mrf.mxu0
  %v4191 = vadd.f32 %v4066, %v4190
  %4192 = vmatprep.mubr.f32.mxu0 0.0
  %4193 = vmatmul.mubr.f32.gmra.mxu0 %v4087
  %v4194 = vpop.f32.mrf.mxu0
  %v4195 = vadd.f32 %v4062, %v4194
  %v4196 = vpop.f32.mrf.mxu0
  %v4197 = vadd.f32 %v4066, %v4196
  %4198 = vmatprep.mubr.f32.mxu0 0.0
  %4199 = vmatmul.mubr.f32.gmra.mxu0 %v4090
  %v4200 = vpop.f32.mrf.mxu0
  %v4201 = vadd.f32 %v4062, %v4200
  %v4202 = vpop.f32.mrf.mxu0
  %v4203 = vadd.f32 %v4066, %v4202
  %4204 = vmatprep.mubr.f32.mxu0 0.0
  %4205 = vmatmul.mubr.f32.gmra.mxu0 %v4093
  %v4206 = vpop.f32.mrf.mxu0
  %v4207 = vadd.f32 %v4062, %v4206
  %v4208 = vpop.f32.mrf.mxu0
  %v4209 = vadd.f32 %v4066, %v4208
  %4210 = vmatprep.mubr.f32.mxu0 0.0
  %4211 = vmatmul.mubr.f32.gmra.mxu0 %v4096
  %v4212 = vpop.f32.mrf.mxu0
  %v4213 = vadd.f32 %v4062, %v4212
  %v4214 = vpop.f32.mrf.mxu0
  %v4215 = vadd.f32 %v4066, %v4214
  %4216 = vmatprep.mubr.f32.mxu0 0.0
  %4217 = vmatmul.mubr.f32.gmra.mxu0 %v4099
  %v4218 = vpop.f32.mrf.mxu0
  %v4219 = vadd.f32 %v4062, %v4218
  %v4220 = vpop.f32.mrf.mxu0
  %v4221 = vadd.f32 %v4066, %v4220
  %4222 = vmatprep.mubr.f32.mxu0 0.0
  %4223 = vmatmul.mubr.f32.gmra.mxu0 %v4102
  %v4224 = vpop.f32.mrf.mxu0
  %v4225 = vadd.f32 %v4062, %v4224
  %v4226 = vpop.f32.mrf.mxu0
  %v4227 = vadd.f32 %v4066, %v4226
  %4228 = vdwg.mxu0
  %4229 = vmatprep.subr.mxu0 0.0
  %4230 = vmatpush1.msra.mxu0 0.0
  %4231 = vmatprep.subr.mxu0 0.0
  %4232 = vmatpush1.msra.mxu0 0.0
  %4233 = vmatprep.subr.mxu0 0.0
  %4234 = vmatpush1.msra.mxu0 0.0
  %4235 = vmatprep.subr.mxu0 0.0
  %4236 = vmatpush1.msra.mxu0 0.0
  %4237 = vmatprep.subr.mxu0 0.0
  %4238 = vmatpush1.msra.mxu0 0.0
  %4239 = vmatprep.subr.mxu0 0.0
  %4240 = vmatpush1.msra.mxu0 0.0
  %4241 = vmatprep.subr.mxu0 0.0
  %4242 = vmatpush1.msra.mxu0 0.0
  %4243 = vmatprep.subr.mxu0 0.0
  %4244 = vmatpush1.msra.mxu0 0.0
  %4245 = vmatprep.subr.mxu0 0.0
  %4246 = vmatpush1.msra.mxu0 0.0
  %4247 = vmatprep.subr.mxu0 0.0
  %4248 = vmatpush1.msra.mxu0 0.0
  %4249 = vmatprep.subr.mxu0 0.0
  %4250 = vmatpush1.msra.mxu0 0.0
  %4251 = vmatprep.subr.mxu0 0.0
  %4252 = vmatpush1.msra.mxu0 0.0
  %4253 = vmatprep.subr.mxu0 0.0
  %4254 = vmatpush1.msra.mxu0 0.0
  %4255 = vmatprep.subr.mxu0 0.0
  %4256 = vmatpush1.msra.mxu0 0.0
  %4257 = vmatprep.subr.mxu0 0.0
  %4258 = vmatpush1.msra.mxu0 %v4055
  %4259 = vmatprep.subr.mxu0 0.0
  %4260 = vmatpush1.msra.mxu0 %v4052
  %4261 = vmatprep.subr.mxu0 0.0
  %4262 = vmatpush2.msra.mxu0 0.0
  %4263 = vmatprep.subr.mxu0 0.0
  %4264 = vmatpush2.msra.mxu0 0.0
  %4265 = vmatprep.subr.mxu0 0.0
  %4266 = vmatpush2.msra.mxu0 0.0
  %4267 = vmatprep.subr.mxu0 0.0
  %4268 = vmatpush2.msra.mxu0 0.0
  %4269 = vmatprep.subr.mxu0 0.0
  %4270 = vmatpush2.msra.mxu0 0.0
  %4271 = vmatprep.subr.mxu0 0.0
  %4272 = vmatpush2.msra.mxu0 0.0
  %4273 = vmatprep.subr.mxu0 0.0
  %4274 = vmatpush2.msra.mxu0 0.0
  %4275 = vmatprep.subr.mxu0 0.0
  %4276 = vmatpush2.msra.mxu0 0.0
  %4277 = vmatprep.subr.mxu0 0.0
  %4278 = vmatpush2.msra.mxu0 0.0
  %4279 = vmatprep.subr.mxu0 0.0
  %4280 = vmatpush2.msra.mxu0 0.0
  %4281 = vmatprep.subr.mxu0 0.0
  %4282 = vmatpush2.msra.mxu0 0.0
  %4283 = vmatprep.subr.mxu0 0.0
  %4284 = vmatpush2.msra.mxu0 0.0
  %4285 = vmatprep.subr.mxu0 0.0
  %4286 = vmatpush2.msra.mxu0 0.0
  %4287 = vmatprep.subr.mxu0 0.0
  %4288 = vmatpush2.msra.mxu0 0.0
  %4289 = vmatprep.subr.mxu0 0.0
  %4290 = vmatpush2.msra.mxu0 0.0
  %4291 = vmatprep.subr.mxu0 0.0
  %4292 = vmatpush2.msra.mxu0 0.0
  %4293 = vmatprep.mubr.f32.mxu0 0.0
  %4294 = vmatmul.mubr.f32.gmra.mxu0 %v4075
  %v4295 = vpop.f32.mrf.mxu0
  %v4296 = vadd.f32 %v4070, %v4295
  %v4297 = vpop.f32.mrf.mxu0
  %4298 = vmatprep.mubr.f32.mxu0 0.0
  %4299 = vmatmul.mubr.f32.gmra.mxu0 %v4078
  %v4300 = vpop.f32.mrf.mxu0
  %v4301 = vadd.f32 %v4070, %v4300
  %v4302 = vpop.f32.mrf.mxu0
  %4303 = vmatprep.mubr.f32.mxu0 0.0
  %4304 = vmatmul.mubr.f32.gmra.mxu0 %v4081
  %v4305 = vpop.f32.mrf.mxu0
  %v4306 = vadd.f32 %v4070, %v4305
  %v4307 = vpop.f32.mrf.mxu0
  %4308 = vmatprep.mubr.f32.mxu0 0.0
  %4309 = vmatmul.mubr.f32.gmra.mxu0 %v4084
  %v4310 = vpop.f32.mrf.mxu0
  %v4311 = vadd.f32 %v4070, %v4310
  %v4312 = vpop.f32.mrf.mxu0
  %4313 = vmatprep.mubr.f32.mxu0 0.0
  %4314 = vmatmul.mubr.f32.gmra.mxu0 %v4087
  %v4315 = vpop.f32.mrf.mxu0
  %v4316 = vadd.f32 %v4070, %v4315
  %v4317 = vpop.f32.mrf.mxu0
  %4318 = vmatprep.mubr.f32.mxu0 0.0
  %4319 = vmatmul.mubr.f32.gmra.mxu0 %v4090
  %v4320 = vpop.f32.mrf.mxu0
  %v4321 = vadd.f32 %v4070, %v4320
  %v4322 = vpop.f32.mrf.mxu0
  %4323 = vmatprep.mubr.f32.mxu0 0.0
  %4324 = vmatmul.mubr.f32.gmra.mxu0 %v4093
  %v4325 = vpop.f32.mrf.mxu0
  %v4326 = vadd.f32 %v4070, %v4325
  %v4327 = vpop.f32.mrf.mxu0
  %4328 = vmatprep.mubr.f32.mxu0 0.0
  %4329 = vmatmul.mubr.f32.gmra.mxu0 %v4096
  %v4330 = vpop.f32.mrf.mxu0
  %v4331 = vadd.f32 %v4070, %v4330
  %v4332 = vpop.f32.mrf.mxu0
  %4333 = vmatprep.mubr.f32.mxu0 0.0
  %4334 = vmatmul.mubr.f32.gmra.mxu0 %v4099
  %v4335 = vpop.f32.mrf.mxu0
  %v4336 = vadd.f32 %v4070, %v4335
  %v4337 = vpop.f32.mrf.mxu0
  %4338 = vmatprep.mubr.f32.mxu0 0.0
  %4339 = vmatmul.mubr.f32.gmra.mxu0 %v4102
  %v4340 = vpop.f32.mrf.mxu0
  %v4341 = vadd.f32 %v4070, %v4340
  %v4342 = vpop.f32.mrf.mxu0
  %4343 = vdwg.mxu0
  %v4344 = vmul.f32 %v4171, %v4173
  %v4345 = vmul.f32 %v4171, %v4179
  %v4346 = vmul.f32 %v4171, %v4185
  %v4347 = vmul.f32 %v4171, %v4191
  %v4348 = vmul.f32 %v4171, %v4197
  %v4349 = vmul.f32 %v4171, %v4203
  %v4350 = vmul.f32 %v4171, %v4209
  %v4351 = vmul.f32 %v4171, %v4215
  %v4352 = vmul.f32 %v4171, %v4221
  %v4353 = vmul.f32 %v4171, %v4227
  %v4354 = vmul.f32 %v4177, %v4173
  %v4355 = vmul.f32 %v4177, %v4179
  %v4356 = vmul.f32 %v4177, %v4185
  %v4357 = vmul.f32 %v4177, %v4191
  %v4358 = vmul.f32 %v4177, %v4197
  %v4359 = vmul.f32 %v4177, %v4203
  %v4360 = vmul.f32 %v4177, %v4209
  %v4361 = vmul.f32 %v4177, %v4215
  %v4362 = vmul.f32 %v4177, %v4221
  %v4363 = vmul.f32 %v4177, %v4227
  %v4364 = vmul.f32 %v4183, %v4173
  %v4365 = vmul.f32 %v4183, %v4179
  %v4366 = vmul.f32 %v4183, %v4185
  %v4367 = vmul.f32 %v4183, %v4191
  %v4368 = vmul.f32 %v4183, %v4197
  %v4369 = vmul.f32 %v4183, %v4203
  %v4370 = vmul.f32 %v4183, %v4209
  %v4371 = vmul.f32 %v4183, %v4215
  %v4372 = vmul.f32 %v4183, %v4221
  %v4373 = vmul.f32 %v4183, %v4227
  %v4374 = vmul.f32 %v4189, %v4173
  %v4375 = vmul.f32 %v4189, %v4179
  %v4376 = vmul.f32 %v4189, %v4185
  %v4377 = vmul.f32 %v4189, %v4191
  %v4378 = vmul.f32 %v4189, %v4197
  %v4379 = vmul.f32 %v4189, %v4203
  %v4380 = vmul.f32 %v4189, %v4209
  %v4381 = vmul.f32 %v4189, %v4215
  %v4382 = vmul.f32 %v4189, %v4221
  %v4383 = vmul.f32 %v4189, %v4227
  %v4384 = vmul.f32 %v4195, %v4173
  %v4385 = vmul.f32 %v4195, %v4179
  %v4386 = vmul.f32 %v4195, %v4185
  %v4387 = vmul.f32 %v4195, %v4191
  %v4388 = vmul.f32 %v4195, %v4197
  %v4389 = vmul.f32 %v4195, %v4203
  %v4390 = vmul.f32 %v4195, %v4209
  %v4391 = vmul.f32 %v4195, %v4215
  %v4392 = vmul.f32 %v4195, %v4221
  %v4393 = vmul.f32 %v4195, %v4227
  %v4394 = vmul.f32 %v4201, %v4173
  %v4395 = vmul.f32 %v4201, %v4179
  %v4396 = vmul.f32 %v4201, %v4185
  %v4397 = vmul.f32 %v4201, %v4191
  %v4398 = vmul.f32 %v4201, %v4197
  %v4399 = vmul.f32 %v4201, %v4203
  %v4400 = vmul.f32 %v4201, %v4209
  %v4401 = vmul.f32 %v4201, %v4215
  %v4402 = vmul.f32 %v4201, %v4221
  %v4403 = vmul.f32 %v4201, %v4227
  %v4404 = vmul.f32 %v4207, %v4173
  %v4405 = vmul.f32 %v4207, %v4179
  %v4406 = vmul.f32 %v4207, %v4185
  %v4407 = vmul.f32 %v4207, %v4191
  %v4408 = vmul.f32 %v4207, %v4197
  %v4409 = vmul.f32 %v4207, %v4203
  %v4410 = vmul.f32 %v4207, %v4209
  %v4411 = vmul.f32 %v4207, %v4215
  %v4412 = vmul.f32 %v4207, %v4221
  %v4413 = vmul.f32 %v4207, %v4227
  %v4414 = vmul.f32 %v4213, %v4173
  %v4415 = vmul.f32 %v4213, %v4179
  %v4416 = vmul.f32 %v4213, %v4185
  %v4417 = vmul.f32 %v4213, %v4191
  %v4418 = vmul.f32 %v4213, %v4197
  %v4419 = vmul.f32 %v4213, %v4203
  %v4420 = vmul.f32 %v4213, %v4209
  %v4421 = vmul.f32 %v4213, %v4215
  %v4422 = vmul.f32 %v4213, %v4221
  %v4423 = vmul.f32 %v4213, %v4227
  %v4424 = vmul.f32 %v4219, %v4173
  %v4425 = vmul.f32 %v4219, %v4179
  %v4426 = vmul.f32 %v4219, %v4185
  %v4427 = vmul.f32 %v4219, %v4191
  %v4428 = vmul.f32 %v4219, %v4197
  %v4429 = vmul.f32 %v4219, %v4203
  %v4430 = vmul.f32 %v4219, %v4209
  %v4431 = vmul.f32 %v4219, %v4215
  %v4432 = vmul.f32 %v4219, %v4221
  %v4433 = vmul.f32 %v4219, %v4227
  %v4434 = vmul.f32 %v4225, %v4173
  %v4435 = vmul.f32 %v4225, %v4179
  %v4436 = vmul.f32 %v4225, %v4185
  %v4437 = vmul.f32 %v4225, %v4191
  %v4438 = vmul.f32 %v4225, %v4197
  %v4439 = vmul.f32 %v4225, %v4203
  %v4440 = vmul.f32 %v4225, %v4209
  %v4441 = vmul.f32 %v4225, %v4215
  %v4442 = vmul.f32 %v4225, %v4221
  %v4443 = vmul.f32 %v4225, %v4227
  %v4444 = vadd.f32 %v1334, %v4344
  %v4445 = vadd.f32 %v1339, %v4345
  %v4446 = vadd.f32 %v1344, %v4346
  %v4447 = vadd.f32 %v1349, %v4347
  %v4448 = vadd.f32 %v1354, %v4348
  %v4449 = vadd.f32 %v1359, %v4349
  %v4450 = vadd.f32 %v1364, %v4350
  %v4451 = vadd.f32 %v1369, %v4351
  %v4452 = vadd.f32 %v1374, %v4352
  %v4453 = vadd.f32 %v1379, %v4353
  %v4454 = vadd.f32 %v1384, %v4354
  %v4455 = vadd.f32 %v1389, %v4355
  %v4456 = vadd.f32 %v1394, %v4356
  %v4457 = vadd.f32 %v1399, %v4357
  %v4458 = vadd.f32 %v1404, %v4358
  %v4459 = vadd.f32 %v1409, %v4359
  %v4460 = vadd.f32 %v1414, %v4360
  %v4461 = vadd.f32 %v1419, %v4361
  %v4462 = vadd.f32 %v1424, %v4362
  %v4463 = vadd.f32 %v1429, %v4363
  %v4464 = vadd.f32 %v1434, %v4364
  %v4465 = vadd.f32 %v1439, %v4365
  %v4466 = vadd.f32 %v1444, %v4366
  %v4467 = vadd.f32 %v1449, %v4367
  %v4468 = vadd.f32 %v1454, %v4368
  %v4469 = vadd.f32 %v1459, %v4369
  %v4470 = vadd.f32 %v1464, %v4370
  %v4471 = vadd.f32 %v1469, %v4371
  %v4472 = vadd.f32 %v1474, %v4372
  %v4473 = vadd.f32 %v1479, %v4373
  %v4474 = vadd.f32 %v1484, %v4374
  %v4475 = vadd.f32 %v1489, %v4375
  %v4476 = vadd.f32 %v1494, %v4376
  %v4477 = vadd.f32 %v1499, %v4377
  %v4478 = vadd.f32 %v1504, %v4378
  %v4479 = vadd.f32 %v1509, %v4379
  %v4480 = vadd.f32 %v1514, %v4380
  %v4481 = vadd.f32 %v1519, %v4381
  %v4482 = vadd.f32 %v1524, %v4382
  %v4483 = vadd.f32 %v1529, %v4383
  %v4484 = vadd.f32 %v1534, %v4384
  %v4485 = vadd.f32 %v1539, %v4385
  %v4486 = vadd.f32 %v1544, %v4386
  %v4487 = vadd.f32 %v1549, %v4387
  %v4488 = vadd.f32 %v1554, %v4388
  %v4489 = vadd.f32 %v1559, %v4389
  %v4490 = vadd.f32 %v1564, %v4390
  %v4491 = vadd.f32 %v1569, %v4391
  %v4492 = vadd.f32 %v1574, %v4392
  %v4493 = vadd.f32 %v1579, %v4393
  %v4494 = vadd.f32 %v1584, %v4394
  %v4495 = vadd.f32 %v1589, %v4395
  %v4496 = vadd.f32 %v1594, %v4396
  %v4497 = vadd.f32 %v1599, %v4397
  %v4498 = vadd.f32 %v1604, %v4398
  %v4499 = vadd.f32 %v1609, %v4399
  %v4500 = vadd.f32 %v1614, %v4400
  %v4501 = vadd.f32 %v1619, %v4401
  %v4502 = vadd.f32 %v1624, %v4402
  %v4503 = vadd.f32 %v1629, %v4403
  %v4504 = vadd.f32 %v1634, %v4404
  %v4505 = vadd.f32 %v1639, %v4405
  %v4506 = vadd.f32 %v1644, %v4406
  %v4507 = vadd.f32 %v1649, %v4407
  %v4508 = vadd.f32 %v1654, %v4408
  %v4509 = vadd.f32 %v1659, %v4409
  %v4510 = vadd.f32 %v1664, %v4410
  %v4511 = vadd.f32 %v1669, %v4411
  %v4512 = vadd.f32 %v1674, %v4412
  %v4513 = vadd.f32 %v1679, %v4413
  %v4514 = vadd.f32 %v1684, %v4414
  %v4515 = vadd.f32 %v1689, %v4415
  %v4516 = vadd.f32 %v1694, %v4416
  %v4517 = vadd.f32 %v1699, %v4417
  %v4518 = vadd.f32 %v1704, %v4418
  %v4519 = vadd.f32 %v1709, %v4419
  %v4520 = vadd.f32 %v1714, %v4420
  %v4521 = vadd.f32 %v1719, %v4421
  %v4522 = vadd.f32 %v1724, %v4422
  %v4523 = vadd.f32 %v1729, %v4423
  %v4524 = vadd.f32 %v1734, %v4424
  %v4525 = vadd.f32 %v1739, %v4425
  %v4526 = vadd.f32 %v1744, %v4426
  %v4527 = vadd.f32 %v1749, %v4427
  %v4528 = vadd.f32 %v1754, %v4428
  %v4529 = vadd.f32 %v1759, %v4429
  %v4530 = vadd.f32 %v1764, %v4430
  %v4531 = vadd.f32 %v1769, %v4431
  %v4532 = vadd.f32 %v1774, %v4432
  %v4533 = vadd.f32 %v1779, %v4433
  %v4534 = vadd.f32 %v1784, %v4434
  %v4535 = vadd.f32 %v1789, %v4435
  %v4536 = vadd.f32 %v1794, %v4436
  %v4537 = vadd.f32 %v1799, %v4437
  %v4538 = vadd.f32 %v1804, %v4438
  %v4539 = vadd.f32 %v1809, %v4439
  %v4540 = vadd.f32 %v1814, %v4440
  %v4541 = vadd.f32 %v1819, %v4441
  %v4542 = vadd.f32 %v1824, %v4442
  %v4543 = vadd.f32 %v1829, %v4443
  %4544 = vrot.lane.b32.xlu0 %v4171, 32
  %v4545 = vpop.permute.xlu0 %4544
  %4546 = vrot.lane.b32.xlu0 %v4177, 32
  %v4547 = vpop.permute.xlu0 %4546
  %4548 = vrot.lane.b32.xlu0 %v4183, 32
  %v4549 = vpop.permute.xlu0 %4548
  %4550 = vrot.lane.b32.xlu0 %v4189, 32
  %v4551 = vpop.permute.xlu0 %4550
  %4552 = vrot.lane.b32.xlu0 %v4195, 32
  %v4553 = vpop.permute.xlu0 %4552
  %4554 = vrot.lane.b32.xlu0 %v4201, 32
  %v4555 = vpop.permute.xlu0 %4554
  %4556 = vrot.lane.b32.xlu0 %v4207, 32
  %v4557 = vpop.permute.xlu0 %4556
  %4558 = vrot.lane.b32.xlu0 %v4213, 32
  %v4559 = vpop.permute.xlu0 %4558
  %4560 = vrot.lane.b32.xlu0 %v4219, 32
  %v4561 = vpop.permute.xlu0 %4560
  %4562 = vrot.lane.b32.xlu0 %v4225, 32
  %v4563 = vpop.permute.xlu0 %4562
  %4564 = vrot.lane.b32.xlu0 %v4173, 32
  %v4565 = vpop.permute.xlu0 %4564
  %4566 = vrot.lane.b32.xlu0 %v4179, 32
  %v4567 = vpop.permute.xlu0 %4566
  %4568 = vrot.lane.b32.xlu0 %v4185, 32
  %v4569 = vpop.permute.xlu0 %4568
  %4570 = vrot.lane.b32.xlu0 %v4191, 32
  %v4571 = vpop.permute.xlu0 %4570
  %4572 = vrot.lane.b32.xlu0 %v4197, 32
  %v4573 = vpop.permute.xlu0 %4572
  %4574 = vrot.lane.b32.xlu0 %v4203, 32
  %v4575 = vpop.permute.xlu0 %4574
  %4576 = vrot.lane.b32.xlu0 %v4209, 32
  %v4577 = vpop.permute.xlu0 %4576
  %4578 = vrot.lane.b32.xlu0 %v4215, 32
  %v4579 = vpop.permute.xlu0 %4578
  %4580 = vrot.lane.b32.xlu0 %v4221, 32
  %v4581 = vpop.permute.xlu0 %4580
  %4582 = vrot.lane.b32.xlu0 %v4227, 32
  %v4583 = vpop.permute.xlu0 %4582
  %v4584 = vmul.f32 %v4545, %v4565
  %v4585 = vmul.f32 %v4545, %v4567
  %v4586 = vmul.f32 %v4545, %v4569
  %v4587 = vmul.f32 %v4545, %v4571
  %v4588 = vmul.f32 %v4545, %v4573
  %v4589 = vmul.f32 %v4545, %v4575
  %v4590 = vmul.f32 %v4545, %v4577
  %v4591 = vmul.f32 %v4545, %v4579
  %v4592 = vmul.f32 %v4545, %v4581
  %v4593 = vmul.f32 %v4545, %v4583
  %v4594 = vmul.f32 %v4547, %v4565
  %v4595 = vmul.f32 %v4547, %v4567
  %v4596 = vmul.f32 %v4547, %v4569
  %v4597 = vmul.f32 %v4547, %v4571
  %v4598 = vmul.f32 %v4547, %v4573
  %v4599 = vmul.f32 %v4547, %v4575
  %v4600 = vmul.f32 %v4547, %v4577
  %v4601 = vmul.f32 %v4547, %v4579
  %v4602 = vmul.f32 %v4547, %v4581
  %v4603 = vmul.f32 %v4547, %v4583
  %v4604 = vmul.f32 %v4549, %v4565
  %v4605 = vmul.f32 %v4549, %v4567
  %v4606 = vmul.f32 %v4549, %v4569
  %v4607 = vmul.f32 %v4549, %v4571
  %v4608 = vmul.f32 %v4549, %v4573
  %v4609 = vmul.f32 %v4549, %v4575
  %v4610 = vmul.f32 %v4549, %v4577
  %v4611 = vmul.f32 %v4549, %v4579
  %v4612 = vmul.f32 %v4549, %v4581
  %v4613 = vmul.f32 %v4549, %v4583
  %v4614 = vmul.f32 %v4551, %v4565
  %v4615 = vmul.f32 %v4551, %v4567
  %v4616 = vmul.f32 %v4551, %v4569
  %v4617 = vmul.f32 %v4551, %v4571
  %v4618 = vmul.f32 %v4551, %v4573
  %v4619 = vmul.f32 %v4551, %v4575
  %v4620 = vmul.f32 %v4551, %v4577
  %v4621 = vmul.f32 %v4551, %v4579
  %v4622 = vmul.f32 %v4551, %v4581
  %v4623 = vmul.f32 %v4551, %v4583
  %v4624 = vmul.f32 %v4553, %v4565
  %v4625 = vmul.f32 %v4553, %v4567
  %v4626 = vmul.f32 %v4553, %v4569
  %v4627 = vmul.f32 %v4553, %v4571
  %v4628 = vmul.f32 %v4553, %v4573
  %v4629 = vmul.f32 %v4553, %v4575
  %v4630 = vmul.f32 %v4553, %v4577
  %v4631 = vmul.f32 %v4553, %v4579
  %v4632 = vmul.f32 %v4553, %v4581
  %v4633 = vmul.f32 %v4553, %v4583
  %v4634 = vmul.f32 %v4555, %v4565
  %v4635 = vmul.f32 %v4555, %v4567
  %v4636 = vmul.f32 %v4555, %v4569
  %v4637 = vmul.f32 %v4555, %v4571
  %v4638 = vmul.f32 %v4555, %v4573
  %v4639 = vmul.f32 %v4555, %v4575
  %v4640 = vmul.f32 %v4555, %v4577
  %v4641 = vmul.f32 %v4555, %v4579
  %v4642 = vmul.f32 %v4555, %v4581
  %v4643 = vmul.f32 %v4555, %v4583
  %v4644 = vmul.f32 %v4557, %v4565
  %v4645 = vmul.f32 %v4557, %v4567
  %v4646 = vmul.f32 %v4557, %v4569
  %v4647 = vmul.f32 %v4557, %v4571
  %v4648 = vmul.f32 %v4557, %v4573
  %v4649 = vmul.f32 %v4557, %v4575
  %v4650 = vmul.f32 %v4557, %v4577
  %v4651 = vmul.f32 %v4557, %v4579
  %v4652 = vmul.f32 %v4557, %v4581
  %v4653 = vmul.f32 %v4557, %v4583
  %v4654 = vmul.f32 %v4559, %v4565
  %v4655 = vmul.f32 %v4559, %v4567
  %v4656 = vmul.f32 %v4559, %v4569
  %v4657 = vmul.f32 %v4559, %v4571
  %v4658 = vmul.f32 %v4559, %v4573
  %v4659 = vmul.f32 %v4559, %v4575
  %v4660 = vmul.f32 %v4559, %v4577
  %v4661 = vmul.f32 %v4559, %v4579
  %v4662 = vmul.f32 %v4559, %v4581
  %v4663 = vmul.f32 %v4559, %v4583
  %v4664 = vmul.f32 %v4561, %v4565
  %v4665 = vmul.f32 %v4561, %v4567
  %v4666 = vmul.f32 %v4561, %v4569
  %v4667 = vmul.f32 %v4561, %v4571
  %v4668 = vmul.f32 %v4561, %v4573
  %v4669 = vmul.f32 %v4561, %v4575
  %v4670 = vmul.f32 %v4561, %v4577
  %v4671 = vmul.f32 %v4561, %v4579
  %v4672 = vmul.f32 %v4561, %v4581
  %v4673 = vmul.f32 %v4561, %v4583
  %v4674 = vmul.f32 %v4563, %v4565
  %v4675 = vmul.f32 %v4563, %v4567
  %v4676 = vmul.f32 %v4563, %v4569
  %v4677 = vmul.f32 %v4563, %v4571
  %v4678 = vmul.f32 %v4563, %v4573
  %v4679 = vmul.f32 %v4563, %v4575
  %v4680 = vmul.f32 %v4563, %v4577
  %v4681 = vmul.f32 %v4563, %v4579
  %v4682 = vmul.f32 %v4563, %v4581
  %v4683 = vmul.f32 %v4563, %v4583
  %v4684 = vadd.f32 %v4444, %v4584
  %v4685 = vadd.f32 %v4445, %v4585
  %v4686 = vadd.f32 %v4446, %v4586
  %v4687 = vadd.f32 %v4447, %v4587
  %v4688 = vadd.f32 %v4448, %v4588
  %v4689 = vadd.f32 %v4449, %v4589
  %v4690 = vadd.f32 %v4450, %v4590
  %v4691 = vadd.f32 %v4451, %v4591
  %v4692 = vadd.f32 %v4452, %v4592
  %v4693 = vadd.f32 %v4453, %v4593
  %v4694 = vadd.f32 %v4454, %v4594
  %v4695 = vadd.f32 %v4455, %v4595
  %v4696 = vadd.f32 %v4456, %v4596
  %v4697 = vadd.f32 %v4457, %v4597
  %v4698 = vadd.f32 %v4458, %v4598
  %v4699 = vadd.f32 %v4459, %v4599
  %v4700 = vadd.f32 %v4460, %v4600
  %v4701 = vadd.f32 %v4461, %v4601
  %v4702 = vadd.f32 %v4462, %v4602
  %v4703 = vadd.f32 %v4463, %v4603
  %v4704 = vadd.f32 %v4464, %v4604
  %v4705 = vadd.f32 %v4465, %v4605
  %v4706 = vadd.f32 %v4466, %v4606
  %v4707 = vadd.f32 %v4467, %v4607
  %v4708 = vadd.f32 %v4468, %v4608
  %v4709 = vadd.f32 %v4469, %v4609
  %v4710 = vadd.f32 %v4470, %v4610
  %v4711 = vadd.f32 %v4471, %v4611
  %v4712 = vadd.f32 %v4472, %v4612
  %v4713 = vadd.f32 %v4473, %v4613
  %v4714 = vadd.f32 %v4474, %v4614
  %v4715 = vadd.f32 %v4475, %v4615
  %v4716 = vadd.f32 %v4476, %v4616
  %v4717 = vadd.f32 %v4477, %v4617
  %v4718 = vadd.f32 %v4478, %v4618
  %v4719 = vadd.f32 %v4479, %v4619
  %v4720 = vadd.f32 %v4480, %v4620
  %v4721 = vadd.f32 %v4481, %v4621
  %v4722 = vadd.f32 %v4482, %v4622
  %v4723 = vadd.f32 %v4483, %v4623
  %v4724 = vadd.f32 %v4484, %v4624
  %v4725 = vadd.f32 %v4485, %v4625
  %v4726 = vadd.f32 %v4486, %v4626
  %v4727 = vadd.f32 %v4487, %v4627
  %v4728 = vadd.f32 %v4488, %v4628
  %v4729 = vadd.f32 %v4489, %v4629
  %v4730 = vadd.f32 %v4490, %v4630
  %v4731 = vadd.f32 %v4491, %v4631
  %v4732 = vadd.f32 %v4492, %v4632
  %v4733 = vadd.f32 %v4493, %v4633
  %v4734 = vadd.f32 %v4494, %v4634
  %v4735 = vadd.f32 %v4495, %v4635
  %v4736 = vadd.f32 %v4496, %v4636
  %v4737 = vadd.f32 %v4497, %v4637
  %v4738 = vadd.f32 %v4498, %v4638
  %v4739 = vadd.f32 %v4499, %v4639
  %v4740 = vadd.f32 %v4500, %v4640
  %v4741 = vadd.f32 %v4501, %v4641
  %v4742 = vadd.f32 %v4502, %v4642
  %v4743 = vadd.f32 %v4503, %v4643
  %v4744 = vadd.f32 %v4504, %v4644
  %v4745 = vadd.f32 %v4505, %v4645
  %v4746 = vadd.f32 %v4506, %v4646
  %v4747 = vadd.f32 %v4507, %v4647
  %v4748 = vadd.f32 %v4508, %v4648
  %v4749 = vadd.f32 %v4509, %v4649
  %v4750 = vadd.f32 %v4510, %v4650
  %v4751 = vadd.f32 %v4511, %v4651
  %v4752 = vadd.f32 %v4512, %v4652
  %v4753 = vadd.f32 %v4513, %v4653
  %v4754 = vadd.f32 %v4514, %v4654
  %v4755 = vadd.f32 %v4515, %v4655
  %v4756 = vadd.f32 %v4516, %v4656
  %v4757 = vadd.f32 %v4517, %v4657
  %v4758 = vadd.f32 %v4518, %v4658
  %v4759 = vadd.f32 %v4519, %v4659
  %v4760 = vadd.f32 %v4520, %v4660
  %v4761 = vadd.f32 %v4521, %v4661
  %v4762 = vadd.f32 %v4522, %v4662
  %v4763 = vadd.f32 %v4523, %v4663
  %v4764 = vadd.f32 %v4524, %v4664
  %v4765 = vadd.f32 %v4525, %v4665
  %v4766 = vadd.f32 %v4526, %v4666
  %v4767 = vadd.f32 %v4527, %v4667
  %v4768 = vadd.f32 %v4528, %v4668
  %v4769 = vadd.f32 %v4529, %v4669
  %v4770 = vadd.f32 %v4530, %v4670
  %v4771 = vadd.f32 %v4531, %v4671
  %v4772 = vadd.f32 %v4532, %v4672
  %v4773 = vadd.f32 %v4533, %v4673
  %v4774 = vadd.f32 %v4534, %v4674
  %v4775 = vadd.f32 %v4535, %v4675
  %v4776 = vadd.f32 %v4536, %v4676
  %v4777 = vadd.f32 %v4537, %v4677
  %v4778 = vadd.f32 %v4538, %v4678
  %v4779 = vadd.f32 %v4539, %v4679
  %v4780 = vadd.f32 %v4540, %v4680
  %v4781 = vadd.f32 %v4541, %v4681
  %v4782 = vadd.f32 %v4542, %v4682
  %v4783 = vadd.f32 %v4543, %v4683
  %4784 = vrot.lane.b32.xlu0 %v4171, 64
  %v4785 = vpop.permute.xlu0 %4784
  %4786 = vrot.lane.b32.xlu0 %v4177, 64
  %v4787 = vpop.permute.xlu0 %4786
  %4788 = vrot.lane.b32.xlu0 %v4183, 64
  %v4789 = vpop.permute.xlu0 %4788
  %4790 = vrot.lane.b32.xlu0 %v4189, 64
  %v4791 = vpop.permute.xlu0 %4790
  %4792 = vrot.lane.b32.xlu0 %v4195, 64
  %v4793 = vpop.permute.xlu0 %4792
  %4794 = vrot.lane.b32.xlu0 %v4201, 64
  %v4795 = vpop.permute.xlu0 %4794
  %4796 = vrot.lane.b32.xlu0 %v4207, 64
  %v4797 = vpop.permute.xlu0 %4796
  %4798 = vrot.lane.b32.xlu0 %v4213, 64
  %v4799 = vpop.permute.xlu0 %4798
  %4800 = vrot.lane.b32.xlu0 %v4219, 64
  %v4801 = vpop.permute.xlu0 %4800
  %4802 = vrot.lane.b32.xlu0 %v4225, 64
  %v4803 = vpop.permute.xlu0 %4802
  %4804 = vrot.lane.b32.xlu0 %v4173, 64
  %v4805 = vpop.permute.xlu0 %4804
  %4806 = vrot.lane.b32.xlu0 %v4179, 64
  %v4807 = vpop.permute.xlu0 %4806
  %4808 = vrot.lane.b32.xlu0 %v4185, 64
  %v4809 = vpop.permute.xlu0 %4808
  %4810 = vrot.lane.b32.xlu0 %v4191, 64
  %v4811 = vpop.permute.xlu0 %4810
  %4812 = vrot.lane.b32.xlu0 %v4197, 64
  %v4813 = vpop.permute.xlu0 %4812
  %4814 = vrot.lane.b32.xlu0 %v4203, 64
  %v4815 = vpop.permute.xlu0 %4814
  %4816 = vrot.lane.b32.xlu0 %v4209, 64
  %v4817 = vpop.permute.xlu0 %4816
  %4818 = vrot.lane.b32.xlu0 %v4215, 64
  %v4819 = vpop.permute.xlu0 %4818
  %4820 = vrot.lane.b32.xlu0 %v4221, 64
  %v4821 = vpop.permute.xlu0 %4820
  %4822 = vrot.lane.b32.xlu0 %v4227, 64
  %v4823 = vpop.permute.xlu0 %4822
  %v4824 = vmul.f32 %v4785, %v4805
  %v4825 = vmul.f32 %v4785, %v4807
  %v4826 = vmul.f32 %v4785, %v4809
  %v4827 = vmul.f32 %v4785, %v4811
  %v4828 = vmul.f32 %v4785, %v4813
  %v4829 = vmul.f32 %v4785, %v4815
  %v4830 = vmul.f32 %v4785, %v4817
  %v4831 = vmul.f32 %v4785, %v4819
  %v4832 = vmul.f32 %v4785, %v4821
  %v4833 = vmul.f32 %v4785, %v4823
  %v4834 = vmul.f32 %v4787, %v4805
  %v4835 = vmul.f32 %v4787, %v4807
  %v4836 = vmul.f32 %v4787, %v4809
  %v4837 = vmul.f32 %v4787, %v4811
  %v4838 = vmul.f32 %v4787, %v4813
  %v4839 = vmul.f32 %v4787, %v4815
  %v4840 = vmul.f32 %v4787, %v4817
  %v4841 = vmul.f32 %v4787, %v4819
  %v4842 = vmul.f32 %v4787, %v4821
  %v4843 = vmul.f32 %v4787, %v4823
  %v4844 = vmul.f32 %v4789, %v4805
  %v4845 = vmul.f32 %v4789, %v4807
  %v4846 = vmul.f32 %v4789, %v4809
  %v4847 = vmul.f32 %v4789, %v4811
  %v4848 = vmul.f32 %v4789, %v4813
  %v4849 = vmul.f32 %v4789, %v4815
  %v4850 = vmul.f32 %v4789, %v4817
  %v4851 = vmul.f32 %v4789, %v4819
  %v4852 = vmul.f32 %v4789, %v4821
  %v4853 = vmul.f32 %v4789, %v4823
  %v4854 = vmul.f32 %v4791, %v4805
  %v4855 = vmul.f32 %v4791, %v4807
  %v4856 = vmul.f32 %v4791, %v4809
  %v4857 = vmul.f32 %v4791, %v4811
  %v4858 = vmul.f32 %v4791, %v4813
  %v4859 = vmul.f32 %v4791, %v4815
  %v4860 = vmul.f32 %v4791, %v4817
  %v4861 = vmul.f32 %v4791, %v4819
  %v4862 = vmul.f32 %v4791, %v4821
  %v4863 = vmul.f32 %v4791, %v4823
  %v4864 = vmul.f32 %v4793, %v4805
  %v4865 = vmul.f32 %v4793, %v4807
  %v4866 = vmul.f32 %v4793, %v4809
  %v4867 = vmul.f32 %v4793, %v4811
  %v4868 = vmul.f32 %v4793, %v4813
  %v4869 = vmul.f32 %v4793, %v4815
  %v4870 = vmul.f32 %v4793, %v4817
  %v4871 = vmul.f32 %v4793, %v4819
  %v4872 = vmul.f32 %v4793, %v4821
  %v4873 = vmul.f32 %v4793, %v4823
  %v4874 = vmul.f32 %v4795, %v4805
  %v4875 = vmul.f32 %v4795, %v4807
  %v4876 = vmul.f32 %v4795, %v4809
  %v4877 = vmul.f32 %v4795, %v4811
  %v4878 = vmul.f32 %v4795, %v4813
  %v4879 = vmul.f32 %v4795, %v4815
  %v4880 = vmul.f32 %v4795, %v4817
  %v4881 = vmul.f32 %v4795, %v4819
  %v4882 = vmul.f32 %v4795, %v4821
  %v4883 = vmul.f32 %v4795, %v4823
  %v4884 = vmul.f32 %v4797, %v4805
  %v4885 = vmul.f32 %v4797, %v4807
  %v4886 = vmul.f32 %v4797, %v4809
  %v4887 = vmul.f32 %v4797, %v4811
  %v4888 = vmul.f32 %v4797, %v4813
  %v4889 = vmul.f32 %v4797, %v4815
  %v4890 = vmul.f32 %v4797, %v4817
  %v4891 = vmul.f32 %v4797, %v4819
  %v4892 = vmul.f32 %v4797, %v4821
  %v4893 = vmul.f32 %v4797, %v4823
  %v4894 = vmul.f32 %v4799, %v4805
  %v4895 = vmul.f32 %v4799, %v4807
  %v4896 = vmul.f32 %v4799, %v4809
  %v4897 = vmul.f32 %v4799, %v4811
  %v4898 = vmul.f32 %v4799, %v4813
  %v4899 = vmul.f32 %v4799, %v4815
  %v4900 = vmul.f32 %v4799, %v4817
  %v4901 = vmul.f32 %v4799, %v4819
  %v4902 = vmul.f32 %v4799, %v4821
  %v4903 = vmul.f32 %v4799, %v4823
  %v4904 = vmul.f32 %v4801, %v4805
  %v4905 = vmul.f32 %v4801, %v4807
  %v4906 = vmul.f32 %v4801, %v4809
  %v4907 = vmul.f32 %v4801, %v4811
  %v4908 = vmul.f32 %v4801, %v4813
  %v4909 = vmul.f32 %v4801, %v4815
  %v4910 = vmul.f32 %v4801, %v4817
  %v4911 = vmul.f32 %v4801, %v4819
  %v4912 = vmul.f32 %v4801, %v4821
  %v4913 = vmul.f32 %v4801, %v4823
  %v4914 = vmul.f32 %v4803, %v4805
  %v4915 = vmul.f32 %v4803, %v4807
  %v4916 = vmul.f32 %v4803, %v4809
  %v4917 = vmul.f32 %v4803, %v4811
  %v4918 = vmul.f32 %v4803, %v4813
  %v4919 = vmul.f32 %v4803, %v4815
  %v4920 = vmul.f32 %v4803, %v4817
  %v4921 = vmul.f32 %v4803, %v4819
  %v4922 = vmul.f32 %v4803, %v4821
  %v4923 = vmul.f32 %v4803, %v4823
  %v4924 = vadd.f32 %v4684, %v4824
  %v4925 = vadd.f32 %v4685, %v4825
  %v4926 = vadd.f32 %v4686, %v4826
  %v4927 = vadd.f32 %v4687, %v4827
  %v4928 = vadd.f32 %v4688, %v4828
  %v4929 = vadd.f32 %v4689, %v4829
  %v4930 = vadd.f32 %v4690, %v4830
  %v4931 = vadd.f32 %v4691, %v4831
  %v4932 = vadd.f32 %v4692, %v4832
  %v4933 = vadd.f32 %v4693, %v4833
  %v4934 = vadd.f32 %v4694, %v4834
  %v4935 = vadd.f32 %v4695, %v4835
  %v4936 = vadd.f32 %v4696, %v4836
  %v4937 = vadd.f32 %v4697, %v4837
  %v4938 = vadd.f32 %v4698, %v4838
  %v4939 = vadd.f32 %v4699, %v4839
  %v4940 = vadd.f32 %v4700, %v4840
  %v4941 = vadd.f32 %v4701, %v4841
  %v4942 = vadd.f32 %v4702, %v4842
  %v4943 = vadd.f32 %v4703, %v4843
  %v4944 = vadd.f32 %v4704, %v4844
  %v4945 = vadd.f32 %v4705, %v4845
  %v4946 = vadd.f32 %v4706, %v4846
  %v4947 = vadd.f32 %v4707, %v4847
  %v4948 = vadd.f32 %v4708, %v4848
  %v4949 = vadd.f32 %v4709, %v4849
  %v4950 = vadd.f32 %v4710, %v4850
  %v4951 = vadd.f32 %v4711, %v4851
  %v4952 = vadd.f32 %v4712, %v4852
  %v4953 = vadd.f32 %v4713, %v4853
  %v4954 = vadd.f32 %v4714, %v4854
  %v4955 = vadd.f32 %v4715, %v4855
  %v4956 = vadd.f32 %v4716, %v4856
  %v4957 = vadd.f32 %v4717, %v4857
  %v4958 = vadd.f32 %v4718, %v4858
  %v4959 = vadd.f32 %v4719, %v4859
  %v4960 = vadd.f32 %v4720, %v4860
  %v4961 = vadd.f32 %v4721, %v4861
  %v4962 = vadd.f32 %v4722, %v4862
  %v4963 = vadd.f32 %v4723, %v4863
  %v4964 = vadd.f32 %v4724, %v4864
  %v4965 = vadd.f32 %v4725, %v4865
  %v4966 = vadd.f32 %v4726, %v4866
  %v4967 = vadd.f32 %v4727, %v4867
  %v4968 = vadd.f32 %v4728, %v4868
  %v4969 = vadd.f32 %v4729, %v4869
  %v4970 = vadd.f32 %v4730, %v4870
  %v4971 = vadd.f32 %v4731, %v4871
  %v4972 = vadd.f32 %v4732, %v4872
  %v4973 = vadd.f32 %v4733, %v4873
  %v4974 = vadd.f32 %v4734, %v4874
  %v4975 = vadd.f32 %v4735, %v4875
  %v4976 = vadd.f32 %v4736, %v4876
  %v4977 = vadd.f32 %v4737, %v4877
  %v4978 = vadd.f32 %v4738, %v4878
  %v4979 = vadd.f32 %v4739, %v4879
  %v4980 = vadd.f32 %v4740, %v4880
  %v4981 = vadd.f32 %v4741, %v4881
  %v4982 = vadd.f32 %v4742, %v4882
  %v4983 = vadd.f32 %v4743, %v4883
  %v4984 = vadd.f32 %v4744, %v4884
  %v4985 = vadd.f32 %v4745, %v4885
  %v4986 = vadd.f32 %v4746, %v4886
  %v4987 = vadd.f32 %v4747, %v4887
  %v4988 = vadd.f32 %v4748, %v4888
  %v4989 = vadd.f32 %v4749, %v4889
  %v4990 = vadd.f32 %v4750, %v4890
  %v4991 = vadd.f32 %v4751, %v4891
  %v4992 = vadd.f32 %v4752, %v4892
  %v4993 = vadd.f32 %v4753, %v4893
  %v4994 = vadd.f32 %v4754, %v4894
  %v4995 = vadd.f32 %v4755, %v4895
  %v4996 = vadd.f32 %v4756, %v4896
  %v4997 = vadd.f32 %v4757, %v4897
  %v4998 = vadd.f32 %v4758, %v4898
  %v4999 = vadd.f32 %v4759, %v4899
  %v5000 = vadd.f32 %v4760, %v4900
  %v5001 = vadd.f32 %v4761, %v4901
  %v5002 = vadd.f32 %v4762, %v4902
  %v5003 = vadd.f32 %v4763, %v4903
  %v5004 = vadd.f32 %v4764, %v4904
  %v5005 = vadd.f32 %v4765, %v4905
  %v5006 = vadd.f32 %v4766, %v4906
  %v5007 = vadd.f32 %v4767, %v4907
  %v5008 = vadd.f32 %v4768, %v4908
  %v5009 = vadd.f32 %v4769, %v4909
  %v5010 = vadd.f32 %v4770, %v4910
  %v5011 = vadd.f32 %v4771, %v4911
  %v5012 = vadd.f32 %v4772, %v4912
  %v5013 = vadd.f32 %v4773, %v4913
  %v5014 = vadd.f32 %v4774, %v4914
  %v5015 = vadd.f32 %v4775, %v4915
  %v5016 = vadd.f32 %v4776, %v4916
  %v5017 = vadd.f32 %v4777, %v4917
  %v5018 = vadd.f32 %v4778, %v4918
  %v5019 = vadd.f32 %v4779, %v4919
  %v5020 = vadd.f32 %v4780, %v4920
  %v5021 = vadd.f32 %v4781, %v4921
  %v5022 = vadd.f32 %v4782, %v4922
  %v5023 = vadd.f32 %v4783, %v4923
  %5024 = vrot.lane.b32.xlu0 %v4171, 96
  %v5025 = vpop.permute.xlu0 %5024
  %5026 = vrot.lane.b32.xlu0 %v4177, 96
  %v5027 = vpop.permute.xlu0 %5026
  %5028 = vrot.lane.b32.xlu0 %v4183, 96
  %v5029 = vpop.permute.xlu0 %5028
  %5030 = vrot.lane.b32.xlu0 %v4189, 96
  %v5031 = vpop.permute.xlu0 %5030
  %5032 = vrot.lane.b32.xlu0 %v4195, 96
  %v5033 = vpop.permute.xlu0 %5032
  %5034 = vrot.lane.b32.xlu0 %v4201, 96
  %v5035 = vpop.permute.xlu0 %5034
  %5036 = vrot.lane.b32.xlu0 %v4207, 96
  %v5037 = vpop.permute.xlu0 %5036
  %5038 = vrot.lane.b32.xlu0 %v4213, 96
  %v5039 = vpop.permute.xlu0 %5038
  %5040 = vrot.lane.b32.xlu0 %v4219, 96
  %v5041 = vpop.permute.xlu0 %5040
  %5042 = vrot.lane.b32.xlu0 %v4225, 96
  %v5043 = vpop.permute.xlu0 %5042
  %5044 = vrot.lane.b32.xlu0 %v4173, 96
  %v5045 = vpop.permute.xlu0 %5044
  %5046 = vrot.lane.b32.xlu0 %v4179, 96
  %v5047 = vpop.permute.xlu0 %5046
  %5048 = vrot.lane.b32.xlu0 %v4185, 96
  %v5049 = vpop.permute.xlu0 %5048
  %5050 = vrot.lane.b32.xlu0 %v4191, 96
  %v5051 = vpop.permute.xlu0 %5050
  %5052 = vrot.lane.b32.xlu0 %v4197, 96
  %v5053 = vpop.permute.xlu0 %5052
  %5054 = vrot.lane.b32.xlu0 %v4203, 96
  %v5055 = vpop.permute.xlu0 %5054
  %5056 = vrot.lane.b32.xlu0 %v4209, 96
  %v5057 = vpop.permute.xlu0 %5056
  %5058 = vrot.lane.b32.xlu0 %v4215, 96
  %v5059 = vpop.permute.xlu0 %5058
  %5060 = vrot.lane.b32.xlu0 %v4221, 96
  %v5061 = vpop.permute.xlu0 %5060
  %5062 = vrot.lane.b32.xlu0 %v4227, 96
  %v5063 = vpop.permute.xlu0 %5062
  %v5064 = vmul.f32 %v5025, %v5045
  %v5065 = vmul.f32 %v5025, %v5047
  %v5066 = vmul.f32 %v5025, %v5049
  %v5067 = vmul.f32 %v5025, %v5051
  %v5068 = vmul.f32 %v5025, %v5053
  %v5069 = vmul.f32 %v5025, %v5055
  %v5070 = vmul.f32 %v5025, %v5057
  %v5071 = vmul.f32 %v5025, %v5059
  %v5072 = vmul.f32 %v5025, %v5061
  %v5073 = vmul.f32 %v5025, %v5063
  %v5074 = vmul.f32 %v5027, %v5045
  %v5075 = vmul.f32 %v5027, %v5047
  %v5076 = vmul.f32 %v5027, %v5049
  %v5077 = vmul.f32 %v5027, %v5051
  %v5078 = vmul.f32 %v5027, %v5053
  %v5079 = vmul.f32 %v5027, %v5055
  %v5080 = vmul.f32 %v5027, %v5057
  %v5081 = vmul.f32 %v5027, %v5059
  %v5082 = vmul.f32 %v5027, %v5061
  %v5083 = vmul.f32 %v5027, %v5063
  %v5084 = vmul.f32 %v5029, %v5045
  %v5085 = vmul.f32 %v5029, %v5047
  %v5086 = vmul.f32 %v5029, %v5049
  %v5087 = vmul.f32 %v5029, %v5051
  %v5088 = vmul.f32 %v5029, %v5053
  %v5089 = vmul.f32 %v5029, %v5055
  %v5090 = vmul.f32 %v5029, %v5057
  %v5091 = vmul.f32 %v5029, %v5059
  %v5092 = vmul.f32 %v5029, %v5061
  %v5093 = vmul.f32 %v5029, %v5063
  %v5094 = vmul.f32 %v5031, %v5045
  %v5095 = vmul.f32 %v5031, %v5047
  %v5096 = vmul.f32 %v5031, %v5049
  %v5097 = vmul.f32 %v5031, %v5051
  %v5098 = vmul.f32 %v5031, %v5053
  %v5099 = vmul.f32 %v5031, %v5055
  %v5100 = vmul.f32 %v5031, %v5057
  %v5101 = vmul.f32 %v5031, %v5059
  %v5102 = vmul.f32 %v5031, %v5061
  %v5103 = vmul.f32 %v5031, %v5063
  %v5104 = vmul.f32 %v5033, %v5045
  %v5105 = vmul.f32 %v5033, %v5047
  %v5106 = vmul.f32 %v5033, %v5049
  %v5107 = vmul.f32 %v5033, %v5051
  %v5108 = vmul.f32 %v5033, %v5053
  %v5109 = vmul.f32 %v5033, %v5055
  %v5110 = vmul.f32 %v5033, %v5057
  %v5111 = vmul.f32 %v5033, %v5059
  %v5112 = vmul.f32 %v5033, %v5061
  %v5113 = vmul.f32 %v5033, %v5063
  %v5114 = vmul.f32 %v5035, %v5045
  %v5115 = vmul.f32 %v5035, %v5047
  %v5116 = vmul.f32 %v5035, %v5049
  %v5117 = vmul.f32 %v5035, %v5051
  %v5118 = vmul.f32 %v5035, %v5053
  %v5119 = vmul.f32 %v5035, %v5055
  %v5120 = vmul.f32 %v5035, %v5057
  %v5121 = vmul.f32 %v5035, %v5059
  %v5122 = vmul.f32 %v5035, %v5061
  %v5123 = vmul.f32 %v5035, %v5063
  %v5124 = vmul.f32 %v5037, %v5045
  %v5125 = vmul.f32 %v5037, %v5047
  %v5126 = vmul.f32 %v5037, %v5049
  %v5127 = vmul.f32 %v5037, %v5051
  %v5128 = vmul.f32 %v5037, %v5053
  %v5129 = vmul.f32 %v5037, %v5055
  %v5130 = vmul.f32 %v5037, %v5057
  %v5131 = vmul.f32 %v5037, %v5059
  %v5132 = vmul.f32 %v5037, %v5061
  %v5133 = vmul.f32 %v5037, %v5063
  %v5134 = vmul.f32 %v5039, %v5045
  %v5135 = vmul.f32 %v5039, %v5047
  %v5136 = vmul.f32 %v5039, %v5049
  %v5137 = vmul.f32 %v5039, %v5051
  %v5138 = vmul.f32 %v5039, %v5053
  %v5139 = vmul.f32 %v5039, %v5055
  %v5140 = vmul.f32 %v5039, %v5057
  %v5141 = vmul.f32 %v5039, %v5059
  %v5142 = vmul.f32 %v5039, %v5061
  %v5143 = vmul.f32 %v5039, %v5063
  %v5144 = vmul.f32 %v5041, %v5045
  %v5145 = vmul.f32 %v5041, %v5047
  %v5146 = vmul.f32 %v5041, %v5049
  %v5147 = vmul.f32 %v5041, %v5051
  %v5148 = vmul.f32 %v5041, %v5053
  %v5149 = vmul.f32 %v5041, %v5055
  %v5150 = vmul.f32 %v5041, %v5057
  %v5151 = vmul.f32 %v5041, %v5059
  %v5152 = vmul.f32 %v5041, %v5061
  %v5153 = vmul.f32 %v5041, %v5063
  %v5154 = vmul.f32 %v5043, %v5045
  %v5155 = vmul.f32 %v5043, %v5047
  %v5156 = vmul.f32 %v5043, %v5049
  %v5157 = vmul.f32 %v5043, %v5051
  %v5158 = vmul.f32 %v5043, %v5053
  %v5159 = vmul.f32 %v5043, %v5055
  %v5160 = vmul.f32 %v5043, %v5057
  %v5161 = vmul.f32 %v5043, %v5059
  %v5162 = vmul.f32 %v5043, %v5061
  %v5163 = vmul.f32 %v5043, %v5063
  %v5164 = vadd.f32 %v4924, %v5064
  %v5165 = vadd.f32 %v4925, %v5065
  %v5166 = vadd.f32 %v4926, %v5066
  %v5167 = vadd.f32 %v4927, %v5067
  %v5168 = vadd.f32 %v4928, %v5068
  %v5169 = vadd.f32 %v4929, %v5069
  %v5170 = vadd.f32 %v4930, %v5070
  %v5171 = vadd.f32 %v4931, %v5071
  %v5172 = vadd.f32 %v4932, %v5072
  %v5173 = vadd.f32 %v4933, %v5073
  %v5174 = vadd.f32 %v4934, %v5074
  %v5175 = vadd.f32 %v4935, %v5075
  %v5176 = vadd.f32 %v4936, %v5076
  %v5177 = vadd.f32 %v4937, %v5077
  %v5178 = vadd.f32 %v4938, %v5078
  %v5179 = vadd.f32 %v4939, %v5079
  %v5180 = vadd.f32 %v4940, %v5080
  %v5181 = vadd.f32 %v4941, %v5081
  %v5182 = vadd.f32 %v4942, %v5082
  %v5183 = vadd.f32 %v4943, %v5083
  %v5184 = vadd.f32 %v4944, %v5084
  %v5185 = vadd.f32 %v4945, %v5085
  %v5186 = vadd.f32 %v4946, %v5086
  %v5187 = vadd.f32 %v4947, %v5087
  %v5188 = vadd.f32 %v4948, %v5088
  %v5189 = vadd.f32 %v4949, %v5089
  %v5190 = vadd.f32 %v4950, %v5090
  %v5191 = vadd.f32 %v4951, %v5091
  %v5192 = vadd.f32 %v4952, %v5092
  %v5193 = vadd.f32 %v4953, %v5093
  %v5194 = vadd.f32 %v4954, %v5094
  %v5195 = vadd.f32 %v4955, %v5095
  %v5196 = vadd.f32 %v4956, %v5096
  %v5197 = vadd.f32 %v4957, %v5097
  %v5198 = vadd.f32 %v4958, %v5098
  %v5199 = vadd.f32 %v4959, %v5099
  %v5200 = vadd.f32 %v4960, %v5100
  %v5201 = vadd.f32 %v4961, %v5101
  %v5202 = vadd.f32 %v4962, %v5102
  %v5203 = vadd.f32 %v4963, %v5103
  %v5204 = vadd.f32 %v4964, %v5104
  %v5205 = vadd.f32 %v4965, %v5105
  %v5206 = vadd.f32 %v4966, %v5106
  %v5207 = vadd.f32 %v4967, %v5107
  %v5208 = vadd.f32 %v4968, %v5108
  %v5209 = vadd.f32 %v4969, %v5109
  %v5210 = vadd.f32 %v4970, %v5110
  %v5211 = vadd.f32 %v4971, %v5111
  %v5212 = vadd.f32 %v4972, %v5112
  %v5213 = vadd.f32 %v4973, %v5113
  %v5214 = vadd.f32 %v4974, %v5114
  %v5215 = vadd.f32 %v4975, %v5115
  %v5216 = vadd.f32 %v4976, %v5116
  %v5217 = vadd.f32 %v4977, %v5117
  %v5218 = vadd.f32 %v4978, %v5118
  %v5219 = vadd.f32 %v4979, %v5119
  %v5220 = vadd.f32 %v4980, %v5120
  %v5221 = vadd.f32 %v4981, %v5121
  %v5222 = vadd.f32 %v4982, %v5122
  %v5223 = vadd.f32 %v4983, %v5123
  %v5224 = vadd.f32 %v4984, %v5124
  %v5225 = vadd.f32 %v4985, %v5125
  %v5226 = vadd.f32 %v4986, %v5126
  %v5227 = vadd.f32 %v4987, %v5127
  %v5228 = vadd.f32 %v4988, %v5128
  %v5229 = vadd.f32 %v4989, %v5129
  %v5230 = vadd.f32 %v4990, %v5130
  %v5231 = vadd.f32 %v4991, %v5131
  %v5232 = vadd.f32 %v4992, %v5132
  %v5233 = vadd.f32 %v4993, %v5133
  %v5234 = vadd.f32 %v4994, %v5134
  %v5235 = vadd.f32 %v4995, %v5135
  %v5236 = vadd.f32 %v4996, %v5136
  %v5237 = vadd.f32 %v4997, %v5137
  %v5238 = vadd.f32 %v4998, %v5138
  %v5239 = vadd.f32 %v4999, %v5139
  %v5240 = vadd.f32 %v5000, %v5140
  %v5241 = vadd.f32 %v5001, %v5141
  %v5242 = vadd.f32 %v5002, %v5142
  %v5243 = vadd.f32 %v5003, %v5143
  %v5244 = vadd.f32 %v5004, %v5144
  %v5245 = vadd.f32 %v5005, %v5145
  %v5246 = vadd.f32 %v5006, %v5146
  %v5247 = vadd.f32 %v5007, %v5147
  %v5248 = vadd.f32 %v5008, %v5148
  %v5249 = vadd.f32 %v5009, %v5149
  %v5250 = vadd.f32 %v5010, %v5150
  %v5251 = vadd.f32 %v5011, %v5151
  %v5252 = vadd.f32 %v5012, %v5152
  %v5253 = vadd.f32 %v5013, %v5153
  %v5254 = vadd.f32 %v5014, %v5154
  %v5255 = vadd.f32 %v5015, %v5155
  %v5256 = vadd.f32 %v5016, %v5156
  %v5257 = vadd.f32 %v5017, %v5157
  %v5258 = vadd.f32 %v5018, %v5158
  %v5259 = vadd.f32 %v5019, %v5159
  %v5260 = vadd.f32 %v5020, %v5160
  %v5261 = vadd.f32 %v5021, %v5161
  %v5262 = vadd.f32 %v5022, %v5162
  %v5263 = vadd.f32 %v5023, %v5163
  %v5264 = vmax.f32 %v5164, %v5165
  %v5265 = vmax.f32 %v5264, %v5166
  %v5266 = vmax.f32 %v5265, %v5167
  %v5267 = vmax.f32 %v5266, %v5168
  %v5268 = vmax.f32 %v5267, %v5169
  %v5269 = vmax.f32 %v5268, %v5170
  %v5270 = vmax.f32 %v5269, %v5171
  %v5271 = vmax.f32 %v5270, %v5172
  %v5272 = vmax.f32 %v5271, %v5173
  %v5273 = vmax.f32 %v5174, %v5175
  %v5274 = vmax.f32 %v5273, %v5176
  %v5275 = vmax.f32 %v5274, %v5177
  %v5276 = vmax.f32 %v5275, %v5178
  %v5277 = vmax.f32 %v5276, %v5179
  %v5278 = vmax.f32 %v5277, %v5180
  %v5279 = vmax.f32 %v5278, %v5181
  %v5280 = vmax.f32 %v5279, %v5182
  %v5281 = vmax.f32 %v5280, %v5183
  %v5282 = vmax.f32 %v5184, %v5185
  %v5283 = vmax.f32 %v5282, %v5186
  %v5284 = vmax.f32 %v5283, %v5187
  %v5285 = vmax.f32 %v5284, %v5188
  %v5286 = vmax.f32 %v5285, %v5189
  %v5287 = vmax.f32 %v5286, %v5190
  %v5288 = vmax.f32 %v5287, %v5191
  %v5289 = vmax.f32 %v5288, %v5192
  %v5290 = vmax.f32 %v5289, %v5193
  %v5291 = vmax.f32 %v5194, %v5195
  %v5292 = vmax.f32 %v5291, %v5196
  %v5293 = vmax.f32 %v5292, %v5197
  %v5294 = vmax.f32 %v5293, %v5198
  %v5295 = vmax.f32 %v5294, %v5199
  %v5296 = vmax.f32 %v5295, %v5200
  %v5297 = vmax.f32 %v5296, %v5201
  %v5298 = vmax.f32 %v5297, %v5202
  %v5299 = vmax.f32 %v5298, %v5203
  %v5300 = vmax.f32 %v5204, %v5205
  %v5301 = vmax.f32 %v5300, %v5206
  %v5302 = vmax.f32 %v5301, %v5207
  %v5303 = vmax.f32 %v5302, %v5208
  %v5304 = vmax.f32 %v5303, %v5209
  %v5305 = vmax.f32 %v5304, %v5210
  %v5306 = vmax.f32 %v5305, %v5211
  %v5307 = vmax.f32 %v5306, %v5212
  %v5308 = vmax.f32 %v5307, %v5213
  %v5309 = vmax.f32 %v5214, %v5215
  %v5310 = vmax.f32 %v5309, %v5216
  %v5311 = vmax.f32 %v5310, %v5217
  %v5312 = vmax.f32 %v5311, %v5218
  %v5313 = vmax.f32 %v5312, %v5219
  %v5314 = vmax.f32 %v5313, %v5220
  %v5315 = vmax.f32 %v5314, %v5221
  %v5316 = vmax.f32 %v5315, %v5222
  %v5317 = vmax.f32 %v5316, %v5223
  %v5318 = vmax.f32 %v5224, %v5225
  %v5319 = vmax.f32 %v5318, %v5226
  %v5320 = vmax.f32 %v5319, %v5227
  %v5321 = vmax.f32 %v5320, %v5228
  %v5322 = vmax.f32 %v5321, %v5229
  %v5323 = vmax.f32 %v5322, %v5230
  %v5324 = vmax.f32 %v5323, %v5231
  %v5325 = vmax.f32 %v5324, %v5232
  %v5326 = vmax.f32 %v5325, %v5233
  %v5327 = vmax.f32 %v5234, %v5235
  %v5328 = vmax.f32 %v5327, %v5236
  %v5329 = vmax.f32 %v5328, %v5237
  %v5330 = vmax.f32 %v5329, %v5238
  %v5331 = vmax.f32 %v5330, %v5239
  %v5332 = vmax.f32 %v5331, %v5240
  %v5333 = vmax.f32 %v5332, %v5241
  %v5334 = vmax.f32 %v5333, %v5242
  %v5335 = vmax.f32 %v5334, %v5243
  %v5336 = vmax.f32 %v5244, %v5245
  %v5337 = vmax.f32 %v5336, %v5246
  %v5338 = vmax.f32 %v5337, %v5247
  %v5339 = vmax.f32 %v5338, %v5248
  %v5340 = vmax.f32 %v5339, %v5249
  %v5341 = vmax.f32 %v5340, %v5250
  %v5342 = vmax.f32 %v5341, %v5251
  %v5343 = vmax.f32 %v5342, %v5252
  %v5344 = vmax.f32 %v5343, %v5253
  %v5345 = vmax.f32 %v5254, %v5255
  %v5346 = vmax.f32 %v5345, %v5256
  %v5347 = vmax.f32 %v5346, %v5257
  %v5348 = vmax.f32 %v5347, %v5258
  %v5349 = vmax.f32 %v5348, %v5259
  %v5350 = vmax.f32 %v5349, %v5260
  %v5351 = vmax.f32 %v5350, %v5261
  %v5352 = vmax.f32 %v5351, %v5262
  %v5353 = vmax.f32 %v5352, %v5263
  %v5354 = vsub.f32 %v5164, %v5272
  %v5355 = vsub.f32 %v5165, %v5272
  %v5356 = vsub.f32 %v5166, %v5272
  %v5357 = vsub.f32 %v5167, %v5272
  %v5358 = vsub.f32 %v5168, %v5272
  %v5359 = vsub.f32 %v5169, %v5272
  %v5360 = vsub.f32 %v5170, %v5272
  %v5361 = vsub.f32 %v5171, %v5272
  %v5362 = vsub.f32 %v5172, %v5272
  %v5363 = vsub.f32 %v5173, %v5272
  %v5364 = vsub.f32 %v5174, %v5281
  %v5365 = vsub.f32 %v5175, %v5281
  %v5366 = vsub.f32 %v5176, %v5281
  %v5367 = vsub.f32 %v5177, %v5281
  %v5368 = vsub.f32 %v5178, %v5281
  %v5369 = vsub.f32 %v5179, %v5281
  %v5370 = vsub.f32 %v5180, %v5281
  %v5371 = vsub.f32 %v5181, %v5281
  %v5372 = vsub.f32 %v5182, %v5281
  %v5373 = vsub.f32 %v5183, %v5281
  %v5374 = vsub.f32 %v5184, %v5290
  %v5375 = vsub.f32 %v5185, %v5290
  %v5376 = vsub.f32 %v5186, %v5290
  %v5377 = vsub.f32 %v5187, %v5290
  %v5378 = vsub.f32 %v5188, %v5290
  %v5379 = vsub.f32 %v5189, %v5290
  %v5380 = vsub.f32 %v5190, %v5290
  %v5381 = vsub.f32 %v5191, %v5290
  %v5382 = vsub.f32 %v5192, %v5290
  %v5383 = vsub.f32 %v5193, %v5290
  %v5384 = vsub.f32 %v5194, %v5299
  %v5385 = vsub.f32 %v5195, %v5299
  %v5386 = vsub.f32 %v5196, %v5299
  %v5387 = vsub.f32 %v5197, %v5299
  %v5388 = vsub.f32 %v5198, %v5299
  %v5389 = vsub.f32 %v5199, %v5299
  %v5390 = vsub.f32 %v5200, %v5299
  %v5391 = vsub.f32 %v5201, %v5299
  %v5392 = vsub.f32 %v5202, %v5299
  %v5393 = vsub.f32 %v5203, %v5299
  %v5394 = vsub.f32 %v5204, %v5308
  %v5395 = vsub.f32 %v5205, %v5308
  %v5396 = vsub.f32 %v5206, %v5308
  %v5397 = vsub.f32 %v5207, %v5308
  %v5398 = vsub.f32 %v5208, %v5308
  %v5399 = vsub.f32 %v5209, %v5308
  %v5400 = vsub.f32 %v5210, %v5308
  %v5401 = vsub.f32 %v5211, %v5308
  %v5402 = vsub.f32 %v5212, %v5308
  %v5403 = vsub.f32 %v5213, %v5308
  %v5404 = vsub.f32 %v5214, %v5317
  %v5405 = vsub.f32 %v5215, %v5317
  %v5406 = vsub.f32 %v5216, %v5317
  %v5407 = vsub.f32 %v5217, %v5317
  %v5408 = vsub.f32 %v5218, %v5317
  %v5409 = vsub.f32 %v5219, %v5317
  %v5410 = vsub.f32 %v5220, %v5317
  %v5411 = vsub.f32 %v5221, %v5317
  %v5412 = vsub.f32 %v5222, %v5317
  %v5413 = vsub.f32 %v5223, %v5317
  %v5414 = vsub.f32 %v5224, %v5326
  %v5415 = vsub.f32 %v5225, %v5326
  %v5416 = vsub.f32 %v5226, %v5326
  %v5417 = vsub.f32 %v5227, %v5326
  %v5418 = vsub.f32 %v5228, %v5326
  %v5419 = vsub.f32 %v5229, %v5326
  %v5420 = vsub.f32 %v5230, %v5326
  %v5421 = vsub.f32 %v5231, %v5326
  %v5422 = vsub.f32 %v5232, %v5326
  %v5423 = vsub.f32 %v5233, %v5326
  %v5424 = vsub.f32 %v5234, %v5335
  %v5425 = vsub.f32 %v5235, %v5335
  %v5426 = vsub.f32 %v5236, %v5335
  %v5427 = vsub.f32 %v5237, %v5335
  %v5428 = vsub.f32 %v5238, %v5335
  %v5429 = vsub.f32 %v5239, %v5335
  %v5430 = vsub.f32 %v5240, %v5335
  %v5431 = vsub.f32 %v5241, %v5335
  %v5432 = vsub.f32 %v5242, %v5335
  %v5433 = vsub.f32 %v5243, %v5335
  %v5434 = vsub.f32 %v5244, %v5344
  %v5435 = vsub.f32 %v5245, %v5344
  %v5436 = vsub.f32 %v5246, %v5344
  %v5437 = vsub.f32 %v5247, %v5344
  %v5438 = vsub.f32 %v5248, %v5344
  %v5439 = vsub.f32 %v5249, %v5344
  %v5440 = vsub.f32 %v5250, %v5344
  %v5441 = vsub.f32 %v5251, %v5344
  %v5442 = vsub.f32 %v5252, %v5344
  %v5443 = vsub.f32 %v5253, %v5344
  %v5444 = vsub.f32 %v5254, %v5353
  %v5445 = vsub.f32 %v5255, %v5353
  %v5446 = vsub.f32 %v5256, %v5353
  %v5447 = vsub.f32 %v5257, %v5353
  %v5448 = vsub.f32 %v5258, %v5353
  %v5449 = vsub.f32 %v5259, %v5353
  %v5450 = vsub.f32 %v5260, %v5353
  %v5451 = vsub.f32 %v5261, %v5353
  %v5452 = vsub.f32 %v5262, %v5353
  %v5453 = vsub.f32 %v5263, %v5353
  %v5454 = vmul.f32 %v5354, 1.442695
  %v5455 = vpow.pop %v5454
  %v5456 = vmul.f32 %v5355, 1.442695
  %v5457 = vpow.pop %v5456
  %v5458 = vmul.f32 %v5356, 1.442695
  %v5459 = vpow.pop %v5458
  %v5460 = vmul.f32 %v5357, 1.442695
  %v5461 = vpow.pop %v5460
  %v5462 = vmul.f32 %v5358, 1.442695
  %v5463 = vpow.pop %v5462
  %v5464 = vmul.f32 %v5359, 1.442695
  %v5465 = vpow.pop %v5464
  %v5466 = vmul.f32 %v5360, 1.442695
  %v5467 = vpow.pop %v5466
  %v5468 = vmul.f32 %v5361, 1.442695
  %v5469 = vpow.pop %v5468
  %v5470 = vmul.f32 %v5362, 1.442695
  %v5471 = vpow.pop %v5470
  %v5472 = vmul.f32 %v5363, 1.442695
  %v5473 = vpow.pop %v5472
  %v5474 = vmul.f32 %v5364, 1.442695
  %v5475 = vpow.pop %v5474
  %v5476 = vmul.f32 %v5365, 1.442695
  %v5477 = vpow.pop %v5476
  %v5478 = vmul.f32 %v5366, 1.442695
  %v5479 = vpow.pop %v5478
  %v5480 = vmul.f32 %v5367, 1.442695
  %v5481 = vpow.pop %v5480
  %v5482 = vmul.f32 %v5368, 1.442695
  %v5483 = vpow.pop %v5482
  %v5484 = vmul.f32 %v5369, 1.442695
  %v5485 = vpow.pop %v5484
  %v5486 = vmul.f32 %v5370, 1.442695
  %v5487 = vpow.pop %v5486
  %v5488 = vmul.f32 %v5371, 1.442695
  %v5489 = vpow.pop %v5488
  %v5490 = vmul.f32 %v5372, 1.442695
  %v5491 = vpow.pop %v5490
  %v5492 = vmul.f32 %v5373, 1.442695
  %v5493 = vpow.pop %v5492
  %v5494 = vmul.f32 %v5374, 1.442695
  %v5495 = vpow.pop %v5494
  %v5496 = vmul.f32 %v5375, 1.442695
  %v5497 = vpow.pop %v5496
  %v5498 = vmul.f32 %v5376, 1.442695
  %v5499 = vpow.pop %v5498
  %v5500 = vmul.f32 %v5377, 1.442695
  %v5501 = vpow.pop %v5500
  %v5502 = vmul.f32 %v5378, 1.442695
  %v5503 = vpow.pop %v5502
  %v5504 = vmul.f32 %v5379, 1.442695
  %v5505 = vpow.pop %v5504
  %v5506 = vmul.f32 %v5380, 1.442695
  %v5507 = vpow.pop %v5506
  %v5508 = vmul.f32 %v5381, 1.442695
  %v5509 = vpow.pop %v5508
  %v5510 = vmul.f32 %v5382, 1.442695
  %v5511 = vpow.pop %v5510
  %v5512 = vmul.f32 %v5383, 1.442695
  %v5513 = vpow.pop %v5512
  %v5514 = vmul.f32 %v5384, 1.442695
  %v5515 = vpow.pop %v5514
  %v5516 = vmul.f32 %v5385, 1.442695
  %v5517 = vpow.pop %v5516
  %v5518 = vmul.f32 %v5386, 1.442695
  %v5519 = vpow.pop %v5518
  %v5520 = vmul.f32 %v5387, 1.442695
  %v5521 = vpow.pop %v5520
  %v5522 = vmul.f32 %v5388, 1.442695
  %v5523 = vpow.pop %v5522
  %v5524 = vmul.f32 %v5389, 1.442695
  %v5525 = vpow.pop %v5524
  %v5526 = vmul.f32 %v5390, 1.442695
  %v5527 = vpow.pop %v5526
  %v5528 = vmul.f32 %v5391, 1.442695
  %v5529 = vpow.pop %v5528
  %v5530 = vmul.f32 %v5392, 1.442695
  %v5531 = vpow.pop %v5530
  %v5532 = vmul.f32 %v5393, 1.442695
  %v5533 = vpow.pop %v5532
  %v5534 = vmul.f32 %v5394, 1.442695
  %v5535 = vpow.pop %v5534
  %v5536 = vmul.f32 %v5395, 1.442695
  %v5537 = vpow.pop %v5536
  %v5538 = vmul.f32 %v5396, 1.442695
  %v5539 = vpow.pop %v5538
  %v5540 = vmul.f32 %v5397, 1.442695
  %v5541 = vpow.pop %v5540
  %v5542 = vmul.f32 %v5398, 1.442695
  %v5543 = vpow.pop %v5542
  %v5544 = vmul.f32 %v5399, 1.442695
  %v5545 = vpow.pop %v5544
  %v5546 = vmul.f32 %v5400, 1.442695
  %v5547 = vpow.pop %v5546
  %v5548 = vmul.f32 %v5401, 1.442695
  %v5549 = vpow.pop %v5548
  %v5550 = vmul.f32 %v5402, 1.442695
  %v5551 = vpow.pop %v5550
  %v5552 = vmul.f32 %v5403, 1.442695
  %v5553 = vpow.pop %v5552
  %v5554 = vmul.f32 %v5404, 1.442695
  %v5555 = vpow.pop %v5554
  %v5556 = vmul.f32 %v5405, 1.442695
  %v5557 = vpow.pop %v5556
  %v5558 = vmul.f32 %v5406, 1.442695
  %v5559 = vpow.pop %v5558
  %v5560 = vmul.f32 %v5407, 1.442695
  %v5561 = vpow.pop %v5560
  %v5562 = vmul.f32 %v5408, 1.442695
  %v5563 = vpow.pop %v5562
  %v5564 = vmul.f32 %v5409, 1.442695
  %v5565 = vpow.pop %v5564
  %v5566 = vmul.f32 %v5410, 1.442695
  %v5567 = vpow.pop %v5566
  %v5568 = vmul.f32 %v5411, 1.442695
  %v5569 = vpow.pop %v5568
  %v5570 = vmul.f32 %v5412, 1.442695
  %v5571 = vpow.pop %v5570
  %v5572 = vmul.f32 %v5413, 1.442695
  %v5573 = vpow.pop %v5572
  %v5574 = vmul.f32 %v5414, 1.442695
  %v5575 = vpow.pop %v5574
  %v5576 = vmul.f32 %v5415, 1.442695
  %v5577 = vpow.pop %v5576
  %v5578 = vmul.f32 %v5416, 1.442695
  %v5579 = vpow.pop %v5578
  %v5580 = vmul.f32 %v5417, 1.442695
  %v5581 = vpow.pop %v5580
  %v5582 = vmul.f32 %v5418, 1.442695
  %v5583 = vpow.pop %v5582
  %v5584 = vmul.f32 %v5419, 1.442695
  %v5585 = vpow.pop %v5584
  %v5586 = vmul.f32 %v5420, 1.442695
  %v5587 = vpow.pop %v5586
  %v5588 = vmul.f32 %v5421, 1.442695
  %v5589 = vpow.pop %v5588
  %v5590 = vmul.f32 %v5422, 1.442695
  %v5591 = vpow.pop %v5590
  %v5592 = vmul.f32 %v5423, 1.442695
  %v5593 = vpow.pop %v5592
  %v5594 = vmul.f32 %v5424, 1.442695
  %v5595 = vpow.pop %v5594
  %v5596 = vmul.f32 %v5425, 1.442695
  %v5597 = vpow.pop %v5596
  %v5598 = vmul.f32 %v5426, 1.442695
  %v5599 = vpow.pop %v5598
  %v5600 = vmul.f32 %v5427, 1.442695
  %v5601 = vpow.pop %v5600
  %v5602 = vmul.f32 %v5428, 1.442695
  %v5603 = vpow.pop %v5602
  %v5604 = vmul.f32 %v5429, 1.442695
  %v5605 = vpow.pop %v5604
  %v5606 = vmul.f32 %v5430, 1.442695
  %v5607 = vpow.pop %v5606
  %v5608 = vmul.f32 %v5431, 1.442695
  %v5609 = vpow.pop %v5608
  %v5610 = vmul.f32 %v5432, 1.442695
  %v5611 = vpow.pop %v5610
  %v5612 = vmul.f32 %v5433, 1.442695
  %v5613 = vpow.pop %v5612
  %v5614 = vmul.f32 %v5434, 1.442695
  %v5615 = vpow.pop %v5614
  %v5616 = vmul.f32 %v5435, 1.442695
  %v5617 = vpow.pop %v5616
  %v5618 = vmul.f32 %v5436, 1.442695
  %v5619 = vpow.pop %v5618
  %v5620 = vmul.f32 %v5437, 1.442695
  %v5621 = vpow.pop %v5620
  %v5622 = vmul.f32 %v5438, 1.442695
  %v5623 = vpow.pop %v5622
  %v5624 = vmul.f32 %v5439, 1.442695
  %v5625 = vpow.pop %v5624
  %v5626 = vmul.f32 %v5440, 1.442695
  %v5627 = vpow.pop %v5626
  %v5628 = vmul.f32 %v5441, 1.442695
  %v5629 = vpow.pop %v5628
  %v5630 = vmul.f32 %v5442, 1.442695
  %v5631 = vpow.pop %v5630
  %v5632 = vmul.f32 %v5443, 1.442695
  %v5633 = vpow.pop %v5632
  %v5634 = vmul.f32 %v5444, 1.442695
  %v5635 = vpow.pop %v5634
  %v5636 = vmul.f32 %v5445, 1.442695
  %v5637 = vpow.pop %v5636
  %v5638 = vmul.f32 %v5446, 1.442695
  %v5639 = vpow.pop %v5638
  %v5640 = vmul.f32 %v5447, 1.442695
  %v5641 = vpow.pop %v5640
  %v5642 = vmul.f32 %v5448, 1.442695
  %v5643 = vpow.pop %v5642
  %v5644 = vmul.f32 %v5449, 1.442695
  %v5645 = vpow.pop %v5644
  %v5646 = vmul.f32 %v5450, 1.442695
  %v5647 = vpow.pop %v5646
  %v5648 = vmul.f32 %v5451, 1.442695
  %v5649 = vpow.pop %v5648
  %v5650 = vmul.f32 %v5452, 1.442695
  %v5651 = vpow.pop %v5650
  %v5652 = vmul.f32 %v5453, 1.442695
  %v5653 = vpow.pop %v5652
  %v5654 = vadd.f32 %v5455, %v5457
  %v5655 = vadd.f32 %v5654, %v5459
  %v5656 = vadd.f32 %v5655, %v5461
  %v5657 = vadd.f32 %v5656, %v5463
  %v5658 = vadd.f32 %v5657, %v5465
  %v5659 = vadd.f32 %v5658, %v5467
  %v5660 = vadd.f32 %v5659, %v5469
  %v5661 = vadd.f32 %v5660, %v5471
  %v5662 = vadd.f32 %v5661, %v5473
  %v5663 = vadd.f32 %v5475, %v5477
  %v5664 = vadd.f32 %v5663, %v5479
  %v5665 = vadd.f32 %v5664, %v5481
  %v5666 = vadd.f32 %v5665, %v5483
  %v5667 = vadd.f32 %v5666, %v5485
  %v5668 = vadd.f32 %v5667, %v5487
  %v5669 = vadd.f32 %v5668, %v5489
  %v5670 = vadd.f32 %v5669, %v5491
  %v5671 = vadd.f32 %v5670, %v5493
  %v5672 = vadd.f32 %v5495, %v5497
  %v5673 = vadd.f32 %v5672, %v5499
  %v5674 = vadd.f32 %v5673, %v5501
  %v5675 = vadd.f32 %v5674, %v5503
  %v5676 = vadd.f32 %v5675, %v5505
  %v5677 = vadd.f32 %v5676, %v5507
  %v5678 = vadd.f32 %v5677, %v5509
  %v5679 = vadd.f32 %v5678, %v5511
  %v5680 = vadd.f32 %v5679, %v5513
  %v5681 = vadd.f32 %v5515, %v5517
  %v5682 = vadd.f32 %v5681, %v5519
  %v5683 = vadd.f32 %v5682, %v5521
  %v5684 = vadd.f32 %v5683, %v5523
  %v5685 = vadd.f32 %v5684, %v5525
  %v5686 = vadd.f32 %v5685, %v5527
  %v5687 = vadd.f32 %v5686, %v5529
  %v5688 = vadd.f32 %v5687, %v5531
  %v5689 = vadd.f32 %v5688, %v5533
  %v5690 = vadd.f32 %v5535, %v5537
  %v5691 = vadd.f32 %v5690, %v5539
  %v5692 = vadd.f32 %v5691, %v5541
  %v5693 = vadd.f32 %v5692, %v5543
  %v5694 = vadd.f32 %v5693, %v5545
  %v5695 = vadd.f32 %v5694, %v5547
  %v5696 = vadd.f32 %v5695, %v5549
  %v5697 = vadd.f32 %v5696, %v5551
  %v5698 = vadd.f32 %v5697, %v5553
  %v5699 = vadd.f32 %v5555, %v5557
  %v5700 = vadd.f32 %v5699, %v5559
  %v5701 = vadd.f32 %v5700, %v5561
  %v5702 = vadd.f32 %v5701, %v5563
  %v5703 = vadd.f32 %v5702, %v5565
  %v5704 = vadd.f32 %v5703, %v5567
  %v5705 = vadd.f32 %v5704, %v5569
  %v5706 = vadd.f32 %v5705, %v5571
  %v5707 = vadd.f32 %v5706, %v5573
  %v5708 = vadd.f32 %v5575, %v5577
  %v5709 = vadd.f32 %v5708, %v5579
  %v5710 = vadd.f32 %v5709, %v5581
  %v5711 = vadd.f32 %v5710, %v5583
  %v5712 = vadd.f32 %v5711, %v5585
  %v5713 = vadd.f32 %v5712, %v5587
  %v5714 = vadd.f32 %v5713, %v5589
  %v5715 = vadd.f32 %v5714, %v5591
  %v5716 = vadd.f32 %v5715, %v5593
  %v5717 = vadd.f32 %v5595, %v5597
  %v5718 = vadd.f32 %v5717, %v5599
  %v5719 = vadd.f32 %v5718, %v5601
  %v5720 = vadd.f32 %v5719, %v5603
  %v5721 = vadd.f32 %v5720, %v5605
  %v5722 = vadd.f32 %v5721, %v5607
  %v5723 = vadd.f32 %v5722, %v5609
  %v5724 = vadd.f32 %v5723, %v5611
  %v5725 = vadd.f32 %v5724, %v5613
  %v5726 = vadd.f32 %v5615, %v5617
  %v5727 = vadd.f32 %v5726, %v5619
  %v5728 = vadd.f32 %v5727, %v5621
  %v5729 = vadd.f32 %v5728, %v5623
  %v5730 = vadd.f32 %v5729, %v5625
  %v5731 = vadd.f32 %v5730, %v5627
  %v5732 = vadd.f32 %v5731, %v5629
  %v5733 = vadd.f32 %v5732, %v5631
  %v5734 = vadd.f32 %v5733, %v5633
  %v5735 = vadd.f32 %v5635, %v5637
  %v5736 = vadd.f32 %v5735, %v5639
  %v5737 = vadd.f32 %v5736, %v5641
  %v5738 = vadd.f32 %v5737, %v5643
  %v5739 = vadd.f32 %v5738, %v5645
  %v5740 = vadd.f32 %v5739, %v5647
  %v5741 = vadd.f32 %v5740, %v5649
  %v5742 = vadd.f32 %v5741, %v5651
  %v5743 = vadd.f32 %v5742, %v5653
  %v5744 = vmul.f32 %v5455, %v4296
  %v5745 = vmul.f32 %v5457, %v4301
  %v5746 = vmul.f32 %v5459, %v4306
  %v5747 = vmul.f32 %v5461, %v4311
  %v5748 = vmul.f32 %v5463, %v4316
  %v5749 = vmul.f32 %v5465, %v4321
  %v5750 = vmul.f32 %v5467, %v4326
  %v5751 = vmul.f32 %v5469, %v4331
  %v5752 = vmul.f32 %v5471, %v4336
  %v5753 = vmul.f32 %v5473, %v4341
  %v5754 = vmul.f32 %v5475, %v4296
  %v5755 = vmul.f32 %v5477, %v4301
  %v5756 = vmul.f32 %v5479, %v4306
  %v5757 = vmul.f32 %v5481, %v4311
  %v5758 = vmul.f32 %v5483, %v4316
  %v5759 = vmul.f32 %v5485, %v4321
  %v5760 = vmul.f32 %v5487, %v4326
  %v5761 = vmul.f32 %v5489, %v4331
  %v5762 = vmul.f32 %v5491, %v4336
  %v5763 = vmul.f32 %v5493, %v4341
  %v5764 = vmul.f32 %v5495, %v4296
  %v5765 = vmul.f32 %v5497, %v4301
  %v5766 = vmul.f32 %v5499, %v4306
  %v5767 = vmul.f32 %v5501, %v4311
  %v5768 = vmul.f32 %v5503, %v4316
  %v5769 = vmul.f32 %v5505, %v4321
  %v5770 = vmul.f32 %v5507, %v4326
  %v5771 = vmul.f32 %v5509, %v4331
  %v5772 = vmul.f32 %v5511, %v4336
  %v5773 = vmul.f32 %v5513, %v4341
  %v5774 = vmul.f32 %v5515, %v4296
  %v5775 = vmul.f32 %v5517, %v4301
  %v5776 = vmul.f32 %v5519, %v4306
  %v5777 = vmul.f32 %v5521, %v4311
  %v5778 = vmul.f32 %v5523, %v4316
  %v5779 = vmul.f32 %v5525, %v4321
  %v5780 = vmul.f32 %v5527, %v4326
  %v5781 = vmul.f32 %v5529, %v4331
  %v5782 = vmul.f32 %v5531, %v4336
  %v5783 = vmul.f32 %v5533, %v4341
  %v5784 = vmul.f32 %v5535, %v4296
  %v5785 = vmul.f32 %v5537, %v4301
  %v5786 = vmul.f32 %v5539, %v4306
  %v5787 = vmul.f32 %v5541, %v4311
  %v5788 = vmul.f32 %v5543, %v4316
  %v5789 = vmul.f32 %v5545, %v4321
  %v5790 = vmul.f32 %v5547, %v4326
  %v5791 = vmul.f32 %v5549, %v4331
  %v5792 = vmul.f32 %v5551, %v4336
  %v5793 = vmul.f32 %v5553, %v4341
  %v5794 = vmul.f32 %v5555, %v4296
  %v5795 = vmul.f32 %v5557, %v4301
  %v5796 = vmul.f32 %v5559, %v4306
  %v5797 = vmul.f32 %v5561, %v4311
  %v5798 = vmul.f32 %v5563, %v4316
  %v5799 = vmul.f32 %v5565, %v4321
  %v5800 = vmul.f32 %v5567, %v4326
  %v5801 = vmul.f32 %v5569, %v4331
  %v5802 = vmul.f32 %v5571, %v4336
  %v5803 = vmul.f32 %v5573, %v4341
  %v5804 = vmul.f32 %v5575, %v4296
  %v5805 = vmul.f32 %v5577, %v4301
  %v5806 = vmul.f32 %v5579, %v4306
  %v5807 = vmul.f32 %v5581, %v4311
  %v5808 = vmul.f32 %v5583, %v4316
  %v5809 = vmul.f32 %v5585, %v4321
  %v5810 = vmul.f32 %v5587, %v4326
  %v5811 = vmul.f32 %v5589, %v4331
  %v5812 = vmul.f32 %v5591, %v4336
  %v5813 = vmul.f32 %v5593, %v4341
  %v5814 = vmul.f32 %v5595, %v4296
  %v5815 = vmul.f32 %v5597, %v4301
  %v5816 = vmul.f32 %v5599, %v4306
  %v5817 = vmul.f32 %v5601, %v4311
  %v5818 = vmul.f32 %v5603, %v4316
  %v5819 = vmul.f32 %v5605, %v4321
  %v5820 = vmul.f32 %v5607, %v4326
  %v5821 = vmul.f32 %v5609, %v4331
  %v5822 = vmul.f32 %v5611, %v4336
  %v5823 = vmul.f32 %v5613, %v4341
  %v5824 = vmul.f32 %v5615, %v4296
  %v5825 = vmul.f32 %v5617, %v4301
  %v5826 = vmul.f32 %v5619, %v4306
  %v5827 = vmul.f32 %v5621, %v4311
  %v5828 = vmul.f32 %v5623, %v4316
  %v5829 = vmul.f32 %v5625, %v4321
  %v5830 = vmul.f32 %v5627, %v4326
  %v5831 = vmul.f32 %v5629, %v4331
  %v5832 = vmul.f32 %v5631, %v4336
  %v5833 = vmul.f32 %v5633, %v4341
  %v5834 = vmul.f32 %v5635, %v4296
  %v5835 = vmul.f32 %v5637, %v4301
  %v5836 = vmul.f32 %v5639, %v4306
  %v5837 = vmul.f32 %v5641, %v4311
  %v5838 = vmul.f32 %v5643, %v4316
  %v5839 = vmul.f32 %v5645, %v4321
  %v5840 = vmul.f32 %v5647, %v4326
  %v5841 = vmul.f32 %v5649, %v4331
  %v5842 = vmul.f32 %v5651, %v4336
  %v5843 = vmul.f32 %v5653, %v4341
  %v5844 = vadd.f32 %v5744, %v5745
  %v5845 = vadd.f32 %v5844, %v5746
  %v5846 = vadd.f32 %v5845, %v5747
  %v5847 = vadd.f32 %v5846, %v5748
  %v5848 = vadd.f32 %v5847, %v5749
  %v5849 = vadd.f32 %v5848, %v5750
  %v5850 = vadd.f32 %v5849, %v5751
  %v5851 = vadd.f32 %v5850, %v5752
  %v5852 = vadd.f32 %v5851, %v5753
  %v5853 = vadd.f32 %v5754, %v5755
  %v5854 = vadd.f32 %v5853, %v5756
  %v5855 = vadd.f32 %v5854, %v5757
  %v5856 = vadd.f32 %v5855, %v5758
  %v5857 = vadd.f32 %v5856, %v5759
  %v5858 = vadd.f32 %v5857, %v5760
  %v5859 = vadd.f32 %v5858, %v5761
  %v5860 = vadd.f32 %v5859, %v5762
  %v5861 = vadd.f32 %v5860, %v5763
  %v5862 = vadd.f32 %v5764, %v5765
  %v5863 = vadd.f32 %v5862, %v5766
  %v5864 = vadd.f32 %v5863, %v5767
  %v5865 = vadd.f32 %v5864, %v5768
  %v5866 = vadd.f32 %v5865, %v5769
  %v5867 = vadd.f32 %v5866, %v5770
  %v5868 = vadd.f32 %v5867, %v5771
  %v5869 = vadd.f32 %v5868, %v5772
  %v5870 = vadd.f32 %v5869, %v5773
  %v5871 = vadd.f32 %v5774, %v5775
  %v5872 = vadd.f32 %v5871, %v5776
  %v5873 = vadd.f32 %v5872, %v5777
  %v5874 = vadd.f32 %v5873, %v5778
  %v5875 = vadd.f32 %v5874, %v5779
  %v5876 = vadd.f32 %v5875, %v5780
  %v5877 = vadd.f32 %v5876, %v5781
  %v5878 = vadd.f32 %v5877, %v5782
  %v5879 = vadd.f32 %v5878, %v5783
  %v5880 = vadd.f32 %v5784, %v5785
  %v5881 = vadd.f32 %v5880, %v5786
  %v5882 = vadd.f32 %v5881, %v5787
  %v5883 = vadd.f32 %v5882, %v5788
  %v5884 = vadd.f32 %v5883, %v5789
  %v5885 = vadd.f32 %v5884, %v5790
  %v5886 = vadd.f32 %v5885, %v5791
  %v5887 = vadd.f32 %v5886, %v5792
  %v5888 = vadd.f32 %v5887, %v5793
  %v5889 = vadd.f32 %v5794, %v5795
  %v5890 = vadd.f32 %v5889, %v5796
  %v5891 = vadd.f32 %v5890, %v5797
  %v5892 = vadd.f32 %v5891, %v5798
  %v5893 = vadd.f32 %v5892, %v5799
  %v5894 = vadd.f32 %v5893, %v5800
  %v5895 = vadd.f32 %v5894, %v5801
  %v5896 = vadd.f32 %v5895, %v5802
  %v5897 = vadd.f32 %v5896, %v5803
  %v5898 = vadd.f32 %v5804, %v5805
  %v5899 = vadd.f32 %v5898, %v5806
  %v5900 = vadd.f32 %v5899, %v5807
  %v5901 = vadd.f32 %v5900, %v5808
  %v5902 = vadd.f32 %v5901, %v5809
  %v5903 = vadd.f32 %v5902, %v5810
  %v5904 = vadd.f32 %v5903, %v5811
  %v5905 = vadd.f32 %v5904, %v5812
  %v5906 = vadd.f32 %v5905, %v5813
  %v5907 = vadd.f32 %v5814, %v5815
  %v5908 = vadd.f32 %v5907, %v5816
  %v5909 = vadd.f32 %v5908, %v5817
  %v5910 = vadd.f32 %v5909, %v5818
  %v5911 = vadd.f32 %v5910, %v5819
  %v5912 = vadd.f32 %v5911, %v5820
  %v5913 = vadd.f32 %v5912, %v5821
  %v5914 = vadd.f32 %v5913, %v5822
  %v5915 = vadd.f32 %v5914, %v5823
  %v5916 = vadd.f32 %v5824, %v5825
  %v5917 = vadd.f32 %v5916, %v5826
  %v5918 = vadd.f32 %v5917, %v5827
  %v5919 = vadd.f32 %v5918, %v5828
  %v5920 = vadd.f32 %v5919, %v5829
  %v5921 = vadd.f32 %v5920, %v5830
  %v5922 = vadd.f32 %v5921, %v5831
  %v5923 = vadd.f32 %v5922, %v5832
  %v5924 = vadd.f32 %v5923, %v5833
  %v5925 = vadd.f32 %v5834, %v5835
  %v5926 = vadd.f32 %v5925, %v5836
  %v5927 = vadd.f32 %v5926, %v5837
  %v5928 = vadd.f32 %v5927, %v5838
  %v5929 = vadd.f32 %v5928, %v5839
  %v5930 = vadd.f32 %v5929, %v5840
  %v5931 = vadd.f32 %v5930, %v5841
  %v5932 = vadd.f32 %v5931, %v5842
  %v5933 = vadd.f32 %v5932, %v5843
  %v5934 = vrcp.pop %v5662
  %v5935 = vrcp.pop %v5671
  %v5936 = vrcp.pop %v5680
  %v5937 = vrcp.pop %v5689
  %v5938 = vrcp.pop %v5698
  %v5939 = vrcp.pop %v5707
  %v5940 = vrcp.pop %v5716
  %v5941 = vrcp.pop %v5725
  %v5942 = vrcp.pop %v5734
  %v5943 = vrcp.pop %v5743
  %v5944 = vmul.f32 %v5852, %v5934
  %v5945 = vmul.f32 %v5861, %v5935
  %v5946 = vmul.f32 %v5870, %v5936
  %v5947 = vmul.f32 %v5879, %v5937
  %v5948 = vmul.f32 %v5888, %v5938
  %v5949 = vmul.f32 %v5897, %v5939
  %v5950 = vmul.f32 %v5906, %v5940
  %v5951 = vmul.f32 %v5915, %v5941
  %v5952 = vmul.f32 %v5924, %v5942
  %v5953 = vmul.f32 %v5933, %v5943
  %s5954 = scalar_lea.vmem %s6, 128
  %v5955 = vld [vmem:[%s5954] sm:$0xff]
  %v5956 = vld [vmem:[%s5954 + $0x8] sm:$0xff]
  %v5957 = vld [vmem:[%s5954 + $0x10] sm:$0xff]
  %v5958 = vld [vmem:[%s5954 + $0x18] sm:$0xff]
  %v5959 = vld [vmem:[%s5954 + $0x20] sm:$0xff]
  %v5960 = vld [vmem:[%s5954 + $0x28] sm:$0xff]
  %v5961 = vld [vmem:[%s5954 + $0x30] sm:$0xff]
  %v5962 = vld [vmem:[%s5954 + $0x38] sm:$0xff]
  %v5963 = vld [vmem:[%s5954 + $0x40] sm:$0xff]
  %v5964 = vld [vmem:[%s5954 + $0x48] sm:$0xff]
  %v5965 = vld [vmem:[%s5954 + $0x50] sm:$0xff]
  %v5966 = vld [vmem:[%s5954 + $0x58] sm:$0xff]
  %v5967 = vld [vmem:[%s5954 + $0x60] sm:$0xff]
  %v5968 = vld [vmem:[%s5954 + $0x68] sm:$0xff]
  %v5969 = vld [vmem:[%s5954 + $0x70] sm:$0xff]
  %v5970 = vld [vmem:[%s5954 + $0x78] sm:$0xff]
  %s5971 = scalar_lea.vmem %s7, 1
  %v5972 = vld [vmem:[%s5971] sm:$0x1]
  %v5974 = vlaneseq
  %v5975 = vshrl.u32 %v5974, 7
  %v5976 = vsub.s32 0, %v5975
  %v5977 = vrot.slane %v5972, %v5976
  %5979 = vmatprep.subr.mxu0 0.0
  %5980 = vmatpush1.msra.mxu0 %v5970
  %5981 = vmatprep.subr.mxu0 0.0
  %5982 = vmatpush1.msra.mxu0 %v5969
  %5983 = vmatprep.subr.mxu0 0.0
  %5984 = vmatpush1.msra.mxu0 %v5968
  %5985 = vmatprep.subr.mxu0 0.0
  %5986 = vmatpush1.msra.mxu0 %v5967
  %5987 = vmatprep.subr.mxu0 0.0
  %5988 = vmatpush1.msra.mxu0 %v5966
  %5989 = vmatprep.subr.mxu0 0.0
  %5990 = vmatpush1.msra.mxu0 %v5965
  %5991 = vmatprep.subr.mxu0 0.0
  %5992 = vmatpush1.msra.mxu0 %v5964
  %5993 = vmatprep.subr.mxu0 0.0
  %5994 = vmatpush1.msra.mxu0 %v5963
  %5995 = vmatprep.subr.mxu0 0.0
  %5996 = vmatpush1.msra.mxu0 %v5962
  %5997 = vmatprep.subr.mxu0 0.0
  %5998 = vmatpush1.msra.mxu0 %v5961
  %5999 = vmatprep.subr.mxu0 0.0
  %6000 = vmatpush1.msra.mxu0 %v5960
  %6001 = vmatprep.subr.mxu0 0.0
  %6002 = vmatpush1.msra.mxu0 %v5959
  %6003 = vmatprep.subr.mxu0 0.0
  %6004 = vmatpush1.msra.mxu0 %v5958
  %6005 = vmatprep.subr.mxu0 0.0
  %6006 = vmatpush1.msra.mxu0 %v5957
  %6007 = vmatprep.subr.mxu0 0.0
  %6008 = vmatpush1.msra.mxu0 %v5956
  %6009 = vmatprep.subr.mxu0 0.0
  %6010 = vmatpush1.msra.mxu0 %v5955
  %6011 = vmatprep.subr.mxu0 0.0
  %6012 = vmatpush2.msra.mxu0 0.0
  %6013 = vmatprep.subr.mxu0 0.0
  %6014 = vmatpush2.msra.mxu0 0.0
  %6015 = vmatprep.subr.mxu0 0.0
  %6016 = vmatpush2.msra.mxu0 0.0
  %6017 = vmatprep.subr.mxu0 0.0
  %6018 = vmatpush2.msra.mxu0 0.0
  %6019 = vmatprep.subr.mxu0 0.0
  %6020 = vmatpush2.msra.mxu0 0.0
  %6021 = vmatprep.subr.mxu0 0.0
  %6022 = vmatpush2.msra.mxu0 0.0
  %6023 = vmatprep.subr.mxu0 0.0
  %6024 = vmatpush2.msra.mxu0 0.0
  %6025 = vmatprep.subr.mxu0 0.0
  %6026 = vmatpush2.msra.mxu0 0.0
  %6027 = vmatprep.subr.mxu0 0.0
  %6028 = vmatpush2.msra.mxu0 0.0
  %6029 = vmatprep.subr.mxu0 0.0
  %6030 = vmatpush2.msra.mxu0 0.0
  %6031 = vmatprep.subr.mxu0 0.0
  %6032 = vmatpush2.msra.mxu0 0.0
  %6033 = vmatprep.subr.mxu0 0.0
  %6034 = vmatpush2.msra.mxu0 0.0
  %6035 = vmatprep.subr.mxu0 0.0
  %6036 = vmatpush2.msra.mxu0 0.0
  %6037 = vmatprep.subr.mxu0 0.0
  %6038 = vmatpush2.msra.mxu0 0.0
  %6039 = vmatprep.subr.mxu0 0.0
  %6040 = vmatpush2.msra.mxu0 0.0
  %6041 = vmatprep.subr.mxu0 0.0
  %6042 = vmatpush2.msra.mxu0 0.0
  %6043 = vmatprep.mubr.f32.mxu0 0.0
  %6044 = vmatmul.mubr.f32.gmra.mxu0 %v5944
  %v6045 = vpop.f32.mrf.mxu0
  %v6046 = vadd.f32 %v5977, %v6045
  %v6047 = vpop.f32.mrf.mxu0
  %6048 = vmatprep.mubr.f32.mxu0 0.0
  %6049 = vmatmul.mubr.f32.gmra.mxu0 %v5945
  %v6050 = vpop.f32.mrf.mxu0
  %v6051 = vadd.f32 %v5977, %v6050
  %v6052 = vpop.f32.mrf.mxu0
  %6053 = vmatprep.mubr.f32.mxu0 0.0
  %6054 = vmatmul.mubr.f32.gmra.mxu0 %v5946
  %v6055 = vpop.f32.mrf.mxu0
  %v6056 = vadd.f32 %v5977, %v6055
  %v6057 = vpop.f32.mrf.mxu0
  %6058 = vmatprep.mubr.f32.mxu0 0.0
  %6059 = vmatmul.mubr.f32.gmra.mxu0 %v5947
  %v6060 = vpop.f32.mrf.mxu0
  %v6061 = vadd.f32 %v5977, %v6060
  %v6062 = vpop.f32.mrf.mxu0
  %6063 = vmatprep.mubr.f32.mxu0 0.0
  %6064 = vmatmul.mubr.f32.gmra.mxu0 %v5948
  %v6065 = vpop.f32.mrf.mxu0
  %v6066 = vadd.f32 %v5977, %v6065
  %v6067 = vpop.f32.mrf.mxu0
  %6068 = vmatprep.mubr.f32.mxu0 0.0
  %6069 = vmatmul.mubr.f32.gmra.mxu0 %v5949
  %v6070 = vpop.f32.mrf.mxu0
  %v6071 = vadd.f32 %v5977, %v6070
  %v6072 = vpop.f32.mrf.mxu0
  %6073 = vmatprep.mubr.f32.mxu0 0.0
  %6074 = vmatmul.mubr.f32.gmra.mxu0 %v5950
  %v6075 = vpop.f32.mrf.mxu0
  %v6076 = vadd.f32 %v5977, %v6075
  %v6077 = vpop.f32.mrf.mxu0
  %6078 = vmatprep.mubr.f32.mxu0 0.0
  %6079 = vmatmul.mubr.f32.gmra.mxu0 %v5951
  %v6080 = vpop.f32.mrf.mxu0
  %v6081 = vadd.f32 %v5977, %v6080
  %v6082 = vpop.f32.mrf.mxu0
  %6083 = vmatprep.mubr.f32.mxu0 0.0
  %6084 = vmatmul.mubr.f32.gmra.mxu0 %v5952
  %v6085 = vpop.f32.mrf.mxu0
  %v6086 = vadd.f32 %v5977, %v6085
  %v6087 = vpop.f32.mrf.mxu0
  %6088 = vmatprep.mubr.f32.mxu0 0.0
  %6089 = vmatmul.mubr.f32.gmra.mxu0 %v5953
  %v6090 = vpop.f32.mrf.mxu0
  %v6091 = vadd.f32 %v5977, %v6090
  %v6092 = vpop.f32.mrf.mxu0
  %6093 = vdwg.mxu0
  %v6094 = vadd.f32 %v4039, %v6046
  %v6095 = vadd.f32 %v4040, %v6051
  %v6096 = vadd.f32 %v4041, %v6056
  %v6097 = vadd.f32 %v4042, %v6061
  %v6098 = vadd.f32 %v4043, %v6066
  %v6099 = vadd.f32 %v4044, %v6071
  %v6100 = vadd.f32 %v4045, %v6076
  %v6101 = vadd.f32 %v4046, %v6081
  %v6102 = vadd.f32 %v4047, %v6086
  %v6103 = vadd.f32 %v4048, %v6091
  %v6104 = vsel %vm1855, %v6094, 0.0
  %6105 = vadd.xlane.f32.xlu0 %v6104
  %v6106 = vpop.xlane.xlu0 %6105
  %v6107 = vsel %vm1855, %v6095, 0.0
  %6108 = vadd.xlane.f32.xlu0 %v6107
  %v6109 = vpop.xlane.xlu0 %6108
  %v6110 = vsel %vm1855, %v6096, 0.0
  %6111 = vadd.xlane.f32.xlu0 %v6110
  %v6112 = vpop.xlane.xlu0 %6111
  %v6113 = vsel %vm1855, %v6097, 0.0
  %6114 = vadd.xlane.f32.xlu0 %v6113
  %v6115 = vpop.xlane.xlu0 %6114
  %v6116 = vsel %vm1855, %v6098, 0.0
  %6117 = vadd.xlane.f32.xlu0 %v6116
  %v6118 = vpop.xlane.xlu0 %6117
  %v6119 = vsel %vm1855, %v6099, 0.0
  %6120 = vadd.xlane.f32.xlu0 %v6119
  %v6121 = vpop.xlane.xlu0 %6120
  %v6122 = vsel %vm1855, %v6100, 0.0
  %6123 = vadd.xlane.f32.xlu0 %v6122
  %v6124 = vpop.xlane.xlu0 %6123
  %v6125 = vsel %vm1855, %v6101, 0.0
  %6126 = vadd.xlane.f32.xlu0 %v6125
  %v6127 = vpop.xlane.xlu0 %6126
  %v6128 = vsel %vm1855, %v6102, 0.0
  %6129 = vadd.xlane.f32.xlu0 %v6128
  %v6130 = vpop.xlane.xlu0 %6129
  %v6131 = vsel %vm1855, %v6103, 0.0
  %6132 = vadd.xlane.f32.xlu0 %v6131
  %v6133 = vpop.xlane.xlu0 %6132
  %v6134 = vmul.f32 %v6106, %v3914
  %v6135 = vmul.f32 %v6109, %v3914
  %v6136 = vmul.f32 %v6112, %v3914
  %v6137 = vmul.f32 %v6115, %v3914
  %v6138 = vmul.f32 %v6118, %v3914
  %v6139 = vmul.f32 %v6121, %v3914
  %v6140 = vmul.f32 %v6124, %v3914
  %v6141 = vmul.f32 %v6127, %v3914
  %v6142 = vmul.f32 %v6130, %v3914
  %v6143 = vmul.f32 %v6133, %v3914
  %v6144 = vsub.f32 %v6094, %v6134
  %v6145 = vsub.f32 %v6095, %v6135
  %v6146 = vsub.f32 %v6096, %v6136
  %v6147 = vsub.f32 %v6097, %v6137
  %v6148 = vsub.f32 %v6098, %v6138
  %v6149 = vsub.f32 %v6099, %v6139
  %v6150 = vsub.f32 %v6100, %v6140
  %v6151 = vsub.f32 %v6101, %v6141
  %v6152 = vsub.f32 %v6102, %v6142
  %v6153 = vsub.f32 %v6103, %v6143
  %v6154 = vmul.f32 %v6144, %v6144
  %v6155 = vmul.f32 %v6145, %v6145
  %v6156 = vmul.f32 %v6146, %v6146
  %v6157 = vmul.f32 %v6147, %v6147
  %v6158 = vmul.f32 %v6148, %v6148
  %v6159 = vmul.f32 %v6149, %v6149
  %v6160 = vmul.f32 %v6150, %v6150
  %v6161 = vmul.f32 %v6151, %v6151
  %v6162 = vmul.f32 %v6152, %v6152
  %v6163 = vmul.f32 %v6153, %v6153
  %v6164 = vsel %vm1855, %v6154, 0.0
  %6165 = vadd.xlane.f32.xlu0 %v6164
  %v6166 = vpop.xlane.xlu0 %6165
  %v6167 = vsel %vm1855, %v6155, 0.0
  %6168 = vadd.xlane.f32.xlu0 %v6167
  %v6169 = vpop.xlane.xlu0 %6168
  %v6170 = vsel %vm1855, %v6156, 0.0
  %6171 = vadd.xlane.f32.xlu0 %v6170
  %v6172 = vpop.xlane.xlu0 %6171
  %v6173 = vsel %vm1855, %v6157, 0.0
  %6174 = vadd.xlane.f32.xlu0 %v6173
  %v6175 = vpop.xlane.xlu0 %6174
  %v6176 = vsel %vm1855, %v6158, 0.0
  %6177 = vadd.xlane.f32.xlu0 %v6176
  %v6178 = vpop.xlane.xlu0 %6177
  %v6179 = vsel %vm1855, %v6159, 0.0
  %6180 = vadd.xlane.f32.xlu0 %v6179
  %v6181 = vpop.xlane.xlu0 %6180
  %v6182 = vsel %vm1855, %v6160, 0.0
  %6183 = vadd.xlane.f32.xlu0 %v6182
  %v6184 = vpop.xlane.xlu0 %6183
  %v6185 = vsel %vm1855, %v6161, 0.0
  %6186 = vadd.xlane.f32.xlu0 %v6185
  %v6187 = vpop.xlane.xlu0 %6186
  %v6188 = vsel %vm1855, %v6162, 0.0
  %6189 = vadd.xlane.f32.xlu0 %v6188
  %v6190 = vpop.xlane.xlu0 %6189
  %v6191 = vsel %vm1855, %v6163, 0.0
  %6192 = vadd.xlane.f32.xlu0 %v6191
  %v6193 = vpop.xlane.xlu0 %6192
  %v6194 = vmul.f32 %v6166, %v3914
  %v6195 = vmul.f32 %v6169, %v3914
  %v6196 = vmul.f32 %v6172, %v3914
  %v6197 = vmul.f32 %v6175, %v3914
  %v6198 = vmul.f32 %v6178, %v3914
  %v6199 = vmul.f32 %v6181, %v3914
  %v6200 = vmul.f32 %v6184, %v3914
  %v6201 = vmul.f32 %v6187, %v3914
  %v6202 = vmul.f32 %v6190, %v3914
  %v6203 = vmul.f32 %v6193, %v3914
  %v6204 = vadd.f32 %v6194, 1e-05
  %v6205 = vadd.f32 %v6195, 1e-05
  %v6206 = vadd.f32 %v6196, 1e-05
  %v6207 = vadd.f32 %v6197, 1e-05
  %v6208 = vadd.f32 %v6198, 1e-05
  %v6209 = vadd.f32 %v6199, 1e-05
  %v6210 = vadd.f32 %v6200, 1e-05
  %v6211 = vadd.f32 %v6201, 1e-05
  %v6212 = vadd.f32 %v6202, 1e-05
  %v6213 = vadd.f32 %v6203, 1e-05
  %v6214 = vrsqrt.pop %v6204
  %v6215 = vrsqrt.pop %v6205
  %v6216 = vrsqrt.pop %v6206
  %v6217 = vrsqrt.pop %v6207
  %v6218 = vrsqrt.pop %v6208
  %v6219 = vrsqrt.pop %v6209
  %v6220 = vrsqrt.pop %v6210
  %v6221 = vrsqrt.pop %v6211
  %v6222 = vrsqrt.pop %v6212
  %v6223 = vrsqrt.pop %v6213
  %v6224 = vmul.f32 %v6144, %v6214
  %v6225 = vmul.f32 %v6145, %v6215
  %v6226 = vmul.f32 %v6146, %v6216
  %v6227 = vmul.f32 %v6147, %v6217
  %v6228 = vmul.f32 %v6148, %v6218
  %v6229 = vmul.f32 %v6149, %v6219
  %v6230 = vmul.f32 %v6150, %v6220
  %v6231 = vmul.f32 %v6151, %v6221
  %v6232 = vmul.f32 %v6152, %v6222
  %v6233 = vmul.f32 %v6153, %v6223
  %s6234 = scalar_lea.vmem %s8, 1
  %v6235 = vld [vmem:[%s6234] sm:$0x1]
  %v6237 = vlaneseq
  %v6238 = vshrl.u32 %v6237, 7
  %v6239 = vsub.s32 0, %v6238
  %v6240 = vrot.slane %v6235, %v6239
  %v6242 = vmul.f32 %v6224, %v6240
  %v6243 = vmul.f32 %v6225, %v6240
  %v6244 = vmul.f32 %v6226, %v6240
  %v6245 = vmul.f32 %v6227, %v6240
  %v6246 = vmul.f32 %v6228, %v6240
  %v6247 = vmul.f32 %v6229, %v6240
  %v6248 = vmul.f32 %v6230, %v6240
  %v6249 = vmul.f32 %v6231, %v6240
  %v6250 = vmul.f32 %v6232, %v6240
  %v6251 = vmul.f32 %v6233, %v6240
  %s6252 = scalar_lea.vmem %s9, 1
  %v6253 = vld [vmem:[%s6252] sm:$0x1]
  %v6255 = vlaneseq
  %v6256 = vshrl.u32 %v6255, 7
  %v6257 = vsub.s32 0, %v6256
  %v6258 = vrot.slane %v6253, %v6257
  %v6260 = vadd.f32 %v6242, %v6258
  %v6261 = vadd.f32 %v6243, %v6258
  %v6262 = vadd.f32 %v6244, %v6258
  %v6263 = vadd.f32 %v6245, %v6258
  %v6264 = vadd.f32 %v6246, %v6258
  %v6265 = vadd.f32 %v6247, %v6258
  %v6266 = vadd.f32 %v6248, %v6258
  %v6267 = vadd.f32 %v6249, %v6258
  %v6268 = vadd.f32 %v6250, %v6258
  %v6269 = vadd.f32 %v6251, %v6258
  %s6270 = scalar_lea.vmem %s4, 96
  %v6271 = vld [vmem:[%s6270] sm:$0xff]
  %v6272 = vld [vmem:[%s6270 + $0x8] sm:$0xff]
  %v6273 = vld [vmem:[%s6270 + $0x10] sm:$0xff]
  %v6274 = vld [vmem:[%s6270 + $0x18] sm:$0xff]
  %v6275 = vld [vmem:[%s6270 + $0x20] sm:$0xff]
  %v6276 = vld [vmem:[%s6270 + $0x28] sm:$0xff]
  %s6277 = scalar_lea.vmem %s5, 6
  %v6278 = vld [vmem:[%s6277] sm:$0x7]
  %v6280 = vlaneseq
  %v6281 = vshrl.u32 %v6280, 7
  %v6282 = vsub.s32 0, %v6281
  %v6283 = vrot.slane %v6278, %v6282
  %v6284 = vlaneseq
  %v6285 = vshrl.u32 %v6284, 7
  %v6286 = vsub.s32 1, %v6285
  %v6287 = vrot.slane %v6278, %v6286
  %v6288 = vlaneseq
  %v6289 = vshrl.u32 %v6288, 7
  %v6290 = vsub.s32 2, %v6289
  %v6291 = vrot.slane %v6278, %v6290
  %v6296 = vsel %vm1855, %v6260, 0
  %v6299 = vsel %vm1855, %v6261, 0
  %v6302 = vsel %vm1855, %v6262, 0
  %v6305 = vsel %vm1855, %v6263, 0
  %v6308 = vsel %vm1855, %v6264, 0
  %v6311 = vsel %vm1855, %v6265, 0
  %v6314 = vsel %vm1855, %v6266, 0
  %v6317 = vsel %vm1855, %v6267, 0
  %v6320 = vsel %vm1855, %v6268, 0
  %v6323 = vsel %vm1855, %v6269, 0
  %6325 = vmatprep.subr.mxu0 0.0
  %6326 = vmatpush1.msra.mxu0 0.0
  %6327 = vmatprep.subr.mxu0 0.0
  %6328 = vmatpush1.msra.mxu0 0.0
  %6329 = vmatprep.subr.mxu0 0.0
  %6330 = vmatpush1.msra.mxu0 0.0
  %6331 = vmatprep.subr.mxu0 0.0
  %6332 = vmatpush1.msra.mxu0 0.0
  %6333 = vmatprep.subr.mxu0 0.0
  %6334 = vmatpush1.msra.mxu0 0.0
  %6335 = vmatprep.subr.mxu0 0.0
  %6336 = vmatpush1.msra.mxu0 0.0
  %6337 = vmatprep.subr.mxu0 0.0
  %6338 = vmatpush1.msra.mxu0 0.0
  %6339 = vmatprep.subr.mxu0 0.0
  %6340 = vmatpush1.msra.mxu0 0.0
  %6341 = vmatprep.subr.mxu0 0.0
  %6342 = vmatpush1.msra.mxu0 0.0
  %6343 = vmatprep.subr.mxu0 0.0
  %6344 = vmatpush1.msra.mxu0 0.0
  %6345 = vmatprep.subr.mxu0 0.0
  %6346 = vmatpush1.msra.mxu0 0.0
  %6347 = vmatprep.subr.mxu0 0.0
  %6348 = vmatpush1.msra.mxu0 0.0
  %6349 = vmatprep.subr.mxu0 0.0
  %6350 = vmatpush1.msra.mxu0 0.0
  %6351 = vmatprep.subr.mxu0 0.0
  %6352 = vmatpush1.msra.mxu0 0.0
  %6353 = vmatprep.subr.mxu0 %v6275
  %6354 = vmatpush1.msra.mxu0 %v6274
  %6355 = vmatprep.subr.mxu0 %v6272
  %6356 = vmatpush1.msra.mxu0 %v6271
  %6357 = vmatprep.subr.mxu0 0.0
  %6358 = vmatpush2.msra.mxu0 0.0
  %6359 = vmatprep.subr.mxu0 0.0
  %6360 = vmatpush2.msra.mxu0 0.0
  %6361 = vmatprep.subr.mxu0 0.0
  %6362 = vmatpush2.msra.mxu0 0.0
  %6363 = vmatprep.subr.mxu0 0.0
  %6364 = vmatpush2.msra.mxu0 0.0
  %6365 = vmatprep.subr.mxu0 0.0
  %6366 = vmatpush2.msra.mxu0 0.0
  %6367 = vmatprep.subr.mxu0 0.0
  %6368 = vmatpush2.msra.mxu0 0.0
  %6369 = vmatprep.subr.mxu0 0.0
  %6370 = vmatpush2.msra.mxu0 0.0
  %6371 = vmatprep.subr.mxu0 0.0
  %6372 = vmatpush2.msra.mxu0 0.0
  %6373 = vmatprep.subr.mxu0 0.0
  %6374 = vmatpush2.msra.mxu0 0.0
  %6375 = vmatprep.subr.mxu0 0.0
  %6376 = vmatpush2.msra.mxu0 0.0
  %6377 = vmatprep.subr.mxu0 0.0
  %6378 = vmatpush2.msra.mxu0 0.0
  %6379 = vmatprep.subr.mxu0 0.0
  %6380 = vmatpush2.msra.mxu0 0.0
  %6381 = vmatprep.subr.mxu0 0.0
  %6382 = vmatpush2.msra.mxu0 0.0
  %6383 = vmatprep.subr.mxu0 0.0
  %6384 = vmatpush2.msra.mxu0 0.0
  %6385 = vmatprep.subr.mxu0 0.0
  %6386 = vmatpush2.msra.mxu0 0.0
  %6387 = vmatprep.subr.mxu0 0.0
  %6388 = vmatpush2.msra.mxu0 0.0
  %6389 = vmatprep.mubr.f32.mxu0 0.0
  %6390 = vmatmul.mubr.f32.gmra.mxu0 %v6296
  %v6391 = vpop.f32.mrf.mxu0
  %v6392 = vadd.f32 %v6283, %v6391
  %v6393 = vpop.f32.mrf.mxu0
  %v6394 = vadd.f32 %v6287, %v6393
  %6395 = vmatprep.mubr.f32.mxu0 0.0
  %6396 = vmatmul.mubr.f32.gmra.mxu0 %v6299
  %v6397 = vpop.f32.mrf.mxu0
  %v6398 = vadd.f32 %v6283, %v6397
  %v6399 = vpop.f32.mrf.mxu0
  %v6400 = vadd.f32 %v6287, %v6399
  %6401 = vmatprep.mubr.f32.mxu0 0.0
  %6402 = vmatmul.mubr.f32.gmra.mxu0 %v6302
  %v6403 = vpop.f32.mrf.mxu0
  %v6404 = vadd.f32 %v6283, %v6403
  %v6405 = vpop.f32.mrf.mxu0
  %v6406 = vadd.f32 %v6287, %v6405
  %6407 = vmatprep.mubr.f32.mxu0 0.0
  %6408 = vmatmul.mubr.f32.gmra.mxu0 %v6305
  %v6409 = vpop.f32.mrf.mxu0
  %v6410 = vadd.f32 %v6283, %v6409
  %v6411 = vpop.f32.mrf.mxu0
  %v6412 = vadd.f32 %v6287, %v6411
  %6413 = vmatprep.mubr.f32.mxu0 0.0
  %6414 = vmatmul.mubr.f32.gmra.mxu0 %v6308
  %v6415 = vpop.f32.mrf.mxu0
  %v6416 = vadd.f32 %v6283, %v6415
  %v6417 = vpop.f32.mrf.mxu0
  %v6418 = vadd.f32 %v6287, %v6417
  %6419 = vmatprep.mubr.f32.mxu0 0.0
  %6420 = vmatmul.mubr.f32.gmra.mxu0 %v6311
  %v6421 = vpop.f32.mrf.mxu0
  %v6422 = vadd.f32 %v6283, %v6421
  %v6423 = vpop.f32.mrf.mxu0
  %v6424 = vadd.f32 %v6287, %v6423
  %6425 = vmatprep.mubr.f32.mxu0 0.0
  %6426 = vmatmul.mubr.f32.gmra.mxu0 %v6314
  %v6427 = vpop.f32.mrf.mxu0
  %v6428 = vadd.f32 %v6283, %v6427
  %v6429 = vpop.f32.mrf.mxu0
  %v6430 = vadd.f32 %v6287, %v6429
  %6431 = vmatprep.mubr.f32.mxu0 0.0
  %6432 = vmatmul.mubr.f32.gmra.mxu0 %v6317
  %v6433 = vpop.f32.mrf.mxu0
  %v6434 = vadd.f32 %v6283, %v6433
  %v6435 = vpop.f32.mrf.mxu0
  %v6436 = vadd.f32 %v6287, %v6435
  %6437 = vmatprep.mubr.f32.mxu0 0.0
  %6438 = vmatmul.mubr.f32.gmra.mxu0 %v6320
  %v6439 = vpop.f32.mrf.mxu0
  %v6440 = vadd.f32 %v6283, %v6439
  %v6441 = vpop.f32.mrf.mxu0
  %v6442 = vadd.f32 %v6287, %v6441
  %6443 = vmatprep.mubr.f32.mxu0 0.0
  %6444 = vmatmul.mubr.f32.gmra.mxu0 %v6323
  %v6445 = vpop.f32.mrf.mxu0
  %v6446 = vadd.f32 %v6283, %v6445
  %v6447 = vpop.f32.mrf.mxu0
  %v6448 = vadd.f32 %v6287, %v6447
  %6449 = vdwg.mxu0
  %6450 = vmatprep.subr.mxu0 0.0
  %6451 = vmatpush1.msra.mxu0 0.0
  %6452 = vmatprep.subr.mxu0 0.0
  %6453 = vmatpush1.msra.mxu0 0.0
  %6454 = vmatprep.subr.mxu0 0.0
  %6455 = vmatpush1.msra.mxu0 0.0
  %6456 = vmatprep.subr.mxu0 0.0
  %6457 = vmatpush1.msra.mxu0 0.0
  %6458 = vmatprep.subr.mxu0 0.0
  %6459 = vmatpush1.msra.mxu0 0.0
  %6460 = vmatprep.subr.mxu0 0.0
  %6461 = vmatpush1.msra.mxu0 0.0
  %6462 = vmatprep.subr.mxu0 0.0
  %6463 = vmatpush1.msra.mxu0 0.0
  %6464 = vmatprep.subr.mxu0 0.0
  %6465 = vmatpush1.msra.mxu0 0.0
  %6466 = vmatprep.subr.mxu0 0.0
  %6467 = vmatpush1.msra.mxu0 0.0
  %6468 = vmatprep.subr.mxu0 0.0
  %6469 = vmatpush1.msra.mxu0 0.0
  %6470 = vmatprep.subr.mxu0 0.0
  %6471 = vmatpush1.msra.mxu0 0.0
  %6472 = vmatprep.subr.mxu0 0.0
  %6473 = vmatpush1.msra.mxu0 0.0
  %6474 = vmatprep.subr.mxu0 0.0
  %6475 = vmatpush1.msra.mxu0 0.0
  %6476 = vmatprep.subr.mxu0 0.0
  %6477 = vmatpush1.msra.mxu0 0.0
  %6478 = vmatprep.subr.mxu0 0.0
  %6479 = vmatpush1.msra.mxu0 %v6276
  %6480 = vmatprep.subr.mxu0 0.0
  %6481 = vmatpush1.msra.mxu0 %v6273
  %6482 = vmatprep.subr.mxu0 0.0
  %6483 = vmatpush2.msra.mxu0 0.0
  %6484 = vmatprep.subr.mxu0 0.0
  %6485 = vmatpush2.msra.mxu0 0.0
  %6486 = vmatprep.subr.mxu0 0.0
  %6487 = vmatpush2.msra.mxu0 0.0
  %6488 = vmatprep.subr.mxu0 0.0
  %6489 = vmatpush2.msra.mxu0 0.0
  %6490 = vmatprep.subr.mxu0 0.0
  %6491 = vmatpush2.msra.mxu0 0.0
  %6492 = vmatprep.subr.mxu0 0.0
  %6493 = vmatpush2.msra.mxu0 0.0
  %6494 = vmatprep.subr.mxu0 0.0
  %6495 = vmatpush2.msra.mxu0 0.0
  %6496 = vmatprep.subr.mxu0 0.0
  %6497 = vmatpush2.msra.mxu0 0.0
  %6498 = vmatprep.subr.mxu0 0.0
  %6499 = vmatpush2.msra.mxu0 0.0
  %6500 = vmatprep.subr.mxu0 0.0
  %6501 = vmatpush2.msra.mxu0 0.0
  %6502 = vmatprep.subr.mxu0 0.0
  %6503 = vmatpush2.msra.mxu0 0.0
  %6504 = vmatprep.subr.mxu0 0.0
  %6505 = vmatpush2.msra.mxu0 0.0
  %6506 = vmatprep.subr.mxu0 0.0
  %6507 = vmatpush2.msra.mxu0 0.0
  %6508 = vmatprep.subr.mxu0 0.0
  %6509 = vmatpush2.msra.mxu0 0.0
  %6510 = vmatprep.subr.mxu0 0.0
  %6511 = vmatpush2.msra.mxu0 0.0
  %6512 = vmatprep.subr.mxu0 0.0
  %6513 = vmatpush2.msra.mxu0 0.0
  %6514 = vmatprep.mubr.f32.mxu0 0.0
  %6515 = vmatmul.mubr.f32.gmra.mxu0 %v6296
  %v6516 = vpop.f32.mrf.mxu0
  %v6517 = vadd.f32 %v6291, %v6516
  %v6518 = vpop.f32.mrf.mxu0
  %6519 = vmatprep.mubr.f32.mxu0 0.0
  %6520 = vmatmul.mubr.f32.gmra.mxu0 %v6299
  %v6521 = vpop.f32.mrf.mxu0
  %v6522 = vadd.f32 %v6291, %v6521
  %v6523 = vpop.f32.mrf.mxu0
  %6524 = vmatprep.mubr.f32.mxu0 0.0
  %6525 = vmatmul.mubr.f32.gmra.mxu0 %v6302
  %v6526 = vpop.f32.mrf.mxu0
  %v6527 = vadd.f32 %v6291, %v6526
  %v6528 = vpop.f32.mrf.mxu0
  %6529 = vmatprep.mubr.f32.mxu0 0.0
  %6530 = vmatmul.mubr.f32.gmra.mxu0 %v6305
  %v6531 = vpop.f32.mrf.mxu0
  %v6532 = vadd.f32 %v6291, %v6531
  %v6533 = vpop.f32.mrf.mxu0
  %6534 = vmatprep.mubr.f32.mxu0 0.0
  %6535 = vmatmul.mubr.f32.gmra.mxu0 %v6308
  %v6536 = vpop.f32.mrf.mxu0
  %v6537 = vadd.f32 %v6291, %v6536
  %v6538 = vpop.f32.mrf.mxu0
  %6539 = vmatprep.mubr.f32.mxu0 0.0
  %6540 = vmatmul.mubr.f32.gmra.mxu0 %v6311
  %v6541 = vpop.f32.mrf.mxu0
  %v6542 = vadd.f32 %v6291, %v6541
  %v6543 = vpop.f32.mrf.mxu0
  %6544 = vmatprep.mubr.f32.mxu0 0.0
  %6545 = vmatmul.mubr.f32.gmra.mxu0 %v6314
  %v6546 = vpop.f32.mrf.mxu0
  %v6547 = vadd.f32 %v6291, %v6546
  %v6548 = vpop.f32.mrf.mxu0
  %6549 = vmatprep.mubr.f32.mxu0 0.0
  %6550 = vmatmul.mubr.f32.gmra.mxu0 %v6317
  %v6551 = vpop.f32.mrf.mxu0
  %v6552 = vadd.f32 %v6291, %v6551
  %v6553 = vpop.f32.mrf.mxu0
  %6554 = vmatprep.mubr.f32.mxu0 0.0
  %6555 = vmatmul.mubr.f32.gmra.mxu0 %v6320
  %v6556 = vpop.f32.mrf.mxu0
  %v6557 = vadd.f32 %v6291, %v6556
  %v6558 = vpop.f32.mrf.mxu0
  %6559 = vmatprep.mubr.f32.mxu0 0.0
  %6560 = vmatmul.mubr.f32.gmra.mxu0 %v6323
  %v6561 = vpop.f32.mrf.mxu0
  %v6562 = vadd.f32 %v6291, %v6561
  %v6563 = vpop.f32.mrf.mxu0
  %6564 = vdwg.mxu0
  %v6565 = vmul.f32 %v6392, %v6394
  %v6566 = vmul.f32 %v6392, %v6400
  %v6567 = vmul.f32 %v6392, %v6406
  %v6568 = vmul.f32 %v6392, %v6412
  %v6569 = vmul.f32 %v6392, %v6418
  %v6570 = vmul.f32 %v6392, %v6424
  %v6571 = vmul.f32 %v6392, %v6430
  %v6572 = vmul.f32 %v6392, %v6436
  %v6573 = vmul.f32 %v6392, %v6442
  %v6574 = vmul.f32 %v6392, %v6448
  %v6575 = vmul.f32 %v6398, %v6394
  %v6576 = vmul.f32 %v6398, %v6400
  %v6577 = vmul.f32 %v6398, %v6406
  %v6578 = vmul.f32 %v6398, %v6412
  %v6579 = vmul.f32 %v6398, %v6418
  %v6580 = vmul.f32 %v6398, %v6424
  %v6581 = vmul.f32 %v6398, %v6430
  %v6582 = vmul.f32 %v6398, %v6436
  %v6583 = vmul.f32 %v6398, %v6442
  %v6584 = vmul.f32 %v6398, %v6448
  %v6585 = vmul.f32 %v6404, %v6394
  %v6586 = vmul.f32 %v6404, %v6400
  %v6587 = vmul.f32 %v6404, %v6406
  %v6588 = vmul.f32 %v6404, %v6412
  %v6589 = vmul.f32 %v6404, %v6418
  %v6590 = vmul.f32 %v6404, %v6424
  %v6591 = vmul.f32 %v6404, %v6430
  %v6592 = vmul.f32 %v6404, %v6436
  %v6593 = vmul.f32 %v6404, %v6442
  %v6594 = vmul.f32 %v6404, %v6448
  %v6595 = vmul.f32 %v6410, %v6394
  %v6596 = vmul.f32 %v6410, %v6400
  %v6597 = vmul.f32 %v6410, %v6406
  %v6598 = vmul.f32 %v6410, %v6412
  %v6599 = vmul.f32 %v6410, %v6418
  %v6600 = vmul.f32 %v6410, %v6424
  %v6601 = vmul.f32 %v6410, %v6430
  %v6602 = vmul.f32 %v6410, %v6436
  %v6603 = vmul.f32 %v6410, %v6442
  %v6604 = vmul.f32 %v6410, %v6448
  %v6605 = vmul.f32 %v6416, %v6394
  %v6606 = vmul.f32 %v6416, %v6400
  %v6607 = vmul.f32 %v6416, %v6406
  %v6608 = vmul.f32 %v6416, %v6412
  %v6609 = vmul.f32 %v6416, %v6418
  %v6610 = vmul.f32 %v6416, %v6424
  %v6611 = vmul.f32 %v6416, %v6430
  %v6612 = vmul.f32 %v6416, %v6436
  %v6613 = vmul.f32 %v6416, %v6442
  %v6614 = vmul.f32 %v6416, %v6448
  %v6615 = vmul.f32 %v6422, %v6394
  %v6616 = vmul.f32 %v6422, %v6400
  %v6617 = vmul.f32 %v6422, %v6406
  %v6618 = vmul.f32 %v6422, %v6412
  %v6619 = vmul.f32 %v6422, %v6418
  %v6620 = vmul.f32 %v6422, %v6424
  %v6621 = vmul.f32 %v6422, %v6430
  %v6622 = vmul.f32 %v6422, %v6436
  %v6623 = vmul.f32 %v6422, %v6442
  %v6624 = vmul.f32 %v6422, %v6448
  %v6625 = vmul.f32 %v6428, %v6394
  %v6626 = vmul.f32 %v6428, %v6400
  %v6627 = vmul.f32 %v6428, %v6406
  %v6628 = vmul.f32 %v6428, %v6412
  %v6629 = vmul.f32 %v6428, %v6418
  %v6630 = vmul.f32 %v6428, %v6424
  %v6631 = vmul.f32 %v6428, %v6430
  %v6632 = vmul.f32 %v6428, %v6436
  %v6633 = vmul.f32 %v6428, %v6442
  %v6634 = vmul.f32 %v6428, %v6448
  %v6635 = vmul.f32 %v6434, %v6394
  %v6636 = vmul.f32 %v6434, %v6400
  %v6637 = vmul.f32 %v6434, %v6406
  %v6638 = vmul.f32 %v6434, %v6412
  %v6639 = vmul.f32 %v6434, %v6418
  %v6640 = vmul.f32 %v6434, %v6424
  %v6641 = vmul.f32 %v6434, %v6430
  %v6642 = vmul.f32 %v6434, %v6436
  %v6643 = vmul.f32 %v6434, %v6442
  %v6644 = vmul.f32 %v6434, %v6448
  %v6645 = vmul.f32 %v6440, %v6394
  %v6646 = vmul.f32 %v6440, %v6400
  %v6647 = vmul.f32 %v6440, %v6406
  %v6648 = vmul.f32 %v6440, %v6412
  %v6649 = vmul.f32 %v6440, %v6418
  %v6650 = vmul.f32 %v6440, %v6424
  %v6651 = vmul.f32 %v6440, %v6430
  %v6652 = vmul.f32 %v6440, %v6436
  %v6653 = vmul.f32 %v6440, %v6442
  %v6654 = vmul.f32 %v6440, %v6448
  %v6655 = vmul.f32 %v6446, %v6394
  %v6656 = vmul.f32 %v6446, %v6400
  %v6657 = vmul.f32 %v6446, %v6406
  %v6658 = vmul.f32 %v6446, %v6412
  %v6659 = vmul.f32 %v6446, %v6418
  %v6660 = vmul.f32 %v6446, %v6424
  %v6661 = vmul.f32 %v6446, %v6430
  %v6662 = vmul.f32 %v6446, %v6436
  %v6663 = vmul.f32 %v6446, %v6442
  %v6664 = vmul.f32 %v6446, %v6448
  %v6665 = vadd.f32 %v1334, %v6565
  %v6666 = vadd.f32 %v1339, %v6566
  %v6667 = vadd.f32 %v1344, %v6567
  %v6668 = vadd.f32 %v1349, %v6568
  %v6669 = vadd.f32 %v1354, %v6569
  %v6670 = vadd.f32 %v1359, %v6570
  %v6671 = vadd.f32 %v1364, %v6571
  %v6672 = vadd.f32 %v1369, %v6572
  %v6673 = vadd.f32 %v1374, %v6573
  %v6674 = vadd.f32 %v1379, %v6574
  %v6675 = vadd.f32 %v1384, %v6575
  %v6676 = vadd.f32 %v1389, %v6576
  %v6677 = vadd.f32 %v1394, %v6577
  %v6678 = vadd.f32 %v1399, %v6578
  %v6679 = vadd.f32 %v1404, %v6579
  %v6680 = vadd.f32 %v1409, %v6580
  %v6681 = vadd.f32 %v1414, %v6581
  %v6682 = vadd.f32 %v1419, %v6582
  %v6683 = vadd.f32 %v1424, %v6583
  %v6684 = vadd.f32 %v1429, %v6584
  %v6685 = vadd.f32 %v1434, %v6585
  %v6686 = vadd.f32 %v1439, %v6586
  %v6687 = vadd.f32 %v1444, %v6587
  %v6688 = vadd.f32 %v1449, %v6588
  %v6689 = vadd.f32 %v1454, %v6589
  %v6690 = vadd.f32 %v1459, %v6590
  %v6691 = vadd.f32 %v1464, %v6591
  %v6692 = vadd.f32 %v1469, %v6592
  %v6693 = vadd.f32 %v1474, %v6593
  %v6694 = vadd.f32 %v1479, %v6594
  %v6695 = vadd.f32 %v1484, %v6595
  %v6696 = vadd.f32 %v1489, %v6596
  %v6697 = vadd.f32 %v1494, %v6597
  %v6698 = vadd.f32 %v1499, %v6598
  %v6699 = vadd.f32 %v1504, %v6599
  %v6700 = vadd.f32 %v1509, %v6600
  %v6701 = vadd.f32 %v1514, %v6601
  %v6702 = vadd.f32 %v1519, %v6602
  %v6703 = vadd.f32 %v1524, %v6603
  %v6704 = vadd.f32 %v1529, %v6604
  %v6705 = vadd.f32 %v1534, %v6605
  %v6706 = vadd.f32 %v1539, %v6606
  %v6707 = vadd.f32 %v1544, %v6607
  %v6708 = vadd.f32 %v1549, %v6608
  %v6709 = vadd.f32 %v1554, %v6609
  %v6710 = vadd.f32 %v1559, %v6610
  %v6711 = vadd.f32 %v1564, %v6611
  %v6712 = vadd.f32 %v1569, %v6612
  %v6713 = vadd.f32 %v1574, %v6613
  %v6714 = vadd.f32 %v1579, %v6614
  %v6715 = vadd.f32 %v1584, %v6615
  %v6716 = vadd.f32 %v1589, %v6616
  %v6717 = vadd.f32 %v1594, %v6617
  %v6718 = vadd.f32 %v1599, %v6618
  %v6719 = vadd.f32 %v1604, %v6619
  %v6720 = vadd.f32 %v1609, %v6620
  %v6721 = vadd.f32 %v1614, %v6621
  %v6722 = vadd.f32 %v1619, %v6622
  %v6723 = vadd.f32 %v1624, %v6623
  %v6724 = vadd.f32 %v1629, %v6624
  %v6725 = vadd.f32 %v1634, %v6625
  %v6726 = vadd.f32 %v1639, %v6626
  %v6727 = vadd.f32 %v1644, %v6627
  %v6728 = vadd.f32 %v1649, %v6628
  %v6729 = vadd.f32 %v1654, %v6629
  %v6730 = vadd.f32 %v1659, %v6630
  %v6731 = vadd.f32 %v1664, %v6631
  %v6732 = vadd.f32 %v1669, %v6632
  %v6733 = vadd.f32 %v1674, %v6633
  %v6734 = vadd.f32 %v1679, %v6634
  %v6735 = vadd.f32 %v1684, %v6635
  %v6736 = vadd.f32 %v1689, %v6636
  %v6737 = vadd.f32 %v1694, %v6637
  %v6738 = vadd.f32 %v1699, %v6638
  %v6739 = vadd.f32 %v1704, %v6639
  %v6740 = vadd.f32 %v1709, %v6640
  %v6741 = vadd.f32 %v1714, %v6641
  %v6742 = vadd.f32 %v1719, %v6642
  %v6743 = vadd.f32 %v1724, %v6643
  %v6744 = vadd.f32 %v1729, %v6644
  %v6745 = vadd.f32 %v1734, %v6645
  %v6746 = vadd.f32 %v1739, %v6646
  %v6747 = vadd.f32 %v1744, %v6647
  %v6748 = vadd.f32 %v1749, %v6648
  %v6749 = vadd.f32 %v1754, %v6649
  %v6750 = vadd.f32 %v1759, %v6650
  %v6751 = vadd.f32 %v1764, %v6651
  %v6752 = vadd.f32 %v1769, %v6652
  %v6753 = vadd.f32 %v1774, %v6653
  %v6754 = vadd.f32 %v1779, %v6654
  %v6755 = vadd.f32 %v1784, %v6655
  %v6756 = vadd.f32 %v1789, %v6656
  %v6757 = vadd.f32 %v1794, %v6657
  %v6758 = vadd.f32 %v1799, %v6658
  %v6759 = vadd.f32 %v1804, %v6659
  %v6760 = vadd.f32 %v1809, %v6660
  %v6761 = vadd.f32 %v1814, %v6661
  %v6762 = vadd.f32 %v1819, %v6662
  %v6763 = vadd.f32 %v1824, %v6663
  %v6764 = vadd.f32 %v1829, %v6664
  %6765 = vrot.lane.b32.xlu0 %v6392, 32
  %v6766 = vpop.permute.xlu0 %6765
  %6767 = vrot.lane.b32.xlu0 %v6398, 32
  %v6768 = vpop.permute.xlu0 %6767
  %6769 = vrot.lane.b32.xlu0 %v6404, 32
  %v6770 = vpop.permute.xlu0 %6769
  %6771 = vrot.lane.b32.xlu0 %v6410, 32
  %v6772 = vpop.permute.xlu0 %6771
  %6773 = vrot.lane.b32.xlu0 %v6416, 32
  %v6774 = vpop.permute.xlu0 %6773
  %6775 = vrot.lane.b32.xlu0 %v6422, 32
  %v6776 = vpop.permute.xlu0 %6775
  %6777 = vrot.lane.b32.xlu0 %v6428, 32
  %v6778 = vpop.permute.xlu0 %6777
  %6779 = vrot.lane.b32.xlu0 %v6434, 32
  %v6780 = vpop.permute.xlu0 %6779
  %6781 = vrot.lane.b32.xlu0 %v6440, 32
  %v6782 = vpop.permute.xlu0 %6781
  %6783 = vrot.lane.b32.xlu0 %v6446, 32
  %v6784 = vpop.permute.xlu0 %6783
  %6785 = vrot.lane.b32.xlu0 %v6394, 32
  %v6786 = vpop.permute.xlu0 %6785
  %6787 = vrot.lane.b32.xlu0 %v6400, 32
  %v6788 = vpop.permute.xlu0 %6787
  %6789 = vrot.lane.b32.xlu0 %v6406, 32
  %v6790 = vpop.permute.xlu0 %6789
  %6791 = vrot.lane.b32.xlu0 %v6412, 32
  %v6792 = vpop.permute.xlu0 %6791
  %6793 = vrot.lane.b32.xlu0 %v6418, 32
  %v6794 = vpop.permute.xlu0 %6793
  %6795 = vrot.lane.b32.xlu0 %v6424, 32
  %v6796 = vpop.permute.xlu0 %6795
  %6797 = vrot.lane.b32.xlu0 %v6430, 32
  %v6798 = vpop.permute.xlu0 %6797
  %6799 = vrot.lane.b32.xlu0 %v6436, 32
  %v6800 = vpop.permute.xlu0 %6799
  %6801 = vrot.lane.b32.xlu0 %v6442, 32
  %v6802 = vpop.permute.xlu0 %6801
  %6803 = vrot.lane.b32.xlu0 %v6448, 32
  %v6804 = vpop.permute.xlu0 %6803
  %v6805 = vmul.f32 %v6766, %v6786
  %v6806 = vmul.f32 %v6766, %v6788
  %v6807 = vmul.f32 %v6766, %v6790
  %v6808 = vmul.f32 %v6766, %v6792
  %v6809 = vmul.f32 %v6766, %v6794
  %v6810 = vmul.f32 %v6766, %v6796
  %v6811 = vmul.f32 %v6766, %v6798
  %v6812 = vmul.f32 %v6766, %v6800
  %v6813 = vmul.f32 %v6766, %v6802
  %v6814 = vmul.f32 %v6766, %v6804
  %v6815 = vmul.f32 %v6768, %v6786
  %v6816 = vmul.f32 %v6768, %v6788
  %v6817 = vmul.f32 %v6768, %v6790
  %v6818 = vmul.f32 %v6768, %v6792
  %v6819 = vmul.f32 %v6768, %v6794
  %v6820 = vmul.f32 %v6768, %v6796
  %v6821 = vmul.f32 %v6768, %v6798
  %v6822 = vmul.f32 %v6768, %v6800
  %v6823 = vmul.f32 %v6768, %v6802
  %v6824 = vmul.f32 %v6768, %v6804
  %v6825 = vmul.f32 %v6770, %v6786
  %v6826 = vmul.f32 %v6770, %v6788
  %v6827 = vmul.f32 %v6770, %v6790
  %v6828 = vmul.f32 %v6770, %v6792
  %v6829 = vmul.f32 %v6770, %v6794
  %v6830 = vmul.f32 %v6770, %v6796
  %v6831 = vmul.f32 %v6770, %v6798
  %v6832 = vmul.f32 %v6770, %v6800
  %v6833 = vmul.f32 %v6770, %v6802
  %v6834 = vmul.f32 %v6770, %v6804
  %v6835 = vmul.f32 %v6772, %v6786
  %v6836 = vmul.f32 %v6772, %v6788
  %v6837 = vmul.f32 %v6772, %v6790
  %v6838 = vmul.f32 %v6772, %v6792
  %v6839 = vmul.f32 %v6772, %v6794
  %v6840 = vmul.f32 %v6772, %v6796
  %v6841 = vmul.f32 %v6772, %v6798
  %v6842 = vmul.f32 %v6772, %v6800
  %v6843 = vmul.f32 %v6772, %v6802
  %v6844 = vmul.f32 %v6772, %v6804
  %v6845 = vmul.f32 %v6774, %v6786
  %v6846 = vmul.f32 %v6774, %v6788
  %v6847 = vmul.f32 %v6774, %v6790
  %v6848 = vmul.f32 %v6774, %v6792
  %v6849 = vmul.f32 %v6774, %v6794
  %v6850 = vmul.f32 %v6774, %v6796
  %v6851 = vmul.f32 %v6774, %v6798
  %v6852 = vmul.f32 %v6774, %v6800
  %v6853 = vmul.f32 %v6774, %v6802
  %v6854 = vmul.f32 %v6774, %v6804
  %v6855 = vmul.f32 %v6776, %v6786
  %v6856 = vmul.f32 %v6776, %v6788
  %v6857 = vmul.f32 %v6776, %v6790
  %v6858 = vmul.f32 %v6776, %v6792
  %v6859 = vmul.f32 %v6776, %v6794
  %v6860 = vmul.f32 %v6776, %v6796
  %v6861 = vmul.f32 %v6776, %v6798
  %v6862 = vmul.f32 %v6776, %v6800
  %v6863 = vmul.f32 %v6776, %v6802
  %v6864 = vmul.f32 %v6776, %v6804
  %v6865 = vmul.f32 %v6778, %v6786
  %v6866 = vmul.f32 %v6778, %v6788
  %v6867 = vmul.f32 %v6778, %v6790
  %v6868 = vmul.f32 %v6778, %v6792
  %v6869 = vmul.f32 %v6778, %v6794
  %v6870 = vmul.f32 %v6778, %v6796
  %v6871 = vmul.f32 %v6778, %v6798
  %v6872 = vmul.f32 %v6778, %v6800
  %v6873 = vmul.f32 %v6778, %v6802
  %v6874 = vmul.f32 %v6778, %v6804
  %v6875 = vmul.f32 %v6780, %v6786
  %v6876 = vmul.f32 %v6780, %v6788
  %v6877 = vmul.f32 %v6780, %v6790
  %v6878 = vmul.f32 %v6780, %v6792
  %v6879 = vmul.f32 %v6780, %v6794
  %v6880 = vmul.f32 %v6780, %v6796
  %v6881 = vmul.f32 %v6780, %v6798
  %v6882 = vmul.f32 %v6780, %v6800
  %v6883 = vmul.f32 %v6780, %v6802
  %v6884 = vmul.f32 %v6780, %v6804
  %v6885 = vmul.f32 %v6782, %v6786
  %v6886 = vmul.f32 %v6782, %v6788
  %v6887 = vmul.f32 %v6782, %v6790
  %v6888 = vmul.f32 %v6782, %v6792
  %v6889 = vmul.f32 %v6782, %v6794
  %v6890 = vmul.f32 %v6782, %v6796
  %v6891 = vmul.f32 %v6782, %v6798
  %v6892 = vmul.f32 %v6782, %v6800
  %v6893 = vmul.f32 %v6782, %v6802
  %v6894 = vmul.f32 %v6782, %v6804
  %v6895 = vmul.f32 %v6784, %v6786
  %v6896 = vmul.f32 %v6784, %v6788
  %v6897 = vmul.f32 %v6784, %v6790
  %v6898 = vmul.f32 %v6784, %v6792
  %v6899 = vmul.f32 %v6784, %v6794
  %v6900 = vmul.f32 %v6784, %v6796
  %v6901 = vmul.f32 %v6784, %v6798
  %v6902 = vmul.f32 %v6784, %v6800
  %v6903 = vmul.f32 %v6784, %v6802
  %v6904 = vmul.f32 %v6784, %v6804
  %v6905 = vadd.f32 %v6665, %v6805
  %v6906 = vadd.f32 %v6666, %v6806
  %v6907 = vadd.f32 %v6667, %v6807
  %v6908 = vadd.f32 %v6668, %v6808
  %v6909 = vadd.f32 %v6669, %v6809
  %v6910 = vadd.f32 %v6670, %v6810
  %v6911 = vadd.f32 %v6671, %v6811
  %v6912 = vadd.f32 %v6672, %v6812
  %v6913 = vadd.f32 %v6673, %v6813
  %v6914 = vadd.f32 %v6674, %v6814
  %v6915 = vadd.f32 %v6675, %v6815
  %v6916 = vadd.f32 %v6676, %v6816
  %v6917 = vadd.f32 %v6677, %v6817
  %v6918 = vadd.f32 %v6678, %v6818
  %v6919 = vadd.f32 %v6679, %v6819
  %v6920 = vadd.f32 %v6680, %v6820
  %v6921 = vadd.f32 %v6681, %v6821
  %v6922 = vadd.f32 %v6682, %v6822
  %v6923 = vadd.f32 %v6683, %v6823
  %v6924 = vadd.f32 %v6684, %v6824
  %v6925 = vadd.f32 %v6685, %v6825
  %v6926 = vadd.f32 %v6686, %v6826
  %v6927 = vadd.f32 %v6687, %v6827
  %v6928 = vadd.f32 %v6688, %v6828
  %v6929 = vadd.f32 %v6689, %v6829
  %v6930 = vadd.f32 %v6690, %v6830
  %v6931 = vadd.f32 %v6691, %v6831
  %v6932 = vadd.f32 %v6692, %v6832
  %v6933 = vadd.f32 %v6693, %v6833
  %v6934 = vadd.f32 %v6694, %v6834
  %v6935 = vadd.f32 %v6695, %v6835
  %v6936 = vadd.f32 %v6696, %v6836
  %v6937 = vadd.f32 %v6697, %v6837
  %v6938 = vadd.f32 %v6698, %v6838
  %v6939 = vadd.f32 %v6699, %v6839
  %v6940 = vadd.f32 %v6700, %v6840
  %v6941 = vadd.f32 %v6701, %v6841
  %v6942 = vadd.f32 %v6702, %v6842
  %v6943 = vadd.f32 %v6703, %v6843
  %v6944 = vadd.f32 %v6704, %v6844
  %v6945 = vadd.f32 %v6705, %v6845
  %v6946 = vadd.f32 %v6706, %v6846
  %v6947 = vadd.f32 %v6707, %v6847
  %v6948 = vadd.f32 %v6708, %v6848
  %v6949 = vadd.f32 %v6709, %v6849
  %v6950 = vadd.f32 %v6710, %v6850
  %v6951 = vadd.f32 %v6711, %v6851
  %v6952 = vadd.f32 %v6712, %v6852
  %v6953 = vadd.f32 %v6713, %v6853
  %v6954 = vadd.f32 %v6714, %v6854
  %v6955 = vadd.f32 %v6715, %v6855
  %v6956 = vadd.f32 %v6716, %v6856
  %v6957 = vadd.f32 %v6717, %v6857
  %v6958 = vadd.f32 %v6718, %v6858
  %v6959 = vadd.f32 %v6719, %v6859
  %v6960 = vadd.f32 %v6720, %v6860
  %v6961 = vadd.f32 %v6721, %v6861
  %v6962 = vadd.f32 %v6722, %v6862
  %v6963 = vadd.f32 %v6723, %v6863
  %v6964 = vadd.f32 %v6724, %v6864
  %v6965 = vadd.f32 %v6725, %v6865
  %v6966 = vadd.f32 %v6726, %v6866
  %v6967 = vadd.f32 %v6727, %v6867
  %v6968 = vadd.f32 %v6728, %v6868
  %v6969 = vadd.f32 %v6729, %v6869
  %v6970 = vadd.f32 %v6730, %v6870
  %v6971 = vadd.f32 %v6731, %v6871
  %v6972 = vadd.f32 %v6732, %v6872
  %v6973 = vadd.f32 %v6733, %v6873
  %v6974 = vadd.f32 %v6734, %v6874
  %v6975 = vadd.f32 %v6735, %v6875
  %v6976 = vadd.f32 %v6736, %v6876
  %v6977 = vadd.f32 %v6737, %v6877
  %v6978 = vadd.f32 %v6738, %v6878
  %v6979 = vadd.f32 %v6739, %v6879
  %v6980 = vadd.f32 %v6740, %v6880
  %v6981 = vadd.f32 %v6741, %v6881
  %v6982 = vadd.f32 %v6742, %v6882
  %v6983 = vadd.f32 %v6743, %v6883
  %v6984 = vadd.f32 %v6744, %v6884
  %v6985 = vadd.f32 %v6745, %v6885
  %v6986 = vadd.f32 %v6746, %v6886
  %v6987 = vadd.f32 %v6747, %v6887
  %v6988 = vadd.f32 %v6748, %v6888
  %v6989 = vadd.f32 %v6749, %v6889
  %v6990 = vadd.f32 %v6750, %v6890
  %v6991 = vadd.f32 %v6751, %v6891
  %v6992 = vadd.f32 %v6752, %v6892
  %v6993 = vadd.f32 %v6753, %v6893
  %v6994 = vadd.f32 %v6754, %v6894
  %v6995 = vadd.f32 %v6755, %v6895
  %v6996 = vadd.f32 %v6756, %v6896
  %v6997 = vadd.f32 %v6757, %v6897
  %v6998 = vadd.f32 %v6758, %v6898
  %v6999 = vadd.f32 %v6759, %v6899
  %v7000 = vadd.f32 %v6760, %v6900
  %v7001 = vadd.f32 %v6761, %v6901
  %v7002 = vadd.f32 %v6762, %v6902
  %v7003 = vadd.f32 %v6763, %v6903
  %v7004 = vadd.f32 %v6764, %v6904
  %7005 = vrot.lane.b32.xlu0 %v6392, 64
  %v7006 = vpop.permute.xlu0 %7005
  %7007 = vrot.lane.b32.xlu0 %v6398, 64
  %v7008 = vpop.permute.xlu0 %7007
  %7009 = vrot.lane.b32.xlu0 %v6404, 64
  %v7010 = vpop.permute.xlu0 %7009
  %7011 = vrot.lane.b32.xlu0 %v6410, 64
  %v7012 = vpop.permute.xlu0 %7011
  %7013 = vrot.lane.b32.xlu0 %v6416, 64
  %v7014 = vpop.permute.xlu0 %7013
  %7015 = vrot.lane.b32.xlu0 %v6422, 64
  %v7016 = vpop.permute.xlu0 %7015
  %7017 = vrot.lane.b32.xlu0 %v6428, 64
  %v7018 = vpop.permute.xlu0 %7017
  %7019 = vrot.lane.b32.xlu0 %v6434, 64
  %v7020 = vpop.permute.xlu0 %7019
  %7021 = vrot.lane.b32.xlu0 %v6440, 64
  %v7022 = vpop.permute.xlu0 %7021
  %7023 = vrot.lane.b32.xlu0 %v6446, 64
  %v7024 = vpop.permute.xlu0 %7023
  %7025 = vrot.lane.b32.xlu0 %v6394, 64
  %v7026 = vpop.permute.xlu0 %7025
  %7027 = vrot.lane.b32.xlu0 %v6400, 64
  %v7028 = vpop.permute.xlu0 %7027
  %7029 = vrot.lane.b32.xlu0 %v6406, 64
  %v7030 = vpop.permute.xlu0 %7029
  %7031 = vrot.lane.b32.xlu0 %v6412, 64
  %v7032 = vpop.permute.xlu0 %7031
  %7033 = vrot.lane.b32.xlu0 %v6418, 64
  %v7034 = vpop.permute.xlu0 %7033
  %7035 = vrot.lane.b32.xlu0 %v6424, 64
  %v7036 = vpop.permute.xlu0 %7035
  %7037 = vrot.lane.b32.xlu0 %v6430, 64
  %v7038 = vpop.permute.xlu0 %7037
  %7039 = vrot.lane.b32.xlu0 %v6436, 64
  %v7040 = vpop.permute.xlu0 %7039
  %7041 = vrot.lane.b32.xlu0 %v6442, 64
  %v7042 = vpop.permute.xlu0 %7041
  %7043 = vrot.lane.b32.xlu0 %v6448, 64
  %v7044 = vpop.permute.xlu0 %7043
  %v7045 = vmul.f32 %v7006, %v7026
  %v7046 = vmul.f32 %v7006, %v7028
  %v7047 = vmul.f32 %v7006, %v7030
  %v7048 = vmul.f32 %v7006, %v7032
  %v7049 = vmul.f32 %v7006, %v7034
  %v7050 = vmul.f32 %v7006, %v7036
  %v7051 = vmul.f32 %v7006, %v7038
  %v7052 = vmul.f32 %v7006, %v7040
  %v7053 = vmul.f32 %v7006, %v7042
  %v7054 = vmul.f32 %v7006, %v7044
  %v7055 = vmul.f32 %v7008, %v7026
  %v7056 = vmul.f32 %v7008, %v7028
  %v7057 = vmul.f32 %v7008, %v7030
  %v7058 = vmul.f32 %v7008, %v7032
  %v7059 = vmul.f32 %v7008, %v7034
  %v7060 = vmul.f32 %v7008, %v7036
  %v7061 = vmul.f32 %v7008, %v7038
  %v7062 = vmul.f32 %v7008, %v7040
  %v7063 = vmul.f32 %v7008, %v7042
  %v7064 = vmul.f32 %v7008, %v7044
  %v7065 = vmul.f32 %v7010, %v7026
  %v7066 = vmul.f32 %v7010, %v7028
  %v7067 = vmul.f32 %v7010, %v7030
  %v7068 = vmul.f32 %v7010, %v7032
  %v7069 = vmul.f32 %v7010, %v7034
  %v7070 = vmul.f32 %v7010, %v7036
  %v7071 = vmul.f32 %v7010, %v7038
  %v7072 = vmul.f32 %v7010, %v7040
  %v7073 = vmul.f32 %v7010, %v7042
  %v7074 = vmul.f32 %v7010, %v7044
  %v7075 = vmul.f32 %v7012, %v7026
  %v7076 = vmul.f32 %v7012, %v7028
  %v7077 = vmul.f32 %v7012, %v7030
  %v7078 = vmul.f32 %v7012, %v7032
  %v7079 = vmul.f32 %v7012, %v7034
  %v7080 = vmul.f32 %v7012, %v7036
  %v7081 = vmul.f32 %v7012, %v7038
  %v7082 = vmul.f32 %v7012, %v7040
  %v7083 = vmul.f32 %v7012, %v7042
  %v7084 = vmul.f32 %v7012, %v7044
  %v7085 = vmul.f32 %v7014, %v7026
  %v7086 = vmul.f32 %v7014, %v7028
  %v7087 = vmul.f32 %v7014, %v7030
  %v7088 = vmul.f32 %v7014, %v7032
  %v7089 = vmul.f32 %v7014, %v7034
  %v7090 = vmul.f32 %v7014, %v7036
  %v7091 = vmul.f32 %v7014, %v7038
  %v7092 = vmul.f32 %v7014, %v7040
  %v7093 = vmul.f32 %v7014, %v7042
  %v7094 = vmul.f32 %v7014, %v7044
  %v7095 = vmul.f32 %v7016, %v7026
  %v7096 = vmul.f32 %v7016, %v7028
  %v7097 = vmul.f32 %v7016, %v7030
  %v7098 = vmul.f32 %v7016, %v7032
  %v7099 = vmul.f32 %v7016, %v7034
  %v7100 = vmul.f32 %v7016, %v7036
  %v7101 = vmul.f32 %v7016, %v7038
  %v7102 = vmul.f32 %v7016, %v7040
  %v7103 = vmul.f32 %v7016, %v7042
  %v7104 = vmul.f32 %v7016, %v7044
  %v7105 = vmul.f32 %v7018, %v7026
  %v7106 = vmul.f32 %v7018, %v7028
  %v7107 = vmul.f32 %v7018, %v7030
  %v7108 = vmul.f32 %v7018, %v7032
  %v7109 = vmul.f32 %v7018, %v7034
  %v7110 = vmul.f32 %v7018, %v7036
  %v7111 = vmul.f32 %v7018, %v7038
  %v7112 = vmul.f32 %v7018, %v7040
  %v7113 = vmul.f32 %v7018, %v7042
  %v7114 = vmul.f32 %v7018, %v7044
  %v7115 = vmul.f32 %v7020, %v7026
  %v7116 = vmul.f32 %v7020, %v7028
  %v7117 = vmul.f32 %v7020, %v7030
  %v7118 = vmul.f32 %v7020, %v7032
  %v7119 = vmul.f32 %v7020, %v7034
  %v7120 = vmul.f32 %v7020, %v7036
  %v7121 = vmul.f32 %v7020, %v7038
  %v7122 = vmul.f32 %v7020, %v7040
  %v7123 = vmul.f32 %v7020, %v7042
  %v7124 = vmul.f32 %v7020, %v7044
  %v7125 = vmul.f32 %v7022, %v7026
  %v7126 = vmul.f32 %v7022, %v7028
  %v7127 = vmul.f32 %v7022, %v7030
  %v7128 = vmul.f32 %v7022, %v7032
  %v7129 = vmul.f32 %v7022, %v7034
  %v7130 = vmul.f32 %v7022, %v7036
  %v7131 = vmul.f32 %v7022, %v7038
  %v7132 = vmul.f32 %v7022, %v7040
  %v7133 = vmul.f32 %v7022, %v7042
  %v7134 = vmul.f32 %v7022, %v7044
  %v7135 = vmul.f32 %v7024, %v7026
  %v7136 = vmul.f32 %v7024, %v7028
  %v7137 = vmul.f32 %v7024, %v7030
  %v7138 = vmul.f32 %v7024, %v7032
  %v7139 = vmul.f32 %v7024, %v7034
  %v7140 = vmul.f32 %v7024, %v7036
  %v7141 = vmul.f32 %v7024, %v7038
  %v7142 = vmul.f32 %v7024, %v7040
  %v7143 = vmul.f32 %v7024, %v7042
  %v7144 = vmul.f32 %v7024, %v7044
  %v7145 = vadd.f32 %v6905, %v7045
  %v7146 = vadd.f32 %v6906, %v7046
  %v7147 = vadd.f32 %v6907, %v7047
  %v7148 = vadd.f32 %v6908, %v7048
  %v7149 = vadd.f32 %v6909, %v7049
  %v7150 = vadd.f32 %v6910, %v7050
  %v7151 = vadd.f32 %v6911, %v7051
  %v7152 = vadd.f32 %v6912, %v7052
  %v7153 = vadd.f32 %v6913, %v7053
  %v7154 = vadd.f32 %v6914, %v7054
  %v7155 = vadd.f32 %v6915, %v7055
  %v7156 = vadd.f32 %v6916, %v7056
  %v7157 = vadd.f32 %v6917, %v7057
  %v7158 = vadd.f32 %v6918, %v7058
  %v7159 = vadd.f32 %v6919, %v7059
  %v7160 = vadd.f32 %v6920, %v7060
  %v7161 = vadd.f32 %v6921, %v7061
  %v7162 = vadd.f32 %v6922, %v7062
  %v7163 = vadd.f32 %v6923, %v7063
  %v7164 = vadd.f32 %v6924, %v7064
  %v7165 = vadd.f32 %v6925, %v7065
  %v7166 = vadd.f32 %v6926, %v7066
  %v7167 = vadd.f32 %v6927, %v7067
  %v7168 = vadd.f32 %v6928, %v7068
  %v7169 = vadd.f32 %v6929, %v7069
  %v7170 = vadd.f32 %v6930, %v7070
  %v7171 = vadd.f32 %v6931, %v7071
  %v7172 = vadd.f32 %v6932, %v7072
  %v7173 = vadd.f32 %v6933, %v7073
  %v7174 = vadd.f32 %v6934, %v7074
  %v7175 = vadd.f32 %v6935, %v7075
  %v7176 = vadd.f32 %v6936, %v7076
  %v7177 = vadd.f32 %v6937, %v7077
  %v7178 = vadd.f32 %v6938, %v7078
  %v7179 = vadd.f32 %v6939, %v7079
  %v7180 = vadd.f32 %v6940, %v7080
  %v7181 = vadd.f32 %v6941, %v7081
  %v7182 = vadd.f32 %v6942, %v7082
  %v7183 = vadd.f32 %v6943, %v7083
  %v7184 = vadd.f32 %v6944, %v7084
  %v7185 = vadd.f32 %v6945, %v7085
  %v7186 = vadd.f32 %v6946, %v7086
  %v7187 = vadd.f32 %v6947, %v7087
  %v7188 = vadd.f32 %v6948, %v7088
  %v7189 = vadd.f32 %v6949, %v7089
  %v7190 = vadd.f32 %v6950, %v7090
  %v7191 = vadd.f32 %v6951, %v7091
  %v7192 = vadd.f32 %v6952, %v7092
  %v7193 = vadd.f32 %v6953, %v7093
  %v7194 = vadd.f32 %v6954, %v7094
  %v7195 = vadd.f32 %v6955, %v7095
  %v7196 = vadd.f32 %v6956, %v7096
  %v7197 = vadd.f32 %v6957, %v7097
  %v7198 = vadd.f32 %v6958, %v7098
  %v7199 = vadd.f32 %v6959, %v7099
  %v7200 = vadd.f32 %v6960, %v7100
  %v7201 = vadd.f32 %v6961, %v7101
  %v7202 = vadd.f32 %v6962, %v7102
  %v7203 = vadd.f32 %v6963, %v7103
  %v7204 = vadd.f32 %v6964, %v7104
  %v7205 = vadd.f32 %v6965, %v7105
  %v7206 = vadd.f32 %v6966, %v7106
  %v7207 = vadd.f32 %v6967, %v7107
  %v7208 = vadd.f32 %v6968, %v7108
  %v7209 = vadd.f32 %v6969, %v7109
  %v7210 = vadd.f32 %v6970, %v7110
  %v7211 = vadd.f32 %v6971, %v7111
  %v7212 = vadd.f32 %v6972, %v7112
  %v7213 = vadd.f32 %v6973, %v7113
  %v7214 = vadd.f32 %v6974, %v7114
  %v7215 = vadd.f32 %v6975, %v7115
  %v7216 = vadd.f32 %v6976, %v7116
  %v7217 = vadd.f32 %v6977, %v7117
  %v7218 = vadd.f32 %v6978, %v7118
  %v7219 = vadd.f32 %v6979, %v7119
  %v7220 = vadd.f32 %v6980, %v7120
  %v7221 = vadd.f32 %v6981, %v7121
  %v7222 = vadd.f32 %v6982, %v7122
  %v7223 = vadd.f32 %v6983, %v7123
  %v7224 = vadd.f32 %v6984, %v7124
  %v7225 = vadd.f32 %v6985, %v7125
  %v7226 = vadd.f32 %v6986, %v7126
  %v7227 = vadd.f32 %v6987, %v7127
  %v7228 = vadd.f32 %v6988, %v7128
  %v7229 = vadd.f32 %v6989, %v7129
  %v7230 = vadd.f32 %v6990, %v7130
  %v7231 = vadd.f32 %v6991, %v7131
  %v7232 = vadd.f32 %v6992, %v7132
  %v7233 = vadd.f32 %v6993, %v7133
  %v7234 = vadd.f32 %v6994, %v7134
  %v7235 = vadd.f32 %v6995, %v7135
  %v7236 = vadd.f32 %v6996, %v7136
  %v7237 = vadd.f32 %v6997, %v7137
  %v7238 = vadd.f32 %v6998, %v7138
  %v7239 = vadd.f32 %v6999, %v7139
  %v7240 = vadd.f32 %v7000, %v7140
  %v7241 = vadd.f32 %v7001, %v7141
  %v7242 = vadd.f32 %v7002, %v7142
  %v7243 = vadd.f32 %v7003, %v7143
  %v7244 = vadd.f32 %v7004, %v7144
  %7245 = vrot.lane.b32.xlu0 %v6392, 96
  %v7246 = vpop.permute.xlu0 %7245
  %7247 = vrot.lane.b32.xlu0 %v6398, 96
  %v7248 = vpop.permute.xlu0 %7247
  %7249 = vrot.lane.b32.xlu0 %v6404, 96
  %v7250 = vpop.permute.xlu0 %7249
  %7251 = vrot.lane.b32.xlu0 %v6410, 96
  %v7252 = vpop.permute.xlu0 %7251
  %7253 = vrot.lane.b32.xlu0 %v6416, 96
  %v7254 = vpop.permute.xlu0 %7253
  %7255 = vrot.lane.b32.xlu0 %v6422, 96
  %v7256 = vpop.permute.xlu0 %7255
  %7257 = vrot.lane.b32.xlu0 %v6428, 96
  %v7258 = vpop.permute.xlu0 %7257
  %7259 = vrot.lane.b32.xlu0 %v6434, 96
  %v7260 = vpop.permute.xlu0 %7259
  %7261 = vrot.lane.b32.xlu0 %v6440, 96
  %v7262 = vpop.permute.xlu0 %7261
  %7263 = vrot.lane.b32.xlu0 %v6446, 96
  %v7264 = vpop.permute.xlu0 %7263
  %7265 = vrot.lane.b32.xlu0 %v6394, 96
  %v7266 = vpop.permute.xlu0 %7265
  %7267 = vrot.lane.b32.xlu0 %v6400, 96
  %v7268 = vpop.permute.xlu0 %7267
  %7269 = vrot.lane.b32.xlu0 %v6406, 96
  %v7270 = vpop.permute.xlu0 %7269
  %7271 = vrot.lane.b32.xlu0 %v6412, 96
  %v7272 = vpop.permute.xlu0 %7271
  %7273 = vrot.lane.b32.xlu0 %v6418, 96
  %v7274 = vpop.permute.xlu0 %7273
  %7275 = vrot.lane.b32.xlu0 %v6424, 96
  %v7276 = vpop.permute.xlu0 %7275
  %7277 = vrot.lane.b32.xlu0 %v6430, 96
  %v7278 = vpop.permute.xlu0 %7277
  %7279 = vrot.lane.b32.xlu0 %v6436, 96
  %v7280 = vpop.permute.xlu0 %7279
  %7281 = vrot.lane.b32.xlu0 %v6442, 96
  %v7282 = vpop.permute.xlu0 %7281
  %7283 = vrot.lane.b32.xlu0 %v6448, 96
  %v7284 = vpop.permute.xlu0 %7283
  %v7285 = vmul.f32 %v7246, %v7266
  %v7286 = vmul.f32 %v7246, %v7268
  %v7287 = vmul.f32 %v7246, %v7270
  %v7288 = vmul.f32 %v7246, %v7272
  %v7289 = vmul.f32 %v7246, %v7274
  %v7290 = vmul.f32 %v7246, %v7276
  %v7291 = vmul.f32 %v7246, %v7278
  %v7292 = vmul.f32 %v7246, %v7280
  %v7293 = vmul.f32 %v7246, %v7282
  %v7294 = vmul.f32 %v7246, %v7284
  %v7295 = vmul.f32 %v7248, %v7266
  %v7296 = vmul.f32 %v7248, %v7268
  %v7297 = vmul.f32 %v7248, %v7270
  %v7298 = vmul.f32 %v7248, %v7272
  %v7299 = vmul.f32 %v7248, %v7274
  %v7300 = vmul.f32 %v7248, %v7276
  %v7301 = vmul.f32 %v7248, %v7278
  %v7302 = vmul.f32 %v7248, %v7280
  %v7303 = vmul.f32 %v7248, %v7282
  %v7304 = vmul.f32 %v7248, %v7284
  %v7305 = vmul.f32 %v7250, %v7266
  %v7306 = vmul.f32 %v7250, %v7268
  %v7307 = vmul.f32 %v7250, %v7270
  %v7308 = vmul.f32 %v7250, %v7272
  %v7309 = vmul.f32 %v7250, %v7274
  %v7310 = vmul.f32 %v7250, %v7276
  %v7311 = vmul.f32 %v7250, %v7278
  %v7312 = vmul.f32 %v7250, %v7280
  %v7313 = vmul.f32 %v7250, %v7282
  %v7314 = vmul.f32 %v7250, %v7284
  %v7315 = vmul.f32 %v7252, %v7266
  %v7316 = vmul.f32 %v7252, %v7268
  %v7317 = vmul.f32 %v7252, %v7270
  %v7318 = vmul.f32 %v7252, %v7272
  %v7319 = vmul.f32 %v7252, %v7274
  %v7320 = vmul.f32 %v7252, %v7276
  %v7321 = vmul.f32 %v7252, %v7278
  %v7322 = vmul.f32 %v7252, %v7280
  %v7323 = vmul.f32 %v7252, %v7282
  %v7324 = vmul.f32 %v7252, %v7284
  %v7325 = vmul.f32 %v7254, %v7266
  %v7326 = vmul.f32 %v7254, %v7268
  %v7327 = vmul.f32 %v7254, %v7270
  %v7328 = vmul.f32 %v7254, %v7272
  %v7329 = vmul.f32 %v7254, %v7274
  %v7330 = vmul.f32 %v7254, %v7276
  %v7331 = vmul.f32 %v7254, %v7278
  %v7332 = vmul.f32 %v7254, %v7280
  %v7333 = vmul.f32 %v7254, %v7282
  %v7334 = vmul.f32 %v7254, %v7284
  %v7335 = vmul.f32 %v7256, %v7266
  %v7336 = vmul.f32 %v7256, %v7268
  %v7337 = vmul.f32 %v7256, %v7270
  %v7338 = vmul.f32 %v7256, %v7272
  %v7339 = vmul.f32 %v7256, %v7274
  %v7340 = vmul.f32 %v7256, %v7276
  %v7341 = vmul.f32 %v7256, %v7278
  %v7342 = vmul.f32 %v7256, %v7280
  %v7343 = vmul.f32 %v7256, %v7282
  %v7344 = vmul.f32 %v7256, %v7284
  %v7345 = vmul.f32 %v7258, %v7266
  %v7346 = vmul.f32 %v7258, %v7268
  %v7347 = vmul.f32 %v7258, %v7270
  %v7348 = vmul.f32 %v7258, %v7272
  %v7349 = vmul.f32 %v7258, %v7274
  %v7350 = vmul.f32 %v7258, %v7276
  %v7351 = vmul.f32 %v7258, %v7278
  %v7352 = vmul.f32 %v7258, %v7280
  %v7353 = vmul.f32 %v7258, %v7282
  %v7354 = vmul.f32 %v7258, %v7284
  %v7355 = vmul.f32 %v7260, %v7266
  %v7356 = vmul.f32 %v7260, %v7268
  %v7357 = vmul.f32 %v7260, %v7270
  %v7358 = vmul.f32 %v7260, %v7272
  %v7359 = vmul.f32 %v7260, %v7274
  %v7360 = vmul.f32 %v7260, %v7276
  %v7361 = vmul.f32 %v7260, %v7278
  %v7362 = vmul.f32 %v7260, %v7280
  %v7363 = vmul.f32 %v7260, %v7282
  %v7364 = vmul.f32 %v7260, %v7284
  %v7365 = vmul.f32 %v7262, %v7266
  %v7366 = vmul.f32 %v7262, %v7268
  %v7367 = vmul.f32 %v7262, %v7270
  %v7368 = vmul.f32 %v7262, %v7272
  %v7369 = vmul.f32 %v7262, %v7274
  %v7370 = vmul.f32 %v7262, %v7276
  %v7371 = vmul.f32 %v7262, %v7278
  %v7372 = vmul.f32 %v7262, %v7280
  %v7373 = vmul.f32 %v7262, %v7282
  %v7374 = vmul.f32 %v7262, %v7284
  %v7375 = vmul.f32 %v7264, %v7266
  %v7376 = vmul.f32 %v7264, %v7268
  %v7377 = vmul.f32 %v7264, %v7270
  %v7378 = vmul.f32 %v7264, %v7272
  %v7379 = vmul.f32 %v7264, %v7274
  %v7380 = vmul.f32 %v7264, %v7276
  %v7381 = vmul.f32 %v7264, %v7278
  %v7382 = vmul.f32 %v7264, %v7280
  %v7383 = vmul.f32 %v7264, %v7282
  %v7384 = vmul.f32 %v7264, %v7284
  %v7385 = vadd.f32 %v7145, %v7285
  %v7386 = vadd.f32 %v7146, %v7286
  %v7387 = vadd.f32 %v7147, %v7287
  %v7388 = vadd.f32 %v7148, %v7288
  %v7389 = vadd.f32 %v7149, %v7289
  %v7390 = vadd.f32 %v7150, %v7290
  %v7391 = vadd.f32 %v7151, %v7291
  %v7392 = vadd.f32 %v7152, %v7292
  %v7393 = vadd.f32 %v7153, %v7293
  %v7394 = vadd.f32 %v7154, %v7294
  %v7395 = vadd.f32 %v7155, %v7295
  %v7396 = vadd.f32 %v7156, %v7296
  %v7397 = vadd.f32 %v7157, %v7297
  %v7398 = vadd.f32 %v7158, %v7298
  %v7399 = vadd.f32 %v7159, %v7299
  %v7400 = vadd.f32 %v7160, %v7300
  %v7401 = vadd.f32 %v7161, %v7301
  %v7402 = vadd.f32 %v7162, %v7302
  %v7403 = vadd.f32 %v7163, %v7303
  %v7404 = vadd.f32 %v7164, %v7304
  %v7405 = vadd.f32 %v7165, %v7305
  %v7406 = vadd.f32 %v7166, %v7306
  %v7407 = vadd.f32 %v7167, %v7307
  %v7408 = vadd.f32 %v7168, %v7308
  %v7409 = vadd.f32 %v7169, %v7309
  %v7410 = vadd.f32 %v7170, %v7310
  %v7411 = vadd.f32 %v7171, %v7311
  %v7412 = vadd.f32 %v7172, %v7312
  %v7413 = vadd.f32 %v7173, %v7313
  %v7414 = vadd.f32 %v7174, %v7314
  %v7415 = vadd.f32 %v7175, %v7315
  %v7416 = vadd.f32 %v7176, %v7316
  %v7417 = vadd.f32 %v7177, %v7317
  %v7418 = vadd.f32 %v7178, %v7318
  %v7419 = vadd.f32 %v7179, %v7319
  %v7420 = vadd.f32 %v7180, %v7320
  %v7421 = vadd.f32 %v7181, %v7321
  %v7422 = vadd.f32 %v7182, %v7322
  %v7423 = vadd.f32 %v7183, %v7323
  %v7424 = vadd.f32 %v7184, %v7324
  %v7425 = vadd.f32 %v7185, %v7325
  %v7426 = vadd.f32 %v7186, %v7326
  %v7427 = vadd.f32 %v7187, %v7327
  %v7428 = vadd.f32 %v7188, %v7328
  %v7429 = vadd.f32 %v7189, %v7329
  %v7430 = vadd.f32 %v7190, %v7330
  %v7431 = vadd.f32 %v7191, %v7331
  %v7432 = vadd.f32 %v7192, %v7332
  %v7433 = vadd.f32 %v7193, %v7333
  %v7434 = vadd.f32 %v7194, %v7334
  %v7435 = vadd.f32 %v7195, %v7335
  %v7436 = vadd.f32 %v7196, %v7336
  %v7437 = vadd.f32 %v7197, %v7337
  %v7438 = vadd.f32 %v7198, %v7338
  %v7439 = vadd.f32 %v7199, %v7339
  %v7440 = vadd.f32 %v7200, %v7340
  %v7441 = vadd.f32 %v7201, %v7341
  %v7442 = vadd.f32 %v7202, %v7342
  %v7443 = vadd.f32 %v7203, %v7343
  %v7444 = vadd.f32 %v7204, %v7344
  %v7445 = vadd.f32 %v7205, %v7345
  %v7446 = vadd.f32 %v7206, %v7346
  %v7447 = vadd.f32 %v7207, %v7347
  %v7448 = vadd.f32 %v7208, %v7348
  %v7449 = vadd.f32 %v7209, %v7349
  %v7450 = vadd.f32 %v7210, %v7350
  %v7451 = vadd.f32 %v7211, %v7351
  %v7452 = vadd.f32 %v7212, %v7352
  %v7453 = vadd.f32 %v7213, %v7353
  %v7454 = vadd.f32 %v7214, %v7354
  %v7455 = vadd.f32 %v7215, %v7355
  %v7456 = vadd.f32 %v7216, %v7356
  %v7457 = vadd.f32 %v7217, %v7357
  %v7458 = vadd.f32 %v7218, %v7358
  %v7459 = vadd.f32 %v7219, %v7359
  %v7460 = vadd.f32 %v7220, %v7360
  %v7461 = vadd.f32 %v7221, %v7361
  %v7462 = vadd.f32 %v7222, %v7362
  %v7463 = vadd.f32 %v7223, %v7363
  %v7464 = vadd.f32 %v7224, %v7364
  %v7465 = vadd.f32 %v7225, %v7365
  %v7466 = vadd.f32 %v7226, %v7366
  %v7467 = vadd.f32 %v7227, %v7367
  %v7468 = vadd.f32 %v7228, %v7368
  %v7469 = vadd.f32 %v7229, %v7369
  %v7470 = vadd.f32 %v7230, %v7370
  %v7471 = vadd.f32 %v7231, %v7371
  %v7472 = vadd.f32 %v7232, %v7372
  %v7473 = vadd.f32 %v7233, %v7373
  %v7474 = vadd.f32 %v7234, %v7374
  %v7475 = vadd.f32 %v7235, %v7375
  %v7476 = vadd.f32 %v7236, %v7376
  %v7477 = vadd.f32 %v7237, %v7377
  %v7478 = vadd.f32 %v7238, %v7378
  %v7479 = vadd.f32 %v7239, %v7379
  %v7480 = vadd.f32 %v7240, %v7380
  %v7481 = vadd.f32 %v7241, %v7381
  %v7482 = vadd.f32 %v7242, %v7382
  %v7483 = vadd.f32 %v7243, %v7383
  %v7484 = vadd.f32 %v7244, %v7384
  %v7485 = vmax.f32 %v7385, %v7386
  %v7486 = vmax.f32 %v7485, %v7387
  %v7487 = vmax.f32 %v7486, %v7388
  %v7488 = vmax.f32 %v7487, %v7389
  %v7489 = vmax.f32 %v7488, %v7390
  %v7490 = vmax.f32 %v7489, %v7391
  %v7491 = vmax.f32 %v7490, %v7392
  %v7492 = vmax.f32 %v7491, %v7393
  %v7493 = vmax.f32 %v7492, %v7394
  %v7494 = vmax.f32 %v7395, %v7396
  %v7495 = vmax.f32 %v7494, %v7397
  %v7496 = vmax.f32 %v7495, %v7398
  %v7497 = vmax.f32 %v7496, %v7399
  %v7498 = vmax.f32 %v7497, %v7400
  %v7499 = vmax.f32 %v7498, %v7401
  %v7500 = vmax.f32 %v7499, %v7402
  %v7501 = vmax.f32 %v7500, %v7403
  %v7502 = vmax.f32 %v7501, %v7404
  %v7503 = vmax.f32 %v7405, %v7406
  %v7504 = vmax.f32 %v7503, %v7407
  %v7505 = vmax.f32 %v7504, %v7408
  %v7506 = vmax.f32 %v7505, %v7409
  %v7507 = vmax.f32 %v7506, %v7410
  %v7508 = vmax.f32 %v7507, %v7411
  %v7509 = vmax.f32 %v7508, %v7412
  %v7510 = vmax.f32 %v7509, %v7413
  %v7511 = vmax.f32 %v7510, %v7414
  %v7512 = vmax.f32 %v7415, %v7416
  %v7513 = vmax.f32 %v7512, %v7417
  %v7514 = vmax.f32 %v7513, %v7418
  %v7515 = vmax.f32 %v7514, %v7419
  %v7516 = vmax.f32 %v7515, %v7420
  %v7517 = vmax.f32 %v7516, %v7421
  %v7518 = vmax.f32 %v7517, %v7422
  %v7519 = vmax.f32 %v7518, %v7423
  %v7520 = vmax.f32 %v7519, %v7424
  %v7521 = vmax.f32 %v7425, %v7426
  %v7522 = vmax.f32 %v7521, %v7427
  %v7523 = vmax.f32 %v7522, %v7428
  %v7524 = vmax.f32 %v7523, %v7429
  %v7525 = vmax.f32 %v7524, %v7430
  %v7526 = vmax.f32 %v7525, %v7431
  %v7527 = vmax.f32 %v7526, %v7432
  %v7528 = vmax.f32 %v7527, %v7433
  %v7529 = vmax.f32 %v7528, %v7434
  %v7530 = vmax.f32 %v7435, %v7436
  %v7531 = vmax.f32 %v7530, %v7437
  %v7532 = vmax.f32 %v7531, %v7438
  %v7533 = vmax.f32 %v7532, %v7439
  %v7534 = vmax.f32 %v7533, %v7440
  %v7535 = vmax.f32 %v7534, %v7441
  %v7536 = vmax.f32 %v7535, %v7442
  %v7537 = vmax.f32 %v7536, %v7443
  %v7538 = vmax.f32 %v7537, %v7444
  %v7539 = vmax.f32 %v7445, %v7446
  %v7540 = vmax.f32 %v7539, %v7447
  %v7541 = vmax.f32 %v7540, %v7448
  %v7542 = vmax.f32 %v7541, %v7449
  %v7543 = vmax.f32 %v7542, %v7450
  %v7544 = vmax.f32 %v7543, %v7451
  %v7545 = vmax.f32 %v7544, %v7452
  %v7546 = vmax.f32 %v7545, %v7453
  %v7547 = vmax.f32 %v7546, %v7454
  %v7548 = vmax.f32 %v7455, %v7456
  %v7549 = vmax.f32 %v7548, %v7457
  %v7550 = vmax.f32 %v7549, %v7458
  %v7551 = vmax.f32 %v7550, %v7459
  %v7552 = vmax.f32 %v7551, %v7460
  %v7553 = vmax.f32 %v7552, %v7461
  %v7554 = vmax.f32 %v7553, %v7462
  %v7555 = vmax.f32 %v7554, %v7463
  %v7556 = vmax.f32 %v7555, %v7464
  %v7557 = vmax.f32 %v7465, %v7466
  %v7558 = vmax.f32 %v7557, %v7467
  %v7559 = vmax.f32 %v7558, %v7468
  %v7560 = vmax.f32 %v7559, %v7469
  %v7561 = vmax.f32 %v7560, %v7470
  %v7562 = vmax.f32 %v7561, %v7471
  %v7563 = vmax.f32 %v7562, %v7472
  %v7564 = vmax.f32 %v7563, %v7473
  %v7565 = vmax.f32 %v7564, %v7474
  %v7566 = vmax.f32 %v7475, %v7476
  %v7567 = vmax.f32 %v7566, %v7477
  %v7568 = vmax.f32 %v7567, %v7478
  %v7569 = vmax.f32 %v7568, %v7479
  %v7570 = vmax.f32 %v7569, %v7480
  %v7571 = vmax.f32 %v7570, %v7481
  %v7572 = vmax.f32 %v7571, %v7482
  %v7573 = vmax.f32 %v7572, %v7483
  %v7574 = vmax.f32 %v7573, %v7484
  %v7575 = vsub.f32 %v7385, %v7493
  %v7576 = vsub.f32 %v7386, %v7493
  %v7577 = vsub.f32 %v7387, %v7493
  %v7578 = vsub.f32 %v7388, %v7493
  %v7579 = vsub.f32 %v7389, %v7493
  %v7580 = vsub.f32 %v7390, %v7493
  %v7581 = vsub.f32 %v7391, %v7493
  %v7582 = vsub.f32 %v7392, %v7493
  %v7583 = vsub.f32 %v7393, %v7493
  %v7584 = vsub.f32 %v7394, %v7493
  %v7585 = vsub.f32 %v7395, %v7502
  %v7586 = vsub.f32 %v7396, %v7502
  %v7587 = vsub.f32 %v7397, %v7502
  %v7588 = vsub.f32 %v7398, %v7502
  %v7589 = vsub.f32 %v7399, %v7502
  %v7590 = vsub.f32 %v7400, %v7502
  %v7591 = vsub.f32 %v7401, %v7502
  %v7592 = vsub.f32 %v7402, %v7502
  %v7593 = vsub.f32 %v7403, %v7502
  %v7594 = vsub.f32 %v7404, %v7502
  %v7595 = vsub.f32 %v7405, %v7511
  %v7596 = vsub.f32 %v7406, %v7511
  %v7597 = vsub.f32 %v7407, %v7511
  %v7598 = vsub.f32 %v7408, %v7511
  %v7599 = vsub.f32 %v7409, %v7511
  %v7600 = vsub.f32 %v7410, %v7511
  %v7601 = vsub.f32 %v7411, %v7511
  %v7602 = vsub.f32 %v7412, %v7511
  %v7603 = vsub.f32 %v7413, %v7511
  %v7604 = vsub.f32 %v7414, %v7511
  %v7605 = vsub.f32 %v7415, %v7520
  %v7606 = vsub.f32 %v7416, %v7520
  %v7607 = vsub.f32 %v7417, %v7520
  %v7608 = vsub.f32 %v7418, %v7520
  %v7609 = vsub.f32 %v7419, %v7520
  %v7610 = vsub.f32 %v7420, %v7520
  %v7611 = vsub.f32 %v7421, %v7520
  %v7612 = vsub.f32 %v7422, %v7520
  %v7613 = vsub.f32 %v7423, %v7520
  %v7614 = vsub.f32 %v7424, %v7520
  %v7615 = vsub.f32 %v7425, %v7529
  %v7616 = vsub.f32 %v7426, %v7529
  %v7617 = vsub.f32 %v7427, %v7529
  %v7618 = vsub.f32 %v7428, %v7529
  %v7619 = vsub.f32 %v7429, %v7529
  %v7620 = vsub.f32 %v7430, %v7529
  %v7621 = vsub.f32 %v7431, %v7529
  %v7622 = vsub.f32 %v7432, %v7529
  %v7623 = vsub.f32 %v7433, %v7529
  %v7624 = vsub.f32 %v7434, %v7529
  %v7625 = vsub.f32 %v7435, %v7538
  %v7626 = vsub.f32 %v7436, %v7538
  %v7627 = vsub.f32 %v7437, %v7538
  %v7628 = vsub.f32 %v7438, %v7538
  %v7629 = vsub.f32 %v7439, %v7538
  %v7630 = vsub.f32 %v7440, %v7538
  %v7631 = vsub.f32 %v7441, %v7538
  %v7632 = vsub.f32 %v7442, %v7538
  %v7633 = vsub.f32 %v7443, %v7538
  %v7634 = vsub.f32 %v7444, %v7538
  %v7635 = vsub.f32 %v7445, %v7547
  %v7636 = vsub.f32 %v7446, %v7547
  %v7637 = vsub.f32 %v7447, %v7547
  %v7638 = vsub.f32 %v7448, %v7547
  %v7639 = vsub.f32 %v7449, %v7547
  %v7640 = vsub.f32 %v7450, %v7547
  %v7641 = vsub.f32 %v7451, %v7547
  %v7642 = vsub.f32 %v7452, %v7547
  %v7643 = vsub.f32 %v7453, %v7547
  %v7644 = vsub.f32 %v7454, %v7547
  %v7645 = vsub.f32 %v7455, %v7556
  %v7646 = vsub.f32 %v7456, %v7556
  %v7647 = vsub.f32 %v7457, %v7556
  %v7648 = vsub.f32 %v7458, %v7556
  %v7649 = vsub.f32 %v7459, %v7556
  %v7650 = vsub.f32 %v7460, %v7556
  %v7651 = vsub.f32 %v7461, %v7556
  %v7652 = vsub.f32 %v7462, %v7556
  %v7653 = vsub.f32 %v7463, %v7556
  %v7654 = vsub.f32 %v7464, %v7556
  %v7655 = vsub.f32 %v7465, %v7565
  %v7656 = vsub.f32 %v7466, %v7565
  %v7657 = vsub.f32 %v7467, %v7565
  %v7658 = vsub.f32 %v7468, %v7565
  %v7659 = vsub.f32 %v7469, %v7565
  %v7660 = vsub.f32 %v7470, %v7565
  %v7661 = vsub.f32 %v7471, %v7565
  %v7662 = vsub.f32 %v7472, %v7565
  %v7663 = vsub.f32 %v7473, %v7565
  %v7664 = vsub.f32 %v7474, %v7565
  %v7665 = vsub.f32 %v7475, %v7574
  %v7666 = vsub.f32 %v7476, %v7574
  %v7667 = vsub.f32 %v7477, %v7574
  %v7668 = vsub.f32 %v7478, %v7574
  %v7669 = vsub.f32 %v7479, %v7574
  %v7670 = vsub.f32 %v7480, %v7574
  %v7671 = vsub.f32 %v7481, %v7574
  %v7672 = vsub.f32 %v7482, %v7574
  %v7673 = vsub.f32 %v7483, %v7574
  %v7674 = vsub.f32 %v7484, %v7574
  %v7675 = vmul.f32 %v7575, 1.442695
  %v7676 = vpow.pop %v7675
  %v7677 = vmul.f32 %v7576, 1.442695
  %v7678 = vpow.pop %v7677
  %v7679 = vmul.f32 %v7577, 1.442695
  %v7680 = vpow.pop %v7679
  %v7681 = vmul.f32 %v7578, 1.442695
  %v7682 = vpow.pop %v7681
  %v7683 = vmul.f32 %v7579, 1.442695
  %v7684 = vpow.pop %v7683
  %v7685 = vmul.f32 %v7580, 1.442695
  %v7686 = vpow.pop %v7685
  %v7687 = vmul.f32 %v7581, 1.442695
  %v7688 = vpow.pop %v7687
  %v7689 = vmul.f32 %v7582, 1.442695
  %v7690 = vpow.pop %v7689
  %v7691 = vmul.f32 %v7583, 1.442695
  %v7692 = vpow.pop %v7691
  %v7693 = vmul.f32 %v7584, 1.442695
  %v7694 = vpow.pop %v7693
  %v7695 = vmul.f32 %v7585, 1.442695
  %v7696 = vpow.pop %v7695
  %v7697 = vmul.f32 %v7586, 1.442695
  %v7698 = vpow.pop %v7697
  %v7699 = vmul.f32 %v7587, 1.442695
  %v7700 = vpow.pop %v7699
  %v7701 = vmul.f32 %v7588, 1.442695
  %v7702 = vpow.pop %v7701
  %v7703 = vmul.f32 %v7589, 1.442695
  %v7704 = vpow.pop %v7703
  %v7705 = vmul.f32 %v7590, 1.442695
  %v7706 = vpow.pop %v7705
  %v7707 = vmul.f32 %v7591, 1.442695
  %v7708 = vpow.pop %v7707
  %v7709 = vmul.f32 %v7592, 1.442695
  %v7710 = vpow.pop %v7709
  %v7711 = vmul.f32 %v7593, 1.442695
  %v7712 = vpow.pop %v7711
  %v7713 = vmul.f32 %v7594, 1.442695
  %v7714 = vpow.pop %v7713
  %v7715 = vmul.f32 %v7595, 1.442695
  %v7716 = vpow.pop %v7715
  %v7717 = vmul.f32 %v7596, 1.442695
  %v7718 = vpow.pop %v7717
  %v7719 = vmul.f32 %v7597, 1.442695
  %v7720 = vpow.pop %v7719
  %v7721 = vmul.f32 %v7598, 1.442695
  %v7722 = vpow.pop %v7721
  %v7723 = vmul.f32 %v7599, 1.442695
  %v7724 = vpow.pop %v7723
  %v7725 = vmul.f32 %v7600, 1.442695
  %v7726 = vpow.pop %v7725
  %v7727 = vmul.f32 %v7601, 1.442695
  %v7728 = vpow.pop %v7727
  %v7729 = vmul.f32 %v7602, 1.442695
  %v7730 = vpow.pop %v7729
  %v7731 = vmul.f32 %v7603, 1.442695
  %v7732 = vpow.pop %v7731
  %v7733 = vmul.f32 %v7604, 1.442695
  %v7734 = vpow.pop %v7733
  %v7735 = vmul.f32 %v7605, 1.442695
  %v7736 = vpow.pop %v7735
  %v7737 = vmul.f32 %v7606, 1.442695
  %v7738 = vpow.pop %v7737
  %v7739 = vmul.f32 %v7607, 1.442695
  %v7740 = vpow.pop %v7739
  %v7741 = vmul.f32 %v7608, 1.442695
  %v7742 = vpow.pop %v7741
  %v7743 = vmul.f32 %v7609, 1.442695
  %v7744 = vpow.pop %v7743
  %v7745 = vmul.f32 %v7610, 1.442695
  %v7746 = vpow.pop %v7745
  %v7747 = vmul.f32 %v7611, 1.442695
  %v7748 = vpow.pop %v7747
  %v7749 = vmul.f32 %v7612, 1.442695
  %v7750 = vpow.pop %v7749
  %v7751 = vmul.f32 %v7613, 1.442695
  %v7752 = vpow.pop %v7751
  %v7753 = vmul.f32 %v7614, 1.442695
  %v7754 = vpow.pop %v7753
  %v7755 = vmul.f32 %v7615, 1.442695
  %v7756 = vpow.pop %v7755
  %v7757 = vmul.f32 %v7616, 1.442695
  %v7758 = vpow.pop %v7757
  %v7759 = vmul.f32 %v7617, 1.442695
  %v7760 = vpow.pop %v7759
  %v7761 = vmul.f32 %v7618, 1.442695
  %v7762 = vpow.pop %v7761
  %v7763 = vmul.f32 %v7619, 1.442695
  %v7764 = vpow.pop %v7763
  %v7765 = vmul.f32 %v7620, 1.442695
  %v7766 = vpow.pop %v7765
  %v7767 = vmul.f32 %v7621, 1.442695
  %v7768 = vpow.pop %v7767
  %v7769 = vmul.f32 %v7622, 1.442695
  %v7770 = vpow.pop %v7769
  %v7771 = vmul.f32 %v7623, 1.442695
  %v7772 = vpow.pop %v7771
  %v7773 = vmul.f32 %v7624, 1.442695
  %v7774 = vpow.pop %v7773
  %v7775 = vmul.f32 %v7625, 1.442695
  %v7776 = vpow.pop %v7775
  %v7777 = vmul.f32 %v7626, 1.442695
  %v7778 = vpow.pop %v7777
  %v7779 = vmul.f32 %v7627, 1.442695
  %v7780 = vpow.pop %v7779
  %v7781 = vmul.f32 %v7628, 1.442695
  %v7782 = vpow.pop %v7781
  %v7783 = vmul.f32 %v7629, 1.442695
  %v7784 = vpow.pop %v7783
  %v7785 = vmul.f32 %v7630, 1.442695
  %v7786 = vpow.pop %v7785
  %v7787 = vmul.f32 %v7631, 1.442695
  %v7788 = vpow.pop %v7787
  %v7789 = vmul.f32 %v7632, 1.442695
  %v7790 = vpow.pop %v7789
  %v7791 = vmul.f32 %v7633, 1.442695
  %v7792 = vpow.pop %v7791
  %v7793 = vmul.f32 %v7634, 1.442695
  %v7794 = vpow.pop %v7793
  %v7795 = vmul.f32 %v7635, 1.442695
  %v7796 = vpow.pop %v7795
  %v7797 = vmul.f32 %v7636, 1.442695
  %v7798 = vpow.pop %v7797
  %v7799 = vmul.f32 %v7637, 1.442695
  %v7800 = vpow.pop %v7799
  %v7801 = vmul.f32 %v7638, 1.442695
  %v7802 = vpow.pop %v7801
  %v7803 = vmul.f32 %v7639, 1.442695
  %v7804 = vpow.pop %v7803
  %v7805 = vmul.f32 %v7640, 1.442695
  %v7806 = vpow.pop %v7805
  %v7807 = vmul.f32 %v7641, 1.442695
  %v7808 = vpow.pop %v7807
  %v7809 = vmul.f32 %v7642, 1.442695
  %v7810 = vpow.pop %v7809
  %v7811 = vmul.f32 %v7643, 1.442695
  %v7812 = vpow.pop %v7811
  %v7813 = vmul.f32 %v7644, 1.442695
  %v7814 = vpow.pop %v7813
  %v7815 = vmul.f32 %v7645, 1.442695
  %v7816 = vpow.pop %v7815
  %v7817 = vmul.f32 %v7646, 1.442695
  %v7818 = vpow.pop %v7817
  %v7819 = vmul.f32 %v7647, 1.442695
  %v7820 = vpow.pop %v7819
  %v7821 = vmul.f32 %v7648, 1.442695
  %v7822 = vpow.pop %v7821
  %v7823 = vmul.f32 %v7649, 1.442695
  %v7824 = vpow.pop %v7823
  %v7825 = vmul.f32 %v7650, 1.442695
  %v7826 = vpow.pop %v7825
  %v7827 = vmul.f32 %v7651, 1.442695
  %v7828 = vpow.pop %v7827
  %v7829 = vmul.f32 %v7652, 1.442695
  %v7830 = vpow.pop %v7829
  %v7831 = vmul.f32 %v7653, 1.442695
  %v7832 = vpow.pop %v7831
  %v7833 = vmul.f32 %v7654, 1.442695
  %v7834 = vpow.pop %v7833
  %v7835 = vmul.f32 %v7655, 1.442695
  %v7836 = vpow.pop %v7835
  %v7837 = vmul.f32 %v7656, 1.442695
  %v7838 = vpow.pop %v7837
  %v7839 = vmul.f32 %v7657, 1.442695
  %v7840 = vpow.pop %v7839
  %v7841 = vmul.f32 %v7658, 1.442695
  %v7842 = vpow.pop %v7841
  %v7843 = vmul.f32 %v7659, 1.442695
  %v7844 = vpow.pop %v7843
  %v7845 = vmul.f32 %v7660, 1.442695
  %v7846 = vpow.pop %v7845
  %v7847 = vmul.f32 %v7661, 1.442695
  %v7848 = vpow.pop %v7847
  %v7849 = vmul.f32 %v7662, 1.442695
  %v7850 = vpow.pop %v7849
  %v7851 = vmul.f32 %v7663, 1.442695
  %v7852 = vpow.pop %v7851
  %v7853 = vmul.f32 %v7664, 1.442695
  %v7854 = vpow.pop %v7853
  %v7855 = vmul.f32 %v7665, 1.442695
  %v7856 = vpow.pop %v7855
  %v7857 = vmul.f32 %v7666, 1.442695
  %v7858 = vpow.pop %v7857
  %v7859 = vmul.f32 %v7667, 1.442695
  %v7860 = vpow.pop %v7859
  %v7861 = vmul.f32 %v7668, 1.442695
  %v7862 = vpow.pop %v7861
  %v7863 = vmul.f32 %v7669, 1.442695
  %v7864 = vpow.pop %v7863
  %v7865 = vmul.f32 %v7670, 1.442695
  %v7866 = vpow.pop %v7865
  %v7867 = vmul.f32 %v7671, 1.442695
  %v7868 = vpow.pop %v7867
  %v7869 = vmul.f32 %v7672, 1.442695
  %v7870 = vpow.pop %v7869
  %v7871 = vmul.f32 %v7673, 1.442695
  %v7872 = vpow.pop %v7871
  %v7873 = vmul.f32 %v7674, 1.442695
  %v7874 = vpow.pop %v7873
  %v7875 = vadd.f32 %v7676, %v7678
  %v7876 = vadd.f32 %v7875, %v7680
  %v7877 = vadd.f32 %v7876, %v7682
  %v7878 = vadd.f32 %v7877, %v7684
  %v7879 = vadd.f32 %v7878, %v7686
  %v7880 = vadd.f32 %v7879, %v7688
  %v7881 = vadd.f32 %v7880, %v7690
  %v7882 = vadd.f32 %v7881, %v7692
  %v7883 = vadd.f32 %v7882, %v7694
  %v7884 = vadd.f32 %v7696, %v7698
  %v7885 = vadd.f32 %v7884, %v7700
  %v7886 = vadd.f32 %v7885, %v7702
  %v7887 = vadd.f32 %v7886, %v7704
  %v7888 = vadd.f32 %v7887, %v7706
  %v7889 = vadd.f32 %v7888, %v7708
  %v7890 = vadd.f32 %v7889, %v7710
  %v7891 = vadd.f32 %v7890, %v7712
  %v7892 = vadd.f32 %v7891, %v7714
  %v7893 = vadd.f32 %v7716, %v7718
  %v7894 = vadd.f32 %v7893, %v7720
  %v7895 = vadd.f32 %v7894, %v7722
  %v7896 = vadd.f32 %v7895, %v7724
  %v7897 = vadd.f32 %v7896, %v7726
  %v7898 = vadd.f32 %v7897, %v7728
  %v7899 = vadd.f32 %v7898, %v7730
  %v7900 = vadd.f32 %v7899, %v7732
  %v7901 = vadd.f32 %v7900, %v7734
  %v7902 = vadd.f32 %v7736, %v7738
  %v7903 = vadd.f32 %v7902, %v7740
  %v7904 = vadd.f32 %v7903, %v7742
  %v7905 = vadd.f32 %v7904, %v7744
  %v7906 = vadd.f32 %v7905, %v7746
  %v7907 = vadd.f32 %v7906, %v7748
  %v7908 = vadd.f32 %v7907, %v7750
  %v7909 = vadd.f32 %v7908, %v7752
  %v7910 = vadd.f32 %v7909, %v7754
  %v7911 = vadd.f32 %v7756, %v7758
  %v7912 = vadd.f32 %v7911, %v7760
  %v7913 = vadd.f32 %v7912, %v7762
  %v7914 = vadd.f32 %v7913, %v7764
  %v7915 = vadd.f32 %v7914, %v7766
  %v7916 = vadd.f32 %v7915, %v7768
  %v7917 = vadd.f32 %v7916, %v7770
  %v7918 = vadd.f32 %v7917, %v7772
  %v7919 = vadd.f32 %v7918, %v7774
  %v7920 = vadd.f32 %v7776, %v7778
  %v7921 = vadd.f32 %v7920, %v7780
  %v7922 = vadd.f32 %v7921, %v7782
  %v7923 = vadd.f32 %v7922, %v7784
  %v7924 = vadd.f32 %v7923, %v7786
  %v7925 = vadd.f32 %v7924, %v7788
  %v7926 = vadd.f32 %v7925, %v7790
  %v7927 = vadd.f32 %v7926, %v7792
  %v7928 = vadd.f32 %v7927, %v7794
  %v7929 = vadd.f32 %v7796, %v7798
  %v7930 = vadd.f32 %v7929, %v7800
  %v7931 = vadd.f32 %v7930, %v7802
  %v7932 = vadd.f32 %v7931, %v7804
  %v7933 = vadd.f32 %v7932, %v7806
  %v7934 = vadd.f32 %v7933, %v7808
  %v7935 = vadd.f32 %v7934, %v7810
  %v7936 = vadd.f32 %v7935, %v7812
  %v7937 = vadd.f32 %v7936, %v7814
  %v7938 = vadd.f32 %v7816, %v7818
  %v7939 = vadd.f32 %v7938, %v7820
  %v7940 = vadd.f32 %v7939, %v7822
  %v7941 = vadd.f32 %v7940, %v7824
  %v7942 = vadd.f32 %v7941, %v7826
  %v7943 = vadd.f32 %v7942, %v7828
  %v7944 = vadd.f32 %v7943, %v7830
  %v7945 = vadd.f32 %v7944, %v7832
  %v7946 = vadd.f32 %v7945, %v7834
  %v7947 = vadd.f32 %v7836, %v7838
  %v7948 = vadd.f32 %v7947, %v7840
  %v7949 = vadd.f32 %v7948, %v7842
  %v7950 = vadd.f32 %v7949, %v7844
  %v7951 = vadd.f32 %v7950, %v7846
  %v7952 = vadd.f32 %v7951, %v7848
  %v7953 = vadd.f32 %v7952, %v7850
  %v7954 = vadd.f32 %v7953, %v7852
  %v7955 = vadd.f32 %v7954, %v7854
  %v7956 = vadd.f32 %v7856, %v7858
  %v7957 = vadd.f32 %v7956, %v7860
  %v7958 = vadd.f32 %v7957, %v7862
  %v7959 = vadd.f32 %v7958, %v7864
  %v7960 = vadd.f32 %v7959, %v7866
  %v7961 = vadd.f32 %v7960, %v7868
  %v7962 = vadd.f32 %v7961, %v7870
  %v7963 = vadd.f32 %v7962, %v7872
  %v7964 = vadd.f32 %v7963, %v7874
  %v7965 = vmul.f32 %v7676, %v6517
  %v7966 = vmul.f32 %v7678, %v6522
  %v7967 = vmul.f32 %v7680, %v6527
  %v7968 = vmul.f32 %v7682, %v6532
  %v7969 = vmul.f32 %v7684, %v6537
  %v7970 = vmul.f32 %v7686, %v6542
  %v7971 = vmul.f32 %v7688, %v6547
  %v7972 = vmul.f32 %v7690, %v6552
  %v7973 = vmul.f32 %v7692, %v6557
  %v7974 = vmul.f32 %v7694, %v6562
  %v7975 = vmul.f32 %v7696, %v6517
  %v7976 = vmul.f32 %v7698, %v6522
  %v7977 = vmul.f32 %v7700, %v6527
  %v7978 = vmul.f32 %v7702, %v6532
  %v7979 = vmul.f32 %v7704, %v6537
  %v7980 = vmul.f32 %v7706, %v6542
  %v7981 = vmul.f32 %v7708, %v6547
  %v7982 = vmul.f32 %v7710, %v6552
  %v7983 = vmul.f32 %v7712, %v6557
  %v7984 = vmul.f32 %v7714, %v6562
  %v7985 = vmul.f32 %v7716, %v6517
  %v7986 = vmul.f32 %v7718, %v6522
  %v7987 = vmul.f32 %v7720, %v6527
  %v7988 = vmul.f32 %v7722, %v6532
  %v7989 = vmul.f32 %v7724, %v6537
  %v7990 = vmul.f32 %v7726, %v6542
  %v7991 = vmul.f32 %v7728, %v6547
  %v7992 = vmul.f32 %v7730, %v6552
  %v7993 = vmul.f32 %v7732, %v6557
  %v7994 = vmul.f32 %v7734, %v6562
  %v7995 = vmul.f32 %v7736, %v6517
  %v7996 = vmul.f32 %v7738, %v6522
  %v7997 = vmul.f32 %v7740, %v6527
  %v7998 = vmul.f32 %v7742, %v6532
  %v7999 = vmul.f32 %v7744, %v6537
  %v8000 = vmul.f32 %v7746, %v6542
  %v8001 = vmul.f32 %v7748, %v6547
  %v8002 = vmul.f32 %v7750, %v6552
  %v8003 = vmul.f32 %v7752, %v6557
  %v8004 = vmul.f32 %v7754, %v6562
  %v8005 = vmul.f32 %v7756, %v6517
  %v8006 = vmul.f32 %v7758, %v6522
  %v8007 = vmul.f32 %v7760, %v6527
  %v8008 = vmul.f32 %v7762, %v6532
  %v8009 = vmul.f32 %v7764, %v6537
  %v8010 = vmul.f32 %v7766, %v6542
  %v8011 = vmul.f32 %v7768, %v6547
  %v8012 = vmul.f32 %v7770, %v6552
  %v8013 = vmul.f32 %v7772, %v6557
  %v8014 = vmul.f32 %v7774, %v6562
  %v8015 = vmul.f32 %v7776, %v6517
  %v8016 = vmul.f32 %v7778, %v6522
  %v8017 = vmul.f32 %v7780, %v6527
  %v8018 = vmul.f32 %v7782, %v6532
  %v8019 = vmul.f32 %v7784, %v6537
  %v8020 = vmul.f32 %v7786, %v6542
  %v8021 = vmul.f32 %v7788, %v6547
  %v8022 = vmul.f32 %v7790, %v6552
  %v8023 = vmul.f32 %v7792, %v6557
  %v8024 = vmul.f32 %v7794, %v6562
  %v8025 = vmul.f32 %v7796, %v6517
  %v8026 = vmul.f32 %v7798, %v6522
  %v8027 = vmul.f32 %v7800, %v6527
  %v8028 = vmul.f32 %v7802, %v6532
  %v8029 = vmul.f32 %v7804, %v6537
  %v8030 = vmul.f32 %v7806, %v6542
  %v8031 = vmul.f32 %v7808, %v6547
  %v8032 = vmul.f32 %v7810, %v6552
  %v8033 = vmul.f32 %v7812, %v6557
  %v8034 = vmul.f32 %v7814, %v6562
  %v8035 = vmul.f32 %v7816, %v6517
  %v8036 = vmul.f32 %v7818, %v6522
  %v8037 = vmul.f32 %v7820, %v6527
  %v8038 = vmul.f32 %v7822, %v6532
  %v8039 = vmul.f32 %v7824, %v6537
  %v8040 = vmul.f32 %v7826, %v6542
  %v8041 = vmul.f32 %v7828, %v6547
  %v8042 = vmul.f32 %v7830, %v6552
  %v8043 = vmul.f32 %v7832, %v6557
  %v8044 = vmul.f32 %v7834, %v6562
  %v8045 = vmul.f32 %v7836, %v6517
  %v8046 = vmul.f32 %v7838, %v6522
  %v8047 = vmul.f32 %v7840, %v6527
  %v8048 = vmul.f32 %v7842, %v6532
  %v8049 = vmul.f32 %v7844, %v6537
  %v8050 = vmul.f32 %v7846, %v6542
  %v8051 = vmul.f32 %v7848, %v6547
  %v8052 = vmul.f32 %v7850, %v6552
  %v8053 = vmul.f32 %v7852, %v6557
  %v8054 = vmul.f32 %v7854, %v6562
  %v8055 = vmul.f32 %v7856, %v6517
  %v8056 = vmul.f32 %v7858, %v6522
  %v8057 = vmul.f32 %v7860, %v6527
  %v8058 = vmul.f32 %v7862, %v6532
  %v8059 = vmul.f32 %v7864, %v6537
  %v8060 = vmul.f32 %v7866, %v6542
  %v8061 = vmul.f32 %v7868, %v6547
  %v8062 = vmul.f32 %v7870, %v6552
  %v8063 = vmul.f32 %v7872, %v6557
  %v8064 = vmul.f32 %v7874, %v6562
  %v8065 = vadd.f32 %v7965, %v7966
  %v8066 = vadd.f32 %v8065, %v7967
  %v8067 = vadd.f32 %v8066, %v7968
  %v8068 = vadd.f32 %v8067, %v7969
  %v8069 = vadd.f32 %v8068, %v7970
  %v8070 = vadd.f32 %v8069, %v7971
  %v8071 = vadd.f32 %v8070, %v7972
  %v8072 = vadd.f32 %v8071, %v7973
  %v8073 = vadd.f32 %v8072, %v7974
  %v8074 = vadd.f32 %v7975, %v7976
  %v8075 = vadd.f32 %v8074, %v7977
  %v8076 = vadd.f32 %v8075, %v7978
  %v8077 = vadd.f32 %v8076, %v7979
  %v8078 = vadd.f32 %v8077, %v7980
  %v8079 = vadd.f32 %v8078, %v7981
  %v8080 = vadd.f32 %v8079, %v7982
  %v8081 = vadd.f32 %v8080, %v7983
  %v8082 = vadd.f32 %v8081, %v7984
  %v8083 = vadd.f32 %v7985, %v7986
  %v8084 = vadd.f32 %v8083, %v7987
  %v8085 = vadd.f32 %v8084, %v7988
  %v8086 = vadd.f32 %v8085, %v7989
  %v8087 = vadd.f32 %v8086, %v7990
  %v8088 = vadd.f32 %v8087, %v7991
  %v8089 = vadd.f32 %v8088, %v7992
  %v8090 = vadd.f32 %v8089, %v7993
  %v8091 = vadd.f32 %v8090, %v7994
  %v8092 = vadd.f32 %v7995, %v7996
  %v8093 = vadd.f32 %v8092, %v7997
  %v8094 = vadd.f32 %v8093, %v7998
  %v8095 = vadd.f32 %v8094, %v7999
  %v8096 = vadd.f32 %v8095, %v8000
  %v8097 = vadd.f32 %v8096, %v8001
  %v8098 = vadd.f32 %v8097, %v8002
  %v8099 = vadd.f32 %v8098, %v8003
  %v8100 = vadd.f32 %v8099, %v8004
  %v8101 = vadd.f32 %v8005, %v8006
  %v8102 = vadd.f32 %v8101, %v8007
  %v8103 = vadd.f32 %v8102, %v8008
  %v8104 = vadd.f32 %v8103, %v8009
  %v8105 = vadd.f32 %v8104, %v8010
  %v8106 = vadd.f32 %v8105, %v8011
  %v8107 = vadd.f32 %v8106, %v8012
  %v8108 = vadd.f32 %v8107, %v8013
  %v8109 = vadd.f32 %v8108, %v8014
  %v8110 = vadd.f32 %v8015, %v8016
  %v8111 = vadd.f32 %v8110, %v8017
  %v8112 = vadd.f32 %v8111, %v8018
  %v8113 = vadd.f32 %v8112, %v8019
  %v8114 = vadd.f32 %v8113, %v8020
  %v8115 = vadd.f32 %v8114, %v8021
  %v8116 = vadd.f32 %v8115, %v8022
  %v8117 = vadd.f32 %v8116, %v8023
  %v8118 = vadd.f32 %v8117, %v8024
  %v8119 = vadd.f32 %v8025, %v8026
  %v8120 = vadd.f32 %v8119, %v8027
  %v8121 = vadd.f32 %v8120, %v8028
  %v8122 = vadd.f32 %v8121, %v8029
  %v8123 = vadd.f32 %v8122, %v8030
  %v8124 = vadd.f32 %v8123, %v8031
  %v8125 = vadd.f32 %v8124, %v8032
  %v8126 = vadd.f32 %v8125, %v8033
  %v8127 = vadd.f32 %v8126, %v8034
  %v8128 = vadd.f32 %v8035, %v8036
  %v8129 = vadd.f32 %v8128, %v8037
  %v8130 = vadd.f32 %v8129, %v8038
  %v8131 = vadd.f32 %v8130, %v8039
  %v8132 = vadd.f32 %v8131, %v8040
  %v8133 = vadd.f32 %v8132, %v8041
  %v8134 = vadd.f32 %v8133, %v8042
  %v8135 = vadd.f32 %v8134, %v8043
  %v8136 = vadd.f32 %v8135, %v8044
  %v8137 = vadd.f32 %v8045, %v8046
  %v8138 = vadd.f32 %v8137, %v8047
  %v8139 = vadd.f32 %v8138, %v8048
  %v8140 = vadd.f32 %v8139, %v8049
  %v8141 = vadd.f32 %v8140, %v8050
  %v8142 = vadd.f32 %v8141, %v8051
  %v8143 = vadd.f32 %v8142, %v8052
  %v8144 = vadd.f32 %v8143, %v8053
  %v8145 = vadd.f32 %v8144, %v8054
  %v8146 = vadd.f32 %v8055, %v8056
  %v8147 = vadd.f32 %v8146, %v8057
  %v8148 = vadd.f32 %v8147, %v8058
  %v8149 = vadd.f32 %v8148, %v8059
  %v8150 = vadd.f32 %v8149, %v8060
  %v8151 = vadd.f32 %v8150, %v8061
  %v8152 = vadd.f32 %v8151, %v8062
  %v8153 = vadd.f32 %v8152, %v8063
  %v8154 = vadd.f32 %v8153, %v8064
  %v8155 = vrcp.pop %v7883
  %v8156 = vrcp.pop %v7892
  %v8157 = vrcp.pop %v7901
  %v8158 = vrcp.pop %v7910
  %v8159 = vrcp.pop %v7919
  %v8160 = vrcp.pop %v7928
  %v8161 = vrcp.pop %v7937
  %v8162 = vrcp.pop %v7946
  %v8163 = vrcp.pop %v7955
  %v8164 = vrcp.pop %v7964
  %v8165 = vmul.f32 %v8073, %v8155
  %v8166 = vmul.f32 %v8082, %v8156
  %v8167 = vmul.f32 %v8091, %v8157
  %v8168 = vmul.f32 %v8100, %v8158
  %v8169 = vmul.f32 %v8109, %v8159
  %v8170 = vmul.f32 %v8118, %v8160
  %v8171 = vmul.f32 %v8127, %v8161
  %v8172 = vmul.f32 %v8136, %v8162
  %v8173 = vmul.f32 %v8145, %v8163
  %v8174 = vmul.f32 %v8154, %v8164
  %s8175 = scalar_lea.vmem %s6, 256
  %v8176 = vld [vmem:[%s8175] sm:$0xff]
  %v8177 = vld [vmem:[%s8175 + $0x8] sm:$0xff]
  %v8178 = vld [vmem:[%s8175 + $0x10] sm:$0xff]
  %v8179 = vld [vmem:[%s8175 + $0x18] sm:$0xff]
  %v8180 = vld [vmem:[%s8175 + $0x20] sm:$0xff]
  %v8181 = vld [vmem:[%s8175 + $0x28] sm:$0xff]
  %v8182 = vld [vmem:[%s8175 + $0x30] sm:$0xff]
  %v8183 = vld [vmem:[%s8175 + $0x38] sm:$0xff]
  %v8184 = vld [vmem:[%s8175 + $0x40] sm:$0xff]
  %v8185 = vld [vmem:[%s8175 + $0x48] sm:$0xff]
  %v8186 = vld [vmem:[%s8175 + $0x50] sm:$0xff]
  %v8187 = vld [vmem:[%s8175 + $0x58] sm:$0xff]
  %v8188 = vld [vmem:[%s8175 + $0x60] sm:$0xff]
  %v8189 = vld [vmem:[%s8175 + $0x68] sm:$0xff]
  %v8190 = vld [vmem:[%s8175 + $0x70] sm:$0xff]
  %v8191 = vld [vmem:[%s8175 + $0x78] sm:$0xff]
  %s8192 = scalar_lea.vmem %s7, 2
  %v8193 = vld [vmem:[%s8192] sm:$0x1]
  %v8195 = vlaneseq
  %v8196 = vshrl.u32 %v8195, 7
  %v8197 = vsub.s32 0, %v8196
  %v8198 = vrot.slane %v8193, %v8197
  %8200 = vmatprep.subr.mxu0 0.0
  %8201 = vmatpush1.msra.mxu0 %v8191
  %8202 = vmatprep.subr.mxu0 0.0
  %8203 = vmatpush1.msra.mxu0 %v8190
  %8204 = vmatprep.subr.mxu0 0.0
  %8205 = vmatpush1.msra.mxu0 %v8189
  %8206 = vmatprep.subr.mxu0 0.0
  %8207 = vmatpush1.msra.mxu0 %v8188
  %8208 = vmatprep.subr.mxu0 0.0
  %8209 = vmatpush1.msra.mxu0 %v8187
  %8210 = vmatprep.subr.mxu0 0.0
  %8211 = vmatpush1.msra.mxu0 %v8186
  %8212 = vmatprep.subr.mxu0 0.0
  %8213 = vmatpush1.msra.mxu0 %v8185
  %8214 = vmatprep.subr.mxu0 0.0
  %8215 = vmatpush1.msra.mxu0 %v8184
  %8216 = vmatprep.subr.mxu0 0.0
  %8217 = vmatpush1.msra.mxu0 %v8183
  %8218 = vmatprep.subr.mxu0 0.0
  %8219 = vmatpush1.msra.mxu0 %v8182
  %8220 = vmatprep.subr.mxu0 0.0
  %8221 = vmatpush1.msra.mxu0 %v8181
  %8222 = vmatprep.subr.mxu0 0.0
  %8223 = vmatpush1.msra.mxu0 %v8180
  %8224 = vmatprep.subr.mxu0 0.0
  %8225 = vmatpush1.msra.mxu0 %v8179
  %8226 = vmatprep.subr.mxu0 0.0
  %8227 = vmatpush1.msra.mxu0 %v8178
  %8228 = vmatprep.subr.mxu0 0.0
  %8229 = vmatpush1.msra.mxu0 %v8177
  %8230 = vmatprep.subr.mxu0 0.0
  %8231 = vmatpush1.msra.mxu0 %v8176
  %8232 = vmatprep.subr.mxu0 0.0
  %8233 = vmatpush2.msra.mxu0 0.0
  %8234 = vmatprep.subr.mxu0 0.0
  %8235 = vmatpush2.msra.mxu0 0.0
  %8236 = vmatprep.subr.mxu0 0.0
  %8237 = vmatpush2.msra.mxu0 0.0
  %8238 = vmatprep.subr.mxu0 0.0
  %8239 = vmatpush2.msra.mxu0 0.0
  %8240 = vmatprep.subr.mxu0 0.0
  %8241 = vmatpush2.msra.mxu0 0.0
  %8242 = vmatprep.subr.mxu0 0.0
  %8243 = vmatpush2.msra.mxu0 0.0
  %8244 = vmatprep.subr.mxu0 0.0
  %8245 = vmatpush2.msra.mxu0 0.0
  %8246 = vmatprep.subr.mxu0 0.0
  %8247 = vmatpush2.msra.mxu0 0.0
  %8248 = vmatprep.subr.mxu0 0.0
  %8249 = vmatpush2.msra.mxu0 0.0
  %8250 = vmatprep.subr.mxu0 0.0
  %8251 = vmatpush2.msra.mxu0 0.0
  %8252 = vmatprep.subr.mxu0 0.0
  %8253 = vmatpush2.msra.mxu0 0.0
  %8254 = vmatprep.subr.mxu0 0.0
  %8255 = vmatpush2.msra.mxu0 0.0
  %8256 = vmatprep.subr.mxu0 0.0
  %8257 = vmatpush2.msra.mxu0 0.0
  %8258 = vmatprep.subr.mxu0 0.0
  %8259 = vmatpush2.msra.mxu0 0.0
  %8260 = vmatprep.subr.mxu0 0.0
  %8261 = vmatpush2.msra.mxu0 0.0
  %8262 = vmatprep.subr.mxu0 0.0
  %8263 = vmatpush2.msra.mxu0 0.0
  %8264 = vmatprep.mubr.f32.mxu0 0.0
  %8265 = vmatmul.mubr.f32.gmra.mxu0 %v8165
  %v8266 = vpop.f32.mrf.mxu0
  %v8267 = vadd.f32 %v8198, %v8266
  %v8268 = vpop.f32.mrf.mxu0
  %8269 = vmatprep.mubr.f32.mxu0 0.0
  %8270 = vmatmul.mubr.f32.gmra.mxu0 %v8166
  %v8271 = vpop.f32.mrf.mxu0
  %v8272 = vadd.f32 %v8198, %v8271
  %v8273 = vpop.f32.mrf.mxu0
  %8274 = vmatprep.mubr.f32.mxu0 0.0
  %8275 = vmatmul.mubr.f32.gmra.mxu0 %v8167
  %v8276 = vpop.f32.mrf.mxu0
  %v8277 = vadd.f32 %v8198, %v8276
  %v8278 = vpop.f32.mrf.mxu0
  %8279 = vmatprep.mubr.f32.mxu0 0.0
  %8280 = vmatmul.mubr.f32.gmra.mxu0 %v8168
  %v8281 = vpop.f32.mrf.mxu0
  %v8282 = vadd.f32 %v8198, %v8281
  %v8283 = vpop.f32.mrf.mxu0
  %8284 = vmatprep.mubr.f32.mxu0 0.0
  %8285 = vmatmul.mubr.f32.gmra.mxu0 %v8169
  %v8286 = vpop.f32.mrf.mxu0
  %v8287 = vadd.f32 %v8198, %v8286
  %v8288 = vpop.f32.mrf.mxu0
  %8289 = vmatprep.mubr.f32.mxu0 0.0
  %8290 = vmatmul.mubr.f32.gmra.mxu0 %v8170
  %v8291 = vpop.f32.mrf.mxu0
  %v8292 = vadd.f32 %v8198, %v8291
  %v8293 = vpop.f32.mrf.mxu0
  %8294 = vmatprep.mubr.f32.mxu0 0.0
  %8295 = vmatmul.mubr.f32.gmra.mxu0 %v8171
  %v8296 = vpop.f32.mrf.mxu0
  %v8297 = vadd.f32 %v8198, %v8296
  %v8298 = vpop.f32.mrf.mxu0
  %8299 = vmatprep.mubr.f32.mxu0 0.0
  %8300 = vmatmul.mubr.f32.gmra.mxu0 %v8172
  %v8301 = vpop.f32.mrf.mxu0
  %v8302 = vadd.f32 %v8198, %v8301
  %v8303 = vpop.f32.mrf.mxu0
  %8304 = vmatprep.mubr.f32.mxu0 0.0
  %8305 = vmatmul.mubr.f32.gmra.mxu0 %v8173
  %v8306 = vpop.f32.mrf.mxu0
  %v8307 = vadd.f32 %v8198, %v8306
  %v8308 = vpop.f32.mrf.mxu0
  %8309 = vmatprep.mubr.f32.mxu0 0.0
  %8310 = vmatmul.mubr.f32.gmra.mxu0 %v8174
  %v8311 = vpop.f32.mrf.mxu0
  %v8312 = vadd.f32 %v8198, %v8311
  %v8313 = vpop.f32.mrf.mxu0
  %8314 = vdwg.mxu0
  %v8315 = vadd.f32 %v6260, %v8267
  %v8316 = vadd.f32 %v6261, %v8272
  %v8317 = vadd.f32 %v6262, %v8277
  %v8318 = vadd.f32 %v6263, %v8282
  %v8319 = vadd.f32 %v6264, %v8287
  %v8320 = vadd.f32 %v6265, %v8292
  %v8321 = vadd.f32 %v6266, %v8297
  %v8322 = vadd.f32 %v6267, %v8302
  %v8323 = vadd.f32 %v6268, %v8307
  %v8324 = vadd.f32 %v6269, %v8312
  %v8325 = vsel %vm1855, %v8315, 0.0
  %8326 = vadd.xlane.f32.xlu0 %v8325
  %v8327 = vpop.xlane.xlu0 %8326
  %v8328 = vsel %vm1855, %v8316, 0.0
  %8329 = vadd.xlane.f32.xlu0 %v8328
  %v8330 = vpop.xlane.xlu0 %8329
  %v8331 = vsel %vm1855, %v8317, 0.0
  %8332 = vadd.xlane.f32.xlu0 %v8331
  %v8333 = vpop.xlane.xlu0 %8332
  %v8334 = vsel %vm1855, %v8318, 0.0
  %8335 = vadd.xlane.f32.xlu0 %v8334
  %v8336 = vpop.xlane.xlu0 %8335
  %v8337 = vsel %vm1855, %v8319, 0.0
  %8338 = vadd.xlane.f32.xlu0 %v8337
  %v8339 = vpop.xlane.xlu0 %8338
  %v8340 = vsel %vm1855, %v8320, 0.0
  %8341 = vadd.xlane.f32.xlu0 %v8340
  %v8342 = vpop.xlane.xlu0 %8341
  %v8343 = vsel %vm1855, %v8321, 0.0
  %8344 = vadd.xlane.f32.xlu0 %v8343
  %v8345 = vpop.xlane.xlu0 %8344
  %v8346 = vsel %vm1855, %v8322, 0.0
  %8347 = vadd.xlane.f32.xlu0 %v8346
  %v8348 = vpop.xlane.xlu0 %8347
  %v8349 = vsel %vm1855, %v8323, 0.0
  %8350 = vadd.xlane.f32.xlu0 %v8349
  %v8351 = vpop.xlane.xlu0 %8350
  %v8352 = vsel %vm1855, %v8324, 0.0
  %8353 = vadd.xlane.f32.xlu0 %v8352
  %v8354 = vpop.xlane.xlu0 %8353
  %v8355 = vmul.f32 %v8327, %v3914
  %v8356 = vmul.f32 %v8330, %v3914
  %v8357 = vmul.f32 %v8333, %v3914
  %v8358 = vmul.f32 %v8336, %v3914
  %v8359 = vmul.f32 %v8339, %v3914
  %v8360 = vmul.f32 %v8342, %v3914
  %v8361 = vmul.f32 %v8345, %v3914
  %v8362 = vmul.f32 %v8348, %v3914
  %v8363 = vmul.f32 %v8351, %v3914
  %v8364 = vmul.f32 %v8354, %v3914
  %v8365 = vsub.f32 %v8315, %v8355
  %v8366 = vsub.f32 %v8316, %v8356
  %v8367 = vsub.f32 %v8317, %v8357
  %v8368 = vsub.f32 %v8318, %v8358
  %v8369 = vsub.f32 %v8319, %v8359
  %v8370 = vsub.f32 %v8320, %v8360
  %v8371 = vsub.f32 %v8321, %v8361
  %v8372 = vsub.f32 %v8322, %v8362
  %v8373 = vsub.f32 %v8323, %v8363
  %v8374 = vsub.f32 %v8324, %v8364
  %v8375 = vmul.f32 %v8365, %v8365
  %v8376 = vmul.f32 %v8366, %v8366
  %v8377 = vmul.f32 %v8367, %v8367
  %v8378 = vmul.f32 %v8368, %v8368
  %v8379 = vmul.f32 %v8369, %v8369
  %v8380 = vmul.f32 %v8370, %v8370
  %v8381 = vmul.f32 %v8371, %v8371
  %v8382 = vmul.f32 %v8372, %v8372
  %v8383 = vmul.f32 %v8373, %v8373
  %v8384 = vmul.f32 %v8374, %v8374
  %v8385 = vsel %vm1855, %v8375, 0.0
  %8386 = vadd.xlane.f32.xlu0 %v8385
  %v8387 = vpop.xlane.xlu0 %8386
  %v8388 = vsel %vm1855, %v8376, 0.0
  %8389 = vadd.xlane.f32.xlu0 %v8388
  %v8390 = vpop.xlane.xlu0 %8389
  %v8391 = vsel %vm1855, %v8377, 0.0
  %8392 = vadd.xlane.f32.xlu0 %v8391
  %v8393 = vpop.xlane.xlu0 %8392
  %v8394 = vsel %vm1855, %v8378, 0.0
  %8395 = vadd.xlane.f32.xlu0 %v8394
  %v8396 = vpop.xlane.xlu0 %8395
  %v8397 = vsel %vm1855, %v8379, 0.0
  %8398 = vadd.xlane.f32.xlu0 %v8397
  %v8399 = vpop.xlane.xlu0 %8398
  %v8400 = vsel %vm1855, %v8380, 0.0
  %8401 = vadd.xlane.f32.xlu0 %v8400
  %v8402 = vpop.xlane.xlu0 %8401
  %v8403 = vsel %vm1855, %v8381, 0.0
  %8404 = vadd.xlane.f32.xlu0 %v8403
  %v8405 = vpop.xlane.xlu0 %8404
  %v8406 = vsel %vm1855, %v8382, 0.0
  %8407 = vadd.xlane.f32.xlu0 %v8406
  %v8408 = vpop.xlane.xlu0 %8407
  %v8409 = vsel %vm1855, %v8383, 0.0
  %8410 = vadd.xlane.f32.xlu0 %v8409
  %v8411 = vpop.xlane.xlu0 %8410
  %v8412 = vsel %vm1855, %v8384, 0.0
  %8413 = vadd.xlane.f32.xlu0 %v8412
  %v8414 = vpop.xlane.xlu0 %8413
  %v8415 = vmul.f32 %v8387, %v3914
  %v8416 = vmul.f32 %v8390, %v3914
  %v8417 = vmul.f32 %v8393, %v3914
  %v8418 = vmul.f32 %v8396, %v3914
  %v8419 = vmul.f32 %v8399, %v3914
  %v8420 = vmul.f32 %v8402, %v3914
  %v8421 = vmul.f32 %v8405, %v3914
  %v8422 = vmul.f32 %v8408, %v3914
  %v8423 = vmul.f32 %v8411, %v3914
  %v8424 = vmul.f32 %v8414, %v3914
  %v8425 = vadd.f32 %v8415, 1e-05
  %v8426 = vadd.f32 %v8416, 1e-05
  %v8427 = vadd.f32 %v8417, 1e-05
  %v8428 = vadd.f32 %v8418, 1e-05
  %v8429 = vadd.f32 %v8419, 1e-05
  %v8430 = vadd.f32 %v8420, 1e-05
  %v8431 = vadd.f32 %v8421, 1e-05
  %v8432 = vadd.f32 %v8422, 1e-05
  %v8433 = vadd.f32 %v8423, 1e-05
  %v8434 = vadd.f32 %v8424, 1e-05
  %v8435 = vrsqrt.pop %v8425
  %v8436 = vrsqrt.pop %v8426
  %v8437 = vrsqrt.pop %v8427
  %v8438 = vrsqrt.pop %v8428
  %v8439 = vrsqrt.pop %v8429
  %v8440 = vrsqrt.pop %v8430
  %v8441 = vrsqrt.pop %v8431
  %v8442 = vrsqrt.pop %v8432
  %v8443 = vrsqrt.pop %v8433
  %v8444 = vrsqrt.pop %v8434
  %v8445 = vmul.f32 %v8365, %v8435
  %v8446 = vmul.f32 %v8366, %v8436
  %v8447 = vmul.f32 %v8367, %v8437
  %v8448 = vmul.f32 %v8368, %v8438
  %v8449 = vmul.f32 %v8369, %v8439
  %v8450 = vmul.f32 %v8370, %v8440
  %v8451 = vmul.f32 %v8371, %v8441
  %v8452 = vmul.f32 %v8372, %v8442
  %v8453 = vmul.f32 %v8373, %v8443
  %v8454 = vmul.f32 %v8374, %v8444
  %s8455 = scalar_lea.vmem %s8, 2
  %v8456 = vld [vmem:[%s8455] sm:$0x1]
  %v8458 = vlaneseq
  %v8459 = vshrl.u32 %v8458, 7
  %v8460 = vsub.s32 0, %v8459
  %v8461 = vrot.slane %v8456, %v8460
  %v8463 = vmul.f32 %v8445, %v8461
  %v8464 = vmul.f32 %v8446, %v8461
  %v8465 = vmul.f32 %v8447, %v8461
  %v8466 = vmul.f32 %v8448, %v8461
  %v8467 = vmul.f32 %v8449, %v8461
  %v8468 = vmul.f32 %v8450, %v8461
  %v8469 = vmul.f32 %v8451, %v8461
  %v8470 = vmul.f32 %v8452, %v8461
  %v8471 = vmul.f32 %v8453, %v8461
  %v8472 = vmul.f32 %v8454, %v8461
  %s8473 = scalar_lea.vmem %s9, 2
  %v8474 = vld [vmem:[%s8473] sm:$0x1]
  %v8476 = vlaneseq
  %v8477 = vshrl.u32 %v8476, 7
  %v8478 = vsub.s32 0, %v8477
  %v8479 = vrot.slane %v8474, %v8478
  %v8481 = vadd.f32 %v8463, %v8479
  %v8482 = vadd.f32 %v8464, %v8479
  %v8483 = vadd.f32 %v8465, %v8479
  %v8484 = vadd.f32 %v8466, %v8479
  %v8485 = vadd.f32 %v8467, %v8479
  %v8486 = vadd.f32 %v8468, %v8479
  %v8487 = vadd.f32 %v8469, %v8479
  %v8488 = vadd.f32 %v8470, %v8479
  %v8489 = vadd.f32 %v8471, %v8479
  %v8490 = vadd.f32 %v8472, %v8479
  %v8491 = vld [vmem:[%s10] sm:$0xff]
  %v8492 = vld [vmem:[%s10 + $0x8] sm:$0xff]
  %s8493 = scalar_lea.vmem %s10, 16
  %v8494 = vld [vmem:[%s8493] sm:$0xff]
  %v8495 = vld [vmem:[%s8493 + $0x8] sm:$0xff]
  %v8497 = vsel %vm1855, %v8482, 0
  %8499 = vmatprep.subr.mxu0 0.0
  %8500 = vmatpush1.msra.mxu0 0.0
  %8501 = vmatprep.subr.mxu0 0.0
  %8502 = vmatpush1.msra.mxu0 0.0
  %8503 = vmatprep.subr.mxu0 0.0
  %8504 = vmatpush1.msra.mxu0 0.0
  %8505 = vmatprep.subr.mxu0 0.0
  %8506 = vmatpush1.msra.mxu0 0.0
  %8507 = vmatprep.subr.mxu0 0.0
  %8508 = vmatpush1.msra.mxu0 0.0
  %8509 = vmatprep.subr.mxu0 0.0
  %8510 = vmatpush1.msra.mxu0 0.0
  %8511 = vmatprep.subr.mxu0 0.0
  %8512 = vmatpush1.msra.mxu0 0.0
  %8513 = vmatprep.subr.mxu0 0.0
  %8514 = vmatpush1.msra.mxu0 0.0
  %8515 = vmatprep.subr.mxu0 0.0
  %8516 = vmatpush1.msra.mxu0 0.0
  %8517 = vmatprep.subr.mxu0 0.0
  %8518 = vmatpush1.msra.mxu0 0.0
  %8519 = vmatprep.subr.mxu0 0.0
  %8520 = vmatpush1.msra.mxu0 0.0
  %8521 = vmatprep.subr.mxu0 0.0
  %8522 = vmatpush1.msra.mxu0 0.0
  %8523 = vmatprep.subr.mxu0 0.0
  %8524 = vmatpush1.msra.mxu0 0.0
  %8525 = vmatprep.subr.mxu0 0.0
  %8526 = vmatpush1.msra.mxu0 0.0
  %8527 = vmatprep.subr.mxu0 0.0
  %8528 = vmatpush1.msra.mxu0 %v8495
  %8529 = vmatprep.subr.mxu0 0.0
  %8530 = vmatpush1.msra.mxu0 %v8494
  %8531 = vmatprep.subr.mxu0 0.0
  %8532 = vmatpush2.msra.mxu0 0.0
  %8533 = vmatprep.subr.mxu0 0.0
  %8534 = vmatpush2.msra.mxu0 0.0
  %8535 = vmatprep.subr.mxu0 0.0
  %8536 = vmatpush2.msra.mxu0 0.0
  %8537 = vmatprep.subr.mxu0 0.0
  %8538 = vmatpush2.msra.mxu0 0.0
  %8539 = vmatprep.subr.mxu0 0.0
  %8540 = vmatpush2.msra.mxu0 0.0
  %8541 = vmatprep.subr.mxu0 0.0
  %8542 = vmatpush2.msra.mxu0 0.0
  %8543 = vmatprep.subr.mxu0 0.0
  %8544 = vmatpush2.msra.mxu0 0.0
  %8545 = vmatprep.subr.mxu0 0.0
  %8546 = vmatpush2.msra.mxu0 0.0
  %8547 = vmatprep.subr.mxu0 0.0
  %8548 = vmatpush2.msra.mxu0 0.0
  %8549 = vmatprep.subr.mxu0 0.0
  %8550 = vmatpush2.msra.mxu0 0.0
  %8551 = vmatprep.subr.mxu0 0.0
  %8552 = vmatpush2.msra.mxu0 0.0
  %8553 = vmatprep.subr.mxu0 0.0
  %8554 = vmatpush2.msra.mxu0 0.0
  %8555 = vmatprep.subr.mxu0 0.0
  %8556 = vmatpush2.msra.mxu0 0.0
  %8557 = vmatprep.subr.mxu0 0.0
  %8558 = vmatpush2.msra.mxu0 0.0
  %8559 = vmatprep.subr.mxu0 0.0
  %8560 = vmatpush2.msra.mxu0 0.0
  %8561 = vmatprep.subr.mxu0 0.0
  %8562 = vmatpush2.msra.mxu0 0.0
  %8563 = vmatprep.mubr.f32.mxu0 0.0
  %8564 = vmatmul.mubr.f32.gmra.mxu0 %v8497
  %v8565 = vpop.f32.mrf.mxu0
  %v8566 = vadd.f32 0.0, %v8565
  %v8567 = vpop.f32.mrf.mxu0
  %8568 = vdwg.mxu0
  %v8570 = vsel %vm1855, %v8481, 0
  %8572 = vmatprep.subr.mxu0 0.0
  %8573 = vmatpush1.msra.mxu0 0.0
  %8574 = vmatprep.subr.mxu0 0.0
  %8575 = vmatpush1.msra.mxu0 0.0
  %8576 = vmatprep.subr.mxu0 0.0
  %8577 = vmatpush1.msra.mxu0 0.0
  %8578 = vmatprep.subr.mxu0 0.0
  %8579 = vmatpush1.msra.mxu0 0.0
  %8580 = vmatprep.subr.mxu0 0.0
  %8581 = vmatpush1.msra.mxu0 0.0
  %8582 = vmatprep.subr.mxu0 0.0
  %8583 = vmatpush1.msra.mxu0 0.0
  %8584 = vmatprep.subr.mxu0 0.0
  %8585 = vmatpush1.msra.mxu0 0.0
  %8586 = vmatprep.subr.mxu0 0.0
  %8587 = vmatpush1.msra.mxu0 0.0
  %8588 = vmatprep.subr.mxu0 0.0
  %8589 = vmatpush1.msra.mxu0 0.0
  %8590 = vmatprep.subr.mxu0 0.0
  %8591 = vmatpush1.msra.mxu0 0.0
  %8592 = vmatprep.subr.mxu0 0.0
  %8593 = vmatpush1.msra.mxu0 0.0
  %8594 = vmatprep.subr.mxu0 0.0
  %8595 = vmatpush1.msra.mxu0 0.0
  %8596 = vmatprep.subr.mxu0 0.0
  %8597 = vmatpush1.msra.mxu0 0.0
  %8598 = vmatprep.subr.mxu0 0.0
  %8599 = vmatpush1.msra.mxu0 0.0
  %8600 = vmatprep.subr.mxu0 0.0
  %8601 = vmatpush1.msra.mxu0 %v8492
  %8602 = vmatprep.subr.mxu0 0.0
  %8603 = vmatpush1.msra.mxu0 %v8491
  %8604 = vmatprep.subr.mxu0 0.0
  %8605 = vmatpush2.msra.mxu0 0.0
  %8606 = vmatprep.subr.mxu0 0.0
  %8607 = vmatpush2.msra.mxu0 0.0
  %8608 = vmatprep.subr.mxu0 0.0
  %8609 = vmatpush2.msra.mxu0 0.0
  %8610 = vmatprep.subr.mxu0 0.0
  %8611 = vmatpush2.msra.mxu0 0.0
  %8612 = vmatprep.subr.mxu0 0.0
  %8613 = vmatpush2.msra.mxu0 0.0
  %8614 = vmatprep.subr.mxu0 0.0
  %8615 = vmatpush2.msra.mxu0 0.0
  %8616 = vmatprep.subr.mxu0 0.0
  %8617 = vmatpush2.msra.mxu0 0.0
  %8618 = vmatprep.subr.mxu0 0.0
  %8619 = vmatpush2.msra.mxu0 0.0
  %8620 = vmatprep.subr.mxu0 0.0
  %8621 = vmatpush2.msra.mxu0 0.0
  %8622 = vmatprep.subr.mxu0 0.0
  %8623 = vmatpush2.msra.mxu0 0.0
  %8624 = vmatprep.subr.mxu0 0.0
  %8625 = vmatpush2.msra.mxu0 0.0
  %8626 = vmatprep.subr.mxu0 0.0
  %8627 = vmatpush2.msra.mxu0 0.0
  %8628 = vmatprep.subr.mxu0 0.0
  %8629 = vmatpush2.msra.mxu0 0.0
  %8630 = vmatprep.subr.mxu0 0.0
  %8631 = vmatpush2.msra.mxu0 0.0
  %8632 = vmatprep.subr.mxu0 0.0
  %8633 = vmatpush2.msra.mxu0 0.0
  %8634 = vmatprep.subr.mxu0 0.0
  %8635 = vmatpush2.msra.mxu0 0.0
  %8636 = vmatprep.mubr.f32.mxu0 0.0
  %8637 = vmatmul.mubr.f32.gmra.mxu0 %v8570
  %v8638 = vpop.f32.mrf.mxu0
  %v8639 = vadd.f32 %v8566, %v8638
  %v8640 = vpop.f32.mrf.mxu0
  %8641 = vdwg.mxu0
  %s8642 = scalar_lea.vmem %s10, 32
  %v8643 = vld [vmem:[%s8642] sm:$0xff]
  %v8644 = vld [vmem:[%s8642 + $0x8] sm:$0xff]
  %v8646 = vsel %vm1855, %v8483, 0
  %8648 = vmatprep.subr.mxu0 0.0
  %8649 = vmatpush1.msra.mxu0 0.0
  %8650 = vmatprep.subr.mxu0 0.0
  %8651 = vmatpush1.msra.mxu0 0.0
  %8652 = vmatprep.subr.mxu0 0.0
  %8653 = vmatpush1.msra.mxu0 0.0
  %8654 = vmatprep.subr.mxu0 0.0
  %8655 = vmatpush1.msra.mxu0 0.0
  %8656 = vmatprep.subr.mxu0 0.0
  %8657 = vmatpush1.msra.mxu0 0.0
  %8658 = vmatprep.subr.mxu0 0.0
  %8659 = vmatpush1.msra.mxu0 0.0
  %8660 = vmatprep.subr.mxu0 0.0
  %8661 = vmatpush1.msra.mxu0 0.0
  %8662 = vmatprep.subr.mxu0 0.0
  %8663 = vmatpush1.msra.mxu0 0.0
  %8664 = vmatprep.subr.mxu0 0.0
  %8665 = vmatpush1.msra.mxu0 0.0
  %8666 = vmatprep.subr.mxu0 0.0
  %8667 = vmatpush1.msra.mxu0 0.0
  %8668 = vmatprep.subr.mxu0 0.0
  %8669 = vmatpush1.msra.mxu0 0.0
  %8670 = vmatprep.subr.mxu0 0.0
  %8671 = vmatpush1.msra.mxu0 0.0
  %8672 = vmatprep.subr.mxu0 0.0
  %8673 = vmatpush1.msra.mxu0 0.0
  %8674 = vmatprep.subr.mxu0 0.0
  %8675 = vmatpush1.msra.mxu0 0.0
  %8676 = vmatprep.subr.mxu0 0.0
  %8677 = vmatpush1.msra.mxu0 %v8644
  %8678 = vmatprep.subr.mxu0 0.0
  %8679 = vmatpush1.msra.mxu0 %v8643
  %8680 = vmatprep.subr.mxu0 0.0
  %8681 = vmatpush2.msra.mxu0 0.0
  %8682 = vmatprep.subr.mxu0 0.0
  %8683 = vmatpush2.msra.mxu0 0.0
  %8684 = vmatprep.subr.mxu0 0.0
  %8685 = vmatpush2.msra.mxu0 0.0
  %8686 = vmatprep.subr.mxu0 0.0
  %8687 = vmatpush2.msra.mxu0 0.0
  %8688 = vmatprep.subr.mxu0 0.0
  %8689 = vmatpush2.msra.mxu0 0.0
  %8690 = vmatprep.subr.mxu0 0.0
  %8691 = vmatpush2.msra.mxu0 0.0
  %8692 = vmatprep.subr.mxu0 0.0
  %8693 = vmatpush2.msra.mxu0 0.0
  %8694 = vmatprep.subr.mxu0 0.0
  %8695 = vmatpush2.msra.mxu0 0.0
  %8696 = vmatprep.subr.mxu0 0.0
  %8697 = vmatpush2.msra.mxu0 0.0
  %8698 = vmatprep.subr.mxu0 0.0
  %8699 = vmatpush2.msra.mxu0 0.0
  %8700 = vmatprep.subr.mxu0 0.0
  %8701 = vmatpush2.msra.mxu0 0.0
  %8702 = vmatprep.subr.mxu0 0.0
  %8703 = vmatpush2.msra.mxu0 0.0
  %8704 = vmatprep.subr.mxu0 0.0
  %8705 = vmatpush2.msra.mxu0 0.0
  %8706 = vmatprep.subr.mxu0 0.0
  %8707 = vmatpush2.msra.mxu0 0.0
  %8708 = vmatprep.subr.mxu0 0.0
  %8709 = vmatpush2.msra.mxu0 0.0
  %8710 = vmatprep.subr.mxu0 0.0
  %8711 = vmatpush2.msra.mxu0 0.0
  %8712 = vmatprep.mubr.f32.mxu0 0.0
  %8713 = vmatmul.mubr.f32.gmra.mxu0 %v8646
  %v8714 = vpop.f32.mrf.mxu0
  %v8715 = vadd.f32 0.0, %v8714
  %v8716 = vpop.f32.mrf.mxu0
  %8717 = vdwg.mxu0
  %v8718 = vadd.f32 %v8639, %v8715
  %s8719 = scalar_lea.vmem %s10, 48
  %v8720 = vld [vmem:[%s8719] sm:$0xff]
  %v8721 = vld [vmem:[%s8719 + $0x8] sm:$0xff]
  %v8723 = vsel %vm1855, %v8484, 0
  %8725 = vmatprep.subr.mxu0 0.0
  %8726 = vmatpush1.msra.mxu0 0.0
  %8727 = vmatprep.subr.mxu0 0.0
  %8728 = vmatpush1.msra.mxu0 0.0
  %8729 = vmatprep.subr.mxu0 0.0
  %8730 = vmatpush1.msra.mxu0 0.0
  %8731 = vmatprep.subr.mxu0 0.0
  %8732 = vmatpush1.msra.mxu0 0.0
  %8733 = vmatprep.subr.mxu0 0.0
  %8734 = vmatpush1.msra.mxu0 0.0
  %8735 = vmatprep.subr.mxu0 0.0
  %8736 = vmatpush1.msra.mxu0 0.0
  %8737 = vmatprep.subr.mxu0 0.0
  %8738 = vmatpush1.msra.mxu0 0.0
  %8739 = vmatprep.subr.mxu0 0.0
  %8740 = vmatpush1.msra.mxu0 0.0
  %8741 = vmatprep.subr.mxu0 0.0
  %8742 = vmatpush1.msra.mxu0 0.0
  %8743 = vmatprep.subr.mxu0 0.0
  %8744 = vmatpush1.msra.mxu0 0.0
  %8745 = vmatprep.subr.mxu0 0.0
  %8746 = vmatpush1.msra.mxu0 0.0
  %8747 = vmatprep.subr.mxu0 0.0
  %8748 = vmatpush1.msra.mxu0 0.0
  %8749 = vmatprep.subr.mxu0 0.0
  %8750 = vmatpush1.msra.mxu0 0.0
  %8751 = vmatprep.subr.mxu0 0.0
  %8752 = vmatpush1.msra.mxu0 0.0
  %8753 = vmatprep.subr.mxu0 0.0
  %8754 = vmatpush1.msra.mxu0 %v8721
  %8755 = vmatprep.subr.mxu0 0.0
  %8756 = vmatpush1.msra.mxu0 %v8720
  %8757 = vmatprep.subr.mxu0 0.0
  %8758 = vmatpush2.msra.mxu0 0.0
  %8759 = vmatprep.subr.mxu0 0.0
  %8760 = vmatpush2.msra.mxu0 0.0
  %8761 = vmatprep.subr.mxu0 0.0
  %8762 = vmatpush2.msra.mxu0 0.0
  %8763 = vmatprep.subr.mxu0 0.0
  %8764 = vmatpush2.msra.mxu0 0.0
  %8765 = vmatprep.subr.mxu0 0.0
  %8766 = vmatpush2.msra.mxu0 0.0
  %8767 = vmatprep.subr.mxu0 0.0
  %8768 = vmatpush2.msra.mxu0 0.0
  %8769 = vmatprep.subr.mxu0 0.0
  %8770 = vmatpush2.msra.mxu0 0.0
  %8771 = vmatprep.subr.mxu0 0.0
  %8772 = vmatpush2.msra.mxu0 0.0
  %8773 = vmatprep.subr.mxu0 0.0
  %8774 = vmatpush2.msra.mxu0 0.0
  %8775 = vmatprep.subr.mxu0 0.0
  %8776 = vmatpush2.msra.mxu0 0.0
  %8777 = vmatprep.subr.mxu0 0.0
  %8778 = vmatpush2.msra.mxu0 0.0
  %8779 = vmatprep.subr.mxu0 0.0
  %8780 = vmatpush2.msra.mxu0 0.0
  %8781 = vmatprep.subr.mxu0 0.0
  %8782 = vmatpush2.msra.mxu0 0.0
  %8783 = vmatprep.subr.mxu0 0.0
  %8784 = vmatpush2.msra.mxu0 0.0
  %8785 = vmatprep.subr.mxu0 0.0
  %8786 = vmatpush2.msra.mxu0 0.0
  %8787 = vmatprep.subr.mxu0 0.0
  %8788 = vmatpush2.msra.mxu0 0.0
  %8789 = vmatprep.mubr.f32.mxu0 0.0
  %8790 = vmatmul.mubr.f32.gmra.mxu0 %v8723
  %v8791 = vpop.f32.mrf.mxu0
  %v8792 = vadd.f32 0.0, %v8791
  %v8793 = vpop.f32.mrf.mxu0
  %8794 = vdwg.mxu0
  %v8795 = vadd.f32 %v8718, %v8792
  %s8796 = scalar_lea.vmem %s10, 64
  %v8797 = vld [vmem:[%s8796] sm:$0xff]
  %v8798 = vld [vmem:[%s8796 + $0x8] sm:$0xff]
  %v8800 = vsel %vm1855, %v8485, 0
  %8802 = vmatprep.subr.mxu0 0.0
  %8803 = vmatpush1.msra.mxu0 0.0
  %8804 = vmatprep.subr.mxu0 0.0
  %8805 = vmatpush1.msra.mxu0 0.0
  %8806 = vmatprep.subr.mxu0 0.0
  %8807 = vmatpush1.msra.mxu0 0.0
  %8808 = vmatprep.subr.mxu0 0.0
  %8809 = vmatpush1.msra.mxu0 0.0
  %8810 = vmatprep.subr.mxu0 0.0
  %8811 = vmatpush1.msra.mxu0 0.0
  %8812 = vmatprep.subr.mxu0 0.0
  %8813 = vmatpush1.msra.mxu0 0.0
  %8814 = vmatprep.subr.mxu0 0.0
  %8815 = vmatpush1.msra.mxu0 0.0
  %8816 = vmatprep.subr.mxu0 0.0
  %8817 = vmatpush1.msra.mxu0 0.0
  %8818 = vmatprep.subr.mxu0 0.0
  %8819 = vmatpush1.msra.mxu0 0.0
  %8820 = vmatprep.subr.mxu0 0.0
  %8821 = vmatpush1.msra.mxu0 0.0
  %8822 = vmatprep.subr.mxu0 0.0
  %8823 = vmatpush1.msra.mxu0 0.0
  %8824 = vmatprep.subr.mxu0 0.0
  %8825 = vmatpush1.msra.mxu0 0.0
  %8826 = vmatprep.subr.mxu0 0.0
  %8827 = vmatpush1.msra.mxu0 0.0
  %8828 = vmatprep.subr.mxu0 0.0
  %8829 = vmatpush1.msra.mxu0 0.0
  %8830 = vmatprep.subr.mxu0 0.0
  %8831 = vmatpush1.msra.mxu0 %v8798
  %8832 = vmatprep.subr.mxu0 0.0
  %8833 = vmatpush1.msra.mxu0 %v8797
  %8834 = vmatprep.subr.mxu0 0.0
  %8835 = vmatpush2.msra.mxu0 0.0
  %8836 = vmatprep.subr.mxu0 0.0
  %8837 = vmatpush2.msra.mxu0 0.0
  %8838 = vmatprep.subr.mxu0 0.0
  %8839 = vmatpush2.msra.mxu0 0.0
  %8840 = vmatprep.subr.mxu0 0.0
  %8841 = vmatpush2.msra.mxu0 0.0
  %8842 = vmatprep.subr.mxu0 0.0
  %8843 = vmatpush2.msra.mxu0 0.0
  %8844 = vmatprep.subr.mxu0 0.0
  %8845 = vmatpush2.msra.mxu0 0.0
  %8846 = vmatprep.subr.mxu0 0.0
  %8847 = vmatpush2.msra.mxu0 0.0
  %8848 = vmatprep.subr.mxu0 0.0
  %8849 = vmatpush2.msra.mxu0 0.0
  %8850 = vmatprep.subr.mxu0 0.0
  %8851 = vmatpush2.msra.mxu0 0.0
  %8852 = vmatprep.subr.mxu0 0.0
  %8853 = vmatpush2.msra.mxu0 0.0
  %8854 = vmatprep.subr.mxu0 0.0
  %8855 = vmatpush2.msra.mxu0 0.0
  %8856 = vmatprep.subr.mxu0 0.0
  %8857 = vmatpush2.msra.mxu0 0.0
  %8858 = vmatprep.subr.mxu0 0.0
  %8859 = vmatpush2.msra.mxu0 0.0
  %8860 = vmatprep.subr.mxu0 0.0
  %8861 = vmatpush2.msra.mxu0 0.0
  %8862 = vmatprep.subr.mxu0 0.0
  %8863 = vmatpush2.msra.mxu0 0.0
  %8864 = vmatprep.subr.mxu0 0.0
  %8865 = vmatpush2.msra.mxu0 0.0
  %8866 = vmatprep.mubr.f32.mxu0 0.0
  %8867 = vmatmul.mubr.f32.gmra.mxu0 %v8800
  %v8868 = vpop.f32.mrf.mxu0
  %v8869 = vadd.f32 0.0, %v8868
  %v8870 = vpop.f32.mrf.mxu0
  %8871 = vdwg.mxu0
  %v8872 = vadd.f32 %v8795, %v8869
  %s8873 = scalar_lea.vmem %s10, 80
  %v8874 = vld [vmem:[%s8873] sm:$0xff]
  %v8875 = vld [vmem:[%s8873 + $0x8] sm:$0xff]
  %v8877 = vsel %vm1855, %v8486, 0
  %8879 = vmatprep.subr.mxu0 0.0
  %8880 = vmatpush1.msra.mxu0 0.0
  %8881 = vmatprep.subr.mxu0 0.0
  %8882 = vmatpush1.msra.mxu0 0.0
  %8883 = vmatprep.subr.mxu0 0.0
  %8884 = vmatpush1.msra.mxu0 0.0
  %8885 = vmatprep.subr.mxu0 0.0
  %8886 = vmatpush1.msra.mxu0 0.0
  %8887 = vmatprep.subr.mxu0 0.0
  %8888 = vmatpush1.msra.mxu0 0.0
  %8889 = vmatprep.subr.mxu0 0.0
  %8890 = vmatpush1.msra.mxu0 0.0
  %8891 = vmatprep.subr.mxu0 0.0
  %8892 = vmatpush1.msra.mxu0 0.0
  %8893 = vmatprep.subr.mxu0 0.0
  %8894 = vmatpush1.msra.mxu0 0.0
  %8895 = vmatprep.subr.mxu0 0.0
  %8896 = vmatpush1.msra.mxu0 0.0
  %8897 = vmatprep.subr.mxu0 0.0
  %8898 = vmatpush1.msra.mxu0 0.0
  %8899 = vmatprep.subr.mxu0 0.0
  %8900 = vmatpush1.msra.mxu0 0.0
  %8901 = vmatprep.subr.mxu0 0.0
  %8902 = vmatpush1.msra.mxu0 0.0
  %8903 = vmatprep.subr.mxu0 0.0
  %8904 = vmatpush1.msra.mxu0 0.0
  %8905 = vmatprep.subr.mxu0 0.0
  %8906 = vmatpush1.msra.mxu0 0.0
  %8907 = vmatprep.subr.mxu0 0.0
  %8908 = vmatpush1.msra.mxu0 %v8875
  %8909 = vmatprep.subr.mxu0 0.0
  %8910 = vmatpush1.msra.mxu0 %v8874
  %8911 = vmatprep.subr.mxu0 0.0
  %8912 = vmatpush2.msra.mxu0 0.0
  %8913 = vmatprep.subr.mxu0 0.0
  %8914 = vmatpush2.msra.mxu0 0.0
  %8915 = vmatprep.subr.mxu0 0.0
  %8916 = vmatpush2.msra.mxu0 0.0
  %8917 = vmatprep.subr.mxu0 0.0
  %8918 = vmatpush2.msra.mxu0 0.0
  %8919 = vmatprep.subr.mxu0 0.0
  %8920 = vmatpush2.msra.mxu0 0.0
  %8921 = vmatprep.subr.mxu0 0.0
  %8922 = vmatpush2.msra.mxu0 0.0
  %8923 = vmatprep.subr.mxu0 0.0
  %8924 = vmatpush2.msra.mxu0 0.0
  %8925 = vmatprep.subr.mxu0 0.0
  %8926 = vmatpush2.msra.mxu0 0.0
  %8927 = vmatprep.subr.mxu0 0.0
  %8928 = vmatpush2.msra.mxu0 0.0
  %8929 = vmatprep.subr.mxu0 0.0
  %8930 = vmatpush2.msra.mxu0 0.0
  %8931 = vmatprep.subr.mxu0 0.0
  %8932 = vmatpush2.msra.mxu0 0.0
  %8933 = vmatprep.subr.mxu0 0.0
  %8934 = vmatpush2.msra.mxu0 0.0
  %8935 = vmatprep.subr.mxu0 0.0
  %8936 = vmatpush2.msra.mxu0 0.0
  %8937 = vmatprep.subr.mxu0 0.0
  %8938 = vmatpush2.msra.mxu0 0.0
  %8939 = vmatprep.subr.mxu0 0.0
  %8940 = vmatpush2.msra.mxu0 0.0
  %8941 = vmatprep.subr.mxu0 0.0
  %8942 = vmatpush2.msra.mxu0 0.0
  %8943 = vmatprep.mubr.f32.mxu0 0.0
  %8944 = vmatmul.mubr.f32.gmra.mxu0 %v8877
  %v8945 = vpop.f32.mrf.mxu0
  %v8946 = vadd.f32 0.0, %v8945
  %v8947 = vpop.f32.mrf.mxu0
  %8948 = vdwg.mxu0
  %v8949 = vadd.f32 %v8872, %v8946
  %s8950 = scalar_lea.vmem %s10, 96
  %v8951 = vld [vmem:[%s8950] sm:$0xff]
  %v8952 = vld [vmem:[%s8950 + $0x8] sm:$0xff]
  %v8954 = vsel %vm1855, %v8487, 0
  %8956 = vmatprep.subr.mxu0 0.0
  %8957 = vmatpush1.msra.mxu0 0.0
  %8958 = vmatprep.subr.mxu0 0.0
  %8959 = vmatpush1.msra.mxu0 0.0
  %8960 = vmatprep.subr.mxu0 0.0
  %8961 = vmatpush1.msra.mxu0 0.0
  %8962 = vmatprep.subr.mxu0 0.0
  %8963 = vmatpush1.msra.mxu0 0.0
  %8964 = vmatprep.subr.mxu0 0.0
  %8965 = vmatpush1.msra.mxu0 0.0
  %8966 = vmatprep.subr.mxu0 0.0
  %8967 = vmatpush1.msra.mxu0 0.0
  %8968 = vmatprep.subr.mxu0 0.0
  %8969 = vmatpush1.msra.mxu0 0.0
  %8970 = vmatprep.subr.mxu0 0.0
  %8971 = vmatpush1.msra.mxu0 0.0
  %8972 = vmatprep.subr.mxu0 0.0
  %8973 = vmatpush1.msra.mxu0 0.0
  %8974 = vmatprep.subr.mxu0 0.0
  %8975 = vmatpush1.msra.mxu0 0.0
  %8976 = vmatprep.subr.mxu0 0.0
  %8977 = vmatpush1.msra.mxu0 0.0
  %8978 = vmatprep.subr.mxu0 0.0
  %8979 = vmatpush1.msra.mxu0 0.0
  %8980 = vmatprep.subr.mxu0 0.0
  %8981 = vmatpush1.msra.mxu0 0.0
  %8982 = vmatprep.subr.mxu0 0.0
  %8983 = vmatpush1.msra.mxu0 0.0
  %8984 = vmatprep.subr.mxu0 0.0
  %8985 = vmatpush1.msra.mxu0 %v8952
  %8986 = vmatprep.subr.mxu0 0.0
  %8987 = vmatpush1.msra.mxu0 %v8951
  %8988 = vmatprep.subr.mxu0 0.0
  %8989 = vmatpush2.msra.mxu0 0.0
  %8990 = vmatprep.subr.mxu0 0.0
  %8991 = vmatpush2.msra.mxu0 0.0
  %8992 = vmatprep.subr.mxu0 0.0
  %8993 = vmatpush2.msra.mxu0 0.0
  %8994 = vmatprep.subr.mxu0 0.0
  %8995 = vmatpush2.msra.mxu0 0.0
  %8996 = vmatprep.subr.mxu0 0.0
  %8997 = vmatpush2.msra.mxu0 0.0
  %8998 = vmatprep.subr.mxu0 0.0
  %8999 = vmatpush2.msra.mxu0 0.0
  %9000 = vmatprep.subr.mxu0 0.0
  %9001 = vmatpush2.msra.mxu0 0.0
  %9002 = vmatprep.subr.mxu0 0.0
  %9003 = vmatpush2.msra.mxu0 0.0
  %9004 = vmatprep.subr.mxu0 0.0
  %9005 = vmatpush2.msra.mxu0 0.0
  %9006 = vmatprep.subr.mxu0 0.0
  %9007 = vmatpush2.msra.mxu0 0.0
  %9008 = vmatprep.subr.mxu0 0.0
  %9009 = vmatpush2.msra.mxu0 0.0
  %9010 = vmatprep.subr.mxu0 0.0
  %9011 = vmatpush2.msra.mxu0 0.0
  %9012 = vmatprep.subr.mxu0 0.0
  %9013 = vmatpush2.msra.mxu0 0.0
  %9014 = vmatprep.subr.mxu0 0.0
  %9015 = vmatpush2.msra.mxu0 0.0
  %9016 = vmatprep.subr.mxu0 0.0
  %9017 = vmatpush2.msra.mxu0 0.0
  %9018 = vmatprep.subr.mxu0 0.0
  %9019 = vmatpush2.msra.mxu0 0.0
  %9020 = vmatprep.mubr.f32.mxu0 0.0
  %9021 = vmatmul.mubr.f32.gmra.mxu0 %v8954
  %v9022 = vpop.f32.mrf.mxu0
  %v9023 = vadd.f32 0.0, %v9022
  %v9024 = vpop.f32.mrf.mxu0
  %9025 = vdwg.mxu0
  %v9026 = vadd.f32 %v8949, %v9023
  %s9027 = scalar_lea.vmem %s10, 112
  %v9028 = vld [vmem:[%s9027] sm:$0xff]
  %v9029 = vld [vmem:[%s9027 + $0x8] sm:$0xff]
  %v9031 = vsel %vm1855, %v8488, 0
  %9033 = vmatprep.subr.mxu0 0.0
  %9034 = vmatpush1.msra.mxu0 0.0
  %9035 = vmatprep.subr.mxu0 0.0
  %9036 = vmatpush1.msra.mxu0 0.0
  %9037 = vmatprep.subr.mxu0 0.0
  %9038 = vmatpush1.msra.mxu0 0.0
  %9039 = vmatprep.subr.mxu0 0.0
  %9040 = vmatpush1.msra.mxu0 0.0
  %9041 = vmatprep.subr.mxu0 0.0
  %9042 = vmatpush1.msra.mxu0 0.0
  %9043 = vmatprep.subr.mxu0 0.0
  %9044 = vmatpush1.msra.mxu0 0.0
  %9045 = vmatprep.subr.mxu0 0.0
  %9046 = vmatpush1.msra.mxu0 0.0
  %9047 = vmatprep.subr.mxu0 0.0
  %9048 = vmatpush1.msra.mxu0 0.0
  %9049 = vmatprep.subr.mxu0 0.0
  %9050 = vmatpush1.msra.mxu0 0.0
  %9051 = vmatprep.subr.mxu0 0.0
  %9052 = vmatpush1.msra.mxu0 0.0
  %9053 = vmatprep.subr.mxu0 0.0
  %9054 = vmatpush1.msra.mxu0 0.0
  %9055 = vmatprep.subr.mxu0 0.0
  %9056 = vmatpush1.msra.mxu0 0.0
  %9057 = vmatprep.subr.mxu0 0.0
  %9058 = vmatpush1.msra.mxu0 0.0
  %9059 = vmatprep.subr.mxu0 0.0
  %9060 = vmatpush1.msra.mxu0 0.0
  %9061 = vmatprep.subr.mxu0 0.0
  %9062 = vmatpush1.msra.mxu0 %v9029
  %9063 = vmatprep.subr.mxu0 0.0
  %9064 = vmatpush1.msra.mxu0 %v9028
  %9065 = vmatprep.subr.mxu0 0.0
  %9066 = vmatpush2.msra.mxu0 0.0
  %9067 = vmatprep.subr.mxu0 0.0
  %9068 = vmatpush2.msra.mxu0 0.0
  %9069 = vmatprep.subr.mxu0 0.0
  %9070 = vmatpush2.msra.mxu0 0.0
  %9071 = vmatprep.subr.mxu0 0.0
  %9072 = vmatpush2.msra.mxu0 0.0
  %9073 = vmatprep.subr.mxu0 0.0
  %9074 = vmatpush2.msra.mxu0 0.0
  %9075 = vmatprep.subr.mxu0 0.0
  %9076 = vmatpush2.msra.mxu0 0.0
  %9077 = vmatprep.subr.mxu0 0.0
  %9078 = vmatpush2.msra.mxu0 0.0
  %9079 = vmatprep.subr.mxu0 0.0
  %9080 = vmatpush2.msra.mxu0 0.0
  %9081 = vmatprep.subr.mxu0 0.0
  %9082 = vmatpush2.msra.mxu0 0.0
  %9083 = vmatprep.subr.mxu0 0.0
  %9084 = vmatpush2.msra.mxu0 0.0
  %9085 = vmatprep.subr.mxu0 0.0
  %9086 = vmatpush2.msra.mxu0 0.0
  %9087 = vmatprep.subr.mxu0 0.0
  %9088 = vmatpush2.msra.mxu0 0.0
  %9089 = vmatprep.subr.mxu0 0.0
  %9090 = vmatpush2.msra.mxu0 0.0
  %9091 = vmatprep.subr.mxu0 0.0
  %9092 = vmatpush2.msra.mxu0 0.0
  %9093 = vmatprep.subr.mxu0 0.0
  %9094 = vmatpush2.msra.mxu0 0.0
  %9095 = vmatprep.subr.mxu0 0.0
  %9096 = vmatpush2.msra.mxu0 0.0
  %9097 = vmatprep.mubr.f32.mxu0 0.0
  %9098 = vmatmul.mubr.f32.gmra.mxu0 %v9031
  %v9099 = vpop.f32.mrf.mxu0
  %v9100 = vadd.f32 0.0, %v9099
  %v9101 = vpop.f32.mrf.mxu0
  %9102 = vdwg.mxu0
  %v9103 = vadd.f32 %v9026, %v9100
  %s9104 = scalar_lea.vmem %s10, 128
  %v9105 = vld [vmem:[%s9104] sm:$0xff]
  %v9106 = vld [vmem:[%s9104 + $0x8] sm:$0xff]
  %v9108 = vsel %vm1855, %v8489, 0
  %9110 = vmatprep.subr.mxu0 0.0
  %9111 = vmatpush1.msra.mxu0 0.0
  %9112 = vmatprep.subr.mxu0 0.0
  %9113 = vmatpush1.msra.mxu0 0.0
  %9114 = vmatprep.subr.mxu0 0.0
  %9115 = vmatpush1.msra.mxu0 0.0
  %9116 = vmatprep.subr.mxu0 0.0
  %9117 = vmatpush1.msra.mxu0 0.0
  %9118 = vmatprep.subr.mxu0 0.0
  %9119 = vmatpush1.msra.mxu0 0.0
  %9120 = vmatprep.subr.mxu0 0.0
  %9121 = vmatpush1.msra.mxu0 0.0
  %9122 = vmatprep.subr.mxu0 0.0
  %9123 = vmatpush1.msra.mxu0 0.0
  %9124 = vmatprep.subr.mxu0 0.0
  %9125 = vmatpush1.msra.mxu0 0.0
  %9126 = vmatprep.subr.mxu0 0.0
  %9127 = vmatpush1.msra.mxu0 0.0
  %9128 = vmatprep.subr.mxu0 0.0
  %9129 = vmatpush1.msra.mxu0 0.0
  %9130 = vmatprep.subr.mxu0 0.0
  %9131 = vmatpush1.msra.mxu0 0.0
  %9132 = vmatprep.subr.mxu0 0.0
  %9133 = vmatpush1.msra.mxu0 0.0
  %9134 = vmatprep.subr.mxu0 0.0
  %9135 = vmatpush1.msra.mxu0 0.0
  %9136 = vmatprep.subr.mxu0 0.0
  %9137 = vmatpush1.msra.mxu0 0.0
  %9138 = vmatprep.subr.mxu0 0.0
  %9139 = vmatpush1.msra.mxu0 %v9106
  %9140 = vmatprep.subr.mxu0 0.0
  %9141 = vmatpush1.msra.mxu0 %v9105
  %9142 = vmatprep.subr.mxu0 0.0
  %9143 = vmatpush2.msra.mxu0 0.0
  %9144 = vmatprep.subr.mxu0 0.0
  %9145 = vmatpush2.msra.mxu0 0.0
  %9146 = vmatprep.subr.mxu0 0.0
  %9147 = vmatpush2.msra.mxu0 0.0
  %9148 = vmatprep.subr.mxu0 0.0
  %9149 = vmatpush2.msra.mxu0 0.0
  %9150 = vmatprep.subr.mxu0 0.0
  %9151 = vmatpush2.msra.mxu0 0.0
  %9152 = vmatprep.subr.mxu0 0.0
  %9153 = vmatpush2.msra.mxu0 0.0
  %9154 = vmatprep.subr.mxu0 0.0
  %9155 = vmatpush2.msra.mxu0 0.0
  %9156 = vmatprep.subr.mxu0 0.0
  %9157 = vmatpush2.msra.mxu0 0.0
  %9158 = vmatprep.subr.mxu0 0.0
  %9159 = vmatpush2.msra.mxu0 0.0
  %9160 = vmatprep.subr.mxu0 0.0
  %9161 = vmatpush2.msra.mxu0 0.0
  %9162 = vmatprep.subr.mxu0 0.0
  %9163 = vmatpush2.msra.mxu0 0.0
  %9164 = vmatprep.subr.mxu0 0.0
  %9165 = vmatpush2.msra.mxu0 0.0
  %9166 = vmatprep.subr.mxu0 0.0
  %9167 = vmatpush2.msra.mxu0 0.0
  %9168 = vmatprep.subr.mxu0 0.0
  %9169 = vmatpush2.msra.mxu0 0.0
  %9170 = vmatprep.subr.mxu0 0.0
  %9171 = vmatpush2.msra.mxu0 0.0
  %9172 = vmatprep.subr.mxu0 0.0
  %9173 = vmatpush2.msra.mxu0 0.0
  %9174 = vmatprep.mubr.f32.mxu0 0.0
  %9175 = vmatmul.mubr.f32.gmra.mxu0 %v9108
  %v9176 = vpop.f32.mrf.mxu0
  %v9177 = vadd.f32 0.0, %v9176
  %v9178 = vpop.f32.mrf.mxu0
  %9179 = vdwg.mxu0
  %v9180 = vadd.f32 %v9103, %v9177
  %s9181 = scalar_lea.vmem %s10, 144
  %v9182 = vld [vmem:[%s9181] sm:$0xff]
  %v9183 = vld [vmem:[%s9181 + $0x8] sm:$0xff]
  %v9185 = vsel %vm1855, %v8490, 0
  %9187 = vmatprep.subr.mxu0 0.0
  %9188 = vmatpush1.msra.mxu0 0.0
  %9189 = vmatprep.subr.mxu0 0.0
  %9190 = vmatpush1.msra.mxu0 0.0
  %9191 = vmatprep.subr.mxu0 0.0
  %9192 = vmatpush1.msra.mxu0 0.0
  %9193 = vmatprep.subr.mxu0 0.0
  %9194 = vmatpush1.msra.mxu0 0.0
  %9195 = vmatprep.subr.mxu0 0.0
  %9196 = vmatpush1.msra.mxu0 0.0
  %9197 = vmatprep.subr.mxu0 0.0
  %9198 = vmatpush1.msra.mxu0 0.0
  %9199 = vmatprep.subr.mxu0 0.0
  %9200 = vmatpush1.msra.mxu0 0.0
  %9201 = vmatprep.subr.mxu0 0.0
  %9202 = vmatpush1.msra.mxu0 0.0
  %9203 = vmatprep.subr.mxu0 0.0
  %9204 = vmatpush1.msra.mxu0 0.0
  %9205 = vmatprep.subr.mxu0 0.0
  %9206 = vmatpush1.msra.mxu0 0.0
  %9207 = vmatprep.subr.mxu0 0.0
  %9208 = vmatpush1.msra.mxu0 0.0
  %9209 = vmatprep.subr.mxu0 0.0
  %9210 = vmatpush1.msra.mxu0 0.0
  %9211 = vmatprep.subr.mxu0 0.0
  %9212 = vmatpush1.msra.mxu0 0.0
  %9213 = vmatprep.subr.mxu0 0.0
  %9214 = vmatpush1.msra.mxu0 0.0
  %9215 = vmatprep.subr.mxu0 0.0
  %9216 = vmatpush1.msra.mxu0 %v9183
  %9217 = vmatprep.subr.mxu0 0.0
  %9218 = vmatpush1.msra.mxu0 %v9182
  %9219 = vmatprep.subr.mxu0 0.0
  %9220 = vmatpush2.msra.mxu0 0.0
  %9221 = vmatprep.subr.mxu0 0.0
  %9222 = vmatpush2.msra.mxu0 0.0
  %9223 = vmatprep.subr.mxu0 0.0
  %9224 = vmatpush2.msra.mxu0 0.0
  %9225 = vmatprep.subr.mxu0 0.0
  %9226 = vmatpush2.msra.mxu0 0.0
  %9227 = vmatprep.subr.mxu0 0.0
  %9228 = vmatpush2.msra.mxu0 0.0
  %9229 = vmatprep.subr.mxu0 0.0
  %9230 = vmatpush2.msra.mxu0 0.0
  %9231 = vmatprep.subr.mxu0 0.0
  %9232 = vmatpush2.msra.mxu0 0.0
  %9233 = vmatprep.subr.mxu0 0.0
  %9234 = vmatpush2.msra.mxu0 0.0
  %9235 = vmatprep.subr.mxu0 0.0
  %9236 = vmatpush2.msra.mxu0 0.0
  %9237 = vmatprep.subr.mxu0 0.0
  %9238 = vmatpush2.msra.mxu0 0.0
  %9239 = vmatprep.subr.mxu0 0.0
  %9240 = vmatpush2.msra.mxu0 0.0
  %9241 = vmatprep.subr.mxu0 0.0
  %9242 = vmatpush2.msra.mxu0 0.0
  %9243 = vmatprep.subr.mxu0 0.0
  %9244 = vmatpush2.msra.mxu0 0.0
  %9245 = vmatprep.subr.mxu0 0.0
  %9246 = vmatpush2.msra.mxu0 0.0
  %9247 = vmatprep.subr.mxu0 0.0
  %9248 = vmatpush2.msra.mxu0 0.0
  %9249 = vmatprep.subr.mxu0 0.0
  %9250 = vmatpush2.msra.mxu0 0.0
  %9251 = vmatprep.mubr.f32.mxu0 0.0
  %9252 = vmatmul.mubr.f32.gmra.mxu0 %v9185
  %v9253 = vpop.f32.mrf.mxu0
  %v9254 = vadd.f32 0.0, %v9253
  %v9255 = vpop.f32.mrf.mxu0
  %9256 = vdwg.mxu0
  %v9257 = vadd.f32 %v9180, %v9254
  %v9258 = vld [vmem:[%s11] sm:$0x1]
  %v9260 = vlaneseq
  %v9261 = vshrl.u32 %v9260, 7
  %v9262 = vsub.s32 0, %v9261
  %v9263 = vrot.slane %v9258, %v9262
  %v9265 = vadd.f32 %v9257, %v9263
  %9266 = vst [vmem:[%s12] sm:$0xff] %v9265
  // Predicated region
  $region50: #{custom_network_forward.1} parent=0 // pred_check
    _
  $region51: #{custom_network_forward.1} parent=0 // pred_check_branch
    %9268 = sbr.rel (0) target = $region53
  $region52: #{custom_network_forward.1} parent=0 // pred_region
    _
  $region53: #{custom_network_forward.1} parent=0 // pred_fallthru
    _
  // Predicated region
  $region54: #{custom_network_forward.1} parent=0 // pred_check
    _
  $region55: #{custom_network_forward.1} parent=0 // pred_check_branch
    %9270 = sbr.rel (0) target = $region57
  $region56: #{custom_network_forward.1} parent=0 // pred_region
    _
  $region57: #{custom_network_forward.1} parent=0 // pred_fallthru
    _

</llo_original>
